<compile_context>
chip_gen: v5e
topology: v5e:2x2
jax: 0.10.0
libtpu: 0.0.40
codegen_flags: <defaults>
</compile_context>

<pallas_src>
import functools

import jax
import jax.numpy as jnp
from jax.experimental import pallas as pl
from jax.experimental.pallas import tpu as pltpu


# ----------------------------------------------------------------------------
# Pallas kernel 1: tiled matmul (MXU, bf16 operands, f32 accum) + fused epilogue
# ----------------------------------------------------------------------------
def _mm_kernel(*refs, k_rem, has_bias, relu):
    if has_bias:
        a_ref, b_ref, bias_ref, o_ref, acc_ref = refs
    else:
        a_ref, b_ref, o_ref, acc_ref = refs

    k = pl.program_id(2)
    nk = pl.num_programs(2)

    @pl.when(k == 0)
    def _():
        acc_ref[...] = jnp.zeros_like(acc_ref)

    a = a_ref[...]
    b = b_ref[...]
    if k_rem:  # static: K does not divide into tk -> mask the tail K block
        lim = jnp.where(k == nk - 1, k_rem, a.shape[1])
        amask = jax.lax.broadcasted_iota(jnp.int32, a.shape, 1) < lim
        bmask = jax.lax.broadcasted_iota(jnp.int32, b.shape, 0) < lim
        a = jnp.where(amask, a, jnp.zeros_like(a))
        b = jnp.where(bmask, b, jnp.zeros_like(b))

    acc_ref[...] += jnp.dot(a, b, preferred_element_type=jnp.float32)

    @pl.when(k == nk - 1)
    def _():
        r = acc_ref[...]
        if has_bias:
            r = r + bias_ref[...]
        if relu:
            r = jnp.maximum(r, 0.0)
        o_ref[...] = r.astype(o_ref.dtype)


def _pick_tiles(M, N, K):
    """VMEM-budgeted tile chooser (double-buffered A/B/out + f32 acc)."""
    def pad_l(n):  # lane padding
        return ((n + 127) // 128) * 128

    def pad_s(n):  # sublane padding
        return ((n + 7) // 8) * 8

    tn = N if N <= 512 else 512
    tk = K if K <= 1024 else 512
    tm = M if M <= 512 else 512
    budget = 10 * 1024 * 1024
    if M > 512:
        for cand in (1024, 2048, 4096):
            if cand > M:
                break
            fp = (2 * pad_s(cand) * pad_l(tk) * 2      # A (bf16, dbl-buffered)
                  + 2 * pad_s(tk) * pad_l(tn) * 2      # B (bf16, dbl-buffered)
                  + 3 * pad_s(cand) * pad_l(tn) * 4)   # out x2 + acc (f32)
            if fp <= budget:
                tm = cand
    return tm, tn, tk


@functools.partial(jax.jit, static_argnames=("relu",))
def _matmul_impl(a, b, bias, relu):
    M, K = a.shape
    K2, N = b.shape
    assert K == K2
    tm, tn, tk = _pick_tiles(M, N, K)
    k_rem = 0 if tk == K else (K % tk)
    gm, gn, gk = pl.cdiv(M, tm), pl.cdiv(N, tn), pl.cdiv(K, tk)

    a = a if a.dtype == jnp.bfloat16 else a.astype(jnp.bfloat16)
    b = b if b.dtype == jnp.bfloat16 else b.astype(jnp.bfloat16)

    has_bias = bias is not None
    ins = [a, b]
    in_specs = [pl.BlockSpec((tm, tk), lambda i, j, k: (i, k)),
                pl.BlockSpec((tk, tn), lambda i, j, k: (k, j))]
    if has_bias:
        ins.append(bias.astype(jnp.float32).reshape(1, N))
        in_specs.append(pl.BlockSpec((1, tn), lambda i, j, k: (0, j)))

    kern = functools.partial(_mm_kernel, k_rem=k_rem, has_bias=has_bias, relu=relu)
    return pl.pallas_call(
        kern,
        out_shape=jax.ShapeDtypeStruct((M, N), jnp.float32),
        grid=(gm, gn, gk),
        in_specs=in_specs,
        out_specs=pl.BlockSpec((tm, tn), lambda i, j, k: (i, j)),
        scratch_shapes=[pltpu.VMEM((tm, tn), jnp.float32)],
        compiler_params=pltpu.CompilerParams(
            dimension_semantics=("parallel", "parallel", "arbitrary")),
    )(*ins)


def matmul(a, b, bias=None, relu=False):
    return _matmul_impl(a, b, bias, relu=relu)


# ----------------------------------------------------------------------------
# Pallas kernel 2: instance-norm (channels-last, lane-packed) + residual + relu
# ----------------------------------------------------------------------------
def _in_kernel(*refs, has_res, relu, g):
    if has_res:
        x_ref, gsel_ref, gselT_ref, r_ref, o_ref = refs
    else:
        x_ref, gsel_ref, gselT_ref, o_ref = refs

    x = x_ref[0]                                     # (Nb, g*C) f32
    gsel = gsel_ref[...]                             # (g*C, C)
    gselT = gselT_ref[...]                           # (C, g*C)
    n_total = x.shape[0] * g

    s = jnp.sum(x, axis=0, keepdims=True)            # (1, g*C)
    sum_c = jnp.dot(s, gsel, preferred_element_type=jnp.float32)     # (1, C)
    mean_c = sum_c * (1.0 / n_total)
    mean = jnp.dot(mean_c, gselT, preferred_element_type=jnp.float32)  # (1, g*C)

    d = x - mean
    ss = jnp.sum(d * d, axis=0, keepdims=True)
    var_c = jnp.dot(ss, gsel, preferred_element_type=jnp.float32) * (1.0 / n_total)
    inv_c = jax.lax.rsqrt(var_c + 1e-5)
    inv = jnp.dot(inv_c, gselT, preferred_element_type=jnp.float32)

    y = d * inv
    if has_res:
        y = y + r_ref[0]
    if relu:
        y = jnp.maximum(y, 0.0)
    o_ref[0] = y


@functools.partial(jax.jit, static_argnames=("relu",))
def _instnorm_impl(x, residual, relu):
    """x: (B, N, C) f32, normalise over N per (b, c).  Optional residual+relu."""
    B, N, C = x.shape
    # pack g spatial positions into the lane dim so it stays (close to) 128-dense
    g = 1
    while g * 2 * C <= 128 and N % (g * 2) == 0:
        g *= 2
    Nb = N // g
    gC = g * C

    xg = x.astype(jnp.float32).reshape(B, Nb, gC)
    gsel = (jnp.arange(gC)[:, None] % C == jnp.arange(C)[None, :]).astype(jnp.float32)
    gselT = gsel.T

    has_res = residual is not None
    ins = [xg, gsel, gselT]
    in_specs = [pl.BlockSpec((1, Nb, gC), lambda b: (b, 0, 0)),
                pl.BlockSpec((gC, C), lambda b: (0, 0)),
                pl.BlockSpec((C, gC), lambda b: (0, 0))]
    if has_res:
        ins.append(residual.astype(jnp.float32).reshape(B, Nb, gC))
        in_specs.append(pl.BlockSpec((1, Nb, gC), lambda b: (b, 0, 0)))

    kern = functools.partial(_in_kernel, has_res=has_res, relu=relu, g=g)
    out = pl.pallas_call(
        kern,
        out_shape=jax.ShapeDtypeStruct((B, Nb, gC), jnp.float32),
        grid=(B,),
        in_specs=in_specs,
        out_specs=pl.BlockSpec((1, Nb, gC), lambda b: (b, 0, 0)),
        compiler_params=pltpu.CompilerParams(dimension_semantics=("parallel",)),
    )(*ins)
    return out.reshape(B, N, C)


def instance_norm_cl(x, residual=None, relu=False):
    """x: (B, D, H, W, C) channels-last InstanceNorm3d (affine=False, eps=1e-5)."""
    B, C = x.shape[0], x.shape[-1]
    N = 1
    for d in x.shape[1:-1]:
        N *= d
    rf = None if residual is None else residual.reshape(B, N, C)
    y = _instnorm_impl(x.reshape(B, N, C), rf, relu=relu)
    return y.reshape(x.shape)


# ----------------------------------------------------------------------------
# Pallas kernel 3: layer-norm over last dim with fused affine
# ----------------------------------------------------------------------------
def _ln_kernel(x_ref, g_ref, b_ref, o_ref):
    x = x_ref[...]                                   # (Rb, S)
    mean = jnp.mean(x, axis=1, keepdims=True)
    d = x - mean
    var = jnp.mean(d * d, axis=1, keepdims=True)
    y = d * jax.lax.rsqrt(var + 1e-5)
    o_ref[...] = y * g_ref[...] + b_ref[...]


@jax.jit
def _layernorm_impl(x, g, b):
    R, S = x.shape
    Rb = R if R <= 1024 else 1024
    return pl.pallas_call(
        _ln_kernel,
        out_shape=jax.ShapeDtypeStruct((R, S), jnp.float32),
        grid=(pl.cdiv(R, Rb),),
        in_specs=[pl.BlockSpec((Rb, S), lambda i: (i, 0)),
                  pl.BlockSpec((1, S), lambda i: (0, 0)),
                  pl.BlockSpec((1, S), lambda i: (0, 0))],
        out_specs=pl.BlockSpec((Rb, S), lambda i: (i, 0)),
        compiler_params=pltpu.CompilerParams(dimension_semantics=("parallel",)),
    )(x.astype(jnp.float32),
      g.astype(jnp.float32).reshape(1, S),
      b.astype(jnp.float32).reshape(1, S))


def layer_norm(x, p):
    sh = x.shape
    return _layernorm_impl(x.reshape(-1, sh[-1]), p["g"], p["b"]).reshape(sh)


# ----------------------------------------------------------------------------
# Pallas kernel 4: fused softmax attention, all heads of a batch in one step
# ----------------------------------------------------------------------------
def _attn_kernel(q_ref, k_ref, v_ref, o_ref, *, scale):
    q = q_ref[0]                                     # (h, Nq, dh) bf16
    k = k_ref[0]                                     # (h, Nk, dh) bf16
    v = v_ref[0]
    s = jnp.einsum("hqd,hkd->hqk", q, k,
                   preferred_element_type=jnp.float32) * scale
    m = jnp.max(s, axis=-1, keepdims=True)
    p = jnp.exp(s - m)
    denom = jnp.sum(p, axis=-1, keepdims=True)
    o = jnp.einsum("hqk,hkd->hqd", p.astype(v.dtype), v,
                   preferred_element_type=jnp.float32)
    o_ref[0] = o * pl.reciprocal(denom, approx=True)


@jax.jit
def attention(q, k, v):
    """q: (B, h, Nq, dh), k/v: (B, h, Nk, dh) -> (B, h, Nq, dh) f32."""
    B, h, Nq, dh = q.shape
    Nk = k.shape[2]
    scale = float(dh) ** -0.5
    kern = functools.partial(_attn_kernel, scale=scale)
    return pl.pallas_call(
        kern,
        out_shape=jax.ShapeDtypeStruct((B, h, Nq, dh), jnp.float32),
        grid=(B,),
        in_specs=[pl.BlockSpec((1, h, Nq, dh), lambda b: (b, 0, 0, 0)),
                  pl.BlockSpec((1, h, Nk, dh), lambda b: (b, 0, 0, 0)),
                  pl.BlockSpec((1, h, Nk, dh), lambda b: (b, 0, 0, 0))],
        out_specs=pl.BlockSpec((1, h, Nq, dh), lambda b: (b, 0, 0, 0)),
        compiler_params=pltpu.CompilerParams(dimension_semantics=("parallel",)),
    )(q.astype(jnp.bfloat16), k.astype(jnp.bfloat16), v.astype(jnp.bfloat16))


# ----------------------------------------------------------------------------
# Pallas kernel 5: batched matmul contracting the trailing dim (priors @ feat^T)
# ----------------------------------------------------------------------------
def _bmm_nt_kernel(a_ref, b_ref, o_ref):
    a = a_ref[0]                                     # (K, C) bf16
    b = b_ref[0]                                     # (tn, C) bf16
    o_ref[0] = jax.lax.dot_general(
        a, b, (((1,), (1,)), ((), ())), preferred_element_type=jnp.float32)


@jax.jit
def bmm_nt(a, b):
    """a: (B, K, C), b: (B, N, C) -> (B, K, N) (einsum 'bkc,bnc->bkn')."""
    B, K, C = a.shape
    N = b.shape[1]
    tn = N if N <= 2048 else 2048
    return pl.pallas_call(
        _bmm_nt_kernel,
        out_shape=jax.ShapeDtypeStruct((B, K, N), jnp.float32),
        grid=(B, pl.cdiv(N, tn)),
        in_specs=[pl.BlockSpec((1, K, C), lambda bi, ni: (bi, 0, 0)),
                  pl.BlockSpec((1, tn, C), lambda bi, ni: (bi, ni, 0))],
        out_specs=pl.BlockSpec((1, K, tn), lambda bi, ni: (bi, 0, ni)),
        compiler_params=pltpu.CompilerParams(
            dimension_semantics=("parallel", "parallel")),
    )(a.astype(jnp.bfloat16), b.astype(jnp.bfloat16))


# ----------------------------------------------------------------------------
# glue ops built on the Pallas kernels (channels-last internal layout)
# ----------------------------------------------------------------------------
@functools.partial(jax.jit, static_argnames=("stride",))
def conv3d_cl(x, w, stride=1):
    """PyTorch-style Conv3d (no bias), channels-last input (B, D, H, W, Cin).

    w: (Cout, Cin, k, k, k).  'same' padding for odd kernels.
    # TODO(synk): a direct (im2col-free) Pallas conv kernel would remove the
    # k^3-expanded patch materialisation; with the tiny (<=64) channel counts
    # here a direct conv would be lane-sparse in VMEM, so im2col is kept.
    """
    B, D, H, W, Cin = x.shape
    Cout = w.shape[0]
    k = w.shape[2]
    if k == 1:
        xs = x[:, ::stride, ::stride, ::stride, :] if stride > 1 else x
        y = matmul(xs.reshape(-1, Cin), jnp.transpose(w.reshape(Cout, Cin)))
        return y.reshape(xs.shape[:-1] + (Cout,))
    pad = (k - 1) // 2
    xb = x.astype(jnp.bfloat16)
    xp = jnp.pad(xb, ((0, 0), (pad, pad), (pad, pad), (pad, pad), (0, 0)))
    Do = (D + 2 * pad - k) // stride + 1
    Ho = (H + 2 * pad - k) // stride + 1
    Wo = (W + 2 * pad - k) // stride + 1
    cols = []
    for dz in range(k):
        for dy in range(k):
            for dx in range(k):
                cols.append(xp[:, dz:dz + stride * Do:stride,
                               dy:dy + stride * Ho:stride,
                               dx:dx + stride * Wo:stride, :])
    pat = jnp.stack(cols, axis=4)                    # (B, Do, Ho, Wo, k^3, Cin)
    pat = pat.reshape(B * Do * Ho * Wo, k * k * k * Cin)
    wm = jnp.transpose(w, (2, 3, 4, 1, 0)).reshape(k * k * k * Cin, Cout)
    y = matmul(pat, wm)
    return y.reshape(B, Do, Ho, Wo, Cout)


def linear(x, w, b=None, relu=False):
    sh = x.shape
    y = matmul(x.reshape(-1, sh[-1]), w, bias=b, relu=relu)
    return y.reshape(sh[:-1] + (w.shape[1],))


def mha(p, xq, xkv):
    B, Nq, _ = xq.shape
    Nk = xkv.shape[1]
    h, dh = p["heads"], p["dh"]
    inner = h * dh
    q = linear(xq, p["wq"])                                  # (B, Nq, inner)
    kv = linear(xkv, p["wkv"])                               # fused K/V projection
    k, v = kv[..., :inner], kv[..., inner:]
    q = q.reshape(B, Nq, h, dh).transpose(0, 2, 1, 3)
    k = k.reshape(B, Nk, h, dh).transpose(0, 2, 1, 3)
    v = v.reshape(B, Nk, h, dh).transpose(0, 2, 1, 3)
    o = attention(q, k, v)                                   # (B, h, Nq, dh)
    o = o.transpose(0, 2, 1, 3).reshape(B, Nq, inner)
    return linear(o, p["wo"])


def ffn(p, x):
    h = linear(x, p["w1"], p["b1"], relu=True)               # relu fused in-kernel
    return linear(h, p["w2"], p["b2"])


def basic_block(p, x, stride=1):
    h = conv3d_cl(x, p["w1"], stride=stride)
    h = instance_norm_cl(h, relu=True)
    h = conv3d_cl(h, p["w2"])
    if "ws" in p:
        sc = instance_norm_cl(conv3d_cl(x, p["ws"], stride=stride))
    else:
        sc = x
    # norm + residual add + relu fused into one Pallas call
    return instance_norm_cl(h, residual=sc, relu=True)


def trans_block(p, feat, smap, priors):
    feat = feat + mha(p["attn_f2m"], layer_norm(feat, p["ln_f1"]), layer_norm(smap, p["ln_m1"]))
    smap = smap + mha(p["attn_m2f"], layer_norm(smap, p["ln_m2"]), layer_norm(feat, p["ln_f2"]))
    feat = feat + ffn(p["ffn_f"], layer_norm(feat, p["ln_f3"]))
    smap = smap + ffn(p["ffn_m"], layer_norm(smap, p["ln_m3"]))
    if priors is not None and "attn_p2m" in p:
        priors = priors + mha(p["attn_p2m"], layer_norm(priors, p["ln_p1"]),
                              layer_norm(smap, p["ln_pm"]))
        priors = priors + ffn(p["ffn_p"], layer_norm(priors, p["ln_p2"]))
    return feat, smap, priors


def semantic_map_gen(p, x, map_size):
    B, D, H, W, C = x.shape
    md, mh, mw = map_size
    pooled = x.reshape(B, md, D // md, mh, H // mh, mw, W // mw, C).mean(axis=(2, 4, 6))
    return linear(pooled.reshape(B, md * mh * mw, C), p["map_proj"])   # (B, M, C)


def gather_priors(p, tgt_idx, mod_idx):
    t = p["task_embed"][tgt_idx]                     # (B, tsel, C)
    m = p["mod_embed"][mod_idx]                      # (B, msel, C)
    return jnp.concatenate([t, m], axis=1)


def down_block_fwd(p, x, tgt_idx=None, mod_idx=None, map_size=(2, 2, 2)):
    x = basic_block(p["down"], x, stride=2)
    for bp in p["convs"]:
        x = basic_block(bp, x)
    if "trans" not in p:
        return x, None
    B, D, H, W, C = x.shape
    smap = semantic_map_gen(p, x, map_size)
    priors = gather_priors(p, tgt_idx, mod_idx)
    feat = x.reshape(B, D * H * W, C)
    for tp in p["trans"]:
        feat, smap, priors = trans_block(tp, feat, smap, priors)
    x = feat.reshape(B, D, H, W, C)
    return x, smap, priors


def up_block_fwd(p, x_low, x_skip, map_low=None, map_skip=None,
                 tgt_idx=None, mod_idx=None, map_size=(2, 2, 2)):
    B, D, H, W, C = x_low.shape
    # TODO(synk): jax trilinear resize uses half-pixel centers, not align_corners=True.
    xu = jax.image.resize(x_low, (B, D * 2, H * 2, W * 2, C), method="trilinear")
    x = jnp.concatenate([xu, x_skip], axis=-1)
    x = basic_block(p["fuse"], x)
    for bp in p["convs"]:
        x = basic_block(bp, x)
    if "trans" not in p:
        return x, None
    smap = linear(map_low, p["map_low_proj"]) + map_skip
    priors = gather_priors(p, tgt_idx, mod_idx)
    B, D, H, W, C = x.shape
    feat = x.reshape(B, D * H * W, C)
    for tp in p["trans"]:
        feat, smap, priors = trans_block(tp, feat, smap, priors)
    x = feat.reshape(B, D, H, W, C)
    return x, smap, priors


def map_fusion_fwd(p, maps):
    toks = [linear(m, p["in_proj"][i]) for i, m in enumerate(maps)]
    lens = [t.shape[1] for t in toks]
    x = jnp.concatenate(toks, axis=1)
    for blk in p["blocks"]:
        xn = layer_norm(x, blk["ln1"])
        x = x + mha(blk["attn"], xn, xn)
        x = x + ffn(blk["ffn"], layer_norm(x, blk["ln2"]))
    outs, start = [], 0
    for i, (m, L) in enumerate(zip(maps, lens)):
        seg = x[:, start:start + L, :]
        start += L
        outs.append(m + linear(seg, p["out_proj"][i]))
    return outs


def hierarchy_prior_classifier(p, feat, prior_list):
    priors = jnp.concatenate(prior_list, axis=-1)            # (B, K, in_dim)
    B, D, H, W, C = feat.shape
    pf = linear(feat.reshape(B, D * H * W, C), p["proj_w"])  # (B, N, in_dim)
    out = bmm_nt(priors, pf)                                 # (B, K, N) batched Pallas matmul
    return out.reshape(B, priors.shape[1], D, H, W)


def modality_classifier(p, mod_prior_list):
    # TODO(synk): exact ModalityClassifier head definition unavailable; using mean-pool + linear.
    priors = jnp.concatenate(mod_prior_list, axis=-1)
    pooled = priors.mean(axis=1)                             # (B, in_dim)
    return matmul(pooled, p["w"], bias=p["b"])


# ----------------------------------------------------------------------------
# deterministic parameter init
# ----------------------------------------------------------------------------
class PG:
    def __init__(self, seed=0):
        self.key = jax.random.PRNGKey(seed)

    def take(self, shape, scale=0.02):
        self.key, k = jax.random.split(self.key)
        return jax.random.normal(k, shape, jnp.float32) * scale


def init_ln(c):
    return {"g": jnp.ones((c,), jnp.float32), "b": jnp.zeros((c,), jnp.float32)}


def init_mha(pg, cq, ckv, heads, dh):
    inner = heads * dh
    return {"wq": pg.take((cq, inner)), "wkv": pg.take((ckv, 2 * inner)),
            "wo": pg.take((inner, cq)), "heads": heads, "dh": dh}


def init_ffn(pg, c, expansion):
    return {"w1": pg.take((c, c * expansion)), "b1": jnp.zeros((c * expansion,), jnp.float32),
            "w2": pg.take((c * expansion, c)), "b2": jnp.zeros((c,), jnp.float32)}


def init_trans_block(pg, c, heads, expansion, with_priors):
    dh = c // heads
    p = {"ln_f1": init_ln(c), "ln_m1": init_ln(c),
         "attn_f2m": init_mha(pg, c, c, heads, dh),
         "ln_m2": init_ln(c), "ln_f2": init_ln(c),
         "attn_m2f": init_mha(pg, c, c, heads, dh),
         "ln_f3": init_ln(c), "ffn_f": init_ffn(pg, c, expansion),
         "ln_m3": init_ln(c), "ffn_m": init_ffn(pg, c, expansion)}
    if with_priors:
        p.update({"ln_p1": init_ln(c), "ln_pm": init_ln(c),
                  "attn_p2m": init_mha(pg, c, c, heads, dh),
                  "ln_p2": init_ln(c), "ffn_p": init_ffn(pg, c, expansion)})
    return p


def init_basic_block(pg, cin, cout, stride=1):
    p = {"w1": pg.take((cout, cin, 3, 3, 3)),
         "w2": pg.take((cout, cout, 3, 3, 3))}
    if stride != 1 or cin != cout:
        p["ws"] = pg.take((cout, cin, 1, 1, 1))
    return p


def init_down_block(pg, cin, cout, conv_num, trans_num, heads, map_gen, exp, tn, mn):
    p = {"down": init_basic_block(pg, cin, cout, stride=2),
         "convs": [init_basic_block(pg, cout, cout) for _ in range(max(conv_num - 1, 0))]}
    if map_gen and trans_num > 0:
        p["map_proj"] = pg.take((cout, cout))
        p["task_embed"] = pg.take((tn, cout))
        p["mod_embed"] = pg.take((mn, cout))
        p["trans"] = [init_trans_block(pg, cout, heads, exp, True) for _ in range(trans_num)]
    return p


def init_up_block(pg, cin, cout, skip_ch, conv_num, trans_num, heads, exp,
                  map_shortcut, map_low_ch, tn, mn):
    p = {"fuse": init_basic_block(pg, cin + skip_ch, cout),
         "convs": [init_basic_block(pg, cout, cout) for _ in range(max(conv_num - 1, 0))]}
    if map_shortcut and trans_num > 0:
        p["map_low_proj"] = pg.take((map_low_ch, cout))
        p["task_embed"] = pg.take((tn, cout))
        p["mod_embed"] = pg.take((mn, cout))
        p["trans"] = [init_trans_block(pg, cout, heads, exp, True) for _ in range(trans_num)]
    return p


def init_map_fusion(pg, dims, fdim, fheads, depth, exp):
    p = {"in_proj": [pg.take((d, fdim)) for d in dims],
         "out_proj": [pg.take((fdim, d)) for d in dims],
         "blocks": []}
    dh = fdim // fheads
    for _ in range(depth):
        p["blocks"].append({"ln1": init_ln(fdim),
                            "attn": init_mha(pg, fdim, fdim, fheads, dh),
                            "ln2": init_ln(fdim),
                            "ffn": init_ffn(pg, fdim, exp)})
    return p


def init_model(pg, cfg):
    cn, nh = cfg["chan_num"], cfg["num_heads"]
    cv, tr = cfg["conv_num"], cfg["trans_num"]
    exp, tn, mn = cfg["expansion"], cfg["tn"], cfg["mn"]
    P = {"inc": {"w0": pg.take((cfg["base_chan"], cfg["in_chan"], 3, 3, 3)),
                 "block": init_basic_block(pg, cfg["base_chan"], cfg["base_chan"])}}
    P["down1"] = init_down_block(pg, cfg["base_chan"], cn[0], cv[0], tr[0], nh[0], False, exp, tn, mn)
    P["down2"] = init_down_block(pg, cn[0], cn[1], cv[1], tr[1], nh[1], True, exp, tn, mn)
    P["down3"] = init_down_block(pg, cn[1], cn[2], cv[2], tr[2], nh[2], True, exp, tn, mn)
    P["down4"] = init_down_block(pg, cn[2], cn[3], cv[3], tr[3], nh[3], True, exp, tn, mn)
    P["map_fusion"] = init_map_fusion(pg, [cn[1], cn[2], cn[3]], cfg["fusion_dim"],
                                      cfg["fusion_heads"], cfg["fusion_depth"], exp)
    P["up1"] = init_up_block(pg, cn[3], cn[4], cn[2], cv[4], tr[4], nh[4], exp, True, cn[3], tn, mn)
    P["up2"] = init_up_block(pg, cn[4], cn[5], cn[1], cv[5], tr[5], nh[5], exp, True, cn[4], tn, mn)
    P["up3"] = init_up_block(pg, cn[5], cn[6], cn[0], cv[6], tr[6], nh[6], exp, False, None, tn, mn)
    P["up4"] = init_up_block(pg, cn[6], cn[7], cfg["base_chan"], cv[7], tr[7], nh[7], exp, False, None, tn, mn)
    in_dim = sum(cn[1:6])
    P["aux_classifier"] = {"proj_w": pg.take((cn[5], in_dim))}
    P["out_classifier"] = {"proj_w": pg.take((cn[7], in_dim))}
    P["mod_out"] = {"w": pg.take((in_dim, mn)), "b": jnp.zeros((mn,), jnp.float32)}
    return P


# ----------------------------------------------------------------------------
# full forward
# ----------------------------------------------------------------------------
def hermes_medformer_forward(P, cfg, x, tgt_idx, mod_idx):
    tn = tgt_idx.shape[1]
    ms = tuple(cfg["map_size"])

    # NCDHW -> NDHWC (channels-last internal layout)
    x_cl = jnp.transpose(x, (0, 2, 3, 4, 1))

    x0 = basic_block(P["inc"]["block"], conv3d_cl(x_cl, P["inc"]["w0"]))
    x1, _ = down_block_fwd(P["down1"], x0)
    x2, map2, priors_2 = down_block_fwd(P["down2"], x1, tgt_idx, mod_idx, ms)
    x3, map3, priors_3 = down_block_fwd(P["down3"], x2, tgt_idx, mod_idx, ms)
    x4, map4, priors_4 = down_block_fwd(P["down4"], x3, tgt_idx, mod_idx, ms)

    map_list = map_fusion_fwd(P["map_fusion"], [map2, map3, map4])

    out, semantic_map, priors_5 = up_block_fwd(P["up1"], x4, x3, map_list[2], map_list[1],
                                               tgt_idx, mod_idx, ms)
    out, semantic_map, priors_6 = up_block_fwd(P["up2"], out, x2, semantic_map, map_list[0],
                                               tgt_idx, mod_idx, ms)

    task_prior_list = [p[:, :tn, :] for p in (priors_2, priors_3, priors_4, priors_5, priors_6)]

    aux_out = None
    if cfg["aux_loss"]:
        aux_out = hierarchy_prior_classifier(P["aux_classifier"], out, task_prior_list)
        aux_out = jax.image.resize(aux_out, aux_out.shape[:2] + x.shape[-3:], method="trilinear")

    out, semantic_map = up_block_fwd(P["up3"], out, x1, semantic_map, None)
    out, semantic_map = up_block_fwd(P["up4"], out, x0, semantic_map, None)
    out = hierarchy_prior_classifier(P["out_classifier"], out, task_prior_list)

    mod_prior_list = [p[:, tn:, :] for p in (priors_2, priors_3, priors_4, priors_5, priors_6)]
    mod_out = modality_classifier(P["mod_out"], mod_prior_list)

    if cfg["aux_loss"]:
        return [out, aux_out], mod_out
    return out, mod_out


# ----------------------------------------------------------------------------
# main
# ----------------------------------------------------------------------------
if __name__ == "__main__":
    # scaled-down config (same structure as the PyTorch defaults, smaller widths)
    CFG = dict(
        in_chan=1, base_chan=8,
        map_size=(2, 2, 2),
        conv_num=[2, 0, 0, 0, 0, 0, 2, 2],
        trans_num=[0, 1, 1, 1, 1, 1, 0, 0],
        chan_num=[16, 32, 48, 64, 48, 32, 16, 8],
        num_heads=[1, 2, 4, 4, 4, 2, 1, 1],
        fusion_depth=1, fusion_dim=64, fusion_heads=4,
        expansion=2, tn=8, mn=2, aux_loss=True,
    )

    pg = PG(seed=0)
    params = init_model(pg, CFG)

    key = jax.random.PRNGKey(0)
    k1, k2, k3 = jax.random.split(key, 3)
    x = jax.random.normal(k1, (1, CFG["in_chan"], 32, 32, 32), jnp.float32)   # NCDHW
    tgt_idx = jax.random.randint(k2, (1, 4), 0, CFG["tn"], jnp.int32)
    mod_idx = jax.random.randint(k3, (1, 1), 0, CFG["mn"], jnp.int32)

    (seg_outs, mod_out) = hermes_medformer_forward(params, CFG, x, tgt_idx, mod_idx)
    jax.block_until_ready((seg_outs, mod_out))

    out, aux_out = seg_outs
    assert out.shape == (1, 4, 32, 32, 32)
    assert aux_out.shape == (1, 4, 32, 32, 32)
    assert mod_out.shape == (1, CFG["mn"])
    print("KERNEL_OK")
</pallas_src>

<mosaic_0001>
module attributes {stable_mosaic.version = 11 : i64} {
  func.func @_mm_kernel(%arg0: i32, %arg1: i32, %arg2: i32, %arg3: memref<4096x27xbf16, #tpu.memory_space<vmem>>, %arg4: memref<27x8xbf16, #tpu.memory_space<vmem>>, %arg5: memref<4096x8xf32, #tpu.memory_space<vmem>>, %arg6: memref<4096x8xf32, #tpu.memory_space<vmem>>) attributes {dimension_semantics = [#tpu.dimension_semantics<parallel>, #tpu.dimension_semantics<parallel>, #tpu.dimension_semantics<arbitrary>], iteration_bounds = array<i64: 8, 1, 1>, scalar_prefetch = 0 : i64, scratch_operands = 1 : i64, tpu.core_type = #tpu.core_type<tc>, window_params = [{transform_indices = @transform_0, window_bounds = array<i64: 4096, 27>}, {transform_indices = @transform_1, window_bounds = array<i64: 27, 8>}, {transform_indices = @transform_2, window_bounds = array<i64: 4096, 8>}]} {
    %c0_i32 = arith.constant 0 : i32
    %0 = arith.cmpi eq, %arg2, %c0_i32 : i32
    %1 = arith.extui %0 : i1 to i32
    %c0_i32_0 = arith.constant 0 : i32
    %2 = arith.cmpi ne, %1, %c0_i32_0 : i32
    scf.if %2 {
      %cst_10 = arith.constant 0.000000e+00 : f32
      %12 = vector.broadcast %cst_10 : f32 to vector<4096x8xf32>
      %c0_11 = arith.constant 0 : index
      %c0_12 = arith.constant 0 : index
      %13 = vector.load %arg6[%c0_11, %c0_12] : memref<4096x8xf32, #tpu.memory_space<vmem>>, vector<4096x8xf32>
      tpu.vector_store %arg6[%c0_11, %c0_12], %12 {strides = array<i32>} : memref<4096x8xf32, #tpu.memory_space<vmem>>, vector<4096x8xf32>,
    } else {
    }
    %c0 = arith.constant 0 : index
    %c0_1 = arith.constant 0 : index
    %3 = vector.load %arg3[%c0, %c0_1] : memref<4096x27xbf16, #tpu.memory_space<vmem>>, vector<4096x27xbf16>
    %c0_2 = arith.constant 0 : index
    %c0_3 = arith.constant 0 : index
    %4 = vector.load %arg4[%c0_2, %c0_3] : memref<27x8xbf16, #tpu.memory_space<vmem>>, vector<27x8xbf16>
    %c0_4 = arith.constant 0 : index
    %c0_5 = arith.constant 0 : index
    %5 = vector.load %arg6[%c0_4, %c0_5] : memref<4096x8xf32, #tpu.memory_space<vmem>>, vector<4096x8xf32>
    %cst = arith.constant dense<0.000000e+00> : vector<4096x8xf32>
    %6 = tpu.matmul %3, %4, %cst {dimension_numbers = #tpu.dot_dimension_numbers<[1], [0], [0], [1], [0, 0, 1, 1], [], []>} : vector<4096x27xbf16>, vector<27x8xbf16>, vector<4096x8xf32> -> vector<4096x8xf32>
    %7 = arith.addf %5, %6 : vector<4096x8xf32>
    %c0_6 = arith.constant 0 : index
    %c0_7 = arith.constant 0 : index
    %8 = vector.load %arg6[%c0_6, %c0_7] : memref<4096x8xf32, #tpu.memory_space<vmem>>, vector<4096x8xf32>
    tpu.vector_store %arg6[%c0_6, %c0_7], %7 {strides = array<i32>} : memref<4096x8xf32, #tpu.memory_space<vmem>>, vector<4096x8xf32>,
    %c0_i32_8 = arith.constant 0 : i32
    %9 = arith.cmpi eq, %arg2, %c0_i32_8 : i32
    %10 = arith.extui %9 : i1 to i32
    %c0_i32_9 = arith.constant 0 : i32
    %11 = arith.cmpi ne, %10, %c0_i32_9 : i32
    scf.if %11 {
      %c0_10 = arith.constant 0 : index
      %c0_11 = arith.constant 0 : index
      %12 = vector.load %arg6[%c0_10, %c0_11] : memref<4096x8xf32, #tpu.memory_space<vmem>>, vector<4096x8xf32>
      %c0_12 = arith.constant 0 : index
      %c0_13 = arith.constant 0 : index
      %13 = vector.load %arg5[%c0_12, %c0_13] : memref<4096x8xf32, #tpu.memory_space<vmem>>, vector<4096x8xf32>
      tpu.vector_store %arg5[%c0_12, %c0_13], %12 {strides = array<i32>} : memref<4096x8xf32, #tpu.memory_space<vmem>>, vector<4096x8xf32>,
    } else {
    }
    return
  }
  func.func @transform_0(%arg0: i32, %arg1: i32, %arg2: i32) -> (i32, i32) {
    %c0_i32 = arith.constant 0 : i32
    return %arg0, %arg2 : i32, i32
  }
  func.func @transform_1(%arg0: i32, %arg1: i32, %arg2: i32) -> (i32, i32) {
    %c0_i32 = arith.constant 0 : i32
    return %arg2, %arg1 : i32, i32
  }
  func.func @transform_2(%arg0: i32, %arg1: i32, %arg2: i32) -> (i32, i32) {
    %c0_i32 = arith.constant 0 : i32
    return %arg0, %arg1 : i32, i32
  }
}

</mosaic_0001>

<llo_original>
// kernel: _matmul_impl.1
$region0: #{_matmul_impl.1}
  #allocation0 [shape = 'u32[]', space=smem, size = 0x4, offset = 0x4, fixed_abs, tag = 'smem constant byte address 0x4 - core index']
  #allocation1 [shape = 'u32[72,128]{1,0:T(1,128)}', space=vmem, size = 0x9000, scoped, tag = 'internal scratch']
  #allocation2 [shape = 'f32[4096,8]{1,0:T(8,128)}', space=vmem, size = 0x200000, scoped, tag = 'scratch operand']
  %s0 = inlined_call_operand.vmem [shape: bf16[32768,27], index: 0, kind: input, shape index: {}]
  %s1 = inlined_call_operand.vmem [shape: bf16[27,8], index: 1, kind: input, shape index: {}]
  %s2 = inlined_call_operand.vmem [shape: f32[32768,8], index: 2, kind: output, shape index: {}]
  %s3 = sld [smem:[#allocation0]]
  $region49: #{_matmul_impl.1} parent=0
    _
  %s5 = ssub.s32 1, %s3
  %s6 = scalar_select 0, %s5, %s3
  loop: start=0, step=1, limit=10
  $region2: #{_matmul_impl.1} parent=0 // loop_pre_header
    _
  $region3: #{_matmul_impl.1} parent=0 // loop_header
    %s8 = sphi 0, %s12
    %p9 = scmp.ge.s32.totalorder %s8, 10
    %s15 = sphi 0, %s34
    %s16 = sphi 0, %s30
    %s17 = sphi 0, %s26
    %s18 = sphi 0, %s15
    %s19 = sphi 0, %s16
    %s20 = sphi 0, %s17
    %s21 = sphi 0, %s18
    %s22 = sphi 0, %s19
    %s23 = sphi 0, %s20
    %s39 = sphi 0, %s41
    %s42 = sphi 0, %s39
    %s43 = sphi 0, %s42
    %s59 = sphi 0, %s43
    %s67 = sphi 0, %s69
    %s70 = sphi 0, %s67
    %s71 = sphi 0, %s70
    %s87 = sphi 0, %s71
    %s95 = sphi 0, %s97
    %s98 = sphi 0, %s95
    %s99 = sphi 0, %s98
    %s115 = sphi 0, %s99
  $region4: #{_matmul_impl.1} parent=0 // loop_header_branch
    %11 = sbr.rel (%p9) target = $region8
  $region5: #{_matmul_impl.1} parent=0 // loop_body
    %s13 = ssub.s32 %s8, 1
    %s14 = ssub.s32 %s8, 2
    %s24 = sadd.s32 1, %s17
    %p25 = scmp.ge.s32.totalorder %s24, 1
    %s26 = scalar_select %p25, 0, %s24
    %s27 = sadd.s32 1, %s16
    %s28 = scalar_select %p25, %s27, %s16
    %p29 = scmp.ge.s32.totalorder %s28, 1
    %s30 = scalar_select %p29, 0, %s28
    %s31 = sadd.s32 1, %s15
    %s32 = scalar_select %p29, %s31, %s15
    %p33 = scmp.ge.s32.totalorder %s32, 8
    %s34 = scalar_select %p33, 0, %s32
    %s35 = ssub.s32 %s15, %s34
    %s36 = ssub.s32 %s17, %s26
    %s37 = sor.u32 %s35, %s36
    %p38 = scmp.eq.s32.totalorder %s37, 0
    %s40 = sadd.s32 %s39, 1
    %s41 = scalar_select %p38, %s39, %s40
    %p44 = pneg %p38
    %p45 = scmp.eq.s32.totalorder %s8, 7
    %p46 = por %p44, %p45
    %p47 = scmp.ne.s32.totalorder %s39, %s42
    %p48 = scmp.eq.s32.totalorder %s8, 0
    %p49 = por %p47, %p48
    %p50 = scmp.ne.s32.totalorder %s39, %s42
    %p51 = scmp.eq.s32.totalorder %s13, 7
    %p52 = por %p50, %p51
    %p53 = scmp.ne.s32.totalorder %s42, %s43
    %p54 = scmp.eq.s32.totalorder %s13, 0
    %p55 = por %p53, %p54
    %p56 = scmp.ne.s32.totalorder %s42, %s43
    %p57 = scmp.eq.s32.totalorder %s14, 7
    %p58 = por %p56, %p57
    %p60 = scmp.ne.s32.totalorder %s43, %s59
    %p61 = scmp.eq.s32.totalorder %s14, 0
    %p62 = por %p60, %p61
    %s63 = ssub.s32 %s17, %s26
    %s64 = ssub.s32 %s16, %s30
    %s65 = sor.u32 %s63, %s64
    %p66 = scmp.eq.s32.totalorder %s65, 0
    %s68 = sadd.s32 %s67, 1
    %s69 = scalar_select %p66, %s67, %s68
    %p72 = pneg %p66
    %p73 = scmp.eq.s32.totalorder %s8, 7
    %p74 = por %p72, %p73
    %p75 = scmp.ne.s32.totalorder %s67, %s70
    %p76 = scmp.eq.s32.totalorder %s8, 0
    %p77 = por %p75, %p76
    %p78 = scmp.ne.s32.totalorder %s67, %s70
    %p79 = scmp.eq.s32.totalorder %s13, 7
    %p80 = por %p78, %p79
    %p81 = scmp.ne.s32.totalorder %s70, %s71
    %p82 = scmp.eq.s32.totalorder %s13, 0
    %p83 = por %p81, %p82
    %p84 = scmp.ne.s32.totalorder %s70, %s71
    %p85 = scmp.eq.s32.totalorder %s14, 7
    %p86 = por %p84, %p85
    %p88 = scmp.ne.s32.totalorder %s71, %s87
    %p89 = scmp.eq.s32.totalorder %s14, 0
    %p90 = por %p88, %p89
    %s91 = ssub.s32 %s15, %s34
    %s92 = ssub.s32 %s16, %s30
    %s93 = sor.u32 %s91, %s92
    %p94 = scmp.eq.s32.totalorder %s93, 0
    %s96 = sadd.s32 %s95, 1
    %s97 = scalar_select %p94, %s95, %s96
    %p100 = pneg %p94
    %p101 = scmp.eq.s32.totalorder %s8, 7
    %p102 = por %p100, %p101
    %p103 = scmp.ne.s32.totalorder %s95, %s98
    %p104 = scmp.eq.s32.totalorder %s8, 0
    %p105 = por %p103, %p104
    %p106 = scmp.ne.s32.totalorder %s95, %s98
    %p107 = scmp.eq.s32.totalorder %s13, 7
    %p108 = por %p106, %p107
    %p109 = scmp.ne.s32.totalorder %s98, %s99
    %p110 = scmp.eq.s32.totalorder %s13, 0
    %p111 = por %p109, %p110
    %p112 = scmp.ne.s32.totalorder %s98, %s99
    %p113 = scmp.eq.s32.totalorder %s14, 7
    %p114 = por %p112, %p113
    %p116 = scmp.ne.s32.totalorder %s99, %s115
    %p117 = scmp.eq.s32.totalorder %s14, 0
    %p118 = por %p116, %p117
    %p119 = scmp.le.s32.totalorder 1, %s8
    %p120 = scmp.lt.s32.totalorder %s8, 9
    %p121 = pnand %p119, %p120
    %p122 = pneg %p121
    // Predicated region
    $region9: #{_matmul_impl.1} parent=5 // pred_check
      _
    $region10: #{_matmul_impl.1} parent=5 // pred_check_branch
      %124 = sbr.rel (%p121) target = $region12
    $region11: #{_matmul_impl.1} parent=5 // pred_region
      %s125 = ssub.s32 %s8, 1
      // Predicated region
      $region13: #{_matmul_impl.1} parent=11 // pred_check
        %p126 = pneg %p83
      $region14: #{_matmul_impl.1} parent=11 // pred_check_branch
        %128 = sbr.rel (%p126) target = $region16
      $region15: #{_matmul_impl.1} parent=11 // pred_region
        %s129 = smul.u32 4, %s20
        %p130 = scmp.lt.s32.totalorder %s129, 3
        %s131 = scalar_select %p130, %s129, 3
        %p132 = scmp.lt.s32.totalorder %s19, 0
        %s133 = scalar_select %p132, %s19, 0
        %s134 = sadd.s32 %s133, %s131
        %s135 = smul.addr %s134, 4
        %s136 = scalar_lea.vmem %s1, %s135
        %s137 = smul.u32 4, %s20
      $region16: #{_matmul_impl.1} parent=11 // pred_fallthru
        _
    $region12: #{_matmul_impl.1} parent=5 // pred_fallthru
      _
    %p138 = scmp.lt.s32.totalorder %s8, 8
    // Predicated region
    $region17: #{_matmul_impl.1} parent=5 // pred_check
      %p139 = pneg %p138
    $region18: #{_matmul_impl.1} parent=5 // pred_check_branch
      %141 = sbr.rel (%p139) target = $region20
    $region19: #{_matmul_impl.1} parent=5 // pred_region
      // Predicated region
      $region21: #{_matmul_impl.1} parent=19 // pred_check
        %p142 = pneg %p49
      $region22: #{_matmul_impl.1} parent=19 // pred_check_branch
        %144 = sbr.rel (%p142) target = $region24
      $region23: #{_matmul_impl.1} parent=19 // pred_region
        %s145 = smul.u32 512, %s15
        %p146 = scmp.lt.s32.totalorder %s145, 4095
        %s147 = scalar_select %p146, %s145, 4095
        %p148 = scmp.lt.s32.totalorder %s17, 0
        %s149 = scalar_select %p148, %s17, 0
        %s150 = sadd.s32 %s149, %s147
        %s151 = smul.addr %s150, 4
        %s152 = scalar_lea.vmem %s0, %s151
        %s153 = smul.u32 512, %s15
      $region24: #{_matmul_impl.1} parent=19 // pred_fallthru
        _
    $region20: #{_matmul_impl.1} parent=5 // pred_fallthru
      _
    %p154 = scmp.le.s32.totalorder 1, %s8
    %p155 = scmp.lt.s32.totalorder %s8, 9
    %p156 = pnand %p154, %p155
    %p157 = pneg %p156
    // Predicated region
    $region25: #{_matmul_impl.1} parent=5 // pred_check
      _
    $region26: #{_matmul_impl.1} parent=5 // pred_check_branch
      %159 = sbr.rel (%p156) target = $region28
    $region27: #{_matmul_impl.1} parent=5 // pred_region
      %s160 = ssub.s32 %s8, 1
      %s161 = smul.u32 512, %s18
      %p162 = scmp.lt.s32.totalorder %s161, 4095
      %s163 = scalar_select %p162, %s161, 4095
      %p164 = scmp.lt.s32.totalorder %s20, 0
      %s165 = scalar_select %p164, %s20, 0
      %s166 = sadd.s32 %s165, %s163
      %s167 = smul.addr %s166, 4
      %s168 = scalar_lea.vmem %s0, %s167
      %p169 = pneg %p55
      %p170 = pneg %p52
      %s171 = smul.u32 4, %s20
      %p172 = scmp.lt.s32.totalorder %s171, 3
      %s173 = scalar_select %p172, %s171, 3
      %p174 = scmp.lt.s32.totalorder %s19, 0
      %s175 = scalar_select %p174, %s19, 0
      %s176 = sadd.s32 %s175, %s173
      %s177 = smul.addr %s176, 4
      %s178 = scalar_lea.vmem %s1, %s177
      %p179 = pneg %p83
      %p180 = pneg %p80
      %p181 = pneg %p111
      %p182 = pneg %p108
      %s183 = smul.u32 512, %s18
      %p184 = scmp.lt.s32.totalorder %s183, 4095
      %s185 = scalar_select %p184, %s183, 4095
      %p186 = scmp.lt.s32.totalorder %s19, 0
      %s187 = scalar_select %p186, %s19, 0
      %s188 = sadd.s32 %s187, %s185
      %s189 = smul.addr %s188, 8
      %s190 = scalar_lea.vmem %s2, %s189
      %s191 = smul.u32 512, %s18
      %p192 = scmp.lt.s32.totalorder %s191, 4095
      %s193 = scalar_select %p192, %s191, 4095
      %p194 = scmp.lt.s32.totalorder %s20, 0
      %s195 = scalar_select %p194, %s20, 0
      %s196 = sadd.s32 %s195, %s193
      %s197 = smul.addr %s196, 4
      %s198 = scalar_lea.vmem %s0, %s197
      %s199 = smul.u32 512, %s18
      %s200 = smul.u32 4, %s20
      %p201 = scmp.lt.s32.totalorder %s200, 3
      %s202 = scalar_select %p201, %s200, 3
      %p203 = scmp.lt.s32.totalorder %s19, 0
      %s204 = scalar_select %p203, %s19, 0
      %s205 = sadd.s32 %s204, %s202
      %s206 = smul.addr %s205, 4
      %s207 = scalar_lea.vmem %s1, %s206
      %s208 = smul.u32 4, %s20
      %s209 = smul.u32 512, %s18
      %p210 = scmp.lt.s32.totalorder %s209, 4095
      %s211 = scalar_select %p210, %s209, 4095
      %p212 = scmp.lt.s32.totalorder %s19, 0
      %s213 = scalar_select %p212, %s19, 0
      %s214 = sadd.s32 %s213, %s211
      %s215 = smul.addr %s214, 8
      %s216 = scalar_lea.vmem %s2, %s215
      %s217 = smul.u32 512, %s18
      %p219 = scmp.eq.s32.totalorder %s20, 0
      // Predicated region
      $region29: #{_matmul_impl.1} parent=27 // pred_check
        %p220 = pneg %p219
      $region30: #{_matmul_impl.1} parent=27 // pred_check_branch
        %222 = sbr.rel (%p220) target = $region32
      $region31: #{_matmul_impl.1} parent=27 // pred_region
        %vm223 = vcmask 64512
        %224 = vst.msk [vmem:[#allocation2] sm:$0xff] %vm223, 0.0
        %225 = vst.msk [vmem:[#allocation2 + $0x8] sm:$0xff] %vm223, 0.0
        %226 = vst.msk [vmem:[#allocation2 + $0x10] sm:$0xff] %vm223, 0.0
        %227 = vst.msk [vmem:[#allocation2 + $0x18] sm:$0xff] %vm223, 0.0
        %228 = vst.msk [vmem:[#allocation2 + $0x20] sm:$0xff] %vm223, 0.0
        %229 = vst.msk [vmem:[#allocation2 + $0x28] sm:$0xff] %vm223, 0.0
        %230 = vst.msk [vmem:[#allocation2 + $0x30] sm:$0xff] %vm223, 0.0
        %231 = vst.msk [vmem:[#allocation2 + $0x38] sm:$0xff] %vm223, 0.0
        %232 = vst.msk [vmem:[#allocation2 + $0x40] sm:$0xff] %vm223, 0.0
        %233 = vst.msk [vmem:[#allocation2 + $0x48] sm:$0xff] %vm223, 0.0
        %234 = vst.msk [vmem:[#allocation2 + $0x50] sm:$0xff] %vm223, 0.0
        %235 = vst.msk [vmem:[#allocation2 + $0x58] sm:$0xff] %vm223, 0.0
        %236 = vst.msk [vmem:[#allocation2 + $0x60] sm:$0xff] %vm223, 0.0
        %237 = vst.msk [vmem:[#allocation2 + $0x68] sm:$0xff] %vm223, 0.0
        %238 = vst.msk [vmem:[#allocation2 + $0x70] sm:$0xff] %vm223, 0.0
        %239 = vst.msk [vmem:[#allocation2 + $0x78] sm:$0xff] %vm223, 0.0
        %240 = vst.msk [vmem:[#allocation2 + $0x80] sm:$0xff] %vm223, 0.0
        %241 = vst.msk [vmem:[#allocation2 + $0x88] sm:$0xff] %vm223, 0.0
        %242 = vst.msk [vmem:[#allocation2 + $0x90] sm:$0xff] %vm223, 0.0
        %243 = vst.msk [vmem:[#allocation2 + $0x98] sm:$0xff] %vm223, 0.0
        %244 = vst.msk [vmem:[#allocation2 + $0xa0] sm:$0xff] %vm223, 0.0
        %245 = vst.msk [vmem:[#allocation2 + $0xa8] sm:$0xff] %vm223, 0.0
        %246 = vst.msk [vmem:[#allocation2 + $0xb0] sm:$0xff] %vm223, 0.0
        %247 = vst.msk [vmem:[#allocation2 + $0xb8] sm:$0xff] %vm223, 0.0
        %248 = vst.msk [vmem:[#allocation2 + $0xc0] sm:$0xff] %vm223, 0.0
        %249 = vst.msk [vmem:[#allocation2 + $0xc8] sm:$0xff] %vm223, 0.0
        %250 = vst.msk [vmem:[#allocation2 + $0xd0] sm:$0xff] %vm223, 0.0
        %251 = vst.msk [vmem:[#allocation2 + $0xd8] sm:$0xff] %vm223, 0.0
        %252 = vst.msk [vmem:[#allocation2 + $0xe0] sm:$0xff] %vm223, 0.0
        %253 = vst.msk [vmem:[#allocation2 + $0xe8] sm:$0xff] %vm223, 0.0
        %254 = vst.msk [vmem:[#allocation2 + $0xf0] sm:$0xff] %vm223, 0.0
        %255 = vst.msk [vmem:[#allocation2 + $0xf8] sm:$0xff] %vm223, 0.0
        %256 = vst.msk [vmem:[#allocation2 + $0x100] sm:$0xff] %vm223, 0.0
        %257 = vst.msk [vmem:[#allocation2 + $0x108] sm:$0xff] %vm223, 0.0
        %258 = vst.msk [vmem:[#allocation2 + $0x110] sm:$0xff] %vm223, 0.0
        %259 = vst.msk [vmem:[#allocation2 + $0x118] sm:$0xff] %vm223, 0.0
        %260 = vst.msk [vmem:[#allocation2 + $0x120] sm:$0xff] %vm223, 0.0
        %261 = vst.msk [vmem:[#allocation2 + $0x128] sm:$0xff] %vm223, 0.0
        %262 = vst.msk [vmem:[#allocation2 + $0x130] sm:$0xff] %vm223, 0.0
        %263 = vst.msk [vmem:[#allocation2 + $0x138] sm:$0xff] %vm223, 0.0
        %264 = vst.msk [vmem:[#allocation2 + $0x140] sm:$0xff] %vm223, 0.0
        %265 = vst.msk [vmem:[#allocation2 + $0x148] sm:$0xff] %vm223, 0.0
        %266 = vst.msk [vmem:[#allocation2 + $0x150] sm:$0xff] %vm223, 0.0
        %267 = vst.msk [vmem:[#allocation2 + $0x158] sm:$0xff] %vm223, 0.0
        %268 = vst.msk [vmem:[#allocation2 + $0x160] sm:$0xff] %vm223, 0.0
        %269 = vst.msk [vmem:[#allocation2 + $0x168] sm:$0xff] %vm223, 0.0
        %270 = vst.msk [vmem:[#allocation2 + $0x170] sm:$0xff] %vm223, 0.0
        %271 = vst.msk [vmem:[#allocation2 + $0x178] sm:$0xff] %vm223, 0.0
        %272 = vst.msk [vmem:[#allocation2 + $0x180] sm:$0xff] %vm223, 0.0
        %273 = vst.msk [vmem:[#allocation2 + $0x188] sm:$0xff] %vm223, 0.0
        %274 = vst.msk [vmem:[#allocation2 + $0x190] sm:$0xff] %vm223, 0.0
        %275 = vst.msk [vmem:[#allocation2 + $0x198] sm:$0xff] %vm223, 0.0
        %276 = vst.msk [vmem:[#allocation2 + $0x1a0] sm:$0xff] %vm223, 0.0
        %277 = vst.msk [vmem:[#allocation2 + $0x1a8] sm:$0xff] %vm223, 0.0
        %278 = vst.msk [vmem:[#allocation2 + $0x1b0] sm:$0xff] %vm223, 0.0
        %279 = vst.msk [vmem:[#allocation2 + $0x1b8] sm:$0xff] %vm223, 0.0
        %280 = vst.msk [vmem:[#allocation2 + $0x1c0] sm:$0xff] %vm223, 0.0
        %281 = vst.msk [vmem:[#allocation2 + $0x1c8] sm:$0xff] %vm223, 0.0
        %282 = vst.msk [vmem:[#allocation2 + $0x1d0] sm:$0xff] %vm223, 0.0
        %283 = vst.msk [vmem:[#allocation2 + $0x1d8] sm:$0xff] %vm223, 0.0
        %284 = vst.msk [vmem:[#allocation2 + $0x1e0] sm:$0xff] %vm223, 0.0
        %285 = vst.msk [vmem:[#allocation2 + $0x1e8] sm:$0xff] %vm223, 0.0
        %286 = vst.msk [vmem:[#allocation2 + $0x1f0] sm:$0xff] %vm223, 0.0
        %287 = vst.msk [vmem:[#allocation2 + $0x1f8] sm:$0xff] %vm223, 0.0
        %288 = vst.msk [vmem:[#allocation2 + $0x200] sm:$0xff] %vm223, 0.0
        %289 = vst.msk [vmem:[#allocation2 + $0x208] sm:$0xff] %vm223, 0.0
        %290 = vst.msk [vmem:[#allocation2 + $0x210] sm:$0xff] %vm223, 0.0
        %291 = vst.msk [vmem:[#allocation2 + $0x218] sm:$0xff] %vm223, 0.0
        %292 = vst.msk [vmem:[#allocation2 + $0x220] sm:$0xff] %vm223, 0.0
        %293 = vst.msk [vmem:[#allocation2 + $0x228] sm:$0xff] %vm223, 0.0
        %294 = vst.msk [vmem:[#allocation2 + $0x230] sm:$0xff] %vm223, 0.0
        %295 = vst.msk [vmem:[#allocation2 + $0x238] sm:$0xff] %vm223, 0.0
        %296 = vst.msk [vmem:[#allocation2 + $0x240] sm:$0xff] %vm223, 0.0
        %297 = vst.msk [vmem:[#allocation2 + $0x248] sm:$0xff] %vm223, 0.0
        %298 = vst.msk [vmem:[#allocation2 + $0x250] sm:$0xff] %vm223, 0.0
        %299 = vst.msk [vmem:[#allocation2 + $0x258] sm:$0xff] %vm223, 0.0
        %300 = vst.msk [vmem:[#allocation2 + $0x260] sm:$0xff] %vm223, 0.0
        %301 = vst.msk [vmem:[#allocation2 + $0x268] sm:$0xff] %vm223, 0.0
        %302 = vst.msk [vmem:[#allocation2 + $0x270] sm:$0xff] %vm223, 0.0
        %303 = vst.msk [vmem:[#allocation2 + $0x278] sm:$0xff] %vm223, 0.0
        %304 = vst.msk [vmem:[#allocation2 + $0x280] sm:$0xff] %vm223, 0.0
        %305 = vst.msk [vmem:[#allocation2 + $0x288] sm:$0xff] %vm223, 0.0
        %306 = vst.msk [vmem:[#allocation2 + $0x290] sm:$0xff] %vm223, 0.0
        %307 = vst.msk [vmem:[#allocation2 + $0x298] sm:$0xff] %vm223, 0.0
        %308 = vst.msk [vmem:[#allocation2 + $0x2a0] sm:$0xff] %vm223, 0.0
        %309 = vst.msk [vmem:[#allocation2 + $0x2a8] sm:$0xff] %vm223, 0.0
        %310 = vst.msk [vmem:[#allocation2 + $0x2b0] sm:$0xff] %vm223, 0.0
        %311 = vst.msk [vmem:[#allocation2 + $0x2b8] sm:$0xff] %vm223, 0.0
        %312 = vst.msk [vmem:[#allocation2 + $0x2c0] sm:$0xff] %vm223, 0.0
        %313 = vst.msk [vmem:[#allocation2 + $0x2c8] sm:$0xff] %vm223, 0.0
        %314 = vst.msk [vmem:[#allocation2 + $0x2d0] sm:$0xff] %vm223, 0.0
        %315 = vst.msk [vmem:[#allocation2 + $0x2d8] sm:$0xff] %vm223, 0.0
        %316 = vst.msk [vmem:[#allocation2 + $0x2e0] sm:$0xff] %vm223, 0.0
        %317 = vst.msk [vmem:[#allocation2 + $0x2e8] sm:$0xff] %vm223, 0.0
        %318 = vst.msk [vmem:[#allocation2 + $0x2f0] sm:$0xff] %vm223, 0.0
        %319 = vst.msk [vmem:[#allocation2 + $0x2f8] sm:$0xff] %vm223, 0.0
        %320 = vst.msk [vmem:[#allocation2 + $0x300] sm:$0xff] %vm223, 0.0
        %321 = vst.msk [vmem:[#allocation2 + $0x308] sm:$0xff] %vm223, 0.0
        %322 = vst.msk [vmem:[#allocation2 + $0x310] sm:$0xff] %vm223, 0.0
        %323 = vst.msk [vmem:[#allocation2 + $0x318] sm:$0xff] %vm223, 0.0
        %324 = vst.msk [vmem:[#allocation2 + $0x320] sm:$0xff] %vm223, 0.0
        %325 = vst.msk [vmem:[#allocation2 + $0x328] sm:$0xff] %vm223, 0.0
        %326 = vst.msk [vmem:[#allocation2 + $0x330] sm:$0xff] %vm223, 0.0
        %327 = vst.msk [vmem:[#allocation2 + $0x338] sm:$0xff] %vm223, 0.0
        %328 = vst.msk [vmem:[#allocation2 + $0x340] sm:$0xff] %vm223, 0.0
        %329 = vst.msk [vmem:[#allocation2 + $0x348] sm:$0xff] %vm223, 0.0
        %330 = vst.msk [vmem:[#allocation2 + $0x350] sm:$0xff] %vm223, 0.0
        %331 = vst.msk [vmem:[#allocation2 + $0x358] sm:$0xff] %vm223, 0.0
        %332 = vst.msk [vmem:[#allocation2 + $0x360] sm:$0xff] %vm223, 0.0
        %333 = vst.msk [vmem:[#allocation2 + $0x368] sm:$0xff] %vm223, 0.0
        %334 = vst.msk [vmem:[#allocation2 + $0x370] sm:$0xff] %vm223, 0.0
        %335 = vst.msk [vmem:[#allocation2 + $0x378] sm:$0xff] %vm223, 0.0
        %336 = vst.msk [vmem:[#allocation2 + $0x380] sm:$0xff] %vm223, 0.0
        %337 = vst.msk [vmem:[#allocation2 + $0x388] sm:$0xff] %vm223, 0.0
        %338 = vst.msk [vmem:[#allocation2 + $0x390] sm:$0xff] %vm223, 0.0
        %339 = vst.msk [vmem:[#allocation2 + $0x398] sm:$0xff] %vm223, 0.0
        %340 = vst.msk [vmem:[#allocation2 + $0x3a0] sm:$0xff] %vm223, 0.0
        %341 = vst.msk [vmem:[#allocation2 + $0x3a8] sm:$0xff] %vm223, 0.0
        %342 = vst.msk [vmem:[#allocation2 + $0x3b0] sm:$0xff] %vm223, 0.0
        %343 = vst.msk [vmem:[#allocation2 + $0x3b8] sm:$0xff] %vm223, 0.0
        %344 = vst.msk [vmem:[#allocation2 + $0x3c0] sm:$0xff] %vm223, 0.0
        %345 = vst.msk [vmem:[#allocation2 + $0x3c8] sm:$0xff] %vm223, 0.0
        %346 = vst.msk [vmem:[#allocation2 + $0x3d0] sm:$0xff] %vm223, 0.0
        %347 = vst.msk [vmem:[#allocation2 + $0x3d8] sm:$0xff] %vm223, 0.0
        %348 = vst.msk [vmem:[#allocation2 + $0x3e0] sm:$0xff] %vm223, 0.0
        %349 = vst.msk [vmem:[#allocation2 + $0x3e8] sm:$0xff] %vm223, 0.0
        %350 = vst.msk [vmem:[#allocation2 + $0x3f0] sm:$0xff] %vm223, 0.0
        %351 = vst.msk [vmem:[#allocation2 + $0x3f8] sm:$0xff] %vm223, 0.0
        %352 = vst.msk [vmem:[#allocation2 + $0x400] sm:$0xff] %vm223, 0.0
        %353 = vst.msk [vmem:[#allocation2 + $0x408] sm:$0xff] %vm223, 0.0
        %354 = vst.msk [vmem:[#allocation2 + $0x410] sm:$0xff] %vm223, 0.0
        %355 = vst.msk [vmem:[#allocation2 + $0x418] sm:$0xff] %vm223, 0.0
        %356 = vst.msk [vmem:[#allocation2 + $0x420] sm:$0xff] %vm223, 0.0
        %357 = vst.msk [vmem:[#allocation2 + $0x428] sm:$0xff] %vm223, 0.0
        %358 = vst.msk [vmem:[#allocation2 + $0x430] sm:$0xff] %vm223, 0.0
        %359 = vst.msk [vmem:[#allocation2 + $0x438] sm:$0xff] %vm223, 0.0
        %360 = vst.msk [vmem:[#allocation2 + $0x440] sm:$0xff] %vm223, 0.0
        %361 = vst.msk [vmem:[#allocation2 + $0x448] sm:$0xff] %vm223, 0.0
        %362 = vst.msk [vmem:[#allocation2 + $0x450] sm:$0xff] %vm223, 0.0
        %363 = vst.msk [vmem:[#allocation2 + $0x458] sm:$0xff] %vm223, 0.0
        %364 = vst.msk [vmem:[#allocation2 + $0x460] sm:$0xff] %vm223, 0.0
        %365 = vst.msk [vmem:[#allocation2 + $0x468] sm:$0xff] %vm223, 0.0
        %366 = vst.msk [vmem:[#allocation2 + $0x470] sm:$0xff] %vm223, 0.0
        %367 = vst.msk [vmem:[#allocation2 + $0x478] sm:$0xff] %vm223, 0.0
        %368 = vst.msk [vmem:[#allocation2 + $0x480] sm:$0xff] %vm223, 0.0
        %369 = vst.msk [vmem:[#allocation2 + $0x488] sm:$0xff] %vm223, 0.0
        %370 = vst.msk [vmem:[#allocation2 + $0x490] sm:$0xff] %vm223, 0.0
        %371 = vst.msk [vmem:[#allocation2 + $0x498] sm:$0xff] %vm223, 0.0
        %372 = vst.msk [vmem:[#allocation2 + $0x4a0] sm:$0xff] %vm223, 0.0
        %373 = vst.msk [vmem:[#allocation2 + $0x4a8] sm:$0xff] %vm223, 0.0
        %374 = vst.msk [vmem:[#allocation2 + $0x4b0] sm:$0xff] %vm223, 0.0
        %375 = vst.msk [vmem:[#allocation2 + $0x4b8] sm:$0xff] %vm223, 0.0
        %376 = vst.msk [vmem:[#allocation2 + $0x4c0] sm:$0xff] %vm223, 0.0
        %377 = vst.msk [vmem:[#allocation2 + $0x4c8] sm:$0xff] %vm223, 0.0
        %378 = vst.msk [vmem:[#allocation2 + $0x4d0] sm:$0xff] %vm223, 0.0
        %379 = vst.msk [vmem:[#allocation2 + $0x4d8] sm:$0xff] %vm223, 0.0
        %380 = vst.msk [vmem:[#allocation2 + $0x4e0] sm:$0xff] %vm223, 0.0
        %381 = vst.msk [vmem:[#allocation2 + $0x4e8] sm:$0xff] %vm223, 0.0
        %382 = vst.msk [vmem:[#allocation2 + $0x4f0] sm:$0xff] %vm223, 0.0
        %383 = vst.msk [vmem:[#allocation2 + $0x4f8] sm:$0xff] %vm223, 0.0
        %384 = vst.msk [vmem:[#allocation2 + $0x500] sm:$0xff] %vm223, 0.0
        %385 = vst.msk [vmem:[#allocation2 + $0x508] sm:$0xff] %vm223, 0.0
        %386 = vst.msk [vmem:[#allocation2 + $0x510] sm:$0xff] %vm223, 0.0
        %387 = vst.msk [vmem:[#allocation2 + $0x518] sm:$0xff] %vm223, 0.0
        %388 = vst.msk [vmem:[#allocation2 + $0x520] sm:$0xff] %vm223, 0.0
        %389 = vst.msk [vmem:[#allocation2 + $0x528] sm:$0xff] %vm223, 0.0
        %390 = vst.msk [vmem:[#allocation2 + $0x530] sm:$0xff] %vm223, 0.0
        %391 = vst.msk [vmem:[#allocation2 + $0x538] sm:$0xff] %vm223, 0.0
        %392 = vst.msk [vmem:[#allocation2 + $0x540] sm:$0xff] %vm223, 0.0
        %393 = vst.msk [vmem:[#allocation2 + $0x548] sm:$0xff] %vm223, 0.0
        %394 = vst.msk [vmem:[#allocation2 + $0x550] sm:$0xff] %vm223, 0.0
        %395 = vst.msk [vmem:[#allocation2 + $0x558] sm:$0xff] %vm223, 0.0
        %396 = vst.msk [vmem:[#allocation2 + $0x560] sm:$0xff] %vm223, 0.0
        %397 = vst.msk [vmem:[#allocation2 + $0x568] sm:$0xff] %vm223, 0.0
        %398 = vst.msk [vmem:[#allocation2 + $0x570] sm:$0xff] %vm223, 0.0
        %399 = vst.msk [vmem:[#allocation2 + $0x578] sm:$0xff] %vm223, 0.0
        %400 = vst.msk [vmem:[#allocation2 + $0x580] sm:$0xff] %vm223, 0.0
        %401 = vst.msk [vmem:[#allocation2 + $0x588] sm:$0xff] %vm223, 0.0
        %402 = vst.msk [vmem:[#allocation2 + $0x590] sm:$0xff] %vm223, 0.0
        %403 = vst.msk [vmem:[#allocation2 + $0x598] sm:$0xff] %vm223, 0.0
        %404 = vst.msk [vmem:[#allocation2 + $0x5a0] sm:$0xff] %vm223, 0.0
        %405 = vst.msk [vmem:[#allocation2 + $0x5a8] sm:$0xff] %vm223, 0.0
        %406 = vst.msk [vmem:[#allocation2 + $0x5b0] sm:$0xff] %vm223, 0.0
        %407 = vst.msk [vmem:[#allocation2 + $0x5b8] sm:$0xff] %vm223, 0.0
        %408 = vst.msk [vmem:[#allocation2 + $0x5c0] sm:$0xff] %vm223, 0.0
        %409 = vst.msk [vmem:[#allocation2 + $0x5c8] sm:$0xff] %vm223, 0.0
        %410 = vst.msk [vmem:[#allocation2 + $0x5d0] sm:$0xff] %vm223, 0.0
        %411 = vst.msk [vmem:[#allocation2 + $0x5d8] sm:$0xff] %vm223, 0.0
        %412 = vst.msk [vmem:[#allocation2 + $0x5e0] sm:$0xff] %vm223, 0.0
        %413 = vst.msk [vmem:[#allocation2 + $0x5e8] sm:$0xff] %vm223, 0.0
        %414 = vst.msk [vmem:[#allocation2 + $0x5f0] sm:$0xff] %vm223, 0.0
        %415 = vst.msk [vmem:[#allocation2 + $0x5f8] sm:$0xff] %vm223, 0.0
        %416 = vst.msk [vmem:[#allocation2 + $0x600] sm:$0xff] %vm223, 0.0
        %417 = vst.msk [vmem:[#allocation2 + $0x608] sm:$0xff] %vm223, 0.0
        %418 = vst.msk [vmem:[#allocation2 + $0x610] sm:$0xff] %vm223, 0.0
        %419 = vst.msk [vmem:[#allocation2 + $0x618] sm:$0xff] %vm223, 0.0
        %420 = vst.msk [vmem:[#allocation2 + $0x620] sm:$0xff] %vm223, 0.0
        %421 = vst.msk [vmem:[#allocation2 + $0x628] sm:$0xff] %vm223, 0.0
        %422 = vst.msk [vmem:[#allocation2 + $0x630] sm:$0xff] %vm223, 0.0
        %423 = vst.msk [vmem:[#allocation2 + $0x638] sm:$0xff] %vm223, 0.0
        %424 = vst.msk [vmem:[#allocation2 + $0x640] sm:$0xff] %vm223, 0.0
        %425 = vst.msk [vmem:[#allocation2 + $0x648] sm:$0xff] %vm223, 0.0
        %426 = vst.msk [vmem:[#allocation2 + $0x650] sm:$0xff] %vm223, 0.0
        %427 = vst.msk [vmem:[#allocation2 + $0x658] sm:$0xff] %vm223, 0.0
        %428 = vst.msk [vmem:[#allocation2 + $0x660] sm:$0xff] %vm223, 0.0
        %429 = vst.msk [vmem:[#allocation2 + $0x668] sm:$0xff] %vm223, 0.0
        %430 = vst.msk [vmem:[#allocation2 + $0x670] sm:$0xff] %vm223, 0.0
        %431 = vst.msk [vmem:[#allocation2 + $0x678] sm:$0xff] %vm223, 0.0
        %432 = vst.msk [vmem:[#allocation2 + $0x680] sm:$0xff] %vm223, 0.0
        %433 = vst.msk [vmem:[#allocation2 + $0x688] sm:$0xff] %vm223, 0.0
        %434 = vst.msk [vmem:[#allocation2 + $0x690] sm:$0xff] %vm223, 0.0
        %435 = vst.msk [vmem:[#allocation2 + $0x698] sm:$0xff] %vm223, 0.0
        %436 = vst.msk [vmem:[#allocation2 + $0x6a0] sm:$0xff] %vm223, 0.0
        %437 = vst.msk [vmem:[#allocation2 + $0x6a8] sm:$0xff] %vm223, 0.0
        %438 = vst.msk [vmem:[#allocation2 + $0x6b0] sm:$0xff] %vm223, 0.0
        %439 = vst.msk [vmem:[#allocation2 + $0x6b8] sm:$0xff] %vm223, 0.0
        %440 = vst.msk [vmem:[#allocation2 + $0x6c0] sm:$0xff] %vm223, 0.0
        %441 = vst.msk [vmem:[#allocation2 + $0x6c8] sm:$0xff] %vm223, 0.0
        %442 = vst.msk [vmem:[#allocation2 + $0x6d0] sm:$0xff] %vm223, 0.0
        %443 = vst.msk [vmem:[#allocation2 + $0x6d8] sm:$0xff] %vm223, 0.0
        %444 = vst.msk [vmem:[#allocation2 + $0x6e0] sm:$0xff] %vm223, 0.0
        %445 = vst.msk [vmem:[#allocation2 + $0x6e8] sm:$0xff] %vm223, 0.0
        %446 = vst.msk [vmem:[#allocation2 + $0x6f0] sm:$0xff] %vm223, 0.0
        %447 = vst.msk [vmem:[#allocation2 + $0x6f8] sm:$0xff] %vm223, 0.0
        %448 = vst.msk [vmem:[#allocation2 + $0x700] sm:$0xff] %vm223, 0.0
        %449 = vst.msk [vmem:[#allocation2 + $0x708] sm:$0xff] %vm223, 0.0
        %450 = vst.msk [vmem:[#allocation2 + $0x710] sm:$0xff] %vm223, 0.0
        %451 = vst.msk [vmem:[#allocation2 + $0x718] sm:$0xff] %vm223, 0.0
        %452 = vst.msk [vmem:[#allocation2 + $0x720] sm:$0xff] %vm223, 0.0
        %453 = vst.msk [vmem:[#allocation2 + $0x728] sm:$0xff] %vm223, 0.0
        %454 = vst.msk [vmem:[#allocation2 + $0x730] sm:$0xff] %vm223, 0.0
        %455 = vst.msk [vmem:[#allocation2 + $0x738] sm:$0xff] %vm223, 0.0
        %456 = vst.msk [vmem:[#allocation2 + $0x740] sm:$0xff] %vm223, 0.0
        %457 = vst.msk [vmem:[#allocation2 + $0x748] sm:$0xff] %vm223, 0.0
        %458 = vst.msk [vmem:[#allocation2 + $0x750] sm:$0xff] %vm223, 0.0
        %459 = vst.msk [vmem:[#allocation2 + $0x758] sm:$0xff] %vm223, 0.0
        %460 = vst.msk [vmem:[#allocation2 + $0x760] sm:$0xff] %vm223, 0.0
        %461 = vst.msk [vmem:[#allocation2 + $0x768] sm:$0xff] %vm223, 0.0
        %462 = vst.msk [vmem:[#allocation2 + $0x770] sm:$0xff] %vm223, 0.0
        %463 = vst.msk [vmem:[#allocation2 + $0x778] sm:$0xff] %vm223, 0.0
        %464 = vst.msk [vmem:[#allocation2 + $0x780] sm:$0xff] %vm223, 0.0
        %465 = vst.msk [vmem:[#allocation2 + $0x788] sm:$0xff] %vm223, 0.0
        %466 = vst.msk [vmem:[#allocation2 + $0x790] sm:$0xff] %vm223, 0.0
        %467 = vst.msk [vmem:[#allocation2 + $0x798] sm:$0xff] %vm223, 0.0
        %468 = vst.msk [vmem:[#allocation2 + $0x7a0] sm:$0xff] %vm223, 0.0
        %469 = vst.msk [vmem:[#allocation2 + $0x7a8] sm:$0xff] %vm223, 0.0
        %470 = vst.msk [vmem:[#allocation2 + $0x7b0] sm:$0xff] %vm223, 0.0
        %471 = vst.msk [vmem:[#allocation2 + $0x7b8] sm:$0xff] %vm223, 0.0
        %472 = vst.msk [vmem:[#allocation2 + $0x7c0] sm:$0xff] %vm223, 0.0
        %473 = vst.msk [vmem:[#allocation2 + $0x7c8] sm:$0xff] %vm223, 0.0
        %474 = vst.msk [vmem:[#allocation2 + $0x7d0] sm:$0xff] %vm223, 0.0
        %475 = vst.msk [vmem:[#allocation2 + $0x7d8] sm:$0xff] %vm223, 0.0
        %476 = vst.msk [vmem:[#allocation2 + $0x7e0] sm:$0xff] %vm223, 0.0
        %477 = vst.msk [vmem:[#allocation2 + $0x7e8] sm:$0xff] %vm223, 0.0
        %478 = vst.msk [vmem:[#allocation2 + $0x7f0] sm:$0xff] %vm223, 0.0
        %479 = vst.msk [vmem:[#allocation2 + $0x7f8] sm:$0xff] %vm223, 0.0
        %480 = vst.msk [vmem:[#allocation2 + $0x800] sm:$0xff] %vm223, 0.0
        %481 = vst.msk [vmem:[#allocation2 + $0x808] sm:$0xff] %vm223, 0.0
        %482 = vst.msk [vmem:[#allocation2 + $0x810] sm:$0xff] %vm223, 0.0
        %483 = vst.msk [vmem:[#allocation2 + $0x818] sm:$0xff] %vm223, 0.0
        %484 = vst.msk [vmem:[#allocation2 + $0x820] sm:$0xff] %vm223, 0.0
        %485 = vst.msk [vmem:[#allocation2 + $0x828] sm:$0xff] %vm223, 0.0
        %486 = vst.msk [vmem:[#allocation2 + $0x830] sm:$0xff] %vm223, 0.0
        %487 = vst.msk [vmem:[#allocation2 + $0x838] sm:$0xff] %vm223, 0.0
        %488 = vst.msk [vmem:[#allocation2 + $0x840] sm:$0xff] %vm223, 0.0
        %489 = vst.msk [vmem:[#allocation2 + $0x848] sm:$0xff] %vm223, 0.0
        %490 = vst.msk [vmem:[#allocation2 + $0x850] sm:$0xff] %vm223, 0.0
        %491 = vst.msk [vmem:[#allocation2 + $0x858] sm:$0xff] %vm223, 0.0
        %492 = vst.msk [vmem:[#allocation2 + $0x860] sm:$0xff] %vm223, 0.0
        %493 = vst.msk [vmem:[#allocation2 + $0x868] sm:$0xff] %vm223, 0.0
        %494 = vst.msk [vmem:[#allocation2 + $0x870] sm:$0xff] %vm223, 0.0
        %495 = vst.msk [vmem:[#allocation2 + $0x878] sm:$0xff] %vm223, 0.0
        %496 = vst.msk [vmem:[#allocation2 + $0x880] sm:$0xff] %vm223, 0.0
        %497 = vst.msk [vmem:[#allocation2 + $0x888] sm:$0xff] %vm223, 0.0
        %498 = vst.msk [vmem:[#allocation2 + $0x890] sm:$0xff] %vm223, 0.0
        %499 = vst.msk [vmem:[#allocation2 + $0x898] sm:$0xff] %vm223, 0.0
        %500 = vst.msk [vmem:[#allocation2 + $0x8a0] sm:$0xff] %vm223, 0.0
        %501 = vst.msk [vmem:[#allocation2 + $0x8a8] sm:$0xff] %vm223, 0.0
        %502 = vst.msk [vmem:[#allocation2 + $0x8b0] sm:$0xff] %vm223, 0.0
        %503 = vst.msk [vmem:[#allocation2 + $0x8b8] sm:$0xff] %vm223, 0.0
        %504 = vst.msk [vmem:[#allocation2 + $0x8c0] sm:$0xff] %vm223, 0.0
        %505 = vst.msk [vmem:[#allocation2 + $0x8c8] sm:$0xff] %vm223, 0.0
        %506 = vst.msk [vmem:[#allocation2 + $0x8d0] sm:$0xff] %vm223, 0.0
        %507 = vst.msk [vmem:[#allocation2 + $0x8d8] sm:$0xff] %vm223, 0.0
        %508 = vst.msk [vmem:[#allocation2 + $0x8e0] sm:$0xff] %vm223, 0.0
        %509 = vst.msk [vmem:[#allocation2 + $0x8e8] sm:$0xff] %vm223, 0.0
        %510 = vst.msk [vmem:[#allocation2 + $0x8f0] sm:$0xff] %vm223, 0.0
        %511 = vst.msk [vmem:[#allocation2 + $0x8f8] sm:$0xff] %vm223, 0.0
        %512 = vst.msk [vmem:[#allocation2 + $0x900] sm:$0xff] %vm223, 0.0
        %513 = vst.msk [vmem:[#allocation2 + $0x908] sm:$0xff] %vm223, 0.0
        %514 = vst.msk [vmem:[#allocation2 + $0x910] sm:$0xff] %vm223, 0.0
        %515 = vst.msk [vmem:[#allocation2 + $0x918] sm:$0xff] %vm223, 0.0
        %516 = vst.msk [vmem:[#allocation2 + $0x920] sm:$0xff] %vm223, 0.0
        %517 = vst.msk [vmem:[#allocation2 + $0x928] sm:$0xff] %vm223, 0.0
        %518 = vst.msk [vmem:[#allocation2 + $0x930] sm:$0xff] %vm223, 0.0
        %519 = vst.msk [vmem:[#allocation2 + $0x938] sm:$0xff] %vm223, 0.0
        %520 = vst.msk [vmem:[#allocation2 + $0x940] sm:$0xff] %vm223, 0.0
        %521 = vst.msk [vmem:[#allocation2 + $0x948] sm:$0xff] %vm223, 0.0
        %522 = vst.msk [vmem:[#allocation2 + $0x950] sm:$0xff] %vm223, 0.0
        %523 = vst.msk [vmem:[#allocation2 + $0x958] sm:$0xff] %vm223, 0.0
        %524 = vst.msk [vmem:[#allocation2 + $0x960] sm:$0xff] %vm223, 0.0
        %525 = vst.msk [vmem:[#allocation2 + $0x968] sm:$0xff] %vm223, 0.0
        %526 = vst.msk [vmem:[#allocation2 + $0x970] sm:$0xff] %vm223, 0.0
        %527 = vst.msk [vmem:[#allocation2 + $0x978] sm:$0xff] %vm223, 0.0
        %528 = vst.msk [vmem:[#allocation2 + $0x980] sm:$0xff] %vm223, 0.0
        %529 = vst.msk [vmem:[#allocation2 + $0x988] sm:$0xff] %vm223, 0.0
        %530 = vst.msk [vmem:[#allocation2 + $0x990] sm:$0xff] %vm223, 0.0
        %531 = vst.msk [vmem:[#allocation2 + $0x998] sm:$0xff] %vm223, 0.0
        %532 = vst.msk [vmem:[#allocation2 + $0x9a0] sm:$0xff] %vm223, 0.0
        %533 = vst.msk [vmem:[#allocation2 + $0x9a8] sm:$0xff] %vm223, 0.0
        %534 = vst.msk [vmem:[#allocation2 + $0x9b0] sm:$0xff] %vm223, 0.0
        %535 = vst.msk [vmem:[#allocation2 + $0x9b8] sm:$0xff] %vm223, 0.0
        %536 = vst.msk [vmem:[#allocation2 + $0x9c0] sm:$0xff] %vm223, 0.0
        %537 = vst.msk [vmem:[#allocation2 + $0x9c8] sm:$0xff] %vm223, 0.0
        %538 = vst.msk [vmem:[#allocation2 + $0x9d0] sm:$0xff] %vm223, 0.0
        %539 = vst.msk [vmem:[#allocation2 + $0x9d8] sm:$0xff] %vm223, 0.0
        %540 = vst.msk [vmem:[#allocation2 + $0x9e0] sm:$0xff] %vm223, 0.0
        %541 = vst.msk [vmem:[#allocation2 + $0x9e8] sm:$0xff] %vm223, 0.0
        %542 = vst.msk [vmem:[#allocation2 + $0x9f0] sm:$0xff] %vm223, 0.0
        %543 = vst.msk [vmem:[#allocation2 + $0x9f8] sm:$0xff] %vm223, 0.0
        %544 = vst.msk [vmem:[#allocation2 + $0xa00] sm:$0xff] %vm223, 0.0
        %545 = vst.msk [vmem:[#allocation2 + $0xa08] sm:$0xff] %vm223, 0.0
        %546 = vst.msk [vmem:[#allocation2 + $0xa10] sm:$0xff] %vm223, 0.0
        %547 = vst.msk [vmem:[#allocation2 + $0xa18] sm:$0xff] %vm223, 0.0
        %548 = vst.msk [vmem:[#allocation2 + $0xa20] sm:$0xff] %vm223, 0.0
        %549 = vst.msk [vmem:[#allocation2 + $0xa28] sm:$0xff] %vm223, 0.0
        %550 = vst.msk [vmem:[#allocation2 + $0xa30] sm:$0xff] %vm223, 0.0
        %551 = vst.msk [vmem:[#allocation2 + $0xa38] sm:$0xff] %vm223, 0.0
        %552 = vst.msk [vmem:[#allocation2 + $0xa40] sm:$0xff] %vm223, 0.0
        %553 = vst.msk [vmem:[#allocation2 + $0xa48] sm:$0xff] %vm223, 0.0
        %554 = vst.msk [vmem:[#allocation2 + $0xa50] sm:$0xff] %vm223, 0.0
        %555 = vst.msk [vmem:[#allocation2 + $0xa58] sm:$0xff] %vm223, 0.0
        %556 = vst.msk [vmem:[#allocation2 + $0xa60] sm:$0xff] %vm223, 0.0
        %557 = vst.msk [vmem:[#allocation2 + $0xa68] sm:$0xff] %vm223, 0.0
        %558 = vst.msk [vmem:[#allocation2 + $0xa70] sm:$0xff] %vm223, 0.0
        %559 = vst.msk [vmem:[#allocation2 + $0xa78] sm:$0xff] %vm223, 0.0
        %560 = vst.msk [vmem:[#allocation2 + $0xa80] sm:$0xff] %vm223, 0.0
        %561 = vst.msk [vmem:[#allocation2 + $0xa88] sm:$0xff] %vm223, 0.0
        %562 = vst.msk [vmem:[#allocation2 + $0xa90] sm:$0xff] %vm223, 0.0
        %563 = vst.msk [vmem:[#allocation2 + $0xa98] sm:$0xff] %vm223, 0.0
        %564 = vst.msk [vmem:[#allocation2 + $0xaa0] sm:$0xff] %vm223, 0.0
        %565 = vst.msk [vmem:[#allocation2 + $0xaa8] sm:$0xff] %vm223, 0.0
        %566 = vst.msk [vmem:[#allocation2 + $0xab0] sm:$0xff] %vm223, 0.0
        %567 = vst.msk [vmem:[#allocation2 + $0xab8] sm:$0xff] %vm223, 0.0
        %568 = vst.msk [vmem:[#allocation2 + $0xac0] sm:$0xff] %vm223, 0.0
        %569 = vst.msk [vmem:[#allocation2 + $0xac8] sm:$0xff] %vm223, 0.0
        %570 = vst.msk [vmem:[#allocation2 + $0xad0] sm:$0xff] %vm223, 0.0
        %571 = vst.msk [vmem:[#allocation2 + $0xad8] sm:$0xff] %vm223, 0.0
        %572 = vst.msk [vmem:[#allocation2 + $0xae0] sm:$0xff] %vm223, 0.0
        %573 = vst.msk [vmem:[#allocation2 + $0xae8] sm:$0xff] %vm223, 0.0
        %574 = vst.msk [vmem:[#allocation2 + $0xaf0] sm:$0xff] %vm223, 0.0
        %575 = vst.msk [vmem:[#allocation2 + $0xaf8] sm:$0xff] %vm223, 0.0
        %576 = vst.msk [vmem:[#allocation2 + $0xb00] sm:$0xff] %vm223, 0.0
        %577 = vst.msk [vmem:[#allocation2 + $0xb08] sm:$0xff] %vm223, 0.0
        %578 = vst.msk [vmem:[#allocation2 + $0xb10] sm:$0xff] %vm223, 0.0
        %579 = vst.msk [vmem:[#allocation2 + $0xb18] sm:$0xff] %vm223, 0.0
        %580 = vst.msk [vmem:[#allocation2 + $0xb20] sm:$0xff] %vm223, 0.0
        %581 = vst.msk [vmem:[#allocation2 + $0xb28] sm:$0xff] %vm223, 0.0
        %582 = vst.msk [vmem:[#allocation2 + $0xb30] sm:$0xff] %vm223, 0.0
        %583 = vst.msk [vmem:[#allocation2 + $0xb38] sm:$0xff] %vm223, 0.0
        %584 = vst.msk [vmem:[#allocation2 + $0xb40] sm:$0xff] %vm223, 0.0
        %585 = vst.msk [vmem:[#allocation2 + $0xb48] sm:$0xff] %vm223, 0.0
        %586 = vst.msk [vmem:[#allocation2 + $0xb50] sm:$0xff] %vm223, 0.0
        %587 = vst.msk [vmem:[#allocation2 + $0xb58] sm:$0xff] %vm223, 0.0
        %588 = vst.msk [vmem:[#allocation2 + $0xb60] sm:$0xff] %vm223, 0.0
        %589 = vst.msk [vmem:[#allocation2 + $0xb68] sm:$0xff] %vm223, 0.0
        %590 = vst.msk [vmem:[#allocation2 + $0xb70] sm:$0xff] %vm223, 0.0
        %591 = vst.msk [vmem:[#allocation2 + $0xb78] sm:$0xff] %vm223, 0.0
        %592 = vst.msk [vmem:[#allocation2 + $0xb80] sm:$0xff] %vm223, 0.0
        %593 = vst.msk [vmem:[#allocation2 + $0xb88] sm:$0xff] %vm223, 0.0
        %594 = vst.msk [vmem:[#allocation2 + $0xb90] sm:$0xff] %vm223, 0.0
        %595 = vst.msk [vmem:[#allocation2 + $0xb98] sm:$0xff] %vm223, 0.0
        %596 = vst.msk [vmem:[#allocation2 + $0xba0] sm:$0xff] %vm223, 0.0
        %597 = vst.msk [vmem:[#allocation2 + $0xba8] sm:$0xff] %vm223, 0.0
        %598 = vst.msk [vmem:[#allocation2 + $0xbb0] sm:$0xff] %vm223, 0.0
        %599 = vst.msk [vmem:[#allocation2 + $0xbb8] sm:$0xff] %vm223, 0.0
        %600 = vst.msk [vmem:[#allocation2 + $0xbc0] sm:$0xff] %vm223, 0.0
        %601 = vst.msk [vmem:[#allocation2 + $0xbc8] sm:$0xff] %vm223, 0.0
        %602 = vst.msk [vmem:[#allocation2 + $0xbd0] sm:$0xff] %vm223, 0.0
        %603 = vst.msk [vmem:[#allocation2 + $0xbd8] sm:$0xff] %vm223, 0.0
        %604 = vst.msk [vmem:[#allocation2 + $0xbe0] sm:$0xff] %vm223, 0.0
        %605 = vst.msk [vmem:[#allocation2 + $0xbe8] sm:$0xff] %vm223, 0.0
        %606 = vst.msk [vmem:[#allocation2 + $0xbf0] sm:$0xff] %vm223, 0.0
        %607 = vst.msk [vmem:[#allocation2 + $0xbf8] sm:$0xff] %vm223, 0.0
        %608 = vst.msk [vmem:[#allocation2 + $0xc00] sm:$0xff] %vm223, 0.0
        %609 = vst.msk [vmem:[#allocation2 + $0xc08] sm:$0xff] %vm223, 0.0
        %610 = vst.msk [vmem:[#allocation2 + $0xc10] sm:$0xff] %vm223, 0.0
        %611 = vst.msk [vmem:[#allocation2 + $0xc18] sm:$0xff] %vm223, 0.0
        %612 = vst.msk [vmem:[#allocation2 + $0xc20] sm:$0xff] %vm223, 0.0
        %613 = vst.msk [vmem:[#allocation2 + $0xc28] sm:$0xff] %vm223, 0.0
        %614 = vst.msk [vmem:[#allocation2 + $0xc30] sm:$0xff] %vm223, 0.0
        %615 = vst.msk [vmem:[#allocation2 + $0xc38] sm:$0xff] %vm223, 0.0
        %616 = vst.msk [vmem:[#allocation2 + $0xc40] sm:$0xff] %vm223, 0.0
        %617 = vst.msk [vmem:[#allocation2 + $0xc48] sm:$0xff] %vm223, 0.0
        %618 = vst.msk [vmem:[#allocation2 + $0xc50] sm:$0xff] %vm223, 0.0
        %619 = vst.msk [vmem:[#allocation2 + $0xc58] sm:$0xff] %vm223, 0.0
        %620 = vst.msk [vmem:[#allocation2 + $0xc60] sm:$0xff] %vm223, 0.0
        %621 = vst.msk [vmem:[#allocation2 + $0xc68] sm:$0xff] %vm223, 0.0
        %622 = vst.msk [vmem:[#allocation2 + $0xc70] sm:$0xff] %vm223, 0.0
        %623 = vst.msk [vmem:[#allocation2 + $0xc78] sm:$0xff] %vm223, 0.0
        %624 = vst.msk [vmem:[#allocation2 + $0xc80] sm:$0xff] %vm223, 0.0
        %625 = vst.msk [vmem:[#allocation2 + $0xc88] sm:$0xff] %vm223, 0.0
        %626 = vst.msk [vmem:[#allocation2 + $0xc90] sm:$0xff] %vm223, 0.0
        %627 = vst.msk [vmem:[#allocation2 + $0xc98] sm:$0xff] %vm223, 0.0
        %628 = vst.msk [vmem:[#allocation2 + $0xca0] sm:$0xff] %vm223, 0.0
        %629 = vst.msk [vmem:[#allocation2 + $0xca8] sm:$0xff] %vm223, 0.0
        %630 = vst.msk [vmem:[#allocation2 + $0xcb0] sm:$0xff] %vm223, 0.0
        %631 = vst.msk [vmem:[#allocation2 + $0xcb8] sm:$0xff] %vm223, 0.0
        %632 = vst.msk [vmem:[#allocation2 + $0xcc0] sm:$0xff] %vm223, 0.0
        %633 = vst.msk [vmem:[#allocation2 + $0xcc8] sm:$0xff] %vm223, 0.0
        %634 = vst.msk [vmem:[#allocation2 + $0xcd0] sm:$0xff] %vm223, 0.0
        %635 = vst.msk [vmem:[#allocation2 + $0xcd8] sm:$0xff] %vm223, 0.0
        %636 = vst.msk [vmem:[#allocation2 + $0xce0] sm:$0xff] %vm223, 0.0
        %637 = vst.msk [vmem:[#allocation2 + $0xce8] sm:$0xff] %vm223, 0.0
        %638 = vst.msk [vmem:[#allocation2 + $0xcf0] sm:$0xff] %vm223, 0.0
        %639 = vst.msk [vmem:[#allocation2 + $0xcf8] sm:$0xff] %vm223, 0.0
        %640 = vst.msk [vmem:[#allocation2 + $0xd00] sm:$0xff] %vm223, 0.0
        %641 = vst.msk [vmem:[#allocation2 + $0xd08] sm:$0xff] %vm223, 0.0
        %642 = vst.msk [vmem:[#allocation2 + $0xd10] sm:$0xff] %vm223, 0.0
        %643 = vst.msk [vmem:[#allocation2 + $0xd18] sm:$0xff] %vm223, 0.0
        %644 = vst.msk [vmem:[#allocation2 + $0xd20] sm:$0xff] %vm223, 0.0
        %645 = vst.msk [vmem:[#allocation2 + $0xd28] sm:$0xff] %vm223, 0.0
        %646 = vst.msk [vmem:[#allocation2 + $0xd30] sm:$0xff] %vm223, 0.0
        %647 = vst.msk [vmem:[#allocation2 + $0xd38] sm:$0xff] %vm223, 0.0
        %648 = vst.msk [vmem:[#allocation2 + $0xd40] sm:$0xff] %vm223, 0.0
        %649 = vst.msk [vmem:[#allocation2 + $0xd48] sm:$0xff] %vm223, 0.0
        %650 = vst.msk [vmem:[#allocation2 + $0xd50] sm:$0xff] %vm223, 0.0
        %651 = vst.msk [vmem:[#allocation2 + $0xd58] sm:$0xff] %vm223, 0.0
        %652 = vst.msk [vmem:[#allocation2 + $0xd60] sm:$0xff] %vm223, 0.0
        %653 = vst.msk [vmem:[#allocation2 + $0xd68] sm:$0xff] %vm223, 0.0
        %654 = vst.msk [vmem:[#allocation2 + $0xd70] sm:$0xff] %vm223, 0.0
        %655 = vst.msk [vmem:[#allocation2 + $0xd78] sm:$0xff] %vm223, 0.0
        %656 = vst.msk [vmem:[#allocation2 + $0xd80] sm:$0xff] %vm223, 0.0
        %657 = vst.msk [vmem:[#allocation2 + $0xd88] sm:$0xff] %vm223, 0.0
        %658 = vst.msk [vmem:[#allocation2 + $0xd90] sm:$0xff] %vm223, 0.0
        %659 = vst.msk [vmem:[#allocation2 + $0xd98] sm:$0xff] %vm223, 0.0
        %660 = vst.msk [vmem:[#allocation2 + $0xda0] sm:$0xff] %vm223, 0.0
        %661 = vst.msk [vmem:[#allocation2 + $0xda8] sm:$0xff] %vm223, 0.0
        %662 = vst.msk [vmem:[#allocation2 + $0xdb0] sm:$0xff] %vm223, 0.0
        %663 = vst.msk [vmem:[#allocation2 + $0xdb8] sm:$0xff] %vm223, 0.0
        %664 = vst.msk [vmem:[#allocation2 + $0xdc0] sm:$0xff] %vm223, 0.0
        %665 = vst.msk [vmem:[#allocation2 + $0xdc8] sm:$0xff] %vm223, 0.0
        %666 = vst.msk [vmem:[#allocation2 + $0xdd0] sm:$0xff] %vm223, 0.0
        %667 = vst.msk [vmem:[#allocation2 + $0xdd8] sm:$0xff] %vm223, 0.0
        %668 = vst.msk [vmem:[#allocation2 + $0xde0] sm:$0xff] %vm223, 0.0
        %669 = vst.msk [vmem:[#allocation2 + $0xde8] sm:$0xff] %vm223, 0.0
        %670 = vst.msk [vmem:[#allocation2 + $0xdf0] sm:$0xff] %vm223, 0.0
        %671 = vst.msk [vmem:[#allocation2 + $0xdf8] sm:$0xff] %vm223, 0.0
        %672 = vst.msk [vmem:[#allocation2 + $0xe00] sm:$0xff] %vm223, 0.0
        %673 = vst.msk [vmem:[#allocation2 + $0xe08] sm:$0xff] %vm223, 0.0
        %674 = vst.msk [vmem:[#allocation2 + $0xe10] sm:$0xff] %vm223, 0.0
        %675 = vst.msk [vmem:[#allocation2 + $0xe18] sm:$0xff] %vm223, 0.0
        %676 = vst.msk [vmem:[#allocation2 + $0xe20] sm:$0xff] %vm223, 0.0
        %677 = vst.msk [vmem:[#allocation2 + $0xe28] sm:$0xff] %vm223, 0.0
        %678 = vst.msk [vmem:[#allocation2 + $0xe30] sm:$0xff] %vm223, 0.0
        %679 = vst.msk [vmem:[#allocation2 + $0xe38] sm:$0xff] %vm223, 0.0
        %680 = vst.msk [vmem:[#allocation2 + $0xe40] sm:$0xff] %vm223, 0.0
        %681 = vst.msk [vmem:[#allocation2 + $0xe48] sm:$0xff] %vm223, 0.0
        %682 = vst.msk [vmem:[#allocation2 + $0xe50] sm:$0xff] %vm223, 0.0
        %683 = vst.msk [vmem:[#allocation2 + $0xe58] sm:$0xff] %vm223, 0.0
        %684 = vst.msk [vmem:[#allocation2 + $0xe60] sm:$0xff] %vm223, 0.0
        %685 = vst.msk [vmem:[#allocation2 + $0xe68] sm:$0xff] %vm223, 0.0
        %686 = vst.msk [vmem:[#allocation2 + $0xe70] sm:$0xff] %vm223, 0.0
        %687 = vst.msk [vmem:[#allocation2 + $0xe78] sm:$0xff] %vm223, 0.0
        %688 = vst.msk [vmem:[#allocation2 + $0xe80] sm:$0xff] %vm223, 0.0
        %689 = vst.msk [vmem:[#allocation2 + $0xe88] sm:$0xff] %vm223, 0.0
        %690 = vst.msk [vmem:[#allocation2 + $0xe90] sm:$0xff] %vm223, 0.0
        %691 = vst.msk [vmem:[#allocation2 + $0xe98] sm:$0xff] %vm223, 0.0
        %692 = vst.msk [vmem:[#allocation2 + $0xea0] sm:$0xff] %vm223, 0.0
        %693 = vst.msk [vmem:[#allocation2 + $0xea8] sm:$0xff] %vm223, 0.0
        %694 = vst.msk [vmem:[#allocation2 + $0xeb0] sm:$0xff] %vm223, 0.0
        %695 = vst.msk [vmem:[#allocation2 + $0xeb8] sm:$0xff] %vm223, 0.0
        %696 = vst.msk [vmem:[#allocation2 + $0xec0] sm:$0xff] %vm223, 0.0
        %697 = vst.msk [vmem:[#allocation2 + $0xec8] sm:$0xff] %vm223, 0.0
        %698 = vst.msk [vmem:[#allocation2 + $0xed0] sm:$0xff] %vm223, 0.0
        %699 = vst.msk [vmem:[#allocation2 + $0xed8] sm:$0xff] %vm223, 0.0
        %700 = vst.msk [vmem:[#allocation2 + $0xee0] sm:$0xff] %vm223, 0.0
        %701 = vst.msk [vmem:[#allocation2 + $0xee8] sm:$0xff] %vm223, 0.0
        %702 = vst.msk [vmem:[#allocation2 + $0xef0] sm:$0xff] %vm223, 0.0
        %703 = vst.msk [vmem:[#allocation2 + $0xef8] sm:$0xff] %vm223, 0.0
        %704 = vst.msk [vmem:[#allocation2 + $0xf00] sm:$0xff] %vm223, 0.0
        %705 = vst.msk [vmem:[#allocation2 + $0xf08] sm:$0xff] %vm223, 0.0
        %706 = vst.msk [vmem:[#allocation2 + $0xf10] sm:$0xff] %vm223, 0.0
        %707 = vst.msk [vmem:[#allocation2 + $0xf18] sm:$0xff] %vm223, 0.0
        %708 = vst.msk [vmem:[#allocation2 + $0xf20] sm:$0xff] %vm223, 0.0
        %709 = vst.msk [vmem:[#allocation2 + $0xf28] sm:$0xff] %vm223, 0.0
        %710 = vst.msk [vmem:[#allocation2 + $0xf30] sm:$0xff] %vm223, 0.0
        %711 = vst.msk [vmem:[#allocation2 + $0xf38] sm:$0xff] %vm223, 0.0
        %712 = vst.msk [vmem:[#allocation2 + $0xf40] sm:$0xff] %vm223, 0.0
        %713 = vst.msk [vmem:[#allocation2 + $0xf48] sm:$0xff] %vm223, 0.0
        %714 = vst.msk [vmem:[#allocation2 + $0xf50] sm:$0xff] %vm223, 0.0
        %715 = vst.msk [vmem:[#allocation2 + $0xf58] sm:$0xff] %vm223, 0.0
        %716 = vst.msk [vmem:[#allocation2 + $0xf60] sm:$0xff] %vm223, 0.0
        %717 = vst.msk [vmem:[#allocation2 + $0xf68] sm:$0xff] %vm223, 0.0
        %718 = vst.msk [vmem:[#allocation2 + $0xf70] sm:$0xff] %vm223, 0.0
        %719 = vst.msk [vmem:[#allocation2 + $0xf78] sm:$0xff] %vm223, 0.0
        %720 = vst.msk [vmem:[#allocation2 + $0xf80] sm:$0xff] %vm223, 0.0
        %721 = vst.msk [vmem:[#allocation2 + $0xf88] sm:$0xff] %vm223, 0.0
        %722 = vst.msk [vmem:[#allocation2 + $0xf90] sm:$0xff] %vm223, 0.0
        %723 = vst.msk [vmem:[#allocation2 + $0xf98] sm:$0xff] %vm223, 0.0
        %724 = vst.msk [vmem:[#allocation2 + $0xfa0] sm:$0xff] %vm223, 0.0
        %725 = vst.msk [vmem:[#allocation2 + $0xfa8] sm:$0xff] %vm223, 0.0
        %726 = vst.msk [vmem:[#allocation2 + $0xfb0] sm:$0xff] %vm223, 0.0
        %727 = vst.msk [vmem:[#allocation2 + $0xfb8] sm:$0xff] %vm223, 0.0
        %728 = vst.msk [vmem:[#allocation2 + $0xfc0] sm:$0xff] %vm223, 0.0
        %729 = vst.msk [vmem:[#allocation2 + $0xfc8] sm:$0xff] %vm223, 0.0
        %730 = vst.msk [vmem:[#allocation2 + $0xfd0] sm:$0xff] %vm223, 0.0
        %731 = vst.msk [vmem:[#allocation2 + $0xfd8] sm:$0xff] %vm223, 0.0
        %732 = vst.msk [vmem:[#allocation2 + $0xfe0] sm:$0xff] %vm223, 0.0
        %733 = vst.msk [vmem:[#allocation2 + $0xfe8] sm:$0xff] %vm223, 0.0
        %734 = vst.msk [vmem:[#allocation2 + $0xff0] sm:$0xff] %vm223, 0.0
        %735 = vst.msk [vmem:[#allocation2 + $0xff8] sm:$0xff] %vm223, 0.0
      $region32: #{_matmul_impl.1} parent=27 // pred_fallthru
        _
      %v736 = vld [vmem:[%s198] sm:$0xf]
      %v737 = vld [vmem:[%s198 + $0x4] sm:$0xf]
      %v738 = vld [vmem:[%s198 + $0x8] sm:$0xf]
      %v739 = vld [vmem:[%s198 + $0xc] sm:$0xf]
      %v740 = vld [vmem:[%s198 + $0x10] sm:$0xf]
      %v741 = vld [vmem:[%s198 + $0x14] sm:$0xf]
      %v742 = vld [vmem:[%s198 + $0x18] sm:$0xf]
      %v743 = vld [vmem:[%s198 + $0x1c] sm:$0xf]
      %v744 = vld [vmem:[%s198 + $0x20] sm:$0xf]
      %v745 = vld [vmem:[%s198 + $0x24] sm:$0xf]
      %v746 = vld [vmem:[%s198 + $0x28] sm:$0xf]
      %v747 = vld [vmem:[%s198 + $0x2c] sm:$0xf]
      %v748 = vld [vmem:[%s198 + $0x30] sm:$0xf]
      %v749 = vld [vmem:[%s198 + $0x34] sm:$0xf]
      %v750 = vld [vmem:[%s198 + $0x38] sm:$0xf]
      %v751 = vld [vmem:[%s198 + $0x3c] sm:$0xf]
      %v752 = vld [vmem:[%s198 + $0x40] sm:$0xf]
      %v753 = vld [vmem:[%s198 + $0x44] sm:$0xf]
      %v754 = vld [vmem:[%s198 + $0x48] sm:$0xf]
      %v755 = vld [vmem:[%s198 + $0x4c] sm:$0xf]
      %v756 = vld [vmem:[%s198 + $0x50] sm:$0xf]
      %v757 = vld [vmem:[%s198 + $0x54] sm:$0xf]
      %v758 = vld [vmem:[%s198 + $0x58] sm:$0xf]
      %v759 = vld [vmem:[%s198 + $0x5c] sm:$0xf]
      %v760 = vld [vmem:[%s198 + $0x60] sm:$0xf]
      %v761 = vld [vmem:[%s198 + $0x64] sm:$0xf]
      %v762 = vld [vmem:[%s198 + $0x68] sm:$0xf]
      %v763 = vld [vmem:[%s198 + $0x6c] sm:$0xf]
      %v764 = vld [vmem:[%s198 + $0x70] sm:$0xf]
      %v765 = vld [vmem:[%s198 + $0x74] sm:$0xf]
      %v766 = vld [vmem:[%s198 + $0x78] sm:$0xf]
      %v767 = vld [vmem:[%s198 + $0x7c] sm:$0xf]
      %v768 = vld [vmem:[%s198 + $0x80] sm:$0xf]
      %v769 = vld [vmem:[%s198 + $0x84] sm:$0xf]
      %v770 = vld [vmem:[%s198 + $0x88] sm:$0xf]
      %v771 = vld [vmem:[%s198 + $0x8c] sm:$0xf]
      %v772 = vld [vmem:[%s198 + $0x90] sm:$0xf]
      %v773 = vld [vmem:[%s198 + $0x94] sm:$0xf]
      %v774 = vld [vmem:[%s198 + $0x98] sm:$0xf]
      %v775 = vld [vmem:[%s198 + $0x9c] sm:$0xf]
      %v776 = vld [vmem:[%s198 + $0xa0] sm:$0xf]
      %v777 = vld [vmem:[%s198 + $0xa4] sm:$0xf]
      %v778 = vld [vmem:[%s198 + $0xa8] sm:$0xf]
      %v779 = vld [vmem:[%s198 + $0xac] sm:$0xf]
      %v780 = vld [vmem:[%s198 + $0xb0] sm:$0xf]
      %v781 = vld [vmem:[%s198 + $0xb4] sm:$0xf]
      %v782 = vld [vmem:[%s198 + $0xb8] sm:$0xf]
      %v783 = vld [vmem:[%s198 + $0xbc] sm:$0xf]
      %v784 = vld [vmem:[%s198 + $0xc0] sm:$0xf]
      %v785 = vld [vmem:[%s198 + $0xc4] sm:$0xf]
      %v786 = vld [vmem:[%s198 + $0xc8] sm:$0xf]
      %v787 = vld [vmem:[%s198 + $0xcc] sm:$0xf]
      %v788 = vld [vmem:[%s198 + $0xd0] sm:$0xf]
      %v789 = vld [vmem:[%s198 + $0xd4] sm:$0xf]
      %v790 = vld [vmem:[%s198 + $0xd8] sm:$0xf]
      %v791 = vld [vmem:[%s198 + $0xdc] sm:$0xf]
      %v792 = vld [vmem:[%s198 + $0xe0] sm:$0xf]
      %v793 = vld [vmem:[%s198 + $0xe4] sm:$0xf]
      %v794 = vld [vmem:[%s198 + $0xe8] sm:$0xf]
      %v795 = vld [vmem:[%s198 + $0xec] sm:$0xf]
      %v796 = vld [vmem:[%s198 + $0xf0] sm:$0xf]
      %v797 = vld [vmem:[%s198 + $0xf4] sm:$0xf]
      %v798 = vld [vmem:[%s198 + $0xf8] sm:$0xf]
      %v799 = vld [vmem:[%s198 + $0xfc] sm:$0xf]
      %v800 = vld [vmem:[%s198 + $0x100] sm:$0xf]
      %v801 = vld [vmem:[%s198 + $0x104] sm:$0xf]
      %v802 = vld [vmem:[%s198 + $0x108] sm:$0xf]
      %v803 = vld [vmem:[%s198 + $0x10c] sm:$0xf]
      %v804 = vld [vmem:[%s198 + $0x110] sm:$0xf]
      %v805 = vld [vmem:[%s198 + $0x114] sm:$0xf]
      %v806 = vld [vmem:[%s198 + $0x118] sm:$0xf]
      %v807 = vld [vmem:[%s198 + $0x11c] sm:$0xf]
      %v808 = vld [vmem:[%s198 + $0x120] sm:$0xf]
      %v809 = vld [vmem:[%s198 + $0x124] sm:$0xf]
      %v810 = vld [vmem:[%s198 + $0x128] sm:$0xf]
      %v811 = vld [vmem:[%s198 + $0x12c] sm:$0xf]
      %v812 = vld [vmem:[%s198 + $0x130] sm:$0xf]
      %v813 = vld [vmem:[%s198 + $0x134] sm:$0xf]
      %v814 = vld [vmem:[%s198 + $0x138] sm:$0xf]
      %v815 = vld [vmem:[%s198 + $0x13c] sm:$0xf]
      %v816 = vld [vmem:[%s198 + $0x140] sm:$0xf]
      %v817 = vld [vmem:[%s198 + $0x144] sm:$0xf]
      %v818 = vld [vmem:[%s198 + $0x148] sm:$0xf]
      %v819 = vld [vmem:[%s198 + $0x14c] sm:$0xf]
      %v820 = vld [vmem:[%s198 + $0x150] sm:$0xf]
      %v821 = vld [vmem:[%s198 + $0x154] sm:$0xf]
      %v822 = vld [vmem:[%s198 + $0x158] sm:$0xf]
      %v823 = vld [vmem:[%s198 + $0x15c] sm:$0xf]
      %v824 = vld [vmem:[%s198 + $0x160] sm:$0xf]
      %v825 = vld [vmem:[%s198 + $0x164] sm:$0xf]
      %v826 = vld [vmem:[%s198 + $0x168] sm:$0xf]
      %v827 = vld [vmem:[%s198 + $0x16c] sm:$0xf]
      %v828 = vld [vmem:[%s198 + $0x170] sm:$0xf]
      %v829 = vld [vmem:[%s198 + $0x174] sm:$0xf]
      %v830 = vld [vmem:[%s198 + $0x178] sm:$0xf]
      %v831 = vld [vmem:[%s198 + $0x17c] sm:$0xf]
      %v832 = vld [vmem:[%s198 + $0x180] sm:$0xf]
      %v833 = vld [vmem:[%s198 + $0x184] sm:$0xf]
      %v834 = vld [vmem:[%s198 + $0x188] sm:$0xf]
      %v835 = vld [vmem:[%s198 + $0x18c] sm:$0xf]
      %v836 = vld [vmem:[%s198 + $0x190] sm:$0xf]
      %v837 = vld [vmem:[%s198 + $0x194] sm:$0xf]
      %v838 = vld [vmem:[%s198 + $0x198] sm:$0xf]
      %v839 = vld [vmem:[%s198 + $0x19c] sm:$0xf]
      %v840 = vld [vmem:[%s198 + $0x1a0] sm:$0xf]
      %v841 = vld [vmem:[%s198 + $0x1a4] sm:$0xf]
      %v842 = vld [vmem:[%s198 + $0x1a8] sm:$0xf]
      %v843 = vld [vmem:[%s198 + $0x1ac] sm:$0xf]
      %v844 = vld [vmem:[%s198 + $0x1b0] sm:$0xf]
      %v845 = vld [vmem:[%s198 + $0x1b4] sm:$0xf]
      %v846 = vld [vmem:[%s198 + $0x1b8] sm:$0xf]
      %v847 = vld [vmem:[%s198 + $0x1bc] sm:$0xf]
      %v848 = vld [vmem:[%s198 + $0x1c0] sm:$0xf]
      %v849 = vld [vmem:[%s198 + $0x1c4] sm:$0xf]
      %v850 = vld [vmem:[%s198 + $0x1c8] sm:$0xf]
      %v851 = vld [vmem:[%s198 + $0x1cc] sm:$0xf]
      %v852 = vld [vmem:[%s198 + $0x1d0] sm:$0xf]
      %v853 = vld [vmem:[%s198 + $0x1d4] sm:$0xf]
      %v854 = vld [vmem:[%s198 + $0x1d8] sm:$0xf]
      %v855 = vld [vmem:[%s198 + $0x1dc] sm:$0xf]
      %v856 = vld [vmem:[%s198 + $0x1e0] sm:$0xf]
      %v857 = vld [vmem:[%s198 + $0x1e4] sm:$0xf]
      %v858 = vld [vmem:[%s198 + $0x1e8] sm:$0xf]
      %v859 = vld [vmem:[%s198 + $0x1ec] sm:$0xf]
      %v860 = vld [vmem:[%s198 + $0x1f0] sm:$0xf]
      %v861 = vld [vmem:[%s198 + $0x1f4] sm:$0xf]
      %v862 = vld [vmem:[%s198 + $0x1f8] sm:$0xf]
      %v863 = vld [vmem:[%s198 + $0x1fc] sm:$0xf]
      %v864 = vld [vmem:[%s198 + $0x200] sm:$0xf]
      %v865 = vld [vmem:[%s198 + $0x204] sm:$0xf]
      %v866 = vld [vmem:[%s198 + $0x208] sm:$0xf]
      %v867 = vld [vmem:[%s198 + $0x20c] sm:$0xf]
      %v868 = vld [vmem:[%s198 + $0x210] sm:$0xf]
      %v869 = vld [vmem:[%s198 + $0x214] sm:$0xf]
      %v870 = vld [vmem:[%s198 + $0x218] sm:$0xf]
      %v871 = vld [vmem:[%s198 + $0x21c] sm:$0xf]
      %v872 = vld [vmem:[%s198 + $0x220] sm:$0xf]
      %v873 = vld [vmem:[%s198 + $0x224] sm:$0xf]
      %v874 = vld [vmem:[%s198 + $0x228] sm:$0xf]
      %v875 = vld [vmem:[%s198 + $0x22c] sm:$0xf]
      %v876 = vld [vmem:[%s198 + $0x230] sm:$0xf]
      %v877 = vld [vmem:[%s198 + $0x234] sm:$0xf]
      %v878 = vld [vmem:[%s198 + $0x238] sm:$0xf]
      %v879 = vld [vmem:[%s198 + $0x23c] sm:$0xf]
      %v880 = vld [vmem:[%s198 + $0x240] sm:$0xf]
      %v881 = vld [vmem:[%s198 + $0x244] sm:$0xf]
      %v882 = vld [vmem:[%s198 + $0x248] sm:$0xf]
      %v883 = vld [vmem:[%s198 + $0x24c] sm:$0xf]
      %v884 = vld [vmem:[%s198 + $0x250] sm:$0xf]
      %v885 = vld [vmem:[%s198 + $0x254] sm:$0xf]
      %v886 = vld [vmem:[%s198 + $0x258] sm:$0xf]
      %v887 = vld [vmem:[%s198 + $0x25c] sm:$0xf]
      %v888 = vld [vmem:[%s198 + $0x260] sm:$0xf]
      %v889 = vld [vmem:[%s198 + $0x264] sm:$0xf]
      %v890 = vld [vmem:[%s198 + $0x268] sm:$0xf]
      %v891 = vld [vmem:[%s198 + $0x26c] sm:$0xf]
      %v892 = vld [vmem:[%s198 + $0x270] sm:$0xf]
      %v893 = vld [vmem:[%s198 + $0x274] sm:$0xf]
      %v894 = vld [vmem:[%s198 + $0x278] sm:$0xf]
      %v895 = vld [vmem:[%s198 + $0x27c] sm:$0xf]
      %v896 = vld [vmem:[%s198 + $0x280] sm:$0xf]
      %v897 = vld [vmem:[%s198 + $0x284] sm:$0xf]
      %v898 = vld [vmem:[%s198 + $0x288] sm:$0xf]
      %v899 = vld [vmem:[%s198 + $0x28c] sm:$0xf]
      %v900 = vld [vmem:[%s198 + $0x290] sm:$0xf]
      %v901 = vld [vmem:[%s198 + $0x294] sm:$0xf]
      %v902 = vld [vmem:[%s198 + $0x298] sm:$0xf]
      %v903 = vld [vmem:[%s198 + $0x29c] sm:$0xf]
      %v904 = vld [vmem:[%s198 + $0x2a0] sm:$0xf]
      %v905 = vld [vmem:[%s198 + $0x2a4] sm:$0xf]
      %v906 = vld [vmem:[%s198 + $0x2a8] sm:$0xf]
      %v907 = vld [vmem:[%s198 + $0x2ac] sm:$0xf]
      %v908 = vld [vmem:[%s198 + $0x2b0] sm:$0xf]
      %v909 = vld [vmem:[%s198 + $0x2b4] sm:$0xf]
      %v910 = vld [vmem:[%s198 + $0x2b8] sm:$0xf]
      %v911 = vld [vmem:[%s198 + $0x2bc] sm:$0xf]
      %v912 = vld [vmem:[%s198 + $0x2c0] sm:$0xf]
      %v913 = vld [vmem:[%s198 + $0x2c4] sm:$0xf]
      %v914 = vld [vmem:[%s198 + $0x2c8] sm:$0xf]
      %v915 = vld [vmem:[%s198 + $0x2cc] sm:$0xf]
      %v916 = vld [vmem:[%s198 + $0x2d0] sm:$0xf]
      %v917 = vld [vmem:[%s198 + $0x2d4] sm:$0xf]
      %v918 = vld [vmem:[%s198 + $0x2d8] sm:$0xf]
      %v919 = vld [vmem:[%s198 + $0x2dc] sm:$0xf]
      %v920 = vld [vmem:[%s198 + $0x2e0] sm:$0xf]
      %v921 = vld [vmem:[%s198 + $0x2e4] sm:$0xf]
      %v922 = vld [vmem:[%s198 + $0x2e8] sm:$0xf]
      %v923 = vld [vmem:[%s198 + $0x2ec] sm:$0xf]
      %v924 = vld [vmem:[%s198 + $0x2f0] sm:$0xf]
      %v925 = vld [vmem:[%s198 + $0x2f4] sm:$0xf]
      %v926 = vld [vmem:[%s198 + $0x2f8] sm:$0xf]
      %v927 = vld [vmem:[%s198 + $0x2fc] sm:$0xf]
      %v928 = vld [vmem:[%s198 + $0x300] sm:$0xf]
      %v929 = vld [vmem:[%s198 + $0x304] sm:$0xf]
      %v930 = vld [vmem:[%s198 + $0x308] sm:$0xf]
      %v931 = vld [vmem:[%s198 + $0x30c] sm:$0xf]
      %v932 = vld [vmem:[%s198 + $0x310] sm:$0xf]
      %v933 = vld [vmem:[%s198 + $0x314] sm:$0xf]
      %v934 = vld [vmem:[%s198 + $0x318] sm:$0xf]
      %v935 = vld [vmem:[%s198 + $0x31c] sm:$0xf]
      %v936 = vld [vmem:[%s198 + $0x320] sm:$0xf]
      %v937 = vld [vmem:[%s198 + $0x324] sm:$0xf]
      %v938 = vld [vmem:[%s198 + $0x328] sm:$0xf]
      %v939 = vld [vmem:[%s198 + $0x32c] sm:$0xf]
      %v940 = vld [vmem:[%s198 + $0x330] sm:$0xf]
      %v941 = vld [vmem:[%s198 + $0x334] sm:$0xf]
      %v942 = vld [vmem:[%s198 + $0x338] sm:$0xf]
      %v943 = vld [vmem:[%s198 + $0x33c] sm:$0xf]
      %v944 = vld [vmem:[%s198 + $0x340] sm:$0xf]
      %v945 = vld [vmem:[%s198 + $0x344] sm:$0xf]
      %v946 = vld [vmem:[%s198 + $0x348] sm:$0xf]
      %v947 = vld [vmem:[%s198 + $0x34c] sm:$0xf]
      %v948 = vld [vmem:[%s198 + $0x350] sm:$0xf]
      %v949 = vld [vmem:[%s198 + $0x354] sm:$0xf]
      %v950 = vld [vmem:[%s198 + $0x358] sm:$0xf]
      %v951 = vld [vmem:[%s198 + $0x35c] sm:$0xf]
      %v952 = vld [vmem:[%s198 + $0x360] sm:$0xf]
      %v953 = vld [vmem:[%s198 + $0x364] sm:$0xf]
      %v954 = vld [vmem:[%s198 + $0x368] sm:$0xf]
      %v955 = vld [vmem:[%s198 + $0x36c] sm:$0xf]
      %v956 = vld [vmem:[%s198 + $0x370] sm:$0xf]
      %v957 = vld [vmem:[%s198 + $0x374] sm:$0xf]
      %v958 = vld [vmem:[%s198 + $0x378] sm:$0xf]
      %v959 = vld [vmem:[%s198 + $0x37c] sm:$0xf]
      %v960 = vld [vmem:[%s198 + $0x380] sm:$0xf]
      %v961 = vld [vmem:[%s198 + $0x384] sm:$0xf]
      %v962 = vld [vmem:[%s198 + $0x388] sm:$0xf]
      %v963 = vld [vmem:[%s198 + $0x38c] sm:$0xf]
      %v964 = vld [vmem:[%s198 + $0x390] sm:$0xf]
      %v965 = vld [vmem:[%s198 + $0x394] sm:$0xf]
      %v966 = vld [vmem:[%s198 + $0x398] sm:$0xf]
      %v967 = vld [vmem:[%s198 + $0x39c] sm:$0xf]
      %v968 = vld [vmem:[%s198 + $0x3a0] sm:$0xf]
      %v969 = vld [vmem:[%s198 + $0x3a4] sm:$0xf]
      %v970 = vld [vmem:[%s198 + $0x3a8] sm:$0xf]
      %v971 = vld [vmem:[%s198 + $0x3ac] sm:$0xf]
      %v972 = vld [vmem:[%s198 + $0x3b0] sm:$0xf]
      %v973 = vld [vmem:[%s198 + $0x3b4] sm:$0xf]
      %v974 = vld [vmem:[%s198 + $0x3b8] sm:$0xf]
      %v975 = vld [vmem:[%s198 + $0x3bc] sm:$0xf]
      %v976 = vld [vmem:[%s198 + $0x3c0] sm:$0xf]
      %v977 = vld [vmem:[%s198 + $0x3c4] sm:$0xf]
      %v978 = vld [vmem:[%s198 + $0x3c8] sm:$0xf]
      %v979 = vld [vmem:[%s198 + $0x3cc] sm:$0xf]
      %v980 = vld [vmem:[%s198 + $0x3d0] sm:$0xf]
      %v981 = vld [vmem:[%s198 + $0x3d4] sm:$0xf]
      %v982 = vld [vmem:[%s198 + $0x3d8] sm:$0xf]
      %v983 = vld [vmem:[%s198 + $0x3dc] sm:$0xf]
      %v984 = vld [vmem:[%s198 + $0x3e0] sm:$0xf]
      %v985 = vld [vmem:[%s198 + $0x3e4] sm:$0xf]
      %v986 = vld [vmem:[%s198 + $0x3e8] sm:$0xf]
      %v987 = vld [vmem:[%s198 + $0x3ec] sm:$0xf]
      %v988 = vld [vmem:[%s198 + $0x3f0] sm:$0xf]
      %v989 = vld [vmem:[%s198 + $0x3f4] sm:$0xf]
      %v990 = vld [vmem:[%s198 + $0x3f8] sm:$0xf]
      %v991 = vld [vmem:[%s198 + $0x3fc] sm:$0xf]
      %v992 = vld [vmem:[%s198 + $0x400] sm:$0xf]
      %v993 = vld [vmem:[%s198 + $0x404] sm:$0xf]
      %v994 = vld [vmem:[%s198 + $0x408] sm:$0xf]
      %v995 = vld [vmem:[%s198 + $0x40c] sm:$0xf]
      %v996 = vld [vmem:[%s198 + $0x410] sm:$0xf]
      %v997 = vld [vmem:[%s198 + $0x414] sm:$0xf]
      %v998 = vld [vmem:[%s198 + $0x418] sm:$0xf]
      %v999 = vld [vmem:[%s198 + $0x41c] sm:$0xf]
      %v1000 = vld [vmem:[%s198 + $0x420] sm:$0xf]
      %v1001 = vld [vmem:[%s198 + $0x424] sm:$0xf]
      %v1002 = vld [vmem:[%s198 + $0x428] sm:$0xf]
      %v1003 = vld [vmem:[%s198 + $0x42c] sm:$0xf]
      %v1004 = vld [vmem:[%s198 + $0x430] sm:$0xf]
      %v1005 = vld [vmem:[%s198 + $0x434] sm:$0xf]
      %v1006 = vld [vmem:[%s198 + $0x438] sm:$0xf]
      %v1007 = vld [vmem:[%s198 + $0x43c] sm:$0xf]
      %v1008 = vld [vmem:[%s198 + $0x440] sm:$0xf]
      %v1009 = vld [vmem:[%s198 + $0x444] sm:$0xf]
      %v1010 = vld [vmem:[%s198 + $0x448] sm:$0xf]
      %v1011 = vld [vmem:[%s198 + $0x44c] sm:$0xf]
      %v1012 = vld [vmem:[%s198 + $0x450] sm:$0xf]
      %v1013 = vld [vmem:[%s198 + $0x454] sm:$0xf]
      %v1014 = vld [vmem:[%s198 + $0x458] sm:$0xf]
      %v1015 = vld [vmem:[%s198 + $0x45c] sm:$0xf]
      %v1016 = vld [vmem:[%s198 + $0x460] sm:$0xf]
      %v1017 = vld [vmem:[%s198 + $0x464] sm:$0xf]
      %v1018 = vld [vmem:[%s198 + $0x468] sm:$0xf]
      %v1019 = vld [vmem:[%s198 + $0x46c] sm:$0xf]
      %v1020 = vld [vmem:[%s198 + $0x470] sm:$0xf]
      %v1021 = vld [vmem:[%s198 + $0x474] sm:$0xf]
      %v1022 = vld [vmem:[%s198 + $0x478] sm:$0xf]
      %v1023 = vld [vmem:[%s198 + $0x47c] sm:$0xf]
      %v1024 = vld [vmem:[%s198 + $0x480] sm:$0xf]
      %v1025 = vld [vmem:[%s198 + $0x484] sm:$0xf]
      %v1026 = vld [vmem:[%s198 + $0x488] sm:$0xf]
      %v1027 = vld [vmem:[%s198 + $0x48c] sm:$0xf]
      %v1028 = vld [vmem:[%s198 + $0x490] sm:$0xf]
      %v1029 = vld [vmem:[%s198 + $0x494] sm:$0xf]
      %v1030 = vld [vmem:[%s198 + $0x498] sm:$0xf]
      %v1031 = vld [vmem:[%s198 + $0x49c] sm:$0xf]
      %v1032 = vld [vmem:[%s198 + $0x4a0] sm:$0xf]
      %v1033 = vld [vmem:[%s198 + $0x4a4] sm:$0xf]
      %v1034 = vld [vmem:[%s198 + $0x4a8] sm:$0xf]
      %v1035 = vld [vmem:[%s198 + $0x4ac] sm:$0xf]
      %v1036 = vld [vmem:[%s198 + $0x4b0] sm:$0xf]
      %v1037 = vld [vmem:[%s198 + $0x4b4] sm:$0xf]
      %v1038 = vld [vmem:[%s198 + $0x4b8] sm:$0xf]
      %v1039 = vld [vmem:[%s198 + $0x4bc] sm:$0xf]
      %v1040 = vld [vmem:[%s198 + $0x4c0] sm:$0xf]
      %v1041 = vld [vmem:[%s198 + $0x4c4] sm:$0xf]
      %v1042 = vld [vmem:[%s198 + $0x4c8] sm:$0xf]
      %v1043 = vld [vmem:[%s198 + $0x4cc] sm:$0xf]
      %v1044 = vld [vmem:[%s198 + $0x4d0] sm:$0xf]
      %v1045 = vld [vmem:[%s198 + $0x4d4] sm:$0xf]
      %v1046 = vld [vmem:[%s198 + $0x4d8] sm:$0xf]
      %v1047 = vld [vmem:[%s198 + $0x4dc] sm:$0xf]
      %v1048 = vld [vmem:[%s198 + $0x4e0] sm:$0xf]
      %v1049 = vld [vmem:[%s198 + $0x4e4] sm:$0xf]
      %v1050 = vld [vmem:[%s198 + $0x4e8] sm:$0xf]
      %v1051 = vld [vmem:[%s198 + $0x4ec] sm:$0xf]
      %v1052 = vld [vmem:[%s198 + $0x4f0] sm:$0xf]
      %v1053 = vld [vmem:[%s198 + $0x4f4] sm:$0xf]
      %v1054 = vld [vmem:[%s198 + $0x4f8] sm:$0xf]
      %v1055 = vld [vmem:[%s198 + $0x4fc] sm:$0xf]
      %v1056 = vld [vmem:[%s198 + $0x500] sm:$0xf]
      %v1057 = vld [vmem:[%s198 + $0x504] sm:$0xf]
      %v1058 = vld [vmem:[%s198 + $0x508] sm:$0xf]
      %v1059 = vld [vmem:[%s198 + $0x50c] sm:$0xf]
      %v1060 = vld [vmem:[%s198 + $0x510] sm:$0xf]
      %v1061 = vld [vmem:[%s198 + $0x514] sm:$0xf]
      %v1062 = vld [vmem:[%s198 + $0x518] sm:$0xf]
      %v1063 = vld [vmem:[%s198 + $0x51c] sm:$0xf]
      %v1064 = vld [vmem:[%s198 + $0x520] sm:$0xf]
      %v1065 = vld [vmem:[%s198 + $0x524] sm:$0xf]
      %v1066 = vld [vmem:[%s198 + $0x528] sm:$0xf]
      %v1067 = vld [vmem:[%s198 + $0x52c] sm:$0xf]
      %v1068 = vld [vmem:[%s198 + $0x530] sm:$0xf]
      %v1069 = vld [vmem:[%s198 + $0x534] sm:$0xf]
      %v1070 = vld [vmem:[%s198 + $0x538] sm:$0xf]
      %v1071 = vld [vmem:[%s198 + $0x53c] sm:$0xf]
      %v1072 = vld [vmem:[%s198 + $0x540] sm:$0xf]
      %v1073 = vld [vmem:[%s198 + $0x544] sm:$0xf]
      %v1074 = vld [vmem:[%s198 + $0x548] sm:$0xf]
      %v1075 = vld [vmem:[%s198 + $0x54c] sm:$0xf]
      %v1076 = vld [vmem:[%s198 + $0x550] sm:$0xf]
      %v1077 = vld [vmem:[%s198 + $0x554] sm:$0xf]
      %v1078 = vld [vmem:[%s198 + $0x558] sm:$0xf]
      %v1079 = vld [vmem:[%s198 + $0x55c] sm:$0xf]
      %v1080 = vld [vmem:[%s198 + $0x560] sm:$0xf]
      %v1081 = vld [vmem:[%s198 + $0x564] sm:$0xf]
      %v1082 = vld [vmem:[%s198 + $0x568] sm:$0xf]
      %v1083 = vld [vmem:[%s198 + $0x56c] sm:$0xf]
      %v1084 = vld [vmem:[%s198 + $0x570] sm:$0xf]
      %v1085 = vld [vmem:[%s198 + $0x574] sm:$0xf]
      %v1086 = vld [vmem:[%s198 + $0x578] sm:$0xf]
      %v1087 = vld [vmem:[%s198 + $0x57c] sm:$0xf]
      %v1088 = vld [vmem:[%s198 + $0x580] sm:$0xf]
      %v1089 = vld [vmem:[%s198 + $0x584] sm:$0xf]
      %v1090 = vld [vmem:[%s198 + $0x588] sm:$0xf]
      %v1091 = vld [vmem:[%s198 + $0x58c] sm:$0xf]
      %v1092 = vld [vmem:[%s198 + $0x590] sm:$0xf]
      %v1093 = vld [vmem:[%s198 + $0x594] sm:$0xf]
      %v1094 = vld [vmem:[%s198 + $0x598] sm:$0xf]
      %v1095 = vld [vmem:[%s198 + $0x59c] sm:$0xf]
      %v1096 = vld [vmem:[%s198 + $0x5a0] sm:$0xf]
      %v1097 = vld [vmem:[%s198 + $0x5a4] sm:$0xf]
      %v1098 = vld [vmem:[%s198 + $0x5a8] sm:$0xf]
      %v1099 = vld [vmem:[%s198 + $0x5ac] sm:$0xf]
      %v1100 = vld [vmem:[%s198 + $0x5b0] sm:$0xf]
      %v1101 = vld [vmem:[%s198 + $0x5b4] sm:$0xf]
      %v1102 = vld [vmem:[%s198 + $0x5b8] sm:$0xf]
      %v1103 = vld [vmem:[%s198 + $0x5bc] sm:$0xf]
      %v1104 = vld [vmem:[%s198 + $0x5c0] sm:$0xf]
      %v1105 = vld [vmem:[%s198 + $0x5c4] sm:$0xf]
      %v1106 = vld [vmem:[%s198 + $0x5c8] sm:$0xf]
      %v1107 = vld [vmem:[%s198 + $0x5cc] sm:$0xf]
      %v1108 = vld [vmem:[%s198 + $0x5d0] sm:$0xf]
      %v1109 = vld [vmem:[%s198 + $0x5d4] sm:$0xf]
      %v1110 = vld [vmem:[%s198 + $0x5d8] sm:$0xf]
      %v1111 = vld [vmem:[%s198 + $0x5dc] sm:$0xf]
      %v1112 = vld [vmem:[%s198 + $0x5e0] sm:$0xf]
      %v1113 = vld [vmem:[%s198 + $0x5e4] sm:$0xf]
      %v1114 = vld [vmem:[%s198 + $0x5e8] sm:$0xf]
      %v1115 = vld [vmem:[%s198 + $0x5ec] sm:$0xf]
      %v1116 = vld [vmem:[%s198 + $0x5f0] sm:$0xf]
      %v1117 = vld [vmem:[%s198 + $0x5f4] sm:$0xf]
      %v1118 = vld [vmem:[%s198 + $0x5f8] sm:$0xf]
      %v1119 = vld [vmem:[%s198 + $0x5fc] sm:$0xf]
      %v1120 = vld [vmem:[%s198 + $0x600] sm:$0xf]
      %v1121 = vld [vmem:[%s198 + $0x604] sm:$0xf]
      %v1122 = vld [vmem:[%s198 + $0x608] sm:$0xf]
      %v1123 = vld [vmem:[%s198 + $0x60c] sm:$0xf]
      %v1124 = vld [vmem:[%s198 + $0x610] sm:$0xf]
      %v1125 = vld [vmem:[%s198 + $0x614] sm:$0xf]
      %v1126 = vld [vmem:[%s198 + $0x618] sm:$0xf]
      %v1127 = vld [vmem:[%s198 + $0x61c] sm:$0xf]
      %v1128 = vld [vmem:[%s198 + $0x620] sm:$0xf]
      %v1129 = vld [vmem:[%s198 + $0x624] sm:$0xf]
      %v1130 = vld [vmem:[%s198 + $0x628] sm:$0xf]
      %v1131 = vld [vmem:[%s198 + $0x62c] sm:$0xf]
      %v1132 = vld [vmem:[%s198 + $0x630] sm:$0xf]
      %v1133 = vld [vmem:[%s198 + $0x634] sm:$0xf]
      %v1134 = vld [vmem:[%s198 + $0x638] sm:$0xf]
      %v1135 = vld [vmem:[%s198 + $0x63c] sm:$0xf]
      %v1136 = vld [vmem:[%s198 + $0x640] sm:$0xf]
      %v1137 = vld [vmem:[%s198 + $0x644] sm:$0xf]
      %v1138 = vld [vmem:[%s198 + $0x648] sm:$0xf]
      %v1139 = vld [vmem:[%s198 + $0x64c] sm:$0xf]
      %v1140 = vld [vmem:[%s198 + $0x650] sm:$0xf]
      %v1141 = vld [vmem:[%s198 + $0x654] sm:$0xf]
      %v1142 = vld [vmem:[%s198 + $0x658] sm:$0xf]
      %v1143 = vld [vmem:[%s198 + $0x65c] sm:$0xf]
      %v1144 = vld [vmem:[%s198 + $0x660] sm:$0xf]
      %v1145 = vld [vmem:[%s198 + $0x664] sm:$0xf]
      %v1146 = vld [vmem:[%s198 + $0x668] sm:$0xf]
      %v1147 = vld [vmem:[%s198 + $0x66c] sm:$0xf]
      %v1148 = vld [vmem:[%s198 + $0x670] sm:$0xf]
      %v1149 = vld [vmem:[%s198 + $0x674] sm:$0xf]
      %v1150 = vld [vmem:[%s198 + $0x678] sm:$0xf]
      %v1151 = vld [vmem:[%s198 + $0x67c] sm:$0xf]
      %v1152 = vld [vmem:[%s198 + $0x680] sm:$0xf]
      %v1153 = vld [vmem:[%s198 + $0x684] sm:$0xf]
      %v1154 = vld [vmem:[%s198 + $0x688] sm:$0xf]
      %v1155 = vld [vmem:[%s198 + $0x68c] sm:$0xf]
      %v1156 = vld [vmem:[%s198 + $0x690] sm:$0xf]
      %v1157 = vld [vmem:[%s198 + $0x694] sm:$0xf]
      %v1158 = vld [vmem:[%s198 + $0x698] sm:$0xf]
      %v1159 = vld [vmem:[%s198 + $0x69c] sm:$0xf]
      %v1160 = vld [vmem:[%s198 + $0x6a0] sm:$0xf]
      %v1161 = vld [vmem:[%s198 + $0x6a4] sm:$0xf]
      %v1162 = vld [vmem:[%s198 + $0x6a8] sm:$0xf]
      %v1163 = vld [vmem:[%s198 + $0x6ac] sm:$0xf]
      %v1164 = vld [vmem:[%s198 + $0x6b0] sm:$0xf]
      %v1165 = vld [vmem:[%s198 + $0x6b4] sm:$0xf]
      %v1166 = vld [vmem:[%s198 + $0x6b8] sm:$0xf]
      %v1167 = vld [vmem:[%s198 + $0x6bc] sm:$0xf]
      %v1168 = vld [vmem:[%s198 + $0x6c0] sm:$0xf]
      %v1169 = vld [vmem:[%s198 + $0x6c4] sm:$0xf]
      %v1170 = vld [vmem:[%s198 + $0x6c8] sm:$0xf]
      %v1171 = vld [vmem:[%s198 + $0x6cc] sm:$0xf]
      %v1172 = vld [vmem:[%s198 + $0x6d0] sm:$0xf]
      %v1173 = vld [vmem:[%s198 + $0x6d4] sm:$0xf]
      %v1174 = vld [vmem:[%s198 + $0x6d8] sm:$0xf]
      %v1175 = vld [vmem:[%s198 + $0x6dc] sm:$0xf]
      %v1176 = vld [vmem:[%s198 + $0x6e0] sm:$0xf]
      %v1177 = vld [vmem:[%s198 + $0x6e4] sm:$0xf]
      %v1178 = vld [vmem:[%s198 + $0x6e8] sm:$0xf]
      %v1179 = vld [vmem:[%s198 + $0x6ec] sm:$0xf]
      %v1180 = vld [vmem:[%s198 + $0x6f0] sm:$0xf]
      %v1181 = vld [vmem:[%s198 + $0x6f4] sm:$0xf]
      %v1182 = vld [vmem:[%s198 + $0x6f8] sm:$0xf]
      %v1183 = vld [vmem:[%s198 + $0x6fc] sm:$0xf]
      %v1184 = vld [vmem:[%s198 + $0x700] sm:$0xf]
      %v1185 = vld [vmem:[%s198 + $0x704] sm:$0xf]
      %v1186 = vld [vmem:[%s198 + $0x708] sm:$0xf]
      %v1187 = vld [vmem:[%s198 + $0x70c] sm:$0xf]
      %v1188 = vld [vmem:[%s198 + $0x710] sm:$0xf]
      %v1189 = vld [vmem:[%s198 + $0x714] sm:$0xf]
      %v1190 = vld [vmem:[%s198 + $0x718] sm:$0xf]
      %v1191 = vld [vmem:[%s198 + $0x71c] sm:$0xf]
      %v1192 = vld [vmem:[%s198 + $0x720] sm:$0xf]
      %v1193 = vld [vmem:[%s198 + $0x724] sm:$0xf]
      %v1194 = vld [vmem:[%s198 + $0x728] sm:$0xf]
      %v1195 = vld [vmem:[%s198 + $0x72c] sm:$0xf]
      %v1196 = vld [vmem:[%s198 + $0x730] sm:$0xf]
      %v1197 = vld [vmem:[%s198 + $0x734] sm:$0xf]
      %v1198 = vld [vmem:[%s198 + $0x738] sm:$0xf]
      %v1199 = vld [vmem:[%s198 + $0x73c] sm:$0xf]
      %v1200 = vld [vmem:[%s198 + $0x740] sm:$0xf]
      %v1201 = vld [vmem:[%s198 + $0x744] sm:$0xf]
      %v1202 = vld [vmem:[%s198 + $0x748] sm:$0xf]
      %v1203 = vld [vmem:[%s198 + $0x74c] sm:$0xf]
      %v1204 = vld [vmem:[%s198 + $0x750] sm:$0xf]
      %v1205 = vld [vmem:[%s198 + $0x754] sm:$0xf]
      %v1206 = vld [vmem:[%s198 + $0x758] sm:$0xf]
      %v1207 = vld [vmem:[%s198 + $0x75c] sm:$0xf]
      %v1208 = vld [vmem:[%s198 + $0x760] sm:$0xf]
      %v1209 = vld [vmem:[%s198 + $0x764] sm:$0xf]
      %v1210 = vld [vmem:[%s198 + $0x768] sm:$0xf]
      %v1211 = vld [vmem:[%s198 + $0x76c] sm:$0xf]
      %v1212 = vld [vmem:[%s198 + $0x770] sm:$0xf]
      %v1213 = vld [vmem:[%s198 + $0x774] sm:$0xf]
      %v1214 = vld [vmem:[%s198 + $0x778] sm:$0xf]
      %v1215 = vld [vmem:[%s198 + $0x77c] sm:$0xf]
      %v1216 = vld [vmem:[%s198 + $0x780] sm:$0xf]
      %v1217 = vld [vmem:[%s198 + $0x784] sm:$0xf]
      %v1218 = vld [vmem:[%s198 + $0x788] sm:$0xf]
      %v1219 = vld [vmem:[%s198 + $0x78c] sm:$0xf]
      %v1220 = vld [vmem:[%s198 + $0x790] sm:$0xf]
      %v1221 = vld [vmem:[%s198 + $0x794] sm:$0xf]
      %v1222 = vld [vmem:[%s198 + $0x798] sm:$0xf]
      %v1223 = vld [vmem:[%s198 + $0x79c] sm:$0xf]
      %v1224 = vld [vmem:[%s198 + $0x7a0] sm:$0xf]
      %v1225 = vld [vmem:[%s198 + $0x7a4] sm:$0xf]
      %v1226 = vld [vmem:[%s198 + $0x7a8] sm:$0xf]
      %v1227 = vld [vmem:[%s198 + $0x7ac] sm:$0xf]
      %v1228 = vld [vmem:[%s198 + $0x7b0] sm:$0xf]
      %v1229 = vld [vmem:[%s198 + $0x7b4] sm:$0xf]
      %v1230 = vld [vmem:[%s198 + $0x7b8] sm:$0xf]
      %v1231 = vld [vmem:[%s198 + $0x7bc] sm:$0xf]
      %v1232 = vld [vmem:[%s198 + $0x7c0] sm:$0xf]
      %v1233 = vld [vmem:[%s198 + $0x7c4] sm:$0xf]
      %v1234 = vld [vmem:[%s198 + $0x7c8] sm:$0xf]
      %v1235 = vld [vmem:[%s198 + $0x7cc] sm:$0xf]
      %v1236 = vld [vmem:[%s198 + $0x7d0] sm:$0xf]
      %v1237 = vld [vmem:[%s198 + $0x7d4] sm:$0xf]
      %v1238 = vld [vmem:[%s198 + $0x7d8] sm:$0xf]
      %v1239 = vld [vmem:[%s198 + $0x7dc] sm:$0xf]
      %v1240 = vld [vmem:[%s198 + $0x7e0] sm:$0xf]
      %v1241 = vld [vmem:[%s198 + $0x7e4] sm:$0xf]
      %v1242 = vld [vmem:[%s198 + $0x7e8] sm:$0xf]
      %v1243 = vld [vmem:[%s198 + $0x7ec] sm:$0xf]
      %v1244 = vld [vmem:[%s198 + $0x7f0] sm:$0xf]
      %v1245 = vld [vmem:[%s198 + $0x7f4] sm:$0xf]
      %v1246 = vld [vmem:[%s198 + $0x7f8] sm:$0xf]
      %v1247 = vld [vmem:[%s198 + $0x7fc] sm:$0xf]
      %v1248 = vld [vmem:[%s207] sm:$0xf]
      %v1249 = vld [vmem:[%s207 + $0x4] sm:$0xf]
      %v1250 = vld [vmem:[%s207 + $0x8] sm:$0xf]
      %v1251 = vld [vmem:[%s207 + $0xc] sm:$0x3]
      %v1252 = vld [vmem:[#allocation2] sm:$0xff]
      %v1253 = vld [vmem:[#allocation2 + $0x8] sm:$0xff]
      %v1254 = vld [vmem:[#allocation2 + $0x10] sm:$0xff]
      %v1255 = vld [vmem:[#allocation2 + $0x18] sm:$0xff]
      %v1256 = vld [vmem:[#allocation2 + $0x20] sm:$0xff]
      %v1257 = vld [vmem:[#allocation2 + $0x28] sm:$0xff]
      %v1258 = vld [vmem:[#allocation2 + $0x30] sm:$0xff]
      %v1259 = vld [vmem:[#allocation2 + $0x38] sm:$0xff]
      %v1260 = vld [vmem:[#allocation2 + $0x40] sm:$0xff]
      %v1261 = vld [vmem:[#allocation2 + $0x48] sm:$0xff]
      %v1262 = vld [vmem:[#allocation2 + $0x50] sm:$0xff]
      %v1263 = vld [vmem:[#allocation2 + $0x58] sm:$0xff]
      %v1264 = vld [vmem:[#allocation2 + $0x60] sm:$0xff]
      %v1265 = vld [vmem:[#allocation2 + $0x68] sm:$0xff]
      %v1266 = vld [vmem:[#allocation2 + $0x70] sm:$0xff]
      %v1267 = vld [vmem:[#allocation2 + $0x78] sm:$0xff]
      %v1268 = vld [vmem:[#allocation2 + $0x80] sm:$0xff]
      %v1269 = vld [vmem:[#allocation2 + $0x88] sm:$0xff]
      %v1270 = vld [vmem:[#allocation2 + $0x90] sm:$0xff]
      %v1271 = vld [vmem:[#allocation2 + $0x98] sm:$0xff]
      %v1272 = vld [vmem:[#allocation2 + $0xa0] sm:$0xff]
      %v1273 = vld [vmem:[#allocation2 + $0xa8] sm:$0xff]
      %v1274 = vld [vmem:[#allocation2 + $0xb0] sm:$0xff]
      %v1275 = vld [vmem:[#allocation2 + $0xb8] sm:$0xff]
      %v1276 = vld [vmem:[#allocation2 + $0xc0] sm:$0xff]
      %v1277 = vld [vmem:[#allocation2 + $0xc8] sm:$0xff]
      %v1278 = vld [vmem:[#allocation2 + $0xd0] sm:$0xff]
      %v1279 = vld [vmem:[#allocation2 + $0xd8] sm:$0xff]
      %v1280 = vld [vmem:[#allocation2 + $0xe0] sm:$0xff]
      %v1281 = vld [vmem:[#allocation2 + $0xe8] sm:$0xff]
      %v1282 = vld [vmem:[#allocation2 + $0xf0] sm:$0xff]
      %v1283 = vld [vmem:[#allocation2 + $0xf8] sm:$0xff]
      %v1284 = vld [vmem:[#allocation2 + $0x100] sm:$0xff]
      %v1285 = vld [vmem:[#allocation2 + $0x108] sm:$0xff]
      %v1286 = vld [vmem:[#allocation2 + $0x110] sm:$0xff]
      %v1287 = vld [vmem:[#allocation2 + $0x118] sm:$0xff]
      %v1288 = vld [vmem:[#allocation2 + $0x120] sm:$0xff]
      %v1289 = vld [vmem:[#allocation2 + $0x128] sm:$0xff]
      %v1290 = vld [vmem:[#allocation2 + $0x130] sm:$0xff]
      %v1291 = vld [vmem:[#allocation2 + $0x138] sm:$0xff]
      %v1292 = vld [vmem:[#allocation2 + $0x140] sm:$0xff]
      %v1293 = vld [vmem:[#allocation2 + $0x148] sm:$0xff]
      %v1294 = vld [vmem:[#allocation2 + $0x150] sm:$0xff]
      %v1295 = vld [vmem:[#allocation2 + $0x158] sm:$0xff]
      %v1296 = vld [vmem:[#allocation2 + $0x160] sm:$0xff]
      %v1297 = vld [vmem:[#allocation2 + $0x168] sm:$0xff]
      %v1298 = vld [vmem:[#allocation2 + $0x170] sm:$0xff]
      %v1299 = vld [vmem:[#allocation2 + $0x178] sm:$0xff]
      %v1300 = vld [vmem:[#allocation2 + $0x180] sm:$0xff]
      %v1301 = vld [vmem:[#allocation2 + $0x188] sm:$0xff]
      %v1302 = vld [vmem:[#allocation2 + $0x190] sm:$0xff]
      %v1303 = vld [vmem:[#allocation2 + $0x198] sm:$0xff]
      %v1304 = vld [vmem:[#allocation2 + $0x1a0] sm:$0xff]
      %v1305 = vld [vmem:[#allocation2 + $0x1a8] sm:$0xff]
      %v1306 = vld [vmem:[#allocation2 + $0x1b0] sm:$0xff]
      %v1307 = vld [vmem:[#allocation2 + $0x1b8] sm:$0xff]
      %v1308 = vld [vmem:[#allocation2 + $0x1c0] sm:$0xff]
      %v1309 = vld [vmem:[#allocation2 + $0x1c8] sm:$0xff]
      %v1310 = vld [vmem:[#allocation2 + $0x1d0] sm:$0xff]
      %v1311 = vld [vmem:[#allocation2 + $0x1d8] sm:$0xff]
      %v1312 = vld [vmem:[#allocation2 + $0x1e0] sm:$0xff]
      %v1313 = vld [vmem:[#allocation2 + $0x1e8] sm:$0xff]
      %v1314 = vld [vmem:[#allocation2 + $0x1f0] sm:$0xff]
      %v1315 = vld [vmem:[#allocation2 + $0x1f8] sm:$0xff]
      %v1316 = vld [vmem:[#allocation2 + $0x200] sm:$0xff]
      %v1317 = vld [vmem:[#allocation2 + $0x208] sm:$0xff]
      %v1318 = vld [vmem:[#allocation2 + $0x210] sm:$0xff]
      %v1319 = vld [vmem:[#allocation2 + $0x218] sm:$0xff]
      %v1320 = vld [vmem:[#allocation2 + $0x220] sm:$0xff]
      %v1321 = vld [vmem:[#allocation2 + $0x228] sm:$0xff]
      %v1322 = vld [vmem:[#allocation2 + $0x230] sm:$0xff]
      %v1323 = vld [vmem:[#allocation2 + $0x238] sm:$0xff]
      %v1324 = vld [vmem:[#allocation2 + $0x240] sm:$0xff]
      %v1325 = vld [vmem:[#allocation2 + $0x248] sm:$0xff]
      %v1326 = vld [vmem:[#allocation2 + $0x250] sm:$0xff]
      %v1327 = vld [vmem:[#allocation2 + $0x258] sm:$0xff]
      %v1328 = vld [vmem:[#allocation2 + $0x260] sm:$0xff]
      %v1329 = vld [vmem:[#allocation2 + $0x268] sm:$0xff]
      %v1330 = vld [vmem:[#allocation2 + $0x270] sm:$0xff]
      %v1331 = vld [vmem:[#allocation2 + $0x278] sm:$0xff]
      %v1332 = vld [vmem:[#allocation2 + $0x280] sm:$0xff]
      %v1333 = vld [vmem:[#allocation2 + $0x288] sm:$0xff]
      %v1334 = vld [vmem:[#allocation2 + $0x290] sm:$0xff]
      %v1335 = vld [vmem:[#allocation2 + $0x298] sm:$0xff]
      %v1336 = vld [vmem:[#allocation2 + $0x2a0] sm:$0xff]
      %v1337 = vld [vmem:[#allocation2 + $0x2a8] sm:$0xff]
      %v1338 = vld [vmem:[#allocation2 + $0x2b0] sm:$0xff]
      %v1339 = vld [vmem:[#allocation2 + $0x2b8] sm:$0xff]
      %v1340 = vld [vmem:[#allocation2 + $0x2c0] sm:$0xff]
      %v1341 = vld [vmem:[#allocation2 + $0x2c8] sm:$0xff]
      %v1342 = vld [vmem:[#allocation2 + $0x2d0] sm:$0xff]
      %v1343 = vld [vmem:[#allocation2 + $0x2d8] sm:$0xff]
      %v1344 = vld [vmem:[#allocation2 + $0x2e0] sm:$0xff]
      %v1345 = vld [vmem:[#allocation2 + $0x2e8] sm:$0xff]
      %v1346 = vld [vmem:[#allocation2 + $0x2f0] sm:$0xff]
      %v1347 = vld [vmem:[#allocation2 + $0x2f8] sm:$0xff]
      %v1348 = vld [vmem:[#allocation2 + $0x300] sm:$0xff]
      %v1349 = vld [vmem:[#allocation2 + $0x308] sm:$0xff]
      %v1350 = vld [vmem:[#allocation2 + $0x310] sm:$0xff]
      %v1351 = vld [vmem:[#allocation2 + $0x318] sm:$0xff]
      %v1352 = vld [vmem:[#allocation2 + $0x320] sm:$0xff]
      %v1353 = vld [vmem:[#allocation2 + $0x328] sm:$0xff]
      %v1354 = vld [vmem:[#allocation2 + $0x330] sm:$0xff]
      %v1355 = vld [vmem:[#allocation2 + $0x338] sm:$0xff]
      %v1356 = vld [vmem:[#allocation2 + $0x340] sm:$0xff]
      %v1357 = vld [vmem:[#allocation2 + $0x348] sm:$0xff]
      %v1358 = vld [vmem:[#allocation2 + $0x350] sm:$0xff]
      %v1359 = vld [vmem:[#allocation2 + $0x358] sm:$0xff]
      %v1360 = vld [vmem:[#allocation2 + $0x360] sm:$0xff]
      %v1361 = vld [vmem:[#allocation2 + $0x368] sm:$0xff]
      %v1362 = vld [vmem:[#allocation2 + $0x370] sm:$0xff]
      %v1363 = vld [vmem:[#allocation2 + $0x378] sm:$0xff]
      %v1364 = vld [vmem:[#allocation2 + $0x380] sm:$0xff]
      %v1365 = vld [vmem:[#allocation2 + $0x388] sm:$0xff]
      %v1366 = vld [vmem:[#allocation2 + $0x390] sm:$0xff]
      %v1367 = vld [vmem:[#allocation2 + $0x398] sm:$0xff]
      %v1368 = vld [vmem:[#allocation2 + $0x3a0] sm:$0xff]
      %v1369 = vld [vmem:[#allocation2 + $0x3a8] sm:$0xff]
      %v1370 = vld [vmem:[#allocation2 + $0x3b0] sm:$0xff]
      %v1371 = vld [vmem:[#allocation2 + $0x3b8] sm:$0xff]
      %v1372 = vld [vmem:[#allocation2 + $0x3c0] sm:$0xff]
      %v1373 = vld [vmem:[#allocation2 + $0x3c8] sm:$0xff]
      %v1374 = vld [vmem:[#allocation2 + $0x3d0] sm:$0xff]
      %v1375 = vld [vmem:[#allocation2 + $0x3d8] sm:$0xff]
      %v1376 = vld [vmem:[#allocation2 + $0x3e0] sm:$0xff]
      %v1377 = vld [vmem:[#allocation2 + $0x3e8] sm:$0xff]
      %v1378 = vld [vmem:[#allocation2 + $0x3f0] sm:$0xff]
      %v1379 = vld [vmem:[#allocation2 + $0x3f8] sm:$0xff]
      %v1380 = vld [vmem:[#allocation2 + $0x400] sm:$0xff]
      %v1381 = vld [vmem:[#allocation2 + $0x408] sm:$0xff]
      %v1382 = vld [vmem:[#allocation2 + $0x410] sm:$0xff]
      %v1383 = vld [vmem:[#allocation2 + $0x418] sm:$0xff]
      %v1384 = vld [vmem:[#allocation2 + $0x420] sm:$0xff]
      %v1385 = vld [vmem:[#allocation2 + $0x428] sm:$0xff]
      %v1386 = vld [vmem:[#allocation2 + $0x430] sm:$0xff]
      %v1387 = vld [vmem:[#allocation2 + $0x438] sm:$0xff]
      %v1388 = vld [vmem:[#allocation2 + $0x440] sm:$0xff]
      %v1389 = vld [vmem:[#allocation2 + $0x448] sm:$0xff]
      %v1390 = vld [vmem:[#allocation2 + $0x450] sm:$0xff]
      %v1391 = vld [vmem:[#allocation2 + $0x458] sm:$0xff]
      %v1392 = vld [vmem:[#allocation2 + $0x460] sm:$0xff]
      %v1393 = vld [vmem:[#allocation2 + $0x468] sm:$0xff]
      %v1394 = vld [vmem:[#allocation2 + $0x470] sm:$0xff]
      %v1395 = vld [vmem:[#allocation2 + $0x478] sm:$0xff]
      %v1396 = vld [vmem:[#allocation2 + $0x480] sm:$0xff]
      %v1397 = vld [vmem:[#allocation2 + $0x488] sm:$0xff]
      %v1398 = vld [vmem:[#allocation2 + $0x490] sm:$0xff]
      %v1399 = vld [vmem:[#allocation2 + $0x498] sm:$0xff]
      %v1400 = vld [vmem:[#allocation2 + $0x4a0] sm:$0xff]
      %v1401 = vld [vmem:[#allocation2 + $0x4a8] sm:$0xff]
      %v1402 = vld [vmem:[#allocation2 + $0x4b0] sm:$0xff]
      %v1403 = vld [vmem:[#allocation2 + $0x4b8] sm:$0xff]
      %v1404 = vld [vmem:[#allocation2 + $0x4c0] sm:$0xff]
      %v1405 = vld [vmem:[#allocation2 + $0x4c8] sm:$0xff]
      %v1406 = vld [vmem:[#allocation2 + $0x4d0] sm:$0xff]
      %v1407 = vld [vmem:[#allocation2 + $0x4d8] sm:$0xff]
      %v1408 = vld [vmem:[#allocation2 + $0x4e0] sm:$0xff]
      %v1409 = vld [vmem:[#allocation2 + $0x4e8] sm:$0xff]
      %v1410 = vld [vmem:[#allocation2 + $0x4f0] sm:$0xff]
      %v1411 = vld [vmem:[#allocation2 + $0x4f8] sm:$0xff]
      %v1412 = vld [vmem:[#allocation2 + $0x500] sm:$0xff]
      %v1413 = vld [vmem:[#allocation2 + $0x508] sm:$0xff]
      %v1414 = vld [vmem:[#allocation2 + $0x510] sm:$0xff]
      %v1415 = vld [vmem:[#allocation2 + $0x518] sm:$0xff]
      %v1416 = vld [vmem:[#allocation2 + $0x520] sm:$0xff]
      %v1417 = vld [vmem:[#allocation2 + $0x528] sm:$0xff]
      %v1418 = vld [vmem:[#allocation2 + $0x530] sm:$0xff]
      %v1419 = vld [vmem:[#allocation2 + $0x538] sm:$0xff]
      %v1420 = vld [vmem:[#allocation2 + $0x540] sm:$0xff]
      %v1421 = vld [vmem:[#allocation2 + $0x548] sm:$0xff]
      %v1422 = vld [vmem:[#allocation2 + $0x550] sm:$0xff]
      %v1423 = vld [vmem:[#allocation2 + $0x558] sm:$0xff]
      %v1424 = vld [vmem:[#allocation2 + $0x560] sm:$0xff]
      %v1425 = vld [vmem:[#allocation2 + $0x568] sm:$0xff]
      %v1426 = vld [vmem:[#allocation2 + $0x570] sm:$0xff]
      %v1427 = vld [vmem:[#allocation2 + $0x578] sm:$0xff]
      %v1428 = vld [vmem:[#allocation2 + $0x580] sm:$0xff]
      %v1429 = vld [vmem:[#allocation2 + $0x588] sm:$0xff]
      %v1430 = vld [vmem:[#allocation2 + $0x590] sm:$0xff]
      %v1431 = vld [vmem:[#allocation2 + $0x598] sm:$0xff]
      %v1432 = vld [vmem:[#allocation2 + $0x5a0] sm:$0xff]
      %v1433 = vld [vmem:[#allocation2 + $0x5a8] sm:$0xff]
      %v1434 = vld [vmem:[#allocation2 + $0x5b0] sm:$0xff]
      %v1435 = vld [vmem:[#allocation2 + $0x5b8] sm:$0xff]
      %v1436 = vld [vmem:[#allocation2 + $0x5c0] sm:$0xff]
      %v1437 = vld [vmem:[#allocation2 + $0x5c8] sm:$0xff]
      %v1438 = vld [vmem:[#allocation2 + $0x5d0] sm:$0xff]
      %v1439 = vld [vmem:[#allocation2 + $0x5d8] sm:$0xff]
      %v1440 = vld [vmem:[#allocation2 + $0x5e0] sm:$0xff]
      %v1441 = vld [vmem:[#allocation2 + $0x5e8] sm:$0xff]
      %v1442 = vld [vmem:[#allocation2 + $0x5f0] sm:$0xff]
      %v1443 = vld [vmem:[#allocation2 + $0x5f8] sm:$0xff]
      %v1444 = vld [vmem:[#allocation2 + $0x600] sm:$0xff]
      %v1445 = vld [vmem:[#allocation2 + $0x608] sm:$0xff]
      %v1446 = vld [vmem:[#allocation2 + $0x610] sm:$0xff]
      %v1447 = vld [vmem:[#allocation2 + $0x618] sm:$0xff]
      %v1448 = vld [vmem:[#allocation2 + $0x620] sm:$0xff]
      %v1449 = vld [vmem:[#allocation2 + $0x628] sm:$0xff]
      %v1450 = vld [vmem:[#allocation2 + $0x630] sm:$0xff]
      %v1451 = vld [vmem:[#allocation2 + $0x638] sm:$0xff]
      %v1452 = vld [vmem:[#allocation2 + $0x640] sm:$0xff]
      %v1453 = vld [vmem:[#allocation2 + $0x648] sm:$0xff]
      %v1454 = vld [vmem:[#allocation2 + $0x650] sm:$0xff]
      %v1455 = vld [vmem:[#allocation2 + $0x658] sm:$0xff]
      %v1456 = vld [vmem:[#allocation2 + $0x660] sm:$0xff]
      %v1457 = vld [vmem:[#allocation2 + $0x668] sm:$0xff]
      %v1458 = vld [vmem:[#allocation2 + $0x670] sm:$0xff]
      %v1459 = vld [vmem:[#allocation2 + $0x678] sm:$0xff]
      %v1460 = vld [vmem:[#allocation2 + $0x680] sm:$0xff]
      %v1461 = vld [vmem:[#allocation2 + $0x688] sm:$0xff]
      %v1462 = vld [vmem:[#allocation2 + $0x690] sm:$0xff]
      %v1463 = vld [vmem:[#allocation2 + $0x698] sm:$0xff]
      %v1464 = vld [vmem:[#allocation2 + $0x6a0] sm:$0xff]
      %v1465 = vld [vmem:[#allocation2 + $0x6a8] sm:$0xff]
      %v1466 = vld [vmem:[#allocation2 + $0x6b0] sm:$0xff]
      %v1467 = vld [vmem:[#allocation2 + $0x6b8] sm:$0xff]
      %v1468 = vld [vmem:[#allocation2 + $0x6c0] sm:$0xff]
      %v1469 = vld [vmem:[#allocation2 + $0x6c8] sm:$0xff]
      %v1470 = vld [vmem:[#allocation2 + $0x6d0] sm:$0xff]
      %v1471 = vld [vmem:[#allocation2 + $0x6d8] sm:$0xff]
      %v1472 = vld [vmem:[#allocation2 + $0x6e0] sm:$0xff]
      %v1473 = vld [vmem:[#allocation2 + $0x6e8] sm:$0xff]
      %v1474 = vld [vmem:[#allocation2 + $0x6f0] sm:$0xff]
      %v1475 = vld [vmem:[#allocation2 + $0x6f8] sm:$0xff]
      %v1476 = vld [vmem:[#allocation2 + $0x700] sm:$0xff]
      %v1477 = vld [vmem:[#allocation2 + $0x708] sm:$0xff]
      %v1478 = vld [vmem:[#allocation2 + $0x710] sm:$0xff]
      %v1479 = vld [vmem:[#allocation2 + $0x718] sm:$0xff]
      %v1480 = vld [vmem:[#allocation2 + $0x720] sm:$0xff]
      %v1481 = vld [vmem:[#allocation2 + $0x728] sm:$0xff]
      %v1482 = vld [vmem:[#allocation2 + $0x730] sm:$0xff]
      %v1483 = vld [vmem:[#allocation2 + $0x738] sm:$0xff]
      %v1484 = vld [vmem:[#allocation2 + $0x740] sm:$0xff]
      %v1485 = vld [vmem:[#allocation2 + $0x748] sm:$0xff]
      %v1486 = vld [vmem:[#allocation2 + $0x750] sm:$0xff]
      %v1487 = vld [vmem:[#allocation2 + $0x758] sm:$0xff]
      %v1488 = vld [vmem:[#allocation2 + $0x760] sm:$0xff]
      %v1489 = vld [vmem:[#allocation2 + $0x768] sm:$0xff]
      %v1490 = vld [vmem:[#allocation2 + $0x770] sm:$0xff]
      %v1491 = vld [vmem:[#allocation2 + $0x778] sm:$0xff]
      %v1492 = vld [vmem:[#allocation2 + $0x780] sm:$0xff]
      %v1493 = vld [vmem:[#allocation2 + $0x788] sm:$0xff]
      %v1494 = vld [vmem:[#allocation2 + $0x790] sm:$0xff]
      %v1495 = vld [vmem:[#allocation2 + $0x798] sm:$0xff]
      %v1496 = vld [vmem:[#allocation2 + $0x7a0] sm:$0xff]
      %v1497 = vld [vmem:[#allocation2 + $0x7a8] sm:$0xff]
      %v1498 = vld [vmem:[#allocation2 + $0x7b0] sm:$0xff]
      %v1499 = vld [vmem:[#allocation2 + $0x7b8] sm:$0xff]
      %v1500 = vld [vmem:[#allocation2 + $0x7c0] sm:$0xff]
      %v1501 = vld [vmem:[#allocation2 + $0x7c8] sm:$0xff]
      %v1502 = vld [vmem:[#allocation2 + $0x7d0] sm:$0xff]
      %v1503 = vld [vmem:[#allocation2 + $0x7d8] sm:$0xff]
      %v1504 = vld [vmem:[#allocation2 + $0x7e0] sm:$0xff]
      %v1505 = vld [vmem:[#allocation2 + $0x7e8] sm:$0xff]
      %v1506 = vld [vmem:[#allocation2 + $0x7f0] sm:$0xff]
      %v1507 = vld [vmem:[#allocation2 + $0x7f8] sm:$0xff]
      %v1508 = vld [vmem:[#allocation2 + $0x800] sm:$0xff]
      %v1509 = vld [vmem:[#allocation2 + $0x808] sm:$0xff]
      %v1510 = vld [vmem:[#allocation2 + $0x810] sm:$0xff]
      %v1511 = vld [vmem:[#allocation2 + $0x818] sm:$0xff]
      %v1512 = vld [vmem:[#allocation2 + $0x820] sm:$0xff]
      %v1513 = vld [vmem:[#allocation2 + $0x828] sm:$0xff]
      %v1514 = vld [vmem:[#allocation2 + $0x830] sm:$0xff]
      %v1515 = vld [vmem:[#allocation2 + $0x838] sm:$0xff]
      %v1516 = vld [vmem:[#allocation2 + $0x840] sm:$0xff]
      %v1517 = vld [vmem:[#allocation2 + $0x848] sm:$0xff]
      %v1518 = vld [vmem:[#allocation2 + $0x850] sm:$0xff]
      %v1519 = vld [vmem:[#allocation2 + $0x858] sm:$0xff]
      %v1520 = vld [vmem:[#allocation2 + $0x860] sm:$0xff]
      %v1521 = vld [vmem:[#allocation2 + $0x868] sm:$0xff]
      %v1522 = vld [vmem:[#allocation2 + $0x870] sm:$0xff]
      %v1523 = vld [vmem:[#allocation2 + $0x878] sm:$0xff]
      %v1524 = vld [vmem:[#allocation2 + $0x880] sm:$0xff]
      %v1525 = vld [vmem:[#allocation2 + $0x888] sm:$0xff]
      %v1526 = vld [vmem:[#allocation2 + $0x890] sm:$0xff]
      %v1527 = vld [vmem:[#allocation2 + $0x898] sm:$0xff]
      %v1528 = vld [vmem:[#allocation2 + $0x8a0] sm:$0xff]
      %v1529 = vld [vmem:[#allocation2 + $0x8a8] sm:$0xff]
      %v1530 = vld [vmem:[#allocation2 + $0x8b0] sm:$0xff]
      %v1531 = vld [vmem:[#allocation2 + $0x8b8] sm:$0xff]
      %v1532 = vld [vmem:[#allocation2 + $0x8c0] sm:$0xff]
      %v1533 = vld [vmem:[#allocation2 + $0x8c8] sm:$0xff]
      %v1534 = vld [vmem:[#allocation2 + $0x8d0] sm:$0xff]
      %v1535 = vld [vmem:[#allocation2 + $0x8d8] sm:$0xff]
      %v1536 = vld [vmem:[#allocation2 + $0x8e0] sm:$0xff]
      %v1537 = vld [vmem:[#allocation2 + $0x8e8] sm:$0xff]
      %v1538 = vld [vmem:[#allocation2 + $0x8f0] sm:$0xff]
      %v1539 = vld [vmem:[#allocation2 + $0x8f8] sm:$0xff]
      %v1540 = vld [vmem:[#allocation2 + $0x900] sm:$0xff]
      %v1541 = vld [vmem:[#allocation2 + $0x908] sm:$0xff]
      %v1542 = vld [vmem:[#allocation2 + $0x910] sm:$0xff]
      %v1543 = vld [vmem:[#allocation2 + $0x918] sm:$0xff]
      %v1544 = vld [vmem:[#allocation2 + $0x920] sm:$0xff]
      %v1545 = vld [vmem:[#allocation2 + $0x928] sm:$0xff]
      %v1546 = vld [vmem:[#allocation2 + $0x930] sm:$0xff]
      %v1547 = vld [vmem:[#allocation2 + $0x938] sm:$0xff]
      %v1548 = vld [vmem:[#allocation2 + $0x940] sm:$0xff]
      %v1549 = vld [vmem:[#allocation2 + $0x948] sm:$0xff]
      %v1550 = vld [vmem:[#allocation2 + $0x950] sm:$0xff]
      %v1551 = vld [vmem:[#allocation2 + $0x958] sm:$0xff]
      %v1552 = vld [vmem:[#allocation2 + $0x960] sm:$0xff]
      %v1553 = vld [vmem:[#allocation2 + $0x968] sm:$0xff]
      %v1554 = vld [vmem:[#allocation2 + $0x970] sm:$0xff]
      %v1555 = vld [vmem:[#allocation2 + $0x978] sm:$0xff]
      %v1556 = vld [vmem:[#allocation2 + $0x980] sm:$0xff]
      %v1557 = vld [vmem:[#allocation2 + $0x988] sm:$0xff]
      %v1558 = vld [vmem:[#allocation2 + $0x990] sm:$0xff]
      %v1559 = vld [vmem:[#allocation2 + $0x998] sm:$0xff]
      %v1560 = vld [vmem:[#allocation2 + $0x9a0] sm:$0xff]
      %v1561 = vld [vmem:[#allocation2 + $0x9a8] sm:$0xff]
      %v1562 = vld [vmem:[#allocation2 + $0x9b0] sm:$0xff]
      %v1563 = vld [vmem:[#allocation2 + $0x9b8] sm:$0xff]
      %v1564 = vld [vmem:[#allocation2 + $0x9c0] sm:$0xff]
      %v1565 = vld [vmem:[#allocation2 + $0x9c8] sm:$0xff]
      %v1566 = vld [vmem:[#allocation2 + $0x9d0] sm:$0xff]
      %v1567 = vld [vmem:[#allocation2 + $0x9d8] sm:$0xff]
      %v1568 = vld [vmem:[#allocation2 + $0x9e0] sm:$0xff]
      %v1569 = vld [vmem:[#allocation2 + $0x9e8] sm:$0xff]
      %v1570 = vld [vmem:[#allocation2 + $0x9f0] sm:$0xff]
      %v1571 = vld [vmem:[#allocation2 + $0x9f8] sm:$0xff]
      %v1572 = vld [vmem:[#allocation2 + $0xa00] sm:$0xff]
      %v1573 = vld [vmem:[#allocation2 + $0xa08] sm:$0xff]
      %v1574 = vld [vmem:[#allocation2 + $0xa10] sm:$0xff]
      %v1575 = vld [vmem:[#allocation2 + $0xa18] sm:$0xff]
      %v1576 = vld [vmem:[#allocation2 + $0xa20] sm:$0xff]
      %v1577 = vld [vmem:[#allocation2 + $0xa28] sm:$0xff]
      %v1578 = vld [vmem:[#allocation2 + $0xa30] sm:$0xff]
      %v1579 = vld [vmem:[#allocation2 + $0xa38] sm:$0xff]
      %v1580 = vld [vmem:[#allocation2 + $0xa40] sm:$0xff]
      %v1581 = vld [vmem:[#allocation2 + $0xa48] sm:$0xff]
      %v1582 = vld [vmem:[#allocation2 + $0xa50] sm:$0xff]
      %v1583 = vld [vmem:[#allocation2 + $0xa58] sm:$0xff]
      %v1584 = vld [vmem:[#allocation2 + $0xa60] sm:$0xff]
      %v1585 = vld [vmem:[#allocation2 + $0xa68] sm:$0xff]
      %v1586 = vld [vmem:[#allocation2 + $0xa70] sm:$0xff]
      %v1587 = vld [vmem:[#allocation2 + $0xa78] sm:$0xff]
      %v1588 = vld [vmem:[#allocation2 + $0xa80] sm:$0xff]
      %v1589 = vld [vmem:[#allocation2 + $0xa88] sm:$0xff]
      %v1590 = vld [vmem:[#allocation2 + $0xa90] sm:$0xff]
      %v1591 = vld [vmem:[#allocation2 + $0xa98] sm:$0xff]
      %v1592 = vld [vmem:[#allocation2 + $0xaa0] sm:$0xff]
      %v1593 = vld [vmem:[#allocation2 + $0xaa8] sm:$0xff]
      %v1594 = vld [vmem:[#allocation2 + $0xab0] sm:$0xff]
      %v1595 = vld [vmem:[#allocation2 + $0xab8] sm:$0xff]
      %v1596 = vld [vmem:[#allocation2 + $0xac0] sm:$0xff]
      %v1597 = vld [vmem:[#allocation2 + $0xac8] sm:$0xff]
      %v1598 = vld [vmem:[#allocation2 + $0xad0] sm:$0xff]
      %v1599 = vld [vmem:[#allocation2 + $0xad8] sm:$0xff]
      %v1600 = vld [vmem:[#allocation2 + $0xae0] sm:$0xff]
      %v1601 = vld [vmem:[#allocation2 + $0xae8] sm:$0xff]
      %v1602 = vld [vmem:[#allocation2 + $0xaf0] sm:$0xff]
      %v1603 = vld [vmem:[#allocation2 + $0xaf8] sm:$0xff]
      %v1604 = vld [vmem:[#allocation2 + $0xb00] sm:$0xff]
      %v1605 = vld [vmem:[#allocation2 + $0xb08] sm:$0xff]
      %v1606 = vld [vmem:[#allocation2 + $0xb10] sm:$0xff]
      %v1607 = vld [vmem:[#allocation2 + $0xb18] sm:$0xff]
      %v1608 = vld [vmem:[#allocation2 + $0xb20] sm:$0xff]
      %v1609 = vld [vmem:[#allocation2 + $0xb28] sm:$0xff]
      %v1610 = vld [vmem:[#allocation2 + $0xb30] sm:$0xff]
      %v1611 = vld [vmem:[#allocation2 + $0xb38] sm:$0xff]
      %v1612 = vld [vmem:[#allocation2 + $0xb40] sm:$0xff]
      %v1613 = vld [vmem:[#allocation2 + $0xb48] sm:$0xff]
      %v1614 = vld [vmem:[#allocation2 + $0xb50] sm:$0xff]
      %v1615 = vld [vmem:[#allocation2 + $0xb58] sm:$0xff]
      %v1616 = vld [vmem:[#allocation2 + $0xb60] sm:$0xff]
      %v1617 = vld [vmem:[#allocation2 + $0xb68] sm:$0xff]
      %v1618 = vld [vmem:[#allocation2 + $0xb70] sm:$0xff]
      %v1619 = vld [vmem:[#allocation2 + $0xb78] sm:$0xff]
      %v1620 = vld [vmem:[#allocation2 + $0xb80] sm:$0xff]
      %v1621 = vld [vmem:[#allocation2 + $0xb88] sm:$0xff]
      %v1622 = vld [vmem:[#allocation2 + $0xb90] sm:$0xff]
      %v1623 = vld [vmem:[#allocation2 + $0xb98] sm:$0xff]
      %v1624 = vld [vmem:[#allocation2 + $0xba0] sm:$0xff]
      %v1625 = vld [vmem:[#allocation2 + $0xba8] sm:$0xff]
      %v1626 = vld [vmem:[#allocation2 + $0xbb0] sm:$0xff]
      %v1627 = vld [vmem:[#allocation2 + $0xbb8] sm:$0xff]
      %v1628 = vld [vmem:[#allocation2 + $0xbc0] sm:$0xff]
      %v1629 = vld [vmem:[#allocation2 + $0xbc8] sm:$0xff]
      %v1630 = vld [vmem:[#allocation2 + $0xbd0] sm:$0xff]
      %v1631 = vld [vmem:[#allocation2 + $0xbd8] sm:$0xff]
      %v1632 = vld [vmem:[#allocation2 + $0xbe0] sm:$0xff]
      %v1633 = vld [vmem:[#allocation2 + $0xbe8] sm:$0xff]
      %v1634 = vld [vmem:[#allocation2 + $0xbf0] sm:$0xff]
      %v1635 = vld [vmem:[#allocation2 + $0xbf8] sm:$0xff]
      %v1636 = vld [vmem:[#allocation2 + $0xc00] sm:$0xff]
      %v1637 = vld [vmem:[#allocation2 + $0xc08] sm:$0xff]
      %v1638 = vld [vmem:[#allocation2 + $0xc10] sm:$0xff]
      %v1639 = vld [vmem:[#allocation2 + $0xc18] sm:$0xff]
      %v1640 = vld [vmem:[#allocation2 + $0xc20] sm:$0xff]
      %v1641 = vld [vmem:[#allocation2 + $0xc28] sm:$0xff]
      %v1642 = vld [vmem:[#allocation2 + $0xc30] sm:$0xff]
      %v1643 = vld [vmem:[#allocation2 + $0xc38] sm:$0xff]
      %v1644 = vld [vmem:[#allocation2 + $0xc40] sm:$0xff]
      %v1645 = vld [vmem:[#allocation2 + $0xc48] sm:$0xff]
      %v1646 = vld [vmem:[#allocation2 + $0xc50] sm:$0xff]
      %v1647 = vld [vmem:[#allocation2 + $0xc58] sm:$0xff]
      %v1648 = vld [vmem:[#allocation2 + $0xc60] sm:$0xff]
      %v1649 = vld [vmem:[#allocation2 + $0xc68] sm:$0xff]
      %v1650 = vld [vmem:[#allocation2 + $0xc70] sm:$0xff]
      %v1651 = vld [vmem:[#allocation2 + $0xc78] sm:$0xff]
      %v1652 = vld [vmem:[#allocation2 + $0xc80] sm:$0xff]
      %v1653 = vld [vmem:[#allocation2 + $0xc88] sm:$0xff]
      %v1654 = vld [vmem:[#allocation2 + $0xc90] sm:$0xff]
      %v1655 = vld [vmem:[#allocation2 + $0xc98] sm:$0xff]
      %v1656 = vld [vmem:[#allocation2 + $0xca0] sm:$0xff]
      %v1657 = vld [vmem:[#allocation2 + $0xca8] sm:$0xff]
      %v1658 = vld [vmem:[#allocation2 + $0xcb0] sm:$0xff]
      %v1659 = vld [vmem:[#allocation2 + $0xcb8] sm:$0xff]
      %v1660 = vld [vmem:[#allocation2 + $0xcc0] sm:$0xff]
      %v1661 = vld [vmem:[#allocation2 + $0xcc8] sm:$0xff]
      %v1662 = vld [vmem:[#allocation2 + $0xcd0] sm:$0xff]
      %v1663 = vld [vmem:[#allocation2 + $0xcd8] sm:$0xff]
      %v1664 = vld [vmem:[#allocation2 + $0xce0] sm:$0xff]
      %v1665 = vld [vmem:[#allocation2 + $0xce8] sm:$0xff]
      %v1666 = vld [vmem:[#allocation2 + $0xcf0] sm:$0xff]
      %v1667 = vld [vmem:[#allocation2 + $0xcf8] sm:$0xff]
      %v1668 = vld [vmem:[#allocation2 + $0xd00] sm:$0xff]
      %v1669 = vld [vmem:[#allocation2 + $0xd08] sm:$0xff]
      %v1670 = vld [vmem:[#allocation2 + $0xd10] sm:$0xff]
      %v1671 = vld [vmem:[#allocation2 + $0xd18] sm:$0xff]
      %v1672 = vld [vmem:[#allocation2 + $0xd20] sm:$0xff]
      %v1673 = vld [vmem:[#allocation2 + $0xd28] sm:$0xff]
      %v1674 = vld [vmem:[#allocation2 + $0xd30] sm:$0xff]
      %v1675 = vld [vmem:[#allocation2 + $0xd38] sm:$0xff]
      %v1676 = vld [vmem:[#allocation2 + $0xd40] sm:$0xff]
      %v1677 = vld [vmem:[#allocation2 + $0xd48] sm:$0xff]
      %v1678 = vld [vmem:[#allocation2 + $0xd50] sm:$0xff]
      %v1679 = vld [vmem:[#allocation2 + $0xd58] sm:$0xff]
      %v1680 = vld [vmem:[#allocation2 + $0xd60] sm:$0xff]
      %v1681 = vld [vmem:[#allocation2 + $0xd68] sm:$0xff]
      %v1682 = vld [vmem:[#allocation2 + $0xd70] sm:$0xff]
      %v1683 = vld [vmem:[#allocation2 + $0xd78] sm:$0xff]
      %v1684 = vld [vmem:[#allocation2 + $0xd80] sm:$0xff]
      %v1685 = vld [vmem:[#allocation2 + $0xd88] sm:$0xff]
      %v1686 = vld [vmem:[#allocation2 + $0xd90] sm:$0xff]
      %v1687 = vld [vmem:[#allocation2 + $0xd98] sm:$0xff]
      %v1688 = vld [vmem:[#allocation2 + $0xda0] sm:$0xff]
      %v1689 = vld [vmem:[#allocation2 + $0xda8] sm:$0xff]
      %v1690 = vld [vmem:[#allocation2 + $0xdb0] sm:$0xff]
      %v1691 = vld [vmem:[#allocation2 + $0xdb8] sm:$0xff]
      %v1692 = vld [vmem:[#allocation2 + $0xdc0] sm:$0xff]
      %v1693 = vld [vmem:[#allocation2 + $0xdc8] sm:$0xff]
      %v1694 = vld [vmem:[#allocation2 + $0xdd0] sm:$0xff]
      %v1695 = vld [vmem:[#allocation2 + $0xdd8] sm:$0xff]
      %v1696 = vld [vmem:[#allocation2 + $0xde0] sm:$0xff]
      %v1697 = vld [vmem:[#allocation2 + $0xde8] sm:$0xff]
      %v1698 = vld [vmem:[#allocation2 + $0xdf0] sm:$0xff]
      %v1699 = vld [vmem:[#allocation2 + $0xdf8] sm:$0xff]
      %v1700 = vld [vmem:[#allocation2 + $0xe00] sm:$0xff]
      %v1701 = vld [vmem:[#allocation2 + $0xe08] sm:$0xff]
      %v1702 = vld [vmem:[#allocation2 + $0xe10] sm:$0xff]
      %v1703 = vld [vmem:[#allocation2 + $0xe18] sm:$0xff]
      %v1704 = vld [vmem:[#allocation2 + $0xe20] sm:$0xff]
      %v1705 = vld [vmem:[#allocation2 + $0xe28] sm:$0xff]
      %v1706 = vld [vmem:[#allocation2 + $0xe30] sm:$0xff]
      %v1707 = vld [vmem:[#allocation2 + $0xe38] sm:$0xff]
      %v1708 = vld [vmem:[#allocation2 + $0xe40] sm:$0xff]
      %v1709 = vld [vmem:[#allocation2 + $0xe48] sm:$0xff]
      %v1710 = vld [vmem:[#allocation2 + $0xe50] sm:$0xff]
      %v1711 = vld [vmem:[#allocation2 + $0xe58] sm:$0xff]
      %v1712 = vld [vmem:[#allocation2 + $0xe60] sm:$0xff]
      %v1713 = vld [vmem:[#allocation2 + $0xe68] sm:$0xff]
      %v1714 = vld [vmem:[#allocation2 + $0xe70] sm:$0xff]
      %v1715 = vld [vmem:[#allocation2 + $0xe78] sm:$0xff]
      %v1716 = vld [vmem:[#allocation2 + $0xe80] sm:$0xff]
      %v1717 = vld [vmem:[#allocation2 + $0xe88] sm:$0xff]
      %v1718 = vld [vmem:[#allocation2 + $0xe90] sm:$0xff]
      %v1719 = vld [vmem:[#allocation2 + $0xe98] sm:$0xff]
      %v1720 = vld [vmem:[#allocation2 + $0xea0] sm:$0xff]
      %v1721 = vld [vmem:[#allocation2 + $0xea8] sm:$0xff]
      %v1722 = vld [vmem:[#allocation2 + $0xeb0] sm:$0xff]
      %v1723 = vld [vmem:[#allocation2 + $0xeb8] sm:$0xff]
      %v1724 = vld [vmem:[#allocation2 + $0xec0] sm:$0xff]
      %v1725 = vld [vmem:[#allocation2 + $0xec8] sm:$0xff]
      %v1726 = vld [vmem:[#allocation2 + $0xed0] sm:$0xff]
      %v1727 = vld [vmem:[#allocation2 + $0xed8] sm:$0xff]
      %v1728 = vld [vmem:[#allocation2 + $0xee0] sm:$0xff]
      %v1729 = vld [vmem:[#allocation2 + $0xee8] sm:$0xff]
      %v1730 = vld [vmem:[#allocation2 + $0xef0] sm:$0xff]
      %v1731 = vld [vmem:[#allocation2 + $0xef8] sm:$0xff]
      %v1732 = vld [vmem:[#allocation2 + $0xf00] sm:$0xff]
      %v1733 = vld [vmem:[#allocation2 + $0xf08] sm:$0xff]
      %v1734 = vld [vmem:[#allocation2 + $0xf10] sm:$0xff]
      %v1735 = vld [vmem:[#allocation2 + $0xf18] sm:$0xff]
      %v1736 = vld [vmem:[#allocation2 + $0xf20] sm:$0xff]
      %v1737 = vld [vmem:[#allocation2 + $0xf28] sm:$0xff]
      %v1738 = vld [vmem:[#allocation2 + $0xf30] sm:$0xff]
      %v1739 = vld [vmem:[#allocation2 + $0xf38] sm:$0xff]
      %v1740 = vld [vmem:[#allocation2 + $0xf40] sm:$0xff]
      %v1741 = vld [vmem:[#allocation2 + $0xf48] sm:$0xff]
      %v1742 = vld [vmem:[#allocation2 + $0xf50] sm:$0xff]
      %v1743 = vld [vmem:[#allocation2 + $0xf58] sm:$0xff]
      %v1744 = vld [vmem:[#allocation2 + $0xf60] sm:$0xff]
      %v1745 = vld [vmem:[#allocation2 + $0xf68] sm:$0xff]
      %v1746 = vld [vmem:[#allocation2 + $0xf70] sm:$0xff]
      %v1747 = vld [vmem:[#allocation2 + $0xf78] sm:$0xff]
      %v1748 = vld [vmem:[#allocation2 + $0xf80] sm:$0xff]
      %v1749 = vld [vmem:[#allocation2 + $0xf88] sm:$0xff]
      %v1750 = vld [vmem:[#allocation2 + $0xf90] sm:$0xff]
      %v1751 = vld [vmem:[#allocation2 + $0xf98] sm:$0xff]
      %v1752 = vld [vmem:[#allocation2 + $0xfa0] sm:$0xff]
      %v1753 = vld [vmem:[#allocation2 + $0xfa8] sm:$0xff]
      %v1754 = vld [vmem:[#allocation2 + $0xfb0] sm:$0xff]
      %v1755 = vld [vmem:[#allocation2 + $0xfb8] sm:$0xff]
      %v1756 = vld [vmem:[#allocation2 + $0xfc0] sm:$0xff]
      %v1757 = vld [vmem:[#allocation2 + $0xfc8] sm:$0xff]
      %v1758 = vld [vmem:[#allocation2 + $0xfd0] sm:$0xff]
      %v1759 = vld [vmem:[#allocation2 + $0xfd8] sm:$0xff]
      %v1760 = vld [vmem:[#allocation2 + $0xfe0] sm:$0xff]
      %v1761 = vld [vmem:[#allocation2 + $0xfe8] sm:$0xff]
      %v1762 = vld [vmem:[#allocation2 + $0xff0] sm:$0xff]
      %v1763 = vld [vmem:[#allocation2 + $0xff8] sm:$0xff]
      %v2276 = vunpack.c.l.b16 %v736
      %v2277 = vunpack.c.l.b16 %v737
      %v2278 = vunpack.c.l.b16 %v738
      %v2279 = vunpack.c.l.b16 %v739
      %v2280 = vunpack.c.l.b16 %v740
      %v2281 = vunpack.c.l.b16 %v741
      %v2282 = vunpack.c.l.b16 %v742
      %v2283 = vunpack.c.l.b16 %v743
      %v2284 = vunpack.c.l.b16 %v744
      %v2285 = vunpack.c.l.b16 %v745
      %v2286 = vunpack.c.l.b16 %v746
      %v2287 = vunpack.c.l.b16 %v747
      %v2288 = vunpack.c.l.b16 %v748
      %v2289 = vunpack.c.l.b16 %v749
      %v2290 = vunpack.c.l.b16 %v750
      %v2291 = vunpack.c.l.b16 %v751
      %v2292 = vunpack.c.l.b16 %v752
      %v2293 = vunpack.c.l.b16 %v753
      %v2294 = vunpack.c.l.b16 %v754
      %v2295 = vunpack.c.l.b16 %v755
      %v2296 = vunpack.c.l.b16 %v756
      %v2297 = vunpack.c.l.b16 %v757
      %v2298 = vunpack.c.l.b16 %v758
      %v2299 = vunpack.c.l.b16 %v759
      %v2300 = vunpack.c.l.b16 %v760
      %v2301 = vunpack.c.l.b16 %v761
      %v2302 = vunpack.c.l.b16 %v762
      %v2303 = vunpack.c.l.b16 %v763
      %v2304 = vunpack.c.l.b16 %v764
      %v2305 = vunpack.c.l.b16 %v765
      %v2306 = vunpack.c.l.b16 %v766
      %v2307 = vunpack.c.l.b16 %v767
      %v2308 = vunpack.c.l.b16 %v768
      %v2309 = vunpack.c.l.b16 %v769
      %v2310 = vunpack.c.l.b16 %v770
      %v2311 = vunpack.c.l.b16 %v771
      %v2312 = vunpack.c.l.b16 %v772
      %v2313 = vunpack.c.l.b16 %v773
      %v2314 = vunpack.c.l.b16 %v774
      %v2315 = vunpack.c.l.b16 %v775
      %v2316 = vunpack.c.l.b16 %v776
      %v2317 = vunpack.c.l.b16 %v777
      %v2318 = vunpack.c.l.b16 %v778
      %v2319 = vunpack.c.l.b16 %v779
      %v2320 = vunpack.c.l.b16 %v780
      %v2321 = vunpack.c.l.b16 %v781
      %v2322 = vunpack.c.l.b16 %v782
      %v2323 = vunpack.c.l.b16 %v783
      %v2324 = vunpack.c.l.b16 %v784
      %v2325 = vunpack.c.l.b16 %v785
      %v2326 = vunpack.c.l.b16 %v786
      %v2327 = vunpack.c.l.b16 %v787
      %v2328 = vunpack.c.l.b16 %v788
      %v2329 = vunpack.c.l.b16 %v789
      %v2330 = vunpack.c.l.b16 %v790
      %v2331 = vunpack.c.l.b16 %v791
      %v2332 = vunpack.c.l.b16 %v792
      %v2333 = vunpack.c.l.b16 %v793
      %v2334 = vunpack.c.l.b16 %v794
      %v2335 = vunpack.c.l.b16 %v795
      %v2336 = vunpack.c.l.b16 %v796
      %v2337 = vunpack.c.l.b16 %v797
      %v2338 = vunpack.c.l.b16 %v798
      %v2339 = vunpack.c.l.b16 %v799
      %v2340 = vunpack.c.l.b16 %v800
      %v2341 = vunpack.c.l.b16 %v801
      %v2342 = vunpack.c.l.b16 %v802
      %v2343 = vunpack.c.l.b16 %v803
      %v2344 = vunpack.c.l.b16 %v804
      %v2345 = vunpack.c.l.b16 %v805
      %v2346 = vunpack.c.l.b16 %v806
      %v2347 = vunpack.c.l.b16 %v807
      %v2348 = vunpack.c.l.b16 %v808
      %v2349 = vunpack.c.l.b16 %v809
      %v2350 = vunpack.c.l.b16 %v810
      %v2351 = vunpack.c.l.b16 %v811
      %v2352 = vunpack.c.l.b16 %v812
      %v2353 = vunpack.c.l.b16 %v813
      %v2354 = vunpack.c.l.b16 %v814
      %v2355 = vunpack.c.l.b16 %v815
      %v2356 = vunpack.c.l.b16 %v816
      %v2357 = vunpack.c.l.b16 %v817
      %v2358 = vunpack.c.l.b16 %v818
      %v2359 = vunpack.c.l.b16 %v819
      %v2360 = vunpack.c.l.b16 %v820
      %v2361 = vunpack.c.l.b16 %v821
      %v2362 = vunpack.c.l.b16 %v822
      %v2363 = vunpack.c.l.b16 %v823
      %v2364 = vunpack.c.l.b16 %v824
      %v2365 = vunpack.c.l.b16 %v825
      %v2366 = vunpack.c.l.b16 %v826
      %v2367 = vunpack.c.l.b16 %v827
      %v2368 = vunpack.c.l.b16 %v828
      %v2369 = vunpack.c.l.b16 %v829
      %v2370 = vunpack.c.l.b16 %v830
      %v2371 = vunpack.c.l.b16 %v831
      %v2372 = vunpack.c.l.b16 %v832
      %v2373 = vunpack.c.l.b16 %v833
      %v2374 = vunpack.c.l.b16 %v834
      %v2375 = vunpack.c.l.b16 %v835
      %v2376 = vunpack.c.l.b16 %v836
      %v2377 = vunpack.c.l.b16 %v837
      %v2378 = vunpack.c.l.b16 %v838
      %v2379 = vunpack.c.l.b16 %v839
      %v2380 = vunpack.c.l.b16 %v840
      %v2381 = vunpack.c.l.b16 %v841
      %v2382 = vunpack.c.l.b16 %v842
      %v2383 = vunpack.c.l.b16 %v843
      %v2384 = vunpack.c.l.b16 %v844
      %v2385 = vunpack.c.l.b16 %v845
      %v2386 = vunpack.c.l.b16 %v846
      %v2387 = vunpack.c.l.b16 %v847
      %v2388 = vunpack.c.l.b16 %v848
      %v2389 = vunpack.c.l.b16 %v849
      %v2390 = vunpack.c.l.b16 %v850
      %v2391 = vunpack.c.l.b16 %v851
      %v2392 = vunpack.c.l.b16 %v852
      %v2393 = vunpack.c.l.b16 %v853
      %v2394 = vunpack.c.l.b16 %v854
      %v2395 = vunpack.c.l.b16 %v855
      %v2396 = vunpack.c.l.b16 %v856
      %v2397 = vunpack.c.l.b16 %v857
      %v2398 = vunpack.c.l.b16 %v858
      %v2399 = vunpack.c.l.b16 %v859
      %v2400 = vunpack.c.l.b16 %v860
      %v2401 = vunpack.c.l.b16 %v861
      %v2402 = vunpack.c.l.b16 %v862
      %v2403 = vunpack.c.l.b16 %v863
      %v2404 = vunpack.c.l.b16 %v864
      %v2405 = vunpack.c.l.b16 %v865
      %v2406 = vunpack.c.l.b16 %v866
      %v2407 = vunpack.c.l.b16 %v867
      %v2408 = vunpack.c.l.b16 %v868
      %v2409 = vunpack.c.l.b16 %v869
      %v2410 = vunpack.c.l.b16 %v870
      %v2411 = vunpack.c.l.b16 %v871
      %v2412 = vunpack.c.l.b16 %v872
      %v2413 = vunpack.c.l.b16 %v873
      %v2414 = vunpack.c.l.b16 %v874
      %v2415 = vunpack.c.l.b16 %v875
      %v2416 = vunpack.c.l.b16 %v876
      %v2417 = vunpack.c.l.b16 %v877
      %v2418 = vunpack.c.l.b16 %v878
      %v2419 = vunpack.c.l.b16 %v879
      %v2420 = vunpack.c.l.b16 %v880
      %v2421 = vunpack.c.l.b16 %v881
      %v2422 = vunpack.c.l.b16 %v882
      %v2423 = vunpack.c.l.b16 %v883
      %v2424 = vunpack.c.l.b16 %v884
      %v2425 = vunpack.c.l.b16 %v885
      %v2426 = vunpack.c.l.b16 %v886
      %v2427 = vunpack.c.l.b16 %v887
      %v2428 = vunpack.c.l.b16 %v888
      %v2429 = vunpack.c.l.b16 %v889
      %v2430 = vunpack.c.l.b16 %v890
      %v2431 = vunpack.c.l.b16 %v891
      %v2432 = vunpack.c.l.b16 %v892
      %v2433 = vunpack.c.l.b16 %v893
      %v2434 = vunpack.c.l.b16 %v894
      %v2435 = vunpack.c.l.b16 %v895
      %v2436 = vunpack.c.l.b16 %v896
      %v2437 = vunpack.c.l.b16 %v897
      %v2438 = vunpack.c.l.b16 %v898
      %v2439 = vunpack.c.l.b16 %v899
      %v2440 = vunpack.c.l.b16 %v900
      %v2441 = vunpack.c.l.b16 %v901
      %v2442 = vunpack.c.l.b16 %v902
      %v2443 = vunpack.c.l.b16 %v903
      %v2444 = vunpack.c.l.b16 %v904
      %v2445 = vunpack.c.l.b16 %v905
      %v2446 = vunpack.c.l.b16 %v906
      %v2447 = vunpack.c.l.b16 %v907
      %v2448 = vunpack.c.l.b16 %v908
      %v2449 = vunpack.c.l.b16 %v909
      %v2450 = vunpack.c.l.b16 %v910
      %v2451 = vunpack.c.l.b16 %v911
      %v2452 = vunpack.c.l.b16 %v912
      %v2453 = vunpack.c.l.b16 %v913
      %v2454 = vunpack.c.l.b16 %v914
      %v2455 = vunpack.c.l.b16 %v915
      %v2456 = vunpack.c.l.b16 %v916
      %v2457 = vunpack.c.l.b16 %v917
      %v2458 = vunpack.c.l.b16 %v918
      %v2459 = vunpack.c.l.b16 %v919
      %v2460 = vunpack.c.l.b16 %v920
      %v2461 = vunpack.c.l.b16 %v921
      %v2462 = vunpack.c.l.b16 %v922
      %v2463 = vunpack.c.l.b16 %v923
      %v2464 = vunpack.c.l.b16 %v924
      %v2465 = vunpack.c.l.b16 %v925
      %v2466 = vunpack.c.l.b16 %v926
      %v2467 = vunpack.c.l.b16 %v927
      %v2468 = vunpack.c.l.b16 %v928
      %v2469 = vunpack.c.l.b16 %v929
      %v2470 = vunpack.c.l.b16 %v930
      %v2471 = vunpack.c.l.b16 %v931
      %v2472 = vunpack.c.l.b16 %v932
      %v2473 = vunpack.c.l.b16 %v933
      %v2474 = vunpack.c.l.b16 %v934
      %v2475 = vunpack.c.l.b16 %v935
      %v2476 = vunpack.c.l.b16 %v936
      %v2477 = vunpack.c.l.b16 %v937
      %v2478 = vunpack.c.l.b16 %v938
      %v2479 = vunpack.c.l.b16 %v939
      %v2480 = vunpack.c.l.b16 %v940
      %v2481 = vunpack.c.l.b16 %v941
      %v2482 = vunpack.c.l.b16 %v942
      %v2483 = vunpack.c.l.b16 %v943
      %v2484 = vunpack.c.l.b16 %v944
      %v2485 = vunpack.c.l.b16 %v945
      %v2486 = vunpack.c.l.b16 %v946
      %v2487 = vunpack.c.l.b16 %v947
      %v2488 = vunpack.c.l.b16 %v948
      %v2489 = vunpack.c.l.b16 %v949
      %v2490 = vunpack.c.l.b16 %v950
      %v2491 = vunpack.c.l.b16 %v951
      %v2492 = vunpack.c.l.b16 %v952
      %v2493 = vunpack.c.l.b16 %v953
      %v2494 = vunpack.c.l.b16 %v954
      %v2495 = vunpack.c.l.b16 %v955
      %v2496 = vunpack.c.l.b16 %v956
      %v2497 = vunpack.c.l.b16 %v957
      %v2498 = vunpack.c.l.b16 %v958
      %v2499 = vunpack.c.l.b16 %v959
      %v2500 = vunpack.c.l.b16 %v960
      %v2501 = vunpack.c.l.b16 %v961
      %v2502 = vunpack.c.l.b16 %v962
      %v2503 = vunpack.c.l.b16 %v963
      %v2504 = vunpack.c.l.b16 %v964
      %v2505 = vunpack.c.l.b16 %v965
      %v2506 = vunpack.c.l.b16 %v966
      %v2507 = vunpack.c.l.b16 %v967
      %v2508 = vunpack.c.l.b16 %v968
      %v2509 = vunpack.c.l.b16 %v969
      %v2510 = vunpack.c.l.b16 %v970
      %v2511 = vunpack.c.l.b16 %v971
      %v2512 = vunpack.c.l.b16 %v972
      %v2513 = vunpack.c.l.b16 %v973
      %v2514 = vunpack.c.l.b16 %v974
      %v2515 = vunpack.c.l.b16 %v975
      %v2516 = vunpack.c.l.b16 %v976
      %v2517 = vunpack.c.l.b16 %v977
      %v2518 = vunpack.c.l.b16 %v978
      %v2519 = vunpack.c.l.b16 %v979
      %v2520 = vunpack.c.l.b16 %v980
      %v2521 = vunpack.c.l.b16 %v981
      %v2522 = vunpack.c.l.b16 %v982
      %v2523 = vunpack.c.l.b16 %v983
      %v2524 = vunpack.c.l.b16 %v984
      %v2525 = vunpack.c.l.b16 %v985
      %v2526 = vunpack.c.l.b16 %v986
      %v2527 = vunpack.c.l.b16 %v987
      %v2528 = vunpack.c.l.b16 %v988
      %v2529 = vunpack.c.l.b16 %v989
      %v2530 = vunpack.c.l.b16 %v990
      %v2531 = vunpack.c.l.b16 %v991
      %v2532 = vunpack.c.l.b16 %v992
      %v2533 = vunpack.c.l.b16 %v993
      %v2534 = vunpack.c.l.b16 %v994
      %v2535 = vunpack.c.l.b16 %v995
      %v2536 = vunpack.c.l.b16 %v996
      %v2537 = vunpack.c.l.b16 %v997
      %v2538 = vunpack.c.l.b16 %v998
      %v2539 = vunpack.c.l.b16 %v999
      %v2540 = vunpack.c.l.b16 %v1000
      %v2541 = vunpack.c.l.b16 %v1001
      %v2542 = vunpack.c.l.b16 %v1002
      %v2543 = vunpack.c.l.b16 %v1003
      %v2544 = vunpack.c.l.b16 %v1004
      %v2545 = vunpack.c.l.b16 %v1005
      %v2546 = vunpack.c.l.b16 %v1006
      %v2547 = vunpack.c.l.b16 %v1007
      %v2548 = vunpack.c.l.b16 %v1008
      %v2549 = vunpack.c.l.b16 %v1009
      %v2550 = vunpack.c.l.b16 %v1010
      %v2551 = vunpack.c.l.b16 %v1011
      %v2552 = vunpack.c.l.b16 %v1012
      %v2553 = vunpack.c.l.b16 %v1013
      %v2554 = vunpack.c.l.b16 %v1014
      %v2555 = vunpack.c.l.b16 %v1015
      %v2556 = vunpack.c.l.b16 %v1016
      %v2557 = vunpack.c.l.b16 %v1017
      %v2558 = vunpack.c.l.b16 %v1018
      %v2559 = vunpack.c.l.b16 %v1019
      %v2560 = vunpack.c.l.b16 %v1020
      %v2561 = vunpack.c.l.b16 %v1021
      %v2562 = vunpack.c.l.b16 %v1022
      %v2563 = vunpack.c.l.b16 %v1023
      %v2564 = vunpack.c.l.b16 %v1024
      %v2565 = vunpack.c.l.b16 %v1025
      %v2566 = vunpack.c.l.b16 %v1026
      %v2567 = vunpack.c.l.b16 %v1027
      %v2568 = vunpack.c.l.b16 %v1028
      %v2569 = vunpack.c.l.b16 %v1029
      %v2570 = vunpack.c.l.b16 %v1030
      %v2571 = vunpack.c.l.b16 %v1031
      %v2572 = vunpack.c.l.b16 %v1032
      %v2573 = vunpack.c.l.b16 %v1033
      %v2574 = vunpack.c.l.b16 %v1034
      %v2575 = vunpack.c.l.b16 %v1035
      %v2576 = vunpack.c.l.b16 %v1036
      %v2577 = vunpack.c.l.b16 %v1037
      %v2578 = vunpack.c.l.b16 %v1038
      %v2579 = vunpack.c.l.b16 %v1039
      %v2580 = vunpack.c.l.b16 %v1040
      %v2581 = vunpack.c.l.b16 %v1041
      %v2582 = vunpack.c.l.b16 %v1042
      %v2583 = vunpack.c.l.b16 %v1043
      %v2584 = vunpack.c.l.b16 %v1044
      %v2585 = vunpack.c.l.b16 %v1045
      %v2586 = vunpack.c.l.b16 %v1046
      %v2587 = vunpack.c.l.b16 %v1047
      %v2588 = vunpack.c.l.b16 %v1048
      %v2589 = vunpack.c.l.b16 %v1049
      %v2590 = vunpack.c.l.b16 %v1050
      %v2591 = vunpack.c.l.b16 %v1051
      %v2592 = vunpack.c.l.b16 %v1052
      %v2593 = vunpack.c.l.b16 %v1053
      %v2594 = vunpack.c.l.b16 %v1054
      %v2595 = vunpack.c.l.b16 %v1055
      %v2596 = vunpack.c.l.b16 %v1056
      %v2597 = vunpack.c.l.b16 %v1057
      %v2598 = vunpack.c.l.b16 %v1058
      %v2599 = vunpack.c.l.b16 %v1059
      %v2600 = vunpack.c.l.b16 %v1060
      %v2601 = vunpack.c.l.b16 %v1061
      %v2602 = vunpack.c.l.b16 %v1062
      %v2603 = vunpack.c.l.b16 %v1063
      %v2604 = vunpack.c.l.b16 %v1064
      %v2605 = vunpack.c.l.b16 %v1065
      %v2606 = vunpack.c.l.b16 %v1066
      %v2607 = vunpack.c.l.b16 %v1067
      %v2608 = vunpack.c.l.b16 %v1068
      %v2609 = vunpack.c.l.b16 %v1069
      %v2610 = vunpack.c.l.b16 %v1070
      %v2611 = vunpack.c.l.b16 %v1071
      %v2612 = vunpack.c.l.b16 %v1072
      %v2613 = vunpack.c.l.b16 %v1073
      %v2614 = vunpack.c.l.b16 %v1074
      %v2615 = vunpack.c.l.b16 %v1075
      %v2616 = vunpack.c.l.b16 %v1076
      %v2617 = vunpack.c.l.b16 %v1077
      %v2618 = vunpack.c.l.b16 %v1078
      %v2619 = vunpack.c.l.b16 %v1079
      %v2620 = vunpack.c.l.b16 %v1080
      %v2621 = vunpack.c.l.b16 %v1081
      %v2622 = vunpack.c.l.b16 %v1082
      %v2623 = vunpack.c.l.b16 %v1083
      %v2624 = vunpack.c.l.b16 %v1084
      %v2625 = vunpack.c.l.b16 %v1085
      %v2626 = vunpack.c.l.b16 %v1086
      %v2627 = vunpack.c.l.b16 %v1087
      %v2628 = vunpack.c.l.b16 %v1088
      %v2629 = vunpack.c.l.b16 %v1089
      %v2630 = vunpack.c.l.b16 %v1090
      %v2631 = vunpack.c.l.b16 %v1091
      %v2632 = vunpack.c.l.b16 %v1092
      %v2633 = vunpack.c.l.b16 %v1093
      %v2634 = vunpack.c.l.b16 %v1094
      %v2635 = vunpack.c.l.b16 %v1095
      %v2636 = vunpack.c.l.b16 %v1096
      %v2637 = vunpack.c.l.b16 %v1097
      %v2638 = vunpack.c.l.b16 %v1098
      %v2639 = vunpack.c.l.b16 %v1099
      %v2640 = vunpack.c.l.b16 %v1100
      %v2641 = vunpack.c.l.b16 %v1101
      %v2642 = vunpack.c.l.b16 %v1102
      %v2643 = vunpack.c.l.b16 %v1103
      %v2644 = vunpack.c.l.b16 %v1104
      %v2645 = vunpack.c.l.b16 %v1105
      %v2646 = vunpack.c.l.b16 %v1106
      %v2647 = vunpack.c.l.b16 %v1107
      %v2648 = vunpack.c.l.b16 %v1108
      %v2649 = vunpack.c.l.b16 %v1109
      %v2650 = vunpack.c.l.b16 %v1110
      %v2651 = vunpack.c.l.b16 %v1111
      %v2652 = vunpack.c.l.b16 %v1112
      %v2653 = vunpack.c.l.b16 %v1113
      %v2654 = vunpack.c.l.b16 %v1114
      %v2655 = vunpack.c.l.b16 %v1115
      %v2656 = vunpack.c.l.b16 %v1116
      %v2657 = vunpack.c.l.b16 %v1117
      %v2658 = vunpack.c.l.b16 %v1118
      %v2659 = vunpack.c.l.b16 %v1119
      %v2660 = vunpack.c.l.b16 %v1120
      %v2661 = vunpack.c.l.b16 %v1121
      %v2662 = vunpack.c.l.b16 %v1122
      %v2663 = vunpack.c.l.b16 %v1123
      %v2664 = vunpack.c.l.b16 %v1124
      %v2665 = vunpack.c.l.b16 %v1125
      %v2666 = vunpack.c.l.b16 %v1126
      %v2667 = vunpack.c.l.b16 %v1127
      %v2668 = vunpack.c.l.b16 %v1128
      %v2669 = vunpack.c.l.b16 %v1129
      %v2670 = vunpack.c.l.b16 %v1130
      %v2671 = vunpack.c.l.b16 %v1131
      %v2672 = vunpack.c.l.b16 %v1132
      %v2673 = vunpack.c.l.b16 %v1133
      %v2674 = vunpack.c.l.b16 %v1134
      %v2675 = vunpack.c.l.b16 %v1135
      %v2676 = vunpack.c.l.b16 %v1136
      %v2677 = vunpack.c.l.b16 %v1137
      %v2678 = vunpack.c.l.b16 %v1138
      %v2679 = vunpack.c.l.b16 %v1139
      %v2680 = vunpack.c.l.b16 %v1140
      %v2681 = vunpack.c.l.b16 %v1141
      %v2682 = vunpack.c.l.b16 %v1142
      %v2683 = vunpack.c.l.b16 %v1143
      %v2684 = vunpack.c.l.b16 %v1144
      %v2685 = vunpack.c.l.b16 %v1145
      %v2686 = vunpack.c.l.b16 %v1146
      %v2687 = vunpack.c.l.b16 %v1147
      %v2688 = vunpack.c.l.b16 %v1148
      %v2689 = vunpack.c.l.b16 %v1149
      %v2690 = vunpack.c.l.b16 %v1150
      %v2691 = vunpack.c.l.b16 %v1151
      %v2692 = vunpack.c.l.b16 %v1152
      %v2693 = vunpack.c.l.b16 %v1153
      %v2694 = vunpack.c.l.b16 %v1154
      %v2695 = vunpack.c.l.b16 %v1155
      %v2696 = vunpack.c.l.b16 %v1156
      %v2697 = vunpack.c.l.b16 %v1157
      %v2698 = vunpack.c.l.b16 %v1158
      %v2699 = vunpack.c.l.b16 %v1159
      %v2700 = vunpack.c.l.b16 %v1160
      %v2701 = vunpack.c.l.b16 %v1161
      %v2702 = vunpack.c.l.b16 %v1162
      %v2703 = vunpack.c.l.b16 %v1163
      %v2704 = vunpack.c.l.b16 %v1164
      %v2705 = vunpack.c.l.b16 %v1165
      %v2706 = vunpack.c.l.b16 %v1166
      %v2707 = vunpack.c.l.b16 %v1167
      %v2708 = vunpack.c.l.b16 %v1168
      %v2709 = vunpack.c.l.b16 %v1169
      %v2710 = vunpack.c.l.b16 %v1170
      %v2711 = vunpack.c.l.b16 %v1171
      %v2712 = vunpack.c.l.b16 %v1172
      %v2713 = vunpack.c.l.b16 %v1173
      %v2714 = vunpack.c.l.b16 %v1174
      %v2715 = vunpack.c.l.b16 %v1175
      %v2716 = vunpack.c.l.b16 %v1176
      %v2717 = vunpack.c.l.b16 %v1177
      %v2718 = vunpack.c.l.b16 %v1178
      %v2719 = vunpack.c.l.b16 %v1179
      %v2720 = vunpack.c.l.b16 %v1180
      %v2721 = vunpack.c.l.b16 %v1181
      %v2722 = vunpack.c.l.b16 %v1182
      %v2723 = vunpack.c.l.b16 %v1183
      %v2724 = vunpack.c.l.b16 %v1184
      %v2725 = vunpack.c.l.b16 %v1185
      %v2726 = vunpack.c.l.b16 %v1186
      %v2727 = vunpack.c.l.b16 %v1187
      %v2728 = vunpack.c.l.b16 %v1188
      %v2729 = vunpack.c.l.b16 %v1189
      %v2730 = vunpack.c.l.b16 %v1190
      %v2731 = vunpack.c.l.b16 %v1191
      %v2732 = vunpack.c.l.b16 %v1192
      %v2733 = vunpack.c.l.b16 %v1193
      %v2734 = vunpack.c.l.b16 %v1194
      %v2735 = vunpack.c.l.b16 %v1195
      %v2736 = vunpack.c.l.b16 %v1196
      %v2737 = vunpack.c.l.b16 %v1197
      %v2738 = vunpack.c.l.b16 %v1198
      %v2739 = vunpack.c.l.b16 %v1199
      %v2740 = vunpack.c.l.b16 %v1200
      %v2741 = vunpack.c.l.b16 %v1201
      %v2742 = vunpack.c.l.b16 %v1202
      %v2743 = vunpack.c.l.b16 %v1203
      %v2744 = vunpack.c.l.b16 %v1204
      %v2745 = vunpack.c.l.b16 %v1205
      %v2746 = vunpack.c.l.b16 %v1206
      %v2747 = vunpack.c.l.b16 %v1207
      %v2748 = vunpack.c.l.b16 %v1208
      %v2749 = vunpack.c.l.b16 %v1209
      %v2750 = vunpack.c.l.b16 %v1210
      %v2751 = vunpack.c.l.b16 %v1211
      %v2752 = vunpack.c.l.b16 %v1212
      %v2753 = vunpack.c.l.b16 %v1213
      %v2754 = vunpack.c.l.b16 %v1214
      %v2755 = vunpack.c.l.b16 %v1215
      %v2756 = vunpack.c.l.b16 %v1216
      %v2757 = vunpack.c.l.b16 %v1217
      %v2758 = vunpack.c.l.b16 %v1218
      %v2759 = vunpack.c.l.b16 %v1219
      %v2760 = vunpack.c.l.b16 %v1220
      %v2761 = vunpack.c.l.b16 %v1221
      %v2762 = vunpack.c.l.b16 %v1222
      %v2763 = vunpack.c.l.b16 %v1223
      %v2764 = vunpack.c.l.b16 %v1224
      %v2765 = vunpack.c.l.b16 %v1225
      %v2766 = vunpack.c.l.b16 %v1226
      %v2767 = vunpack.c.l.b16 %v1227
      %v2768 = vunpack.c.l.b16 %v1228
      %v2769 = vunpack.c.l.b16 %v1229
      %v2770 = vunpack.c.l.b16 %v1230
      %v2771 = vunpack.c.l.b16 %v1231
      %v2772 = vunpack.c.l.b16 %v1232
      %v2773 = vunpack.c.l.b16 %v1233
      %v2774 = vunpack.c.l.b16 %v1234
      %v2775 = vunpack.c.l.b16 %v1235
      %v2776 = vunpack.c.l.b16 %v1236
      %v2777 = vunpack.c.l.b16 %v1237
      %v2778 = vunpack.c.l.b16 %v1238
      %v2779 = vunpack.c.l.b16 %v1239
      %v2780 = vunpack.c.l.b16 %v1240
      %v2781 = vunpack.c.l.b16 %v1241
      %v2782 = vunpack.c.l.b16 %v1242
      %v2783 = vunpack.c.l.b16 %v1243
      %v2784 = vunpack.c.l.b16 %v1244
      %v2785 = vunpack.c.l.b16 %v1245
      %v2786 = vunpack.c.l.b16 %v1246
      %v2787 = vunpack.c.l.b16 %v1247
      %v2788 = vpack.c.b16 %v2277, %v2276
      %v2789 = vpack.c.b16 %v2279, %v2278
      %v2790 = vpack.c.b16 %v2281, %v2280
      %v2791 = vpack.c.b16 %v2283, %v2282
      %v2792 = vpack.c.b16 %v2285, %v2284
      %v2793 = vpack.c.b16 %v2287, %v2286
      %v2794 = vpack.c.b16 %v2289, %v2288
      %v2795 = vpack.c.b16 %v2291, %v2290
      %v2796 = vpack.c.b16 %v2293, %v2292
      %v2797 = vpack.c.b16 %v2295, %v2294
      %v2798 = vpack.c.b16 %v2297, %v2296
      %v2799 = vpack.c.b16 %v2299, %v2298
      %v2800 = vpack.c.b16 %v2301, %v2300
      %v2801 = vpack.c.b16 %v2303, %v2302
      %v2802 = vpack.c.b16 %v2305, %v2304
      %v2803 = vpack.c.b16 %v2307, %v2306
      %v2804 = vpack.c.b16 %v2309, %v2308
      %v2805 = vpack.c.b16 %v2311, %v2310
      %v2806 = vpack.c.b16 %v2313, %v2312
      %v2807 = vpack.c.b16 %v2315, %v2314
      %v2808 = vpack.c.b16 %v2317, %v2316
      %v2809 = vpack.c.b16 %v2319, %v2318
      %v2810 = vpack.c.b16 %v2321, %v2320
      %v2811 = vpack.c.b16 %v2323, %v2322
      %v2812 = vpack.c.b16 %v2325, %v2324
      %v2813 = vpack.c.b16 %v2327, %v2326
      %v2814 = vpack.c.b16 %v2329, %v2328
      %v2815 = vpack.c.b16 %v2331, %v2330
      %v2816 = vpack.c.b16 %v2333, %v2332
      %v2817 = vpack.c.b16 %v2335, %v2334
      %v2818 = vpack.c.b16 %v2337, %v2336
      %v2819 = vpack.c.b16 %v2339, %v2338
      %v2820 = vpack.c.b16 %v2341, %v2340
      %v2821 = vpack.c.b16 %v2343, %v2342
      %v2822 = vpack.c.b16 %v2345, %v2344
      %v2823 = vpack.c.b16 %v2347, %v2346
      %v2824 = vpack.c.b16 %v2349, %v2348
      %v2825 = vpack.c.b16 %v2351, %v2350
      %v2826 = vpack.c.b16 %v2353, %v2352
      %v2827 = vpack.c.b16 %v2355, %v2354
      %v2828 = vpack.c.b16 %v2357, %v2356
      %v2829 = vpack.c.b16 %v2359, %v2358
      %v2830 = vpack.c.b16 %v2361, %v2360
      %v2831 = vpack.c.b16 %v2363, %v2362
      %v2832 = vpack.c.b16 %v2365, %v2364
      %v2833 = vpack.c.b16 %v2367, %v2366
      %v2834 = vpack.c.b16 %v2369, %v2368
      %v2835 = vpack.c.b16 %v2371, %v2370
      %v2836 = vpack.c.b16 %v2373, %v2372
      %v2837 = vpack.c.b16 %v2375, %v2374
      %v2838 = vpack.c.b16 %v2377, %v2376
      %v2839 = vpack.c.b16 %v2379, %v2378
      %v2840 = vpack.c.b16 %v2381, %v2380
      %v2841 = vpack.c.b16 %v2383, %v2382
      %v2842 = vpack.c.b16 %v2385, %v2384
      %v2843 = vpack.c.b16 %v2387, %v2386
      %v2844 = vpack.c.b16 %v2389, %v2388
      %v2845 = vpack.c.b16 %v2391, %v2390
      %v2846 = vpack.c.b16 %v2393, %v2392
      %v2847 = vpack.c.b16 %v2395, %v2394
      %v2848 = vpack.c.b16 %v2397, %v2396
      %v2849 = vpack.c.b16 %v2399, %v2398
      %v2850 = vpack.c.b16 %v2401, %v2400
      %v2851 = vpack.c.b16 %v2403, %v2402
      %v2852 = vpack.c.b16 %v2405, %v2404
      %v2853 = vpack.c.b16 %v2407, %v2406
      %v2854 = vpack.c.b16 %v2409, %v2408
      %v2855 = vpack.c.b16 %v2411, %v2410
      %v2856 = vpack.c.b16 %v2413, %v2412
      %v2857 = vpack.c.b16 %v2415, %v2414
      %v2858 = vpack.c.b16 %v2417, %v2416
      %v2859 = vpack.c.b16 %v2419, %v2418
      %v2860 = vpack.c.b16 %v2421, %v2420
      %v2861 = vpack.c.b16 %v2423, %v2422
      %v2862 = vpack.c.b16 %v2425, %v2424
      %v2863 = vpack.c.b16 %v2427, %v2426
      %v2864 = vpack.c.b16 %v2429, %v2428
      %v2865 = vpack.c.b16 %v2431, %v2430
      %v2866 = vpack.c.b16 %v2433, %v2432
      %v2867 = vpack.c.b16 %v2435, %v2434
      %v2868 = vpack.c.b16 %v2437, %v2436
      %v2869 = vpack.c.b16 %v2439, %v2438
      %v2870 = vpack.c.b16 %v2441, %v2440
      %v2871 = vpack.c.b16 %v2443, %v2442
      %v2872 = vpack.c.b16 %v2445, %v2444
      %v2873 = vpack.c.b16 %v2447, %v2446
      %v2874 = vpack.c.b16 %v2449, %v2448
      %v2875 = vpack.c.b16 %v2451, %v2450
      %v2876 = vpack.c.b16 %v2453, %v2452
      %v2877 = vpack.c.b16 %v2455, %v2454
      %v2878 = vpack.c.b16 %v2457, %v2456
      %v2879 = vpack.c.b16 %v2459, %v2458
      %v2880 = vpack.c.b16 %v2461, %v2460
      %v2881 = vpack.c.b16 %v2463, %v2462
      %v2882 = vpack.c.b16 %v2465, %v2464
      %v2883 = vpack.c.b16 %v2467, %v2466
      %v2884 = vpack.c.b16 %v2469, %v2468
      %v2885 = vpack.c.b16 %v2471, %v2470
      %v2886 = vpack.c.b16 %v2473, %v2472
      %v2887 = vpack.c.b16 %v2475, %v2474
      %v2888 = vpack.c.b16 %v2477, %v2476
      %v2889 = vpack.c.b16 %v2479, %v2478
      %v2890 = vpack.c.b16 %v2481, %v2480
      %v2891 = vpack.c.b16 %v2483, %v2482
      %v2892 = vpack.c.b16 %v2485, %v2484
      %v2893 = vpack.c.b16 %v2487, %v2486
      %v2894 = vpack.c.b16 %v2489, %v2488
      %v2895 = vpack.c.b16 %v2491, %v2490
      %v2896 = vpack.c.b16 %v2493, %v2492
      %v2897 = vpack.c.b16 %v2495, %v2494
      %v2898 = vpack.c.b16 %v2497, %v2496
      %v2899 = vpack.c.b16 %v2499, %v2498
      %v2900 = vpack.c.b16 %v2501, %v2500
      %v2901 = vpack.c.b16 %v2503, %v2502
      %v2902 = vpack.c.b16 %v2505, %v2504
      %v2903 = vpack.c.b16 %v2507, %v2506
      %v2904 = vpack.c.b16 %v2509, %v2508
      %v2905 = vpack.c.b16 %v2511, %v2510
      %v2906 = vpack.c.b16 %v2513, %v2512
      %v2907 = vpack.c.b16 %v2515, %v2514
      %v2908 = vpack.c.b16 %v2517, %v2516
      %v2909 = vpack.c.b16 %v2519, %v2518
      %v2910 = vpack.c.b16 %v2521, %v2520
      %v2911 = vpack.c.b16 %v2523, %v2522
      %v2912 = vpack.c.b16 %v2525, %v2524
      %v2913 = vpack.c.b16 %v2527, %v2526
      %v2914 = vpack.c.b16 %v2529, %v2528
      %v2915 = vpack.c.b16 %v2531, %v2530
      %v2916 = vpack.c.b16 %v2533, %v2532
      %v2917 = vpack.c.b16 %v2535, %v2534
      %v2918 = vpack.c.b16 %v2537, %v2536
      %v2919 = vpack.c.b16 %v2539, %v2538
      %v2920 = vpack.c.b16 %v2541, %v2540
      %v2921 = vpack.c.b16 %v2543, %v2542
      %v2922 = vpack.c.b16 %v2545, %v2544
      %v2923 = vpack.c.b16 %v2547, %v2546
      %v2924 = vpack.c.b16 %v2549, %v2548
      %v2925 = vpack.c.b16 %v2551, %v2550
      %v2926 = vpack.c.b16 %v2553, %v2552
      %v2927 = vpack.c.b16 %v2555, %v2554
      %v2928 = vpack.c.b16 %v2557, %v2556
      %v2929 = vpack.c.b16 %v2559, %v2558
      %v2930 = vpack.c.b16 %v2561, %v2560
      %v2931 = vpack.c.b16 %v2563, %v2562
      %v2932 = vpack.c.b16 %v2565, %v2564
      %v2933 = vpack.c.b16 %v2567, %v2566
      %v2934 = vpack.c.b16 %v2569, %v2568
      %v2935 = vpack.c.b16 %v2571, %v2570
      %v2936 = vpack.c.b16 %v2573, %v2572
      %v2937 = vpack.c.b16 %v2575, %v2574
      %v2938 = vpack.c.b16 %v2577, %v2576
      %v2939 = vpack.c.b16 %v2579, %v2578
      %v2940 = vpack.c.b16 %v2581, %v2580
      %v2941 = vpack.c.b16 %v2583, %v2582
      %v2942 = vpack.c.b16 %v2585, %v2584
      %v2943 = vpack.c.b16 %v2587, %v2586
      %v2944 = vpack.c.b16 %v2589, %v2588
      %v2945 = vpack.c.b16 %v2591, %v2590
      %v2946 = vpack.c.b16 %v2593, %v2592
      %v2947 = vpack.c.b16 %v2595, %v2594
      %v2948 = vpack.c.b16 %v2597, %v2596
      %v2949 = vpack.c.b16 %v2599, %v2598
      %v2950 = vpack.c.b16 %v2601, %v2600
      %v2951 = vpack.c.b16 %v2603, %v2602
      %v2952 = vpack.c.b16 %v2605, %v2604
      %v2953 = vpack.c.b16 %v2607, %v2606
      %v2954 = vpack.c.b16 %v2609, %v2608
      %v2955 = vpack.c.b16 %v2611, %v2610
      %v2956 = vpack.c.b16 %v2613, %v2612
      %v2957 = vpack.c.b16 %v2615, %v2614
      %v2958 = vpack.c.b16 %v2617, %v2616
      %v2959 = vpack.c.b16 %v2619, %v2618
      %v2960 = vpack.c.b16 %v2621, %v2620
      %v2961 = vpack.c.b16 %v2623, %v2622
      %v2962 = vpack.c.b16 %v2625, %v2624
      %v2963 = vpack.c.b16 %v2627, %v2626
      %v2964 = vpack.c.b16 %v2629, %v2628
      %v2965 = vpack.c.b16 %v2631, %v2630
      %v2966 = vpack.c.b16 %v2633, %v2632
      %v2967 = vpack.c.b16 %v2635, %v2634
      %v2968 = vpack.c.b16 %v2637, %v2636
      %v2969 = vpack.c.b16 %v2639, %v2638
      %v2970 = vpack.c.b16 %v2641, %v2640
      %v2971 = vpack.c.b16 %v2643, %v2642
      %v2972 = vpack.c.b16 %v2645, %v2644
      %v2973 = vpack.c.b16 %v2647, %v2646
      %v2974 = vpack.c.b16 %v2649, %v2648
      %v2975 = vpack.c.b16 %v2651, %v2650
      %v2976 = vpack.c.b16 %v2653, %v2652
      %v2977 = vpack.c.b16 %v2655, %v2654
      %v2978 = vpack.c.b16 %v2657, %v2656
      %v2979 = vpack.c.b16 %v2659, %v2658
      %v2980 = vpack.c.b16 %v2661, %v2660
      %v2981 = vpack.c.b16 %v2663, %v2662
      %v2982 = vpack.c.b16 %v2665, %v2664
      %v2983 = vpack.c.b16 %v2667, %v2666
      %v2984 = vpack.c.b16 %v2669, %v2668
      %v2985 = vpack.c.b16 %v2671, %v2670
      %v2986 = vpack.c.b16 %v2673, %v2672
      %v2987 = vpack.c.b16 %v2675, %v2674
      %v2988 = vpack.c.b16 %v2677, %v2676
      %v2989 = vpack.c.b16 %v2679, %v2678
      %v2990 = vpack.c.b16 %v2681, %v2680
      %v2991 = vpack.c.b16 %v2683, %v2682
      %v2992 = vpack.c.b16 %v2685, %v2684
      %v2993 = vpack.c.b16 %v2687, %v2686
      %v2994 = vpack.c.b16 %v2689, %v2688
      %v2995 = vpack.c.b16 %v2691, %v2690
      %v2996 = vpack.c.b16 %v2693, %v2692
      %v2997 = vpack.c.b16 %v2695, %v2694
      %v2998 = vpack.c.b16 %v2697, %v2696
      %v2999 = vpack.c.b16 %v2699, %v2698
      %v3000 = vpack.c.b16 %v2701, %v2700
      %v3001 = vpack.c.b16 %v2703, %v2702
      %v3002 = vpack.c.b16 %v2705, %v2704
      %v3003 = vpack.c.b16 %v2707, %v2706
      %v3004 = vpack.c.b16 %v2709, %v2708
      %v3005 = vpack.c.b16 %v2711, %v2710
      %v3006 = vpack.c.b16 %v2713, %v2712
      %v3007 = vpack.c.b16 %v2715, %v2714
      %v3008 = vpack.c.b16 %v2717, %v2716
      %v3009 = vpack.c.b16 %v2719, %v2718
      %v3010 = vpack.c.b16 %v2721, %v2720
      %v3011 = vpack.c.b16 %v2723, %v2722
      %v3012 = vpack.c.b16 %v2725, %v2724
      %v3013 = vpack.c.b16 %v2727, %v2726
      %v3014 = vpack.c.b16 %v2729, %v2728
      %v3015 = vpack.c.b16 %v2731, %v2730
      %v3016 = vpack.c.b16 %v2733, %v2732
      %v3017 = vpack.c.b16 %v2735, %v2734
      %v3018 = vpack.c.b16 %v2737, %v2736
      %v3019 = vpack.c.b16 %v2739, %v2738
      %v3020 = vpack.c.b16 %v2741, %v2740
      %v3021 = vpack.c.b16 %v2743, %v2742
      %v3022 = vpack.c.b16 %v2745, %v2744
      %v3023 = vpack.c.b16 %v2747, %v2746
      %v3024 = vpack.c.b16 %v2749, %v2748
      %v3025 = vpack.c.b16 %v2751, %v2750
      %v3026 = vpack.c.b16 %v2753, %v2752
      %v3027 = vpack.c.b16 %v2755, %v2754
      %v3028 = vpack.c.b16 %v2757, %v2756
      %v3029 = vpack.c.b16 %v2759, %v2758
      %v3030 = vpack.c.b16 %v2761, %v2760
      %v3031 = vpack.c.b16 %v2763, %v2762
      %v3032 = vpack.c.b16 %v2765, %v2764
      %v3033 = vpack.c.b16 %v2767, %v2766
      %v3034 = vpack.c.b16 %v2769, %v2768
      %v3035 = vpack.c.b16 %v2771, %v2770
      %v3036 = vpack.c.b16 %v2773, %v2772
      %v3037 = vpack.c.b16 %v2775, %v2774
      %v3038 = vpack.c.b16 %v2777, %v2776
      %v3039 = vpack.c.b16 %v2779, %v2778
      %v3040 = vpack.c.b16 %v2781, %v2780
      %v3041 = vpack.c.b16 %v2783, %v2782
      %v3042 = vpack.c.b16 %v2785, %v2784
      %v3043 = vpack.c.b16 %v2787, %v2786
      %v3048 = vunpack.c.l.b16 %v1248
      %v3049 = vunpack.c.l.b16 %v1249
      %v3050 = vunpack.c.l.b16 %v1250
      %v3051 = vunpack.c.l.b16 %v1251
      %v3052 = vpack.c.b16 %v3049, %v3048
      %v3053 = vpack.c.b16 %v3051, %v3050
      %vm3055 = vcmask 220160
      %v3057 = vsel %vm3055, %v2788, 0
      %v3060 = vsel %vm3055, %v2789, 0
      %v3063 = vsel %vm3055, %v2790, 0
      %v3066 = vsel %vm3055, %v2791, 0
      %v3069 = vsel %vm3055, %v2792, 0
      %v3072 = vsel %vm3055, %v2793, 0
      %v3075 = vsel %vm3055, %v2794, 0
      %v3078 = vsel %vm3055, %v2795, 0
      %v3081 = vsel %vm3055, %v2796, 0
      %v3084 = vsel %vm3055, %v2797, 0
      %v3087 = vsel %vm3055, %v2798, 0
      %v3090 = vsel %vm3055, %v2799, 0
      %v3093 = vsel %vm3055, %v2800, 0
      %v3096 = vsel %vm3055, %v2801, 0
      %v3099 = vsel %vm3055, %v2802, 0
      %v3102 = vsel %vm3055, %v2803, 0
      %v3105 = vsel %vm3055, %v2804, 0
      %v3108 = vsel %vm3055, %v2805, 0
      %v3111 = vsel %vm3055, %v2806, 0
      %v3114 = vsel %vm3055, %v2807, 0
      %v3117 = vsel %vm3055, %v2808, 0
      %v3120 = vsel %vm3055, %v2809, 0
      %v3123 = vsel %vm3055, %v2810, 0
      %v3126 = vsel %vm3055, %v2811, 0
      %v3129 = vsel %vm3055, %v2812, 0
      %v3132 = vsel %vm3055, %v2813, 0
      %v3135 = vsel %vm3055, %v2814, 0
      %v3138 = vsel %vm3055, %v2815, 0
      %v3141 = vsel %vm3055, %v2816, 0
      %v3144 = vsel %vm3055, %v2817, 0
      %v3147 = vsel %vm3055, %v2818, 0
      %v3150 = vsel %vm3055, %v2819, 0
      %v3153 = vsel %vm3055, %v2820, 0
      %v3156 = vsel %vm3055, %v2821, 0
      %v3159 = vsel %vm3055, %v2822, 0
      %v3162 = vsel %vm3055, %v2823, 0
      %v3165 = vsel %vm3055, %v2824, 0
      %v3168 = vsel %vm3055, %v2825, 0
      %v3171 = vsel %vm3055, %v2826, 0
      %v3174 = vsel %vm3055, %v2827, 0
      %v3177 = vsel %vm3055, %v2828, 0
      %v3180 = vsel %vm3055, %v2829, 0
      %v3183 = vsel %vm3055, %v2830, 0
      %v3186 = vsel %vm3055, %v2831, 0
      %v3189 = vsel %vm3055, %v2832, 0
      %v3192 = vsel %vm3055, %v2833, 0
      %v3195 = vsel %vm3055, %v2834, 0
      %v3198 = vsel %vm3055, %v2835, 0
      %v3201 = vsel %vm3055, %v2836, 0
      %v3204 = vsel %vm3055, %v2837, 0
      %v3207 = vsel %vm3055, %v2838, 0
      %v3210 = vsel %vm3055, %v2839, 0
      %v3213 = vsel %vm3055, %v2840, 0
      %v3216 = vsel %vm3055, %v2841, 0
      %v3219 = vsel %vm3055, %v2842, 0
      %v3222 = vsel %vm3055, %v2843, 0
      %v3225 = vsel %vm3055, %v2844, 0
      %v3228 = vsel %vm3055, %v2845, 0
      %v3231 = vsel %vm3055, %v2846, 0
      %v3234 = vsel %vm3055, %v2847, 0
      %v3237 = vsel %vm3055, %v2848, 0
      %v3240 = vsel %vm3055, %v2849, 0
      %v3243 = vsel %vm3055, %v2850, 0
      %v3246 = vsel %vm3055, %v2851, 0
      %v3249 = vsel %vm3055, %v2852, 0
      %v3252 = vsel %vm3055, %v2853, 0
      %v3255 = vsel %vm3055, %v2854, 0
      %v3258 = vsel %vm3055, %v2855, 0
      %v3261 = vsel %vm3055, %v2856, 0
      %v3264 = vsel %vm3055, %v2857, 0
      %v3267 = vsel %vm3055, %v2858, 0
      %v3270 = vsel %vm3055, %v2859, 0
      %v3273 = vsel %vm3055, %v2860, 0
      %v3276 = vsel %vm3055, %v2861, 0
      %v3279 = vsel %vm3055, %v2862, 0
      %v3282 = vsel %vm3055, %v2863, 0
      %v3285 = vsel %vm3055, %v2864, 0
      %v3288 = vsel %vm3055, %v2865, 0
      %v3291 = vsel %vm3055, %v2866, 0
      %v3294 = vsel %vm3055, %v2867, 0
      %v3297 = vsel %vm3055, %v2868, 0
      %v3300 = vsel %vm3055, %v2869, 0
      %v3303 = vsel %vm3055, %v2870, 0
      %v3306 = vsel %vm3055, %v2871, 0
      %v3309 = vsel %vm3055, %v2872, 0
      %v3312 = vsel %vm3055, %v2873, 0
      %v3315 = vsel %vm3055, %v2874, 0
      %v3318 = vsel %vm3055, %v2875, 0
      %v3321 = vsel %vm3055, %v2876, 0
      %v3324 = vsel %vm3055, %v2877, 0
      %v3327 = vsel %vm3055, %v2878, 0
      %v3330 = vsel %vm3055, %v2879, 0
      %v3333 = vsel %vm3055, %v2880, 0
      %v3336 = vsel %vm3055, %v2881, 0
      %v3339 = vsel %vm3055, %v2882, 0
      %v3342 = vsel %vm3055, %v2883, 0
      %v3345 = vsel %vm3055, %v2884, 0
      %v3348 = vsel %vm3055, %v2885, 0
      %v3351 = vsel %vm3055, %v2886, 0
      %v3354 = vsel %vm3055, %v2887, 0
      %v3357 = vsel %vm3055, %v2888, 0
      %v3360 = vsel %vm3055, %v2889, 0
      %v3363 = vsel %vm3055, %v2890, 0
      %v3366 = vsel %vm3055, %v2891, 0
      %v3369 = vsel %vm3055, %v2892, 0
      %v3372 = vsel %vm3055, %v2893, 0
      %v3375 = vsel %vm3055, %v2894, 0
      %v3378 = vsel %vm3055, %v2895, 0
      %v3381 = vsel %vm3055, %v2896, 0
      %v3384 = vsel %vm3055, %v2897, 0
      %v3387 = vsel %vm3055, %v2898, 0
      %v3390 = vsel %vm3055, %v2899, 0
      %v3393 = vsel %vm3055, %v2900, 0
      %v3396 = vsel %vm3055, %v2901, 0
      %v3399 = vsel %vm3055, %v2902, 0
      %v3402 = vsel %vm3055, %v2903, 0
      %v3405 = vsel %vm3055, %v2904, 0
      %v3408 = vsel %vm3055, %v2905, 0
      %v3411 = vsel %vm3055, %v2906, 0
      %v3414 = vsel %vm3055, %v2907, 0
      %v3417 = vsel %vm3055, %v2908, 0
      %v3420 = vsel %vm3055, %v2909, 0
      %v3423 = vsel %vm3055, %v2910, 0
      %v3426 = vsel %vm3055, %v2911, 0
      %v3429 = vsel %vm3055, %v2912, 0
      %v3432 = vsel %vm3055, %v2913, 0
      %v3435 = vsel %vm3055, %v2914, 0
      %v3438 = vsel %vm3055, %v2915, 0
      %v3441 = vsel %vm3055, %v2916, 0
      %v3444 = vsel %vm3055, %v2917, 0
      %v3447 = vsel %vm3055, %v2918, 0
      %v3450 = vsel %vm3055, %v2919, 0
      %v3453 = vsel %vm3055, %v2920, 0
      %v3456 = vsel %vm3055, %v2921, 0
      %v3459 = vsel %vm3055, %v2922, 0
      %v3462 = vsel %vm3055, %v2923, 0
      %v3465 = vsel %vm3055, %v2924, 0
      %v3468 = vsel %vm3055, %v2925, 0
      %v3471 = vsel %vm3055, %v2926, 0
      %v3474 = vsel %vm3055, %v2927, 0
      %v3477 = vsel %vm3055, %v2928, 0
      %v3480 = vsel %vm3055, %v2929, 0
      %v3483 = vsel %vm3055, %v2930, 0
      %v3486 = vsel %vm3055, %v2931, 0
      %v3489 = vsel %vm3055, %v2932, 0
      %v3492 = vsel %vm3055, %v2933, 0
      %v3495 = vsel %vm3055, %v2934, 0
      %v3498 = vsel %vm3055, %v2935, 0
      %v3501 = vsel %vm3055, %v2936, 0
      %v3504 = vsel %vm3055, %v2937, 0
      %v3507 = vsel %vm3055, %v2938, 0
      %v3510 = vsel %vm3055, %v2939, 0
      %v3513 = vsel %vm3055, %v2940, 0
      %v3516 = vsel %vm3055, %v2941, 0
      %v3519 = vsel %vm3055, %v2942, 0
      %v3522 = vsel %vm3055, %v2943, 0
      %v3525 = vsel %vm3055, %v2944, 0
      %v3528 = vsel %vm3055, %v2945, 0
      %v3531 = vsel %vm3055, %v2946, 0
      %v3534 = vsel %vm3055, %v2947, 0
      %v3537 = vsel %vm3055, %v2948, 0
      %v3540 = vsel %vm3055, %v2949, 0
      %v3543 = vsel %vm3055, %v2950, 0
      %v3546 = vsel %vm3055, %v2951, 0
      %v3549 = vsel %vm3055, %v2952, 0
      %v3552 = vsel %vm3055, %v2953, 0
      %v3555 = vsel %vm3055, %v2954, 0
      %v3558 = vsel %vm3055, %v2955, 0
      %v3561 = vsel %vm3055, %v2956, 0
      %v3564 = vsel %vm3055, %v2957, 0
      %v3567 = vsel %vm3055, %v2958, 0
      %v3570 = vsel %vm3055, %v2959, 0
      %v3573 = vsel %vm3055, %v2960, 0
      %v3576 = vsel %vm3055, %v2961, 0
      %v3579 = vsel %vm3055, %v2962, 0
      %v3582 = vsel %vm3055, %v2963, 0
      %v3585 = vsel %vm3055, %v2964, 0
      %v3588 = vsel %vm3055, %v2965, 0
      %v3591 = vsel %vm3055, %v2966, 0
      %v3594 = vsel %vm3055, %v2967, 0
      %v3597 = vsel %vm3055, %v2968, 0
      %v3600 = vsel %vm3055, %v2969, 0
      %v3603 = vsel %vm3055, %v2970, 0
      %v3606 = vsel %vm3055, %v2971, 0
      %v3609 = vsel %vm3055, %v2972, 0
      %v3612 = vsel %vm3055, %v2973, 0
      %v3615 = vsel %vm3055, %v2974, 0
      %v3618 = vsel %vm3055, %v2975, 0
      %v3621 = vsel %vm3055, %v2976, 0
      %v3624 = vsel %vm3055, %v2977, 0
      %v3627 = vsel %vm3055, %v2978, 0
      %v3630 = vsel %vm3055, %v2979, 0
      %v3633 = vsel %vm3055, %v2980, 0
      %v3636 = vsel %vm3055, %v2981, 0
      %v3639 = vsel %vm3055, %v2982, 0
      %v3642 = vsel %vm3055, %v2983, 0
      %v3645 = vsel %vm3055, %v2984, 0
      %v3648 = vsel %vm3055, %v2985, 0
      %v3651 = vsel %vm3055, %v2986, 0
      %v3654 = vsel %vm3055, %v2987, 0
      %v3657 = vsel %vm3055, %v2988, 0
      %v3660 = vsel %vm3055, %v2989, 0
      %v3663 = vsel %vm3055, %v2990, 0
      %v3666 = vsel %vm3055, %v2991, 0
      %v3669 = vsel %vm3055, %v2992, 0
      %v3672 = vsel %vm3055, %v2993, 0
      %v3675 = vsel %vm3055, %v2994, 0
      %v3678 = vsel %vm3055, %v2995, 0
      %v3681 = vsel %vm3055, %v2996, 0
      %v3684 = vsel %vm3055, %v2997, 0
      %v3687 = vsel %vm3055, %v2998, 0
      %v3690 = vsel %vm3055, %v2999, 0
      %v3693 = vsel %vm3055, %v3000, 0
      %v3696 = vsel %vm3055, %v3001, 0
      %v3699 = vsel %vm3055, %v3002, 0
      %v3702 = vsel %vm3055, %v3003, 0
      %v3705 = vsel %vm3055, %v3004, 0
      %v3708 = vsel %vm3055, %v3005, 0
      %v3711 = vsel %vm3055, %v3006, 0
      %v3714 = vsel %vm3055, %v3007, 0
      %v3717 = vsel %vm3055, %v3008, 0
      %v3720 = vsel %vm3055, %v3009, 0
      %v3723 = vsel %vm3055, %v3010, 0
      %v3726 = vsel %vm3055, %v3011, 0
      %v3729 = vsel %vm3055, %v3012, 0
      %v3732 = vsel %vm3055, %v3013, 0
      %v3735 = vsel %vm3055, %v3014, 0
      %v3738 = vsel %vm3055, %v3015, 0
      %v3741 = vsel %vm3055, %v3016, 0
      %v3744 = vsel %vm3055, %v3017, 0
      %v3747 = vsel %vm3055, %v3018, 0
      %v3750 = vsel %vm3055, %v3019, 0
      %v3753 = vsel %vm3055, %v3020, 0
      %v3756 = vsel %vm3055, %v3021, 0
      %v3759 = vsel %vm3055, %v3022, 0
      %v3762 = vsel %vm3055, %v3023, 0
      %v3765 = vsel %vm3055, %v3024, 0
      %v3768 = vsel %vm3055, %v3025, 0
      %v3771 = vsel %vm3055, %v3026, 0
      %v3774 = vsel %vm3055, %v3027, 0
      %v3777 = vsel %vm3055, %v3028, 0
      %v3780 = vsel %vm3055, %v3029, 0
      %v3783 = vsel %vm3055, %v3030, 0
      %v3786 = vsel %vm3055, %v3031, 0
      %v3789 = vsel %vm3055, %v3032, 0
      %v3792 = vsel %vm3055, %v3033, 0
      %v3795 = vsel %vm3055, %v3034, 0
      %v3798 = vsel %vm3055, %v3035, 0
      %v3801 = vsel %vm3055, %v3036, 0
      %v3804 = vsel %vm3055, %v3037, 0
      %v3807 = vsel %vm3055, %v3038, 0
      %v3810 = vsel %vm3055, %v3039, 0
      %v3813 = vsel %vm3055, %v3040, 0
      %v3816 = vsel %vm3055, %v3041, 0
      %v3819 = vsel %vm3055, %v3042, 0
      %v3822 = vsel %vm3055, %v3043, 0
      %vm3824 = vcmask 1044480
      %vm3825 = vcmask 1045504
      %v3826 = vsel %vm3824, 4294967295, 65535
      %v3827 = vsel %vm3825, %v3826, 0
      %v3829 = vand.u32 %v3053, %v3827
      %3831 = vmatpush.bf16.msra.mxu0 0
      %3832 = vmatpush.bf16.msra.mxu0 0
      %3833 = vmatpush.bf16.msra.mxu0 0
      %3834 = vmatpush.bf16.msra.mxu0 0
      %3835 = vmatpush.bf16.msra.mxu0 0
      %3836 = vmatpush.bf16.msra.mxu0 0
      %3837 = vmatpush.bf16.msra.mxu0 %v3829
      %3838 = vmatpush.bf16.msra.mxu0 %v3052
      %3839 = vmatmul.bf16.gmra.mxu0 %v3057
      %v3840 = vpop.f32.mrf.mxu0
      %v3841 = vadd.f32 0.0, %v3840
      %v3842 = vpop.f32.mrf.mxu0
      %v3843 = vadd.f32 0.0, %v3842
      %3844 = vmatmul.bf16.gmra.mxu0 %v3060
      %v3845 = vpop.f32.mrf.mxu0
      %v3846 = vadd.f32 0.0, %v3845
      %v3847 = vpop.f32.mrf.mxu0
      %v3848 = vadd.f32 0.0, %v3847
      %3849 = vmatmul.bf16.gmra.mxu0 %v3063
      %v3850 = vpop.f32.mrf.mxu0
      %v3851 = vadd.f32 0.0, %v3850
      %v3852 = vpop.f32.mrf.mxu0
      %v3853 = vadd.f32 0.0, %v3852
      %3854 = vmatmul.bf16.gmra.mxu0 %v3066
      %v3855 = vpop.f32.mrf.mxu0
      %v3856 = vadd.f32 0.0, %v3855
      %v3857 = vpop.f32.mrf.mxu0
      %v3858 = vadd.f32 0.0, %v3857
      %3859 = vmatmul.bf16.gmra.mxu0 %v3069
      %v3860 = vpop.f32.mrf.mxu0
      %v3861 = vadd.f32 0.0, %v3860
      %v3862 = vpop.f32.mrf.mxu0
      %v3863 = vadd.f32 0.0, %v3862
      %3864 = vmatmul.bf16.gmra.mxu0 %v3072
      %v3865 = vpop.f32.mrf.mxu0
      %v3866 = vadd.f32 0.0, %v3865
      %v3867 = vpop.f32.mrf.mxu0
      %v3868 = vadd.f32 0.0, %v3867
      %3869 = vmatmul.bf16.gmra.mxu0 %v3075
      %v3870 = vpop.f32.mrf.mxu0
      %v3871 = vadd.f32 0.0, %v3870
      %v3872 = vpop.f32.mrf.mxu0
      %v3873 = vadd.f32 0.0, %v3872
      %3874 = vmatmul.bf16.gmra.mxu0 %v3078
      %v3875 = vpop.f32.mrf.mxu0
      %v3876 = vadd.f32 0.0, %v3875
      %v3877 = vpop.f32.mrf.mxu0
      %v3878 = vadd.f32 0.0, %v3877
      %3879 = vmatmul.bf16.gmra.mxu0 %v3081
      %v3880 = vpop.f32.mrf.mxu0
      %v3881 = vadd.f32 0.0, %v3880
      %v3882 = vpop.f32.mrf.mxu0
      %v3883 = vadd.f32 0.0, %v3882
      %3884 = vmatmul.bf16.gmra.mxu0 %v3084
      %v3885 = vpop.f32.mrf.mxu0
      %v3886 = vadd.f32 0.0, %v3885
      %v3887 = vpop.f32.mrf.mxu0
      %v3888 = vadd.f32 0.0, %v3887
      %3889 = vmatmul.bf16.gmra.mxu0 %v3087
      %v3890 = vpop.f32.mrf.mxu0
      %v3891 = vadd.f32 0.0, %v3890
      %v3892 = vpop.f32.mrf.mxu0
      %v3893 = vadd.f32 0.0, %v3892
      %3894 = vmatmul.bf16.gmra.mxu0 %v3090
      %v3895 = vpop.f32.mrf.mxu0
      %v3896 = vadd.f32 0.0, %v3895
      %v3897 = vpop.f32.mrf.mxu0
      %v3898 = vadd.f32 0.0, %v3897
      %3899 = vmatmul.bf16.gmra.mxu0 %v3093
      %v3900 = vpop.f32.mrf.mxu0
      %v3901 = vadd.f32 0.0, %v3900
      %v3902 = vpop.f32.mrf.mxu0
      %v3903 = vadd.f32 0.0, %v3902
      %3904 = vmatmul.bf16.gmra.mxu0 %v3096
      %v3905 = vpop.f32.mrf.mxu0
      %v3906 = vadd.f32 0.0, %v3905
      %v3907 = vpop.f32.mrf.mxu0
      %v3908 = vadd.f32 0.0, %v3907
      %3909 = vmatmul.bf16.gmra.mxu0 %v3099
      %v3910 = vpop.f32.mrf.mxu0
      %v3911 = vadd.f32 0.0, %v3910
      %v3912 = vpop.f32.mrf.mxu0
      %v3913 = vadd.f32 0.0, %v3912
      %3914 = vmatmul.bf16.gmra.mxu0 %v3102
      %v3915 = vpop.f32.mrf.mxu0
      %v3916 = vadd.f32 0.0, %v3915
      %v3917 = vpop.f32.mrf.mxu0
      %v3918 = vadd.f32 0.0, %v3917
      %3919 = vmatmul.bf16.gmra.mxu0 %v3105
      %v3920 = vpop.f32.mrf.mxu0
      %v3921 = vadd.f32 0.0, %v3920
      %v3922 = vpop.f32.mrf.mxu0
      %v3923 = vadd.f32 0.0, %v3922
      %3924 = vmatmul.bf16.gmra.mxu0 %v3108
      %v3925 = vpop.f32.mrf.mxu0
      %v3926 = vadd.f32 0.0, %v3925
      %v3927 = vpop.f32.mrf.mxu0
      %v3928 = vadd.f32 0.0, %v3927
      %3929 = vmatmul.bf16.gmra.mxu0 %v3111
      %v3930 = vpop.f32.mrf.mxu0
      %v3931 = vadd.f32 0.0, %v3930
      %v3932 = vpop.f32.mrf.mxu0
      %v3933 = vadd.f32 0.0, %v3932
      %3934 = vmatmul.bf16.gmra.mxu0 %v3114
      %v3935 = vpop.f32.mrf.mxu0
      %v3936 = vadd.f32 0.0, %v3935
      %v3937 = vpop.f32.mrf.mxu0
      %v3938 = vadd.f32 0.0, %v3937
      %3939 = vmatmul.bf16.gmra.mxu0 %v3117
      %v3940 = vpop.f32.mrf.mxu0
      %v3941 = vadd.f32 0.0, %v3940
      %v3942 = vpop.f32.mrf.mxu0
      %v3943 = vadd.f32 0.0, %v3942
      %3944 = vmatmul.bf16.gmra.mxu0 %v3120
      %v3945 = vpop.f32.mrf.mxu0
      %v3946 = vadd.f32 0.0, %v3945
      %v3947 = vpop.f32.mrf.mxu0
      %v3948 = vadd.f32 0.0, %v3947
      %3949 = vmatmul.bf16.gmra.mxu0 %v3123
      %v3950 = vpop.f32.mrf.mxu0
      %v3951 = vadd.f32 0.0, %v3950
      %v3952 = vpop.f32.mrf.mxu0
      %v3953 = vadd.f32 0.0, %v3952
      %3954 = vmatmul.bf16.gmra.mxu0 %v3126
      %v3955 = vpop.f32.mrf.mxu0
      %v3956 = vadd.f32 0.0, %v3955
      %v3957 = vpop.f32.mrf.mxu0
      %v3958 = vadd.f32 0.0, %v3957
      %3959 = vmatmul.bf16.gmra.mxu0 %v3129
      %v3960 = vpop.f32.mrf.mxu0
      %v3961 = vadd.f32 0.0, %v3960
      %v3962 = vpop.f32.mrf.mxu0
      %v3963 = vadd.f32 0.0, %v3962
      %3964 = vmatmul.bf16.gmra.mxu0 %v3132
      %v3965 = vpop.f32.mrf.mxu0
      %v3966 = vadd.f32 0.0, %v3965
      %v3967 = vpop.f32.mrf.mxu0
      %v3968 = vadd.f32 0.0, %v3967
      %3969 = vmatmul.bf16.gmra.mxu0 %v3135
      %v3970 = vpop.f32.mrf.mxu0
      %v3971 = vadd.f32 0.0, %v3970
      %v3972 = vpop.f32.mrf.mxu0
      %v3973 = vadd.f32 0.0, %v3972
      %3974 = vmatmul.bf16.gmra.mxu0 %v3138
      %v3975 = vpop.f32.mrf.mxu0
      %v3976 = vadd.f32 0.0, %v3975
      %v3977 = vpop.f32.mrf.mxu0
      %v3978 = vadd.f32 0.0, %v3977
      %3979 = vmatmul.bf16.gmra.mxu0 %v3141
      %v3980 = vpop.f32.mrf.mxu0
      %v3981 = vadd.f32 0.0, %v3980
      %v3982 = vpop.f32.mrf.mxu0
      %v3983 = vadd.f32 0.0, %v3982
      %3984 = vmatmul.bf16.gmra.mxu0 %v3144
      %v3985 = vpop.f32.mrf.mxu0
      %v3986 = vadd.f32 0.0, %v3985
      %v3987 = vpop.f32.mrf.mxu0
      %v3988 = vadd.f32 0.0, %v3987
      %3989 = vmatmul.bf16.gmra.mxu0 %v3147
      %v3990 = vpop.f32.mrf.mxu0
      %v3991 = vadd.f32 0.0, %v3990
      %v3992 = vpop.f32.mrf.mxu0
      %v3993 = vadd.f32 0.0, %v3992
      %3994 = vmatmul.bf16.gmra.mxu0 %v3150
      %v3995 = vpop.f32.mrf.mxu0
      %v3996 = vadd.f32 0.0, %v3995
      %v3997 = vpop.f32.mrf.mxu0
      %v3998 = vadd.f32 0.0, %v3997
      %3999 = vmatmul.bf16.gmra.mxu0 %v3153
      %v4000 = vpop.f32.mrf.mxu0
      %v4001 = vadd.f32 0.0, %v4000
      %v4002 = vpop.f32.mrf.mxu0
      %v4003 = vadd.f32 0.0, %v4002
      %4004 = vmatmul.bf16.gmra.mxu0 %v3156
      %v4005 = vpop.f32.mrf.mxu0
      %v4006 = vadd.f32 0.0, %v4005
      %v4007 = vpop.f32.mrf.mxu0
      %v4008 = vadd.f32 0.0, %v4007
      %4009 = vmatmul.bf16.gmra.mxu0 %v3159
      %v4010 = vpop.f32.mrf.mxu0
      %v4011 = vadd.f32 0.0, %v4010
      %v4012 = vpop.f32.mrf.mxu0
      %v4013 = vadd.f32 0.0, %v4012
      %4014 = vmatmul.bf16.gmra.mxu0 %v3162
      %v4015 = vpop.f32.mrf.mxu0
      %v4016 = vadd.f32 0.0, %v4015
      %v4017 = vpop.f32.mrf.mxu0
      %v4018 = vadd.f32 0.0, %v4017
      %4019 = vmatmul.bf16.gmra.mxu0 %v3165
      %v4020 = vpop.f32.mrf.mxu0
      %v4021 = vadd.f32 0.0, %v4020
      %v4022 = vpop.f32.mrf.mxu0
      %v4023 = vadd.f32 0.0, %v4022
      %4024 = vmatmul.bf16.gmra.mxu0 %v3168
      %v4025 = vpop.f32.mrf.mxu0
      %v4026 = vadd.f32 0.0, %v4025
      %v4027 = vpop.f32.mrf.mxu0
      %v4028 = vadd.f32 0.0, %v4027
      %4029 = vmatmul.bf16.gmra.mxu0 %v3171
      %v4030 = vpop.f32.mrf.mxu0
      %v4031 = vadd.f32 0.0, %v4030
      %v4032 = vpop.f32.mrf.mxu0
      %v4033 = vadd.f32 0.0, %v4032
      %4034 = vmatmul.bf16.gmra.mxu0 %v3174
      %v4035 = vpop.f32.mrf.mxu0
      %v4036 = vadd.f32 0.0, %v4035
      %v4037 = vpop.f32.mrf.mxu0
      %v4038 = vadd.f32 0.0, %v4037
      %4039 = vmatmul.bf16.gmra.mxu0 %v3177
      %v4040 = vpop.f32.mrf.mxu0
      %v4041 = vadd.f32 0.0, %v4040
      %v4042 = vpop.f32.mrf.mxu0
      %v4043 = vadd.f32 0.0, %v4042
      %4044 = vmatmul.bf16.gmra.mxu0 %v3180
      %v4045 = vpop.f32.mrf.mxu0
      %v4046 = vadd.f32 0.0, %v4045
      %v4047 = vpop.f32.mrf.mxu0
      %v4048 = vadd.f32 0.0, %v4047
      %4049 = vmatmul.bf16.gmra.mxu0 %v3183
      %v4050 = vpop.f32.mrf.mxu0
      %v4051 = vadd.f32 0.0, %v4050
      %v4052 = vpop.f32.mrf.mxu0
      %v4053 = vadd.f32 0.0, %v4052
      %4054 = vmatmul.bf16.gmra.mxu0 %v3186
      %v4055 = vpop.f32.mrf.mxu0
      %v4056 = vadd.f32 0.0, %v4055
      %v4057 = vpop.f32.mrf.mxu0
      %v4058 = vadd.f32 0.0, %v4057
      %4059 = vmatmul.bf16.gmra.mxu0 %v3189
      %v4060 = vpop.f32.mrf.mxu0
      %v4061 = vadd.f32 0.0, %v4060
      %v4062 = vpop.f32.mrf.mxu0
      %v4063 = vadd.f32 0.0, %v4062
      %4064 = vmatmul.bf16.gmra.mxu0 %v3192
      %v4065 = vpop.f32.mrf.mxu0
      %v4066 = vadd.f32 0.0, %v4065
      %v4067 = vpop.f32.mrf.mxu0
      %v4068 = vadd.f32 0.0, %v4067
      %4069 = vmatmul.bf16.gmra.mxu0 %v3195
      %v4070 = vpop.f32.mrf.mxu0
      %v4071 = vadd.f32 0.0, %v4070
      %v4072 = vpop.f32.mrf.mxu0
      %v4073 = vadd.f32 0.0, %v4072
      %4074 = vmatmul.bf16.gmra.mxu0 %v3198
      %v4075 = vpop.f32.mrf.mxu0
      %v4076 = vadd.f32 0.0, %v4075
      %v4077 = vpop.f32.mrf.mxu0
      %v4078 = vadd.f32 0.0, %v4077
      %4079 = vmatmul.bf16.gmra.mxu0 %v3201
      %v4080 = vpop.f32.mrf.mxu0
      %v4081 = vadd.f32 0.0, %v4080
      %v4082 = vpop.f32.mrf.mxu0
      %v4083 = vadd.f32 0.0, %v4082
      %4084 = vmatmul.bf16.gmra.mxu0 %v3204
      %v4085 = vpop.f32.mrf.mxu0
      %v4086 = vadd.f32 0.0, %v4085
      %v4087 = vpop.f32.mrf.mxu0
      %v4088 = vadd.f32 0.0, %v4087
      %4089 = vmatmul.bf16.gmra.mxu0 %v3207
      %v4090 = vpop.f32.mrf.mxu0
      %v4091 = vadd.f32 0.0, %v4090
      %v4092 = vpop.f32.mrf.mxu0
      %v4093 = vadd.f32 0.0, %v4092
      %4094 = vmatmul.bf16.gmra.mxu0 %v3210
      %v4095 = vpop.f32.mrf.mxu0
      %v4096 = vadd.f32 0.0, %v4095
      %v4097 = vpop.f32.mrf.mxu0
      %v4098 = vadd.f32 0.0, %v4097
      %4099 = vmatmul.bf16.gmra.mxu0 %v3213
      %v4100 = vpop.f32.mrf.mxu0
      %v4101 = vadd.f32 0.0, %v4100
      %v4102 = vpop.f32.mrf.mxu0
      %v4103 = vadd.f32 0.0, %v4102
      %4104 = vmatmul.bf16.gmra.mxu0 %v3216
      %v4105 = vpop.f32.mrf.mxu0
      %v4106 = vadd.f32 0.0, %v4105
      %v4107 = vpop.f32.mrf.mxu0
      %v4108 = vadd.f32 0.0, %v4107
      %4109 = vmatmul.bf16.gmra.mxu0 %v3219
      %v4110 = vpop.f32.mrf.mxu0
      %v4111 = vadd.f32 0.0, %v4110
      %v4112 = vpop.f32.mrf.mxu0
      %v4113 = vadd.f32 0.0, %v4112
      %4114 = vmatmul.bf16.gmra.mxu0 %v3222
      %v4115 = vpop.f32.mrf.mxu0
      %v4116 = vadd.f32 0.0, %v4115
      %v4117 = vpop.f32.mrf.mxu0
      %v4118 = vadd.f32 0.0, %v4117
      %4119 = vmatmul.bf16.gmra.mxu0 %v3225
      %v4120 = vpop.f32.mrf.mxu0
      %v4121 = vadd.f32 0.0, %v4120
      %v4122 = vpop.f32.mrf.mxu0
      %v4123 = vadd.f32 0.0, %v4122
      %4124 = vmatmul.bf16.gmra.mxu0 %v3228
      %v4125 = vpop.f32.mrf.mxu0
      %v4126 = vadd.f32 0.0, %v4125
      %v4127 = vpop.f32.mrf.mxu0
      %v4128 = vadd.f32 0.0, %v4127
      %4129 = vmatmul.bf16.gmra.mxu0 %v3231
      %v4130 = vpop.f32.mrf.mxu0
      %v4131 = vadd.f32 0.0, %v4130
      %v4132 = vpop.f32.mrf.mxu0
      %v4133 = vadd.f32 0.0, %v4132
      %4134 = vmatmul.bf16.gmra.mxu0 %v3234
      %v4135 = vpop.f32.mrf.mxu0
      %v4136 = vadd.f32 0.0, %v4135
      %v4137 = vpop.f32.mrf.mxu0
      %v4138 = vadd.f32 0.0, %v4137
      %4139 = vmatmul.bf16.gmra.mxu0 %v3237
      %v4140 = vpop.f32.mrf.mxu0
      %v4141 = vadd.f32 0.0, %v4140
      %v4142 = vpop.f32.mrf.mxu0
      %v4143 = vadd.f32 0.0, %v4142
      %4144 = vmatmul.bf16.gmra.mxu0 %v3240
      %v4145 = vpop.f32.mrf.mxu0
      %v4146 = vadd.f32 0.0, %v4145
      %v4147 = vpop.f32.mrf.mxu0
      %v4148 = vadd.f32 0.0, %v4147
      %4149 = vmatmul.bf16.gmra.mxu0 %v3243
      %v4150 = vpop.f32.mrf.mxu0
      %v4151 = vadd.f32 0.0, %v4150
      %v4152 = vpop.f32.mrf.mxu0
      %v4153 = vadd.f32 0.0, %v4152
      %4154 = vmatmul.bf16.gmra.mxu0 %v3246
      %v4155 = vpop.f32.mrf.mxu0
      %v4156 = vadd.f32 0.0, %v4155
      %v4157 = vpop.f32.mrf.mxu0
      %v4158 = vadd.f32 0.0, %v4157
      %4159 = vmatmul.bf16.gmra.mxu0 %v3249
      %v4160 = vpop.f32.mrf.mxu0
      %v4161 = vadd.f32 0.0, %v4160
      %v4162 = vpop.f32.mrf.mxu0
      %v4163 = vadd.f32 0.0, %v4162
      %4164 = vmatmul.bf16.gmra.mxu0 %v3252
      %v4165 = vpop.f32.mrf.mxu0
      %v4166 = vadd.f32 0.0, %v4165
      %v4167 = vpop.f32.mrf.mxu0
      %v4168 = vadd.f32 0.0, %v4167
      %4169 = vmatmul.bf16.gmra.mxu0 %v3255
      %v4170 = vpop.f32.mrf.mxu0
      %v4171 = vadd.f32 0.0, %v4170
      %v4172 = vpop.f32.mrf.mxu0
      %v4173 = vadd.f32 0.0, %v4172
      %4174 = vmatmul.bf16.gmra.mxu0 %v3258
      %v4175 = vpop.f32.mrf.mxu0
      %v4176 = vadd.f32 0.0, %v4175
      %v4177 = vpop.f32.mrf.mxu0
      %v4178 = vadd.f32 0.0, %v4177
      %4179 = vmatmul.bf16.gmra.mxu0 %v3261
      %v4180 = vpop.f32.mrf.mxu0
      %v4181 = vadd.f32 0.0, %v4180
      %v4182 = vpop.f32.mrf.mxu0
      %v4183 = vadd.f32 0.0, %v4182
      %4184 = vmatmul.bf16.gmra.mxu0 %v3264
      %v4185 = vpop.f32.mrf.mxu0
      %v4186 = vadd.f32 0.0, %v4185
      %v4187 = vpop.f32.mrf.mxu0
      %v4188 = vadd.f32 0.0, %v4187
      %4189 = vmatmul.bf16.gmra.mxu0 %v3267
      %v4190 = vpop.f32.mrf.mxu0
      %v4191 = vadd.f32 0.0, %v4190
      %v4192 = vpop.f32.mrf.mxu0
      %v4193 = vadd.f32 0.0, %v4192
      %4194 = vmatmul.bf16.gmra.mxu0 %v3270
      %v4195 = vpop.f32.mrf.mxu0
      %v4196 = vadd.f32 0.0, %v4195
      %v4197 = vpop.f32.mrf.mxu0
      %v4198 = vadd.f32 0.0, %v4197
      %4199 = vmatmul.bf16.gmra.mxu0 %v3273
      %v4200 = vpop.f32.mrf.mxu0
      %v4201 = vadd.f32 0.0, %v4200
      %v4202 = vpop.f32.mrf.mxu0
      %v4203 = vadd.f32 0.0, %v4202
      %4204 = vmatmul.bf16.gmra.mxu0 %v3276
      %v4205 = vpop.f32.mrf.mxu0
      %v4206 = vadd.f32 0.0, %v4205
      %v4207 = vpop.f32.mrf.mxu0
      %v4208 = vadd.f32 0.0, %v4207
      %4209 = vmatmul.bf16.gmra.mxu0 %v3279
      %v4210 = vpop.f32.mrf.mxu0
      %v4211 = vadd.f32 0.0, %v4210
      %v4212 = vpop.f32.mrf.mxu0
      %v4213 = vadd.f32 0.0, %v4212
      %4214 = vmatmul.bf16.gmra.mxu0 %v3282
      %v4215 = vpop.f32.mrf.mxu0
      %v4216 = vadd.f32 0.0, %v4215
      %v4217 = vpop.f32.mrf.mxu0
      %v4218 = vadd.f32 0.0, %v4217
      %4219 = vmatmul.bf16.gmra.mxu0 %v3285
      %v4220 = vpop.f32.mrf.mxu0
      %v4221 = vadd.f32 0.0, %v4220
      %v4222 = vpop.f32.mrf.mxu0
      %v4223 = vadd.f32 0.0, %v4222
      %4224 = vmatmul.bf16.gmra.mxu0 %v3288
      %v4225 = vpop.f32.mrf.mxu0
      %v4226 = vadd.f32 0.0, %v4225
      %v4227 = vpop.f32.mrf.mxu0
      %v4228 = vadd.f32 0.0, %v4227
      %4229 = vmatmul.bf16.gmra.mxu0 %v3291
      %v4230 = vpop.f32.mrf.mxu0
      %v4231 = vadd.f32 0.0, %v4230
      %v4232 = vpop.f32.mrf.mxu0
      %v4233 = vadd.f32 0.0, %v4232
      %4234 = vmatmul.bf16.gmra.mxu0 %v3294
      %v4235 = vpop.f32.mrf.mxu0
      %v4236 = vadd.f32 0.0, %v4235
      %v4237 = vpop.f32.mrf.mxu0
      %v4238 = vadd.f32 0.0, %v4237
      %4239 = vmatmul.bf16.gmra.mxu0 %v3297
      %v4240 = vpop.f32.mrf.mxu0
      %v4241 = vadd.f32 0.0, %v4240
      %v4242 = vpop.f32.mrf.mxu0
      %v4243 = vadd.f32 0.0, %v4242
      %4244 = vmatmul.bf16.gmra.mxu0 %v3300
      %v4245 = vpop.f32.mrf.mxu0
      %v4246 = vadd.f32 0.0, %v4245
      %v4247 = vpop.f32.mrf.mxu0
      %v4248 = vadd.f32 0.0, %v4247
      %4249 = vmatmul.bf16.gmra.mxu0 %v3303
      %v4250 = vpop.f32.mrf.mxu0
      %v4251 = vadd.f32 0.0, %v4250
      %v4252 = vpop.f32.mrf.mxu0
      %v4253 = vadd.f32 0.0, %v4252
      %4254 = vmatmul.bf16.gmra.mxu0 %v3306
      %v4255 = vpop.f32.mrf.mxu0
      %v4256 = vadd.f32 0.0, %v4255
      %v4257 = vpop.f32.mrf.mxu0
      %v4258 = vadd.f32 0.0, %v4257
      %4259 = vmatmul.bf16.gmra.mxu0 %v3309
      %v4260 = vpop.f32.mrf.mxu0
      %v4261 = vadd.f32 0.0, %v4260
      %v4262 = vpop.f32.mrf.mxu0
      %v4263 = vadd.f32 0.0, %v4262
      %4264 = vmatmul.bf16.gmra.mxu0 %v3312
      %v4265 = vpop.f32.mrf.mxu0
      %v4266 = vadd.f32 0.0, %v4265
      %v4267 = vpop.f32.mrf.mxu0
      %v4268 = vadd.f32 0.0, %v4267
      %4269 = vmatmul.bf16.gmra.mxu0 %v3315
      %v4270 = vpop.f32.mrf.mxu0
      %v4271 = vadd.f32 0.0, %v4270
      %v4272 = vpop.f32.mrf.mxu0
      %v4273 = vadd.f32 0.0, %v4272
      %4274 = vmatmul.bf16.gmra.mxu0 %v3318
      %v4275 = vpop.f32.mrf.mxu0
      %v4276 = vadd.f32 0.0, %v4275
      %v4277 = vpop.f32.mrf.mxu0
      %v4278 = vadd.f32 0.0, %v4277
      %4279 = vmatmul.bf16.gmra.mxu0 %v3321
      %v4280 = vpop.f32.mrf.mxu0
      %v4281 = vadd.f32 0.0, %v4280
      %v4282 = vpop.f32.mrf.mxu0
      %v4283 = vadd.f32 0.0, %v4282
      %4284 = vmatmul.bf16.gmra.mxu0 %v3324
      %v4285 = vpop.f32.mrf.mxu0
      %v4286 = vadd.f32 0.0, %v4285
      %v4287 = vpop.f32.mrf.mxu0
      %v4288 = vadd.f32 0.0, %v4287
      %4289 = vmatmul.bf16.gmra.mxu0 %v3327
      %v4290 = vpop.f32.mrf.mxu0
      %v4291 = vadd.f32 0.0, %v4290
      %v4292 = vpop.f32.mrf.mxu0
      %v4293 = vadd.f32 0.0, %v4292
      %4294 = vmatmul.bf16.gmra.mxu0 %v3330
      %v4295 = vpop.f32.mrf.mxu0
      %v4296 = vadd.f32 0.0, %v4295
      %v4297 = vpop.f32.mrf.mxu0
      %v4298 = vadd.f32 0.0, %v4297
      %4299 = vmatmul.bf16.gmra.mxu0 %v3333
      %v4300 = vpop.f32.mrf.mxu0
      %v4301 = vadd.f32 0.0, %v4300
      %v4302 = vpop.f32.mrf.mxu0
      %v4303 = vadd.f32 0.0, %v4302
      %4304 = vmatmul.bf16.gmra.mxu0 %v3336
      %v4305 = vpop.f32.mrf.mxu0
      %v4306 = vadd.f32 0.0, %v4305
      %v4307 = vpop.f32.mrf.mxu0
      %v4308 = vadd.f32 0.0, %v4307
      %4309 = vmatmul.bf16.gmra.mxu0 %v3339
      %v4310 = vpop.f32.mrf.mxu0
      %v4311 = vadd.f32 0.0, %v4310
      %v4312 = vpop.f32.mrf.mxu0
      %v4313 = vadd.f32 0.0, %v4312
      %4314 = vmatmul.bf16.gmra.mxu0 %v3342
      %v4315 = vpop.f32.mrf.mxu0
      %v4316 = vadd.f32 0.0, %v4315
      %v4317 = vpop.f32.mrf.mxu0
      %v4318 = vadd.f32 0.0, %v4317
      %4319 = vmatmul.bf16.gmra.mxu0 %v3345
      %v4320 = vpop.f32.mrf.mxu0
      %v4321 = vadd.f32 0.0, %v4320
      %v4322 = vpop.f32.mrf.mxu0
      %v4323 = vadd.f32 0.0, %v4322
      %4324 = vmatmul.bf16.gmra.mxu0 %v3348
      %v4325 = vpop.f32.mrf.mxu0
      %v4326 = vadd.f32 0.0, %v4325
      %v4327 = vpop.f32.mrf.mxu0
      %v4328 = vadd.f32 0.0, %v4327
      %4329 = vmatmul.bf16.gmra.mxu0 %v3351
      %v4330 = vpop.f32.mrf.mxu0
      %v4331 = vadd.f32 0.0, %v4330
      %v4332 = vpop.f32.mrf.mxu0
      %v4333 = vadd.f32 0.0, %v4332
      %4334 = vmatmul.bf16.gmra.mxu0 %v3354
      %v4335 = vpop.f32.mrf.mxu0
      %v4336 = vadd.f32 0.0, %v4335
      %v4337 = vpop.f32.mrf.mxu0
      %v4338 = vadd.f32 0.0, %v4337
      %4339 = vmatmul.bf16.gmra.mxu0 %v3357
      %v4340 = vpop.f32.mrf.mxu0
      %v4341 = vadd.f32 0.0, %v4340
      %v4342 = vpop.f32.mrf.mxu0
      %v4343 = vadd.f32 0.0, %v4342
      %4344 = vmatmul.bf16.gmra.mxu0 %v3360
      %v4345 = vpop.f32.mrf.mxu0
      %v4346 = vadd.f32 0.0, %v4345
      %v4347 = vpop.f32.mrf.mxu0
      %v4348 = vadd.f32 0.0, %v4347
      %4349 = vmatmul.bf16.gmra.mxu0 %v3363
      %v4350 = vpop.f32.mrf.mxu0
      %v4351 = vadd.f32 0.0, %v4350
      %v4352 = vpop.f32.mrf.mxu0
      %v4353 = vadd.f32 0.0, %v4352
      %4354 = vmatmul.bf16.gmra.mxu0 %v3366
      %v4355 = vpop.f32.mrf.mxu0
      %v4356 = vadd.f32 0.0, %v4355
      %v4357 = vpop.f32.mrf.mxu0
      %v4358 = vadd.f32 0.0, %v4357
      %4359 = vmatmul.bf16.gmra.mxu0 %v3369
      %v4360 = vpop.f32.mrf.mxu0
      %v4361 = vadd.f32 0.0, %v4360
      %v4362 = vpop.f32.mrf.mxu0
      %v4363 = vadd.f32 0.0, %v4362
      %4364 = vmatmul.bf16.gmra.mxu0 %v3372
      %v4365 = vpop.f32.mrf.mxu0
      %v4366 = vadd.f32 0.0, %v4365
      %v4367 = vpop.f32.mrf.mxu0
      %v4368 = vadd.f32 0.0, %v4367
      %4369 = vmatmul.bf16.gmra.mxu0 %v3375
      %v4370 = vpop.f32.mrf.mxu0
      %v4371 = vadd.f32 0.0, %v4370
      %v4372 = vpop.f32.mrf.mxu0
      %v4373 = vadd.f32 0.0, %v4372
      %4374 = vmatmul.bf16.gmra.mxu0 %v3378
      %v4375 = vpop.f32.mrf.mxu0
      %v4376 = vadd.f32 0.0, %v4375
      %v4377 = vpop.f32.mrf.mxu0
      %v4378 = vadd.f32 0.0, %v4377
      %4379 = vmatmul.bf16.gmra.mxu0 %v3381
      %v4380 = vpop.f32.mrf.mxu0
      %v4381 = vadd.f32 0.0, %v4380
      %v4382 = vpop.f32.mrf.mxu0
      %v4383 = vadd.f32 0.0, %v4382
      %4384 = vmatmul.bf16.gmra.mxu0 %v3384
      %v4385 = vpop.f32.mrf.mxu0
      %v4386 = vadd.f32 0.0, %v4385
      %v4387 = vpop.f32.mrf.mxu0
      %v4388 = vadd.f32 0.0, %v4387
      %4389 = vmatmul.bf16.gmra.mxu0 %v3387
      %v4390 = vpop.f32.mrf.mxu0
      %v4391 = vadd.f32 0.0, %v4390
      %v4392 = vpop.f32.mrf.mxu0
      %v4393 = vadd.f32 0.0, %v4392
      %4394 = vmatmul.bf16.gmra.mxu0 %v3390
      %v4395 = vpop.f32.mrf.mxu0
      %v4396 = vadd.f32 0.0, %v4395
      %v4397 = vpop.f32.mrf.mxu0
      %v4398 = vadd.f32 0.0, %v4397
      %4399 = vmatmul.bf16.gmra.mxu0 %v3393
      %v4400 = vpop.f32.mrf.mxu0
      %v4401 = vadd.f32 0.0, %v4400
      %v4402 = vpop.f32.mrf.mxu0
      %v4403 = vadd.f32 0.0, %v4402
      %4404 = vmatmul.bf16.gmra.mxu0 %v3396
      %v4405 = vpop.f32.mrf.mxu0
      %v4406 = vadd.f32 0.0, %v4405
      %v4407 = vpop.f32.mrf.mxu0
      %v4408 = vadd.f32 0.0, %v4407
      %4409 = vmatmul.bf16.gmra.mxu0 %v3399
      %v4410 = vpop.f32.mrf.mxu0
      %v4411 = vadd.f32 0.0, %v4410
      %v4412 = vpop.f32.mrf.mxu0
      %v4413 = vadd.f32 0.0, %v4412
      %4414 = vmatmul.bf16.gmra.mxu0 %v3402
      %v4415 = vpop.f32.mrf.mxu0
      %v4416 = vadd.f32 0.0, %v4415
      %v4417 = vpop.f32.mrf.mxu0
      %v4418 = vadd.f32 0.0, %v4417
      %4419 = vmatmul.bf16.gmra.mxu0 %v3405
      %v4420 = vpop.f32.mrf.mxu0
      %v4421 = vadd.f32 0.0, %v4420
      %v4422 = vpop.f32.mrf.mxu0
      %v4423 = vadd.f32 0.0, %v4422
      %4424 = vmatmul.bf16.gmra.mxu0 %v3408
      %v4425 = vpop.f32.mrf.mxu0
      %v4426 = vadd.f32 0.0, %v4425
      %v4427 = vpop.f32.mrf.mxu0
      %v4428 = vadd.f32 0.0, %v4427
      %4429 = vmatmul.bf16.gmra.mxu0 %v3411
      %v4430 = vpop.f32.mrf.mxu0
      %v4431 = vadd.f32 0.0, %v4430
      %v4432 = vpop.f32.mrf.mxu0
      %v4433 = vadd.f32 0.0, %v4432
      %4434 = vmatmul.bf16.gmra.mxu0 %v3414
      %v4435 = vpop.f32.mrf.mxu0
      %v4436 = vadd.f32 0.0, %v4435
      %v4437 = vpop.f32.mrf.mxu0
      %v4438 = vadd.f32 0.0, %v4437
      %4439 = vmatmul.bf16.gmra.mxu0 %v3417
      %v4440 = vpop.f32.mrf.mxu0
      %v4441 = vadd.f32 0.0, %v4440
      %v4442 = vpop.f32.mrf.mxu0
      %v4443 = vadd.f32 0.0, %v4442
      %4444 = vmatmul.bf16.gmra.mxu0 %v3420
      %v4445 = vpop.f32.mrf.mxu0
      %v4446 = vadd.f32 0.0, %v4445
      %v4447 = vpop.f32.mrf.mxu0
      %v4448 = vadd.f32 0.0, %v4447
      %4449 = vmatmul.bf16.gmra.mxu0 %v3423
      %v4450 = vpop.f32.mrf.mxu0
      %v4451 = vadd.f32 0.0, %v4450
      %v4452 = vpop.f32.mrf.mxu0
      %v4453 = vadd.f32 0.0, %v4452
      %4454 = vmatmul.bf16.gmra.mxu0 %v3426
      %v4455 = vpop.f32.mrf.mxu0
      %v4456 = vadd.f32 0.0, %v4455
      %v4457 = vpop.f32.mrf.mxu0
      %v4458 = vadd.f32 0.0, %v4457
      %4459 = vmatmul.bf16.gmra.mxu0 %v3429
      %v4460 = vpop.f32.mrf.mxu0
      %v4461 = vadd.f32 0.0, %v4460
      %v4462 = vpop.f32.mrf.mxu0
      %v4463 = vadd.f32 0.0, %v4462
      %4464 = vmatmul.bf16.gmra.mxu0 %v3432
      %v4465 = vpop.f32.mrf.mxu0
      %v4466 = vadd.f32 0.0, %v4465
      %v4467 = vpop.f32.mrf.mxu0
      %v4468 = vadd.f32 0.0, %v4467
      %4469 = vmatmul.bf16.gmra.mxu0 %v3435
      %v4470 = vpop.f32.mrf.mxu0
      %v4471 = vadd.f32 0.0, %v4470
      %v4472 = vpop.f32.mrf.mxu0
      %v4473 = vadd.f32 0.0, %v4472
      %4474 = vmatmul.bf16.gmra.mxu0 %v3438
      %v4475 = vpop.f32.mrf.mxu0
      %v4476 = vadd.f32 0.0, %v4475
      %v4477 = vpop.f32.mrf.mxu0
      %v4478 = vadd.f32 0.0, %v4477
      %4479 = vmatmul.bf16.gmra.mxu0 %v3441
      %v4480 = vpop.f32.mrf.mxu0
      %v4481 = vadd.f32 0.0, %v4480
      %v4482 = vpop.f32.mrf.mxu0
      %v4483 = vadd.f32 0.0, %v4482
      %4484 = vmatmul.bf16.gmra.mxu0 %v3444
      %v4485 = vpop.f32.mrf.mxu0
      %v4486 = vadd.f32 0.0, %v4485
      %v4487 = vpop.f32.mrf.mxu0
      %v4488 = vadd.f32 0.0, %v4487
      %4489 = vmatmul.bf16.gmra.mxu0 %v3447
      %v4490 = vpop.f32.mrf.mxu0
      %v4491 = vadd.f32 0.0, %v4490
      %v4492 = vpop.f32.mrf.mxu0
      %v4493 = vadd.f32 0.0, %v4492
      %4494 = vmatmul.bf16.gmra.mxu0 %v3450
      %v4495 = vpop.f32.mrf.mxu0
      %v4496 = vadd.f32 0.0, %v4495
      %v4497 = vpop.f32.mrf.mxu0
      %v4498 = vadd.f32 0.0, %v4497
      %4499 = vmatmul.bf16.gmra.mxu0 %v3453
      %v4500 = vpop.f32.mrf.mxu0
      %v4501 = vadd.f32 0.0, %v4500
      %v4502 = vpop.f32.mrf.mxu0
      %v4503 = vadd.f32 0.0, %v4502
      %4504 = vmatmul.bf16.gmra.mxu0 %v3456
      %v4505 = vpop.f32.mrf.mxu0
      %v4506 = vadd.f32 0.0, %v4505
      %v4507 = vpop.f32.mrf.mxu0
      %v4508 = vadd.f32 0.0, %v4507
      %4509 = vmatmul.bf16.gmra.mxu0 %v3459
      %v4510 = vpop.f32.mrf.mxu0
      %v4511 = vadd.f32 0.0, %v4510
      %v4512 = vpop.f32.mrf.mxu0
      %v4513 = vadd.f32 0.0, %v4512
      %4514 = vmatmul.bf16.gmra.mxu0 %v3462
      %v4515 = vpop.f32.mrf.mxu0
      %v4516 = vadd.f32 0.0, %v4515
      %v4517 = vpop.f32.mrf.mxu0
      %v4518 = vadd.f32 0.0, %v4517
      %4519 = vmatmul.bf16.gmra.mxu0 %v3465
      %v4520 = vpop.f32.mrf.mxu0
      %v4521 = vadd.f32 0.0, %v4520
      %v4522 = vpop.f32.mrf.mxu0
      %v4523 = vadd.f32 0.0, %v4522
      %4524 = vmatmul.bf16.gmra.mxu0 %v3468
      %v4525 = vpop.f32.mrf.mxu0
      %v4526 = vadd.f32 0.0, %v4525
      %v4527 = vpop.f32.mrf.mxu0
      %v4528 = vadd.f32 0.0, %v4527
      %4529 = vmatmul.bf16.gmra.mxu0 %v3471
      %v4530 = vpop.f32.mrf.mxu0
      %v4531 = vadd.f32 0.0, %v4530
      %v4532 = vpop.f32.mrf.mxu0
      %v4533 = vadd.f32 0.0, %v4532
      %4534 = vmatmul.bf16.gmra.mxu0 %v3474
      %v4535 = vpop.f32.mrf.mxu0
      %v4536 = vadd.f32 0.0, %v4535
      %v4537 = vpop.f32.mrf.mxu0
      %v4538 = vadd.f32 0.0, %v4537
      %4539 = vmatmul.bf16.gmra.mxu0 %v3477
      %v4540 = vpop.f32.mrf.mxu0
      %v4541 = vadd.f32 0.0, %v4540
      %v4542 = vpop.f32.mrf.mxu0
      %v4543 = vadd.f32 0.0, %v4542
      %4544 = vmatmul.bf16.gmra.mxu0 %v3480
      %v4545 = vpop.f32.mrf.mxu0
      %v4546 = vadd.f32 0.0, %v4545
      %v4547 = vpop.f32.mrf.mxu0
      %v4548 = vadd.f32 0.0, %v4547
      %4549 = vmatmul.bf16.gmra.mxu0 %v3483
      %v4550 = vpop.f32.mrf.mxu0
      %v4551 = vadd.f32 0.0, %v4550
      %v4552 = vpop.f32.mrf.mxu0
      %v4553 = vadd.f32 0.0, %v4552
      %4554 = vmatmul.bf16.gmra.mxu0 %v3486
      %v4555 = vpop.f32.mrf.mxu0
      %v4556 = vadd.f32 0.0, %v4555
      %v4557 = vpop.f32.mrf.mxu0
      %v4558 = vadd.f32 0.0, %v4557
      %4559 = vmatmul.bf16.gmra.mxu0 %v3489
      %v4560 = vpop.f32.mrf.mxu0
      %v4561 = vadd.f32 0.0, %v4560
      %v4562 = vpop.f32.mrf.mxu0
      %v4563 = vadd.f32 0.0, %v4562
      %4564 = vmatmul.bf16.gmra.mxu0 %v3492
      %v4565 = vpop.f32.mrf.mxu0
      %v4566 = vadd.f32 0.0, %v4565
      %v4567 = vpop.f32.mrf.mxu0
      %v4568 = vadd.f32 0.0, %v4567
      %4569 = vmatmul.bf16.gmra.mxu0 %v3495
      %v4570 = vpop.f32.mrf.mxu0
      %v4571 = vadd.f32 0.0, %v4570
      %v4572 = vpop.f32.mrf.mxu0
      %v4573 = vadd.f32 0.0, %v4572
      %4574 = vmatmul.bf16.gmra.mxu0 %v3498
      %v4575 = vpop.f32.mrf.mxu0
      %v4576 = vadd.f32 0.0, %v4575
      %v4577 = vpop.f32.mrf.mxu0
      %v4578 = vadd.f32 0.0, %v4577
      %4579 = vmatmul.bf16.gmra.mxu0 %v3501
      %v4580 = vpop.f32.mrf.mxu0
      %v4581 = vadd.f32 0.0, %v4580
      %v4582 = vpop.f32.mrf.mxu0
      %v4583 = vadd.f32 0.0, %v4582
      %4584 = vmatmul.bf16.gmra.mxu0 %v3504
      %v4585 = vpop.f32.mrf.mxu0
      %v4586 = vadd.f32 0.0, %v4585
      %v4587 = vpop.f32.mrf.mxu0
      %v4588 = vadd.f32 0.0, %v4587
      %4589 = vmatmul.bf16.gmra.mxu0 %v3507
      %v4590 = vpop.f32.mrf.mxu0
      %v4591 = vadd.f32 0.0, %v4590
      %v4592 = vpop.f32.mrf.mxu0
      %v4593 = vadd.f32 0.0, %v4592
      %4594 = vmatmul.bf16.gmra.mxu0 %v3510
      %v4595 = vpop.f32.mrf.mxu0
      %v4596 = vadd.f32 0.0, %v4595
      %v4597 = vpop.f32.mrf.mxu0
      %v4598 = vadd.f32 0.0, %v4597
      %4599 = vmatmul.bf16.gmra.mxu0 %v3513
      %v4600 = vpop.f32.mrf.mxu0
      %v4601 = vadd.f32 0.0, %v4600
      %v4602 = vpop.f32.mrf.mxu0
      %v4603 = vadd.f32 0.0, %v4602
      %4604 = vmatmul.bf16.gmra.mxu0 %v3516
      %v4605 = vpop.f32.mrf.mxu0
      %v4606 = vadd.f32 0.0, %v4605
      %v4607 = vpop.f32.mrf.mxu0
      %v4608 = vadd.f32 0.0, %v4607
      %4609 = vmatmul.bf16.gmra.mxu0 %v3519
      %v4610 = vpop.f32.mrf.mxu0
      %v4611 = vadd.f32 0.0, %v4610
      %v4612 = vpop.f32.mrf.mxu0
      %v4613 = vadd.f32 0.0, %v4612
      %4614 = vmatmul.bf16.gmra.mxu0 %v3522
      %v4615 = vpop.f32.mrf.mxu0
      %v4616 = vadd.f32 0.0, %v4615
      %v4617 = vpop.f32.mrf.mxu0
      %v4618 = vadd.f32 0.0, %v4617
      %4619 = vmatmul.bf16.gmra.mxu0 %v3525
      %v4620 = vpop.f32.mrf.mxu0
      %v4621 = vadd.f32 0.0, %v4620
      %v4622 = vpop.f32.mrf.mxu0
      %v4623 = vadd.f32 0.0, %v4622
      %4624 = vmatmul.bf16.gmra.mxu0 %v3528
      %v4625 = vpop.f32.mrf.mxu0
      %v4626 = vadd.f32 0.0, %v4625
      %v4627 = vpop.f32.mrf.mxu0
      %v4628 = vadd.f32 0.0, %v4627
      %4629 = vmatmul.bf16.gmra.mxu0 %v3531
      %v4630 = vpop.f32.mrf.mxu0
      %v4631 = vadd.f32 0.0, %v4630
      %v4632 = vpop.f32.mrf.mxu0
      %v4633 = vadd.f32 0.0, %v4632
      %4634 = vmatmul.bf16.gmra.mxu0 %v3534
      %v4635 = vpop.f32.mrf.mxu0
      %v4636 = vadd.f32 0.0, %v4635
      %v4637 = vpop.f32.mrf.mxu0
      %v4638 = vadd.f32 0.0, %v4637
      %4639 = vmatmul.bf16.gmra.mxu0 %v3537
      %v4640 = vpop.f32.mrf.mxu0
      %v4641 = vadd.f32 0.0, %v4640
      %v4642 = vpop.f32.mrf.mxu0
      %v4643 = vadd.f32 0.0, %v4642
      %4644 = vmatmul.bf16.gmra.mxu0 %v3540
      %v4645 = vpop.f32.mrf.mxu0
      %v4646 = vadd.f32 0.0, %v4645
      %v4647 = vpop.f32.mrf.mxu0
      %v4648 = vadd.f32 0.0, %v4647
      %4649 = vmatmul.bf16.gmra.mxu0 %v3543
      %v4650 = vpop.f32.mrf.mxu0
      %v4651 = vadd.f32 0.0, %v4650
      %v4652 = vpop.f32.mrf.mxu0
      %v4653 = vadd.f32 0.0, %v4652
      %4654 = vmatmul.bf16.gmra.mxu0 %v3546
      %v4655 = vpop.f32.mrf.mxu0
      %v4656 = vadd.f32 0.0, %v4655
      %v4657 = vpop.f32.mrf.mxu0
      %v4658 = vadd.f32 0.0, %v4657
      %4659 = vmatmul.bf16.gmra.mxu0 %v3549
      %v4660 = vpop.f32.mrf.mxu0
      %v4661 = vadd.f32 0.0, %v4660
      %v4662 = vpop.f32.mrf.mxu0
      %v4663 = vadd.f32 0.0, %v4662
      %4664 = vmatmul.bf16.gmra.mxu0 %v3552
      %v4665 = vpop.f32.mrf.mxu0
      %v4666 = vadd.f32 0.0, %v4665
      %v4667 = vpop.f32.mrf.mxu0
      %v4668 = vadd.f32 0.0, %v4667
      %4669 = vmatmul.bf16.gmra.mxu0 %v3555
      %v4670 = vpop.f32.mrf.mxu0
      %v4671 = vadd.f32 0.0, %v4670
      %v4672 = vpop.f32.mrf.mxu0
      %v4673 = vadd.f32 0.0, %v4672
      %4674 = vmatmul.bf16.gmra.mxu0 %v3558
      %v4675 = vpop.f32.mrf.mxu0
      %v4676 = vadd.f32 0.0, %v4675
      %v4677 = vpop.f32.mrf.mxu0
      %v4678 = vadd.f32 0.0, %v4677
      %4679 = vmatmul.bf16.gmra.mxu0 %v3561
      %v4680 = vpop.f32.mrf.mxu0
      %v4681 = vadd.f32 0.0, %v4680
      %v4682 = vpop.f32.mrf.mxu0
      %v4683 = vadd.f32 0.0, %v4682
      %4684 = vmatmul.bf16.gmra.mxu0 %v3564
      %v4685 = vpop.f32.mrf.mxu0
      %v4686 = vadd.f32 0.0, %v4685
      %v4687 = vpop.f32.mrf.mxu0
      %v4688 = vadd.f32 0.0, %v4687
      %4689 = vmatmul.bf16.gmra.mxu0 %v3567
      %v4690 = vpop.f32.mrf.mxu0
      %v4691 = vadd.f32 0.0, %v4690
      %v4692 = vpop.f32.mrf.mxu0
      %v4693 = vadd.f32 0.0, %v4692
      %4694 = vmatmul.bf16.gmra.mxu0 %v3570
      %v4695 = vpop.f32.mrf.mxu0
      %v4696 = vadd.f32 0.0, %v4695
      %v4697 = vpop.f32.mrf.mxu0
      %v4698 = vadd.f32 0.0, %v4697
      %4699 = vmatmul.bf16.gmra.mxu0 %v3573
      %v4700 = vpop.f32.mrf.mxu0
      %v4701 = vadd.f32 0.0, %v4700
      %v4702 = vpop.f32.mrf.mxu0
      %v4703 = vadd.f32 0.0, %v4702
      %4704 = vmatmul.bf16.gmra.mxu0 %v3576
      %v4705 = vpop.f32.mrf.mxu0
      %v4706 = vadd.f32 0.0, %v4705
      %v4707 = vpop.f32.mrf.mxu0
      %v4708 = vadd.f32 0.0, %v4707
      %4709 = vmatmul.bf16.gmra.mxu0 %v3579
      %v4710 = vpop.f32.mrf.mxu0
      %v4711 = vadd.f32 0.0, %v4710
      %v4712 = vpop.f32.mrf.mxu0
      %v4713 = vadd.f32 0.0, %v4712
      %4714 = vmatmul.bf16.gmra.mxu0 %v3582
      %v4715 = vpop.f32.mrf.mxu0
      %v4716 = vadd.f32 0.0, %v4715
      %v4717 = vpop.f32.mrf.mxu0
      %v4718 = vadd.f32 0.0, %v4717
      %4719 = vmatmul.bf16.gmra.mxu0 %v3585
      %v4720 = vpop.f32.mrf.mxu0
      %v4721 = vadd.f32 0.0, %v4720
      %v4722 = vpop.f32.mrf.mxu0
      %v4723 = vadd.f32 0.0, %v4722
      %4724 = vmatmul.bf16.gmra.mxu0 %v3588
      %v4725 = vpop.f32.mrf.mxu0
      %v4726 = vadd.f32 0.0, %v4725
      %v4727 = vpop.f32.mrf.mxu0
      %v4728 = vadd.f32 0.0, %v4727
      %4729 = vmatmul.bf16.gmra.mxu0 %v3591
      %v4730 = vpop.f32.mrf.mxu0
      %v4731 = vadd.f32 0.0, %v4730
      %v4732 = vpop.f32.mrf.mxu0
      %v4733 = vadd.f32 0.0, %v4732
      %4734 = vmatmul.bf16.gmra.mxu0 %v3594
      %v4735 = vpop.f32.mrf.mxu0
      %v4736 = vadd.f32 0.0, %v4735
      %v4737 = vpop.f32.mrf.mxu0
      %v4738 = vadd.f32 0.0, %v4737
      %4739 = vmatmul.bf16.gmra.mxu0 %v3597
      %v4740 = vpop.f32.mrf.mxu0
      %v4741 = vadd.f32 0.0, %v4740
      %v4742 = vpop.f32.mrf.mxu0
      %v4743 = vadd.f32 0.0, %v4742
      %4744 = vmatmul.bf16.gmra.mxu0 %v3600
      %v4745 = vpop.f32.mrf.mxu0
      %v4746 = vadd.f32 0.0, %v4745
      %v4747 = vpop.f32.mrf.mxu0
      %v4748 = vadd.f32 0.0, %v4747
      %4749 = vmatmul.bf16.gmra.mxu0 %v3603
      %v4750 = vpop.f32.mrf.mxu0
      %v4751 = vadd.f32 0.0, %v4750
      %v4752 = vpop.f32.mrf.mxu0
      %v4753 = vadd.f32 0.0, %v4752
      %4754 = vmatmul.bf16.gmra.mxu0 %v3606
      %v4755 = vpop.f32.mrf.mxu0
      %v4756 = vadd.f32 0.0, %v4755
      %v4757 = vpop.f32.mrf.mxu0
      %v4758 = vadd.f32 0.0, %v4757
      %4759 = vmatmul.bf16.gmra.mxu0 %v3609
      %v4760 = vpop.f32.mrf.mxu0
      %v4761 = vadd.f32 0.0, %v4760
      %v4762 = vpop.f32.mrf.mxu0
      %v4763 = vadd.f32 0.0, %v4762
      %4764 = vmatmul.bf16.gmra.mxu0 %v3612
      %v4765 = vpop.f32.mrf.mxu0
      %v4766 = vadd.f32 0.0, %v4765
      %v4767 = vpop.f32.mrf.mxu0
      %v4768 = vadd.f32 0.0, %v4767
      %4769 = vmatmul.bf16.gmra.mxu0 %v3615
      %v4770 = vpop.f32.mrf.mxu0
      %v4771 = vadd.f32 0.0, %v4770
      %v4772 = vpop.f32.mrf.mxu0
      %v4773 = vadd.f32 0.0, %v4772
      %4774 = vmatmul.bf16.gmra.mxu0 %v3618
      %v4775 = vpop.f32.mrf.mxu0
      %v4776 = vadd.f32 0.0, %v4775
      %v4777 = vpop.f32.mrf.mxu0
      %v4778 = vadd.f32 0.0, %v4777
      %4779 = vmatmul.bf16.gmra.mxu0 %v3621
      %v4780 = vpop.f32.mrf.mxu0
      %v4781 = vadd.f32 0.0, %v4780
      %v4782 = vpop.f32.mrf.mxu0
      %v4783 = vadd.f32 0.0, %v4782
      %4784 = vmatmul.bf16.gmra.mxu0 %v3624
      %v4785 = vpop.f32.mrf.mxu0
      %v4786 = vadd.f32 0.0, %v4785
      %v4787 = vpop.f32.mrf.mxu0
      %v4788 = vadd.f32 0.0, %v4787
      %4789 = vmatmul.bf16.gmra.mxu0 %v3627
      %v4790 = vpop.f32.mrf.mxu0
      %v4791 = vadd.f32 0.0, %v4790
      %v4792 = vpop.f32.mrf.mxu0
      %v4793 = vadd.f32 0.0, %v4792
      %4794 = vmatmul.bf16.gmra.mxu0 %v3630
      %v4795 = vpop.f32.mrf.mxu0
      %v4796 = vadd.f32 0.0, %v4795
      %v4797 = vpop.f32.mrf.mxu0
      %v4798 = vadd.f32 0.0, %v4797
      %4799 = vmatmul.bf16.gmra.mxu0 %v3633
      %v4800 = vpop.f32.mrf.mxu0
      %v4801 = vadd.f32 0.0, %v4800
      %v4802 = vpop.f32.mrf.mxu0
      %v4803 = vadd.f32 0.0, %v4802
      %4804 = vmatmul.bf16.gmra.mxu0 %v3636
      %v4805 = vpop.f32.mrf.mxu0
      %v4806 = vadd.f32 0.0, %v4805
      %v4807 = vpop.f32.mrf.mxu0
      %v4808 = vadd.f32 0.0, %v4807
      %4809 = vmatmul.bf16.gmra.mxu0 %v3639
      %v4810 = vpop.f32.mrf.mxu0
      %v4811 = vadd.f32 0.0, %v4810
      %v4812 = vpop.f32.mrf.mxu0
      %v4813 = vadd.f32 0.0, %v4812
      %4814 = vmatmul.bf16.gmra.mxu0 %v3642
      %v4815 = vpop.f32.mrf.mxu0
      %v4816 = vadd.f32 0.0, %v4815
      %v4817 = vpop.f32.mrf.mxu0
      %v4818 = vadd.f32 0.0, %v4817
      %4819 = vmatmul.bf16.gmra.mxu0 %v3645
      %v4820 = vpop.f32.mrf.mxu0
      %v4821 = vadd.f32 0.0, %v4820
      %v4822 = vpop.f32.mrf.mxu0
      %v4823 = vadd.f32 0.0, %v4822
      %4824 = vmatmul.bf16.gmra.mxu0 %v3648
      %v4825 = vpop.f32.mrf.mxu0
      %v4826 = vadd.f32 0.0, %v4825
      %v4827 = vpop.f32.mrf.mxu0
      %v4828 = vadd.f32 0.0, %v4827
      %4829 = vmatmul.bf16.gmra.mxu0 %v3651
      %v4830 = vpop.f32.mrf.mxu0
      %v4831 = vadd.f32 0.0, %v4830
      %v4832 = vpop.f32.mrf.mxu0
      %v4833 = vadd.f32 0.0, %v4832
      %4834 = vmatmul.bf16.gmra.mxu0 %v3654
      %v4835 = vpop.f32.mrf.mxu0
      %v4836 = vadd.f32 0.0, %v4835
      %v4837 = vpop.f32.mrf.mxu0
      %v4838 = vadd.f32 0.0, %v4837
      %4839 = vmatmul.bf16.gmra.mxu0 %v3657
      %v4840 = vpop.f32.mrf.mxu0
      %v4841 = vadd.f32 0.0, %v4840
      %v4842 = vpop.f32.mrf.mxu0
      %v4843 = vadd.f32 0.0, %v4842
      %4844 = vmatmul.bf16.gmra.mxu0 %v3660
      %v4845 = vpop.f32.mrf.mxu0
      %v4846 = vadd.f32 0.0, %v4845
      %v4847 = vpop.f32.mrf.mxu0
      %v4848 = vadd.f32 0.0, %v4847
      %4849 = vmatmul.bf16.gmra.mxu0 %v3663
      %v4850 = vpop.f32.mrf.mxu0
      %v4851 = vadd.f32 0.0, %v4850
      %v4852 = vpop.f32.mrf.mxu0
      %v4853 = vadd.f32 0.0, %v4852
      %4854 = vmatmul.bf16.gmra.mxu0 %v3666
      %v4855 = vpop.f32.mrf.mxu0
      %v4856 = vadd.f32 0.0, %v4855
      %v4857 = vpop.f32.mrf.mxu0
      %v4858 = vadd.f32 0.0, %v4857
      %4859 = vmatmul.bf16.gmra.mxu0 %v3669
      %v4860 = vpop.f32.mrf.mxu0
      %v4861 = vadd.f32 0.0, %v4860
      %v4862 = vpop.f32.mrf.mxu0
      %v4863 = vadd.f32 0.0, %v4862
      %4864 = vmatmul.bf16.gmra.mxu0 %v3672
      %v4865 = vpop.f32.mrf.mxu0
      %v4866 = vadd.f32 0.0, %v4865
      %v4867 = vpop.f32.mrf.mxu0
      %v4868 = vadd.f32 0.0, %v4867
      %4869 = vmatmul.bf16.gmra.mxu0 %v3675
      %v4870 = vpop.f32.mrf.mxu0
      %v4871 = vadd.f32 0.0, %v4870
      %v4872 = vpop.f32.mrf.mxu0
      %v4873 = vadd.f32 0.0, %v4872
      %4874 = vmatmul.bf16.gmra.mxu0 %v3678
      %v4875 = vpop.f32.mrf.mxu0
      %v4876 = vadd.f32 0.0, %v4875
      %v4877 = vpop.f32.mrf.mxu0
      %v4878 = vadd.f32 0.0, %v4877
      %4879 = vmatmul.bf16.gmra.mxu0 %v3681
      %v4880 = vpop.f32.mrf.mxu0
      %v4881 = vadd.f32 0.0, %v4880
      %v4882 = vpop.f32.mrf.mxu0
      %v4883 = vadd.f32 0.0, %v4882
      %4884 = vmatmul.bf16.gmra.mxu0 %v3684
      %v4885 = vpop.f32.mrf.mxu0
      %v4886 = vadd.f32 0.0, %v4885
      %v4887 = vpop.f32.mrf.mxu0
      %v4888 = vadd.f32 0.0, %v4887
      %4889 = vmatmul.bf16.gmra.mxu0 %v3687
      %v4890 = vpop.f32.mrf.mxu0
      %v4891 = vadd.f32 0.0, %v4890
      %v4892 = vpop.f32.mrf.mxu0
      %v4893 = vadd.f32 0.0, %v4892
      %4894 = vmatmul.bf16.gmra.mxu0 %v3690
      %v4895 = vpop.f32.mrf.mxu0
      %v4896 = vadd.f32 0.0, %v4895
      %v4897 = vpop.f32.mrf.mxu0
      %v4898 = vadd.f32 0.0, %v4897
      %4899 = vmatmul.bf16.gmra.mxu0 %v3693
      %v4900 = vpop.f32.mrf.mxu0
      %v4901 = vadd.f32 0.0, %v4900
      %v4902 = vpop.f32.mrf.mxu0
      %v4903 = vadd.f32 0.0, %v4902
      %4904 = vmatmul.bf16.gmra.mxu0 %v3696
      %v4905 = vpop.f32.mrf.mxu0
      %v4906 = vadd.f32 0.0, %v4905
      %v4907 = vpop.f32.mrf.mxu0
      %v4908 = vadd.f32 0.0, %v4907
      %4909 = vmatmul.bf16.gmra.mxu0 %v3699
      %v4910 = vpop.f32.mrf.mxu0
      %v4911 = vadd.f32 0.0, %v4910
      %v4912 = vpop.f32.mrf.mxu0
      %v4913 = vadd.f32 0.0, %v4912
      %4914 = vmatmul.bf16.gmra.mxu0 %v3702
      %v4915 = vpop.f32.mrf.mxu0
      %v4916 = vadd.f32 0.0, %v4915
      %v4917 = vpop.f32.mrf.mxu0
      %v4918 = vadd.f32 0.0, %v4917
      %4919 = vmatmul.bf16.gmra.mxu0 %v3705
      %v4920 = vpop.f32.mrf.mxu0
      %v4921 = vadd.f32 0.0, %v4920
      %v4922 = vpop.f32.mrf.mxu0
      %v4923 = vadd.f32 0.0, %v4922
      %4924 = vmatmul.bf16.gmra.mxu0 %v3708
      %v4925 = vpop.f32.mrf.mxu0
      %v4926 = vadd.f32 0.0, %v4925
      %v4927 = vpop.f32.mrf.mxu0
      %v4928 = vadd.f32 0.0, %v4927
      %4929 = vmatmul.bf16.gmra.mxu0 %v3711
      %v4930 = vpop.f32.mrf.mxu0
      %v4931 = vadd.f32 0.0, %v4930
      %v4932 = vpop.f32.mrf.mxu0
      %v4933 = vadd.f32 0.0, %v4932
      %4934 = vmatmul.bf16.gmra.mxu0 %v3714
      %v4935 = vpop.f32.mrf.mxu0
      %v4936 = vadd.f32 0.0, %v4935
      %v4937 = vpop.f32.mrf.mxu0
      %v4938 = vadd.f32 0.0, %v4937
      %4939 = vmatmul.bf16.gmra.mxu0 %v3717
      %v4940 = vpop.f32.mrf.mxu0
      %v4941 = vadd.f32 0.0, %v4940
      %v4942 = vpop.f32.mrf.mxu0
      %v4943 = vadd.f32 0.0, %v4942
      %4944 = vmatmul.bf16.gmra.mxu0 %v3720
      %v4945 = vpop.f32.mrf.mxu0
      %v4946 = vadd.f32 0.0, %v4945
      %v4947 = vpop.f32.mrf.mxu0
      %v4948 = vadd.f32 0.0, %v4947
      %4949 = vmatmul.bf16.gmra.mxu0 %v3723
      %v4950 = vpop.f32.mrf.mxu0
      %v4951 = vadd.f32 0.0, %v4950
      %v4952 = vpop.f32.mrf.mxu0
      %v4953 = vadd.f32 0.0, %v4952
      %4954 = vmatmul.bf16.gmra.mxu0 %v3726
      %v4955 = vpop.f32.mrf.mxu0
      %v4956 = vadd.f32 0.0, %v4955
      %v4957 = vpop.f32.mrf.mxu0
      %v4958 = vadd.f32 0.0, %v4957
      %4959 = vmatmul.bf16.gmra.mxu0 %v3729
      %v4960 = vpop.f32.mrf.mxu0
      %v4961 = vadd.f32 0.0, %v4960
      %v4962 = vpop.f32.mrf.mxu0
      %v4963 = vadd.f32 0.0, %v4962
      %4964 = vmatmul.bf16.gmra.mxu0 %v3732
      %v4965 = vpop.f32.mrf.mxu0
      %v4966 = vadd.f32 0.0, %v4965
      %v4967 = vpop.f32.mrf.mxu0
      %v4968 = vadd.f32 0.0, %v4967
      %4969 = vmatmul.bf16.gmra.mxu0 %v3735
      %v4970 = vpop.f32.mrf.mxu0
      %v4971 = vadd.f32 0.0, %v4970
      %v4972 = vpop.f32.mrf.mxu0
      %v4973 = vadd.f32 0.0, %v4972
      %4974 = vmatmul.bf16.gmra.mxu0 %v3738
      %v4975 = vpop.f32.mrf.mxu0
      %v4976 = vadd.f32 0.0, %v4975
      %v4977 = vpop.f32.mrf.mxu0
      %v4978 = vadd.f32 0.0, %v4977
      %4979 = vmatmul.bf16.gmra.mxu0 %v3741
      %v4980 = vpop.f32.mrf.mxu0
      %v4981 = vadd.f32 0.0, %v4980
      %v4982 = vpop.f32.mrf.mxu0
      %v4983 = vadd.f32 0.0, %v4982
      %4984 = vmatmul.bf16.gmra.mxu0 %v3744
      %v4985 = vpop.f32.mrf.mxu0
      %v4986 = vadd.f32 0.0, %v4985
      %v4987 = vpop.f32.mrf.mxu0
      %v4988 = vadd.f32 0.0, %v4987
      %4989 = vmatmul.bf16.gmra.mxu0 %v3747
      %v4990 = vpop.f32.mrf.mxu0
      %v4991 = vadd.f32 0.0, %v4990
      %v4992 = vpop.f32.mrf.mxu0
      %v4993 = vadd.f32 0.0, %v4992
      %4994 = vmatmul.bf16.gmra.mxu0 %v3750
      %v4995 = vpop.f32.mrf.mxu0
      %v4996 = vadd.f32 0.0, %v4995
      %v4997 = vpop.f32.mrf.mxu0
      %v4998 = vadd.f32 0.0, %v4997
      %4999 = vmatmul.bf16.gmra.mxu0 %v3753
      %v5000 = vpop.f32.mrf.mxu0
      %v5001 = vadd.f32 0.0, %v5000
      %v5002 = vpop.f32.mrf.mxu0
      %v5003 = vadd.f32 0.0, %v5002
      %5004 = vmatmul.bf16.gmra.mxu0 %v3756
      %v5005 = vpop.f32.mrf.mxu0
      %v5006 = vadd.f32 0.0, %v5005
      %v5007 = vpop.f32.mrf.mxu0
      %v5008 = vadd.f32 0.0, %v5007
      %5009 = vmatmul.bf16.gmra.mxu0 %v3759
      %v5010 = vpop.f32.mrf.mxu0
      %v5011 = vadd.f32 0.0, %v5010
      %v5012 = vpop.f32.mrf.mxu0
      %v5013 = vadd.f32 0.0, %v5012
      %5014 = vmatmul.bf16.gmra.mxu0 %v3762
      %v5015 = vpop.f32.mrf.mxu0
      %v5016 = vadd.f32 0.0, %v5015
      %v5017 = vpop.f32.mrf.mxu0
      %v5018 = vadd.f32 0.0, %v5017
      %5019 = vmatmul.bf16.gmra.mxu0 %v3765
      %v5020 = vpop.f32.mrf.mxu0
      %v5021 = vadd.f32 0.0, %v5020
      %v5022 = vpop.f32.mrf.mxu0
      %v5023 = vadd.f32 0.0, %v5022
      %5024 = vmatmul.bf16.gmra.mxu0 %v3768
      %v5025 = vpop.f32.mrf.mxu0
      %v5026 = vadd.f32 0.0, %v5025
      %v5027 = vpop.f32.mrf.mxu0
      %v5028 = vadd.f32 0.0, %v5027
      %5029 = vmatmul.bf16.gmra.mxu0 %v3771
      %v5030 = vpop.f32.mrf.mxu0
      %v5031 = vadd.f32 0.0, %v5030
      %v5032 = vpop.f32.mrf.mxu0
      %v5033 = vadd.f32 0.0, %v5032
      %5034 = vmatmul.bf16.gmra.mxu0 %v3774
      %v5035 = vpop.f32.mrf.mxu0
      %v5036 = vadd.f32 0.0, %v5035
      %v5037 = vpop.f32.mrf.mxu0
      %v5038 = vadd.f32 0.0, %v5037
      %5039 = vmatmul.bf16.gmra.mxu0 %v3777
      %v5040 = vpop.f32.mrf.mxu0
      %v5041 = vadd.f32 0.0, %v5040
      %v5042 = vpop.f32.mrf.mxu0
      %v5043 = vadd.f32 0.0, %v5042
      %5044 = vmatmul.bf16.gmra.mxu0 %v3780
      %v5045 = vpop.f32.mrf.mxu0
      %v5046 = vadd.f32 0.0, %v5045
      %v5047 = vpop.f32.mrf.mxu0
      %v5048 = vadd.f32 0.0, %v5047
      %5049 = vmatmul.bf16.gmra.mxu0 %v3783
      %v5050 = vpop.f32.mrf.mxu0
      %v5051 = vadd.f32 0.0, %v5050
      %v5052 = vpop.f32.mrf.mxu0
      %v5053 = vadd.f32 0.0, %v5052
      %5054 = vmatmul.bf16.gmra.mxu0 %v3786
      %v5055 = vpop.f32.mrf.mxu0
      %v5056 = vadd.f32 0.0, %v5055
      %v5057 = vpop.f32.mrf.mxu0
      %v5058 = vadd.f32 0.0, %v5057
      %5059 = vmatmul.bf16.gmra.mxu0 %v3789
      %v5060 = vpop.f32.mrf.mxu0
      %v5061 = vadd.f32 0.0, %v5060
      %v5062 = vpop.f32.mrf.mxu0
      %v5063 = vadd.f32 0.0, %v5062
      %5064 = vmatmul.bf16.gmra.mxu0 %v3792
      %v5065 = vpop.f32.mrf.mxu0
      %v5066 = vadd.f32 0.0, %v5065
      %v5067 = vpop.f32.mrf.mxu0
      %v5068 = vadd.f32 0.0, %v5067
      %5069 = vmatmul.bf16.gmra.mxu0 %v3795
      %v5070 = vpop.f32.mrf.mxu0
      %v5071 = vadd.f32 0.0, %v5070
      %v5072 = vpop.f32.mrf.mxu0
      %v5073 = vadd.f32 0.0, %v5072
      %5074 = vmatmul.bf16.gmra.mxu0 %v3798
      %v5075 = vpop.f32.mrf.mxu0
      %v5076 = vadd.f32 0.0, %v5075
      %v5077 = vpop.f32.mrf.mxu0
      %v5078 = vadd.f32 0.0, %v5077
      %5079 = vmatmul.bf16.gmra.mxu0 %v3801
      %v5080 = vpop.f32.mrf.mxu0
      %v5081 = vadd.f32 0.0, %v5080
      %v5082 = vpop.f32.mrf.mxu0
      %v5083 = vadd.f32 0.0, %v5082
      %5084 = vmatmul.bf16.gmra.mxu0 %v3804
      %v5085 = vpop.f32.mrf.mxu0
      %v5086 = vadd.f32 0.0, %v5085
      %v5087 = vpop.f32.mrf.mxu0
      %v5088 = vadd.f32 0.0, %v5087
      %5089 = vmatmul.bf16.gmra.mxu0 %v3807
      %v5090 = vpop.f32.mrf.mxu0
      %v5091 = vadd.f32 0.0, %v5090
      %v5092 = vpop.f32.mrf.mxu0
      %v5093 = vadd.f32 0.0, %v5092
      %5094 = vmatmul.bf16.gmra.mxu0 %v3810
      %v5095 = vpop.f32.mrf.mxu0
      %v5096 = vadd.f32 0.0, %v5095
      %v5097 = vpop.f32.mrf.mxu0
      %v5098 = vadd.f32 0.0, %v5097
      %5099 = vmatmul.bf16.gmra.mxu0 %v3813
      %v5100 = vpop.f32.mrf.mxu0
      %v5101 = vadd.f32 0.0, %v5100
      %v5102 = vpop.f32.mrf.mxu0
      %v5103 = vadd.f32 0.0, %v5102
      %5104 = vmatmul.bf16.gmra.mxu0 %v3816
      %v5105 = vpop.f32.mrf.mxu0
      %v5106 = vadd.f32 0.0, %v5105
      %v5107 = vpop.f32.mrf.mxu0
      %v5108 = vadd.f32 0.0, %v5107
      %5109 = vmatmul.bf16.gmra.mxu0 %v3819
      %v5110 = vpop.f32.mrf.mxu0
      %v5111 = vadd.f32 0.0, %v5110
      %v5112 = vpop.f32.mrf.mxu0
      %v5113 = vadd.f32 0.0, %v5112
      %5114 = vmatmul.bf16.gmra.mxu0 %v3822
      %v5115 = vpop.f32.mrf.mxu0
      %v5116 = vadd.f32 0.0, %v5115
      %v5117 = vpop.f32.mrf.mxu0
      %v5118 = vadd.f32 0.0, %v5117
      %5119 = vdwg.mxu0
      %v5120 = vadd.f32 %v1252, %v3841
      %v5121 = vadd.f32 %v1253, %v3843
      %v5122 = vadd.f32 %v1254, %v3846
      %v5123 = vadd.f32 %v1255, %v3848
      %v5124 = vadd.f32 %v1256, %v3851
      %v5125 = vadd.f32 %v1257, %v3853
      %v5126 = vadd.f32 %v1258, %v3856
      %v5127 = vadd.f32 %v1259, %v3858
      %v5128 = vadd.f32 %v1260, %v3861
      %v5129 = vadd.f32 %v1261, %v3863
      %v5130 = vadd.f32 %v1262, %v3866
      %v5131 = vadd.f32 %v1263, %v3868
      %v5132 = vadd.f32 %v1264, %v3871
      %v5133 = vadd.f32 %v1265, %v3873
      %v5134 = vadd.f32 %v1266, %v3876
      %v5135 = vadd.f32 %v1267, %v3878
      %v5136 = vadd.f32 %v1268, %v3881
      %v5137 = vadd.f32 %v1269, %v3883
      %v5138 = vadd.f32 %v1270, %v3886
      %v5139 = vadd.f32 %v1271, %v3888
      %v5140 = vadd.f32 %v1272, %v3891
      %v5141 = vadd.f32 %v1273, %v3893
      %v5142 = vadd.f32 %v1274, %v3896
      %v5143 = vadd.f32 %v1275, %v3898
      %v5144 = vadd.f32 %v1276, %v3901
      %v5145 = vadd.f32 %v1277, %v3903
      %v5146 = vadd.f32 %v1278, %v3906
      %v5147 = vadd.f32 %v1279, %v3908
      %v5148 = vadd.f32 %v1280, %v3911
      %v5149 = vadd.f32 %v1281, %v3913
      %v5150 = vadd.f32 %v1282, %v3916
      %v5151 = vadd.f32 %v1283, %v3918
      %v5152 = vadd.f32 %v1284, %v3921
      %v5153 = vadd.f32 %v1285, %v3923
      %v5154 = vadd.f32 %v1286, %v3926
      %v5155 = vadd.f32 %v1287, %v3928
      %v5156 = vadd.f32 %v1288, %v3931
      %v5157 = vadd.f32 %v1289, %v3933
      %v5158 = vadd.f32 %v1290, %v3936
      %v5159 = vadd.f32 %v1291, %v3938
      %v5160 = vadd.f32 %v1292, %v3941
      %v5161 = vadd.f32 %v1293, %v3943
      %v5162 = vadd.f32 %v1294, %v3946
      %v5163 = vadd.f32 %v1295, %v3948
      %v5164 = vadd.f32 %v1296, %v3951
      %v5165 = vadd.f32 %v1297, %v3953
      %v5166 = vadd.f32 %v1298, %v3956
      %v5167 = vadd.f32 %v1299, %v3958
      %v5168 = vadd.f32 %v1300, %v3961
      %v5169 = vadd.f32 %v1301, %v3963
      %v5170 = vadd.f32 %v1302, %v3966
      %v5171 = vadd.f32 %v1303, %v3968
      %v5172 = vadd.f32 %v1304, %v3971
      %v5173 = vadd.f32 %v1305, %v3973
      %v5174 = vadd.f32 %v1306, %v3976
      %v5175 = vadd.f32 %v1307, %v3978
      %v5176 = vadd.f32 %v1308, %v3981
      %v5177 = vadd.f32 %v1309, %v3983
      %v5178 = vadd.f32 %v1310, %v3986
      %v5179 = vadd.f32 %v1311, %v3988
      %v5180 = vadd.f32 %v1312, %v3991
      %v5181 = vadd.f32 %v1313, %v3993
      %v5182 = vadd.f32 %v1314, %v3996
      %v5183 = vadd.f32 %v1315, %v3998
      %v5184 = vadd.f32 %v1316, %v4001
      %v5185 = vadd.f32 %v1317, %v4003
      %v5186 = vadd.f32 %v1318, %v4006
      %v5187 = vadd.f32 %v1319, %v4008
      %v5188 = vadd.f32 %v1320, %v4011
      %v5189 = vadd.f32 %v1321, %v4013
      %v5190 = vadd.f32 %v1322, %v4016
      %v5191 = vadd.f32 %v1323, %v4018
      %v5192 = vadd.f32 %v1324, %v4021
      %v5193 = vadd.f32 %v1325, %v4023
      %v5194 = vadd.f32 %v1326, %v4026
      %v5195 = vadd.f32 %v1327, %v4028
      %v5196 = vadd.f32 %v1328, %v4031
      %v5197 = vadd.f32 %v1329, %v4033
      %v5198 = vadd.f32 %v1330, %v4036
      %v5199 = vadd.f32 %v1331, %v4038
      %v5200 = vadd.f32 %v1332, %v4041
      %v5201 = vadd.f32 %v1333, %v4043
      %v5202 = vadd.f32 %v1334, %v4046
      %v5203 = vadd.f32 %v1335, %v4048
      %v5204 = vadd.f32 %v1336, %v4051
      %v5205 = vadd.f32 %v1337, %v4053
      %v5206 = vadd.f32 %v1338, %v4056
      %v5207 = vadd.f32 %v1339, %v4058
      %v5208 = vadd.f32 %v1340, %v4061
      %v5209 = vadd.f32 %v1341, %v4063
      %v5210 = vadd.f32 %v1342, %v4066
      %v5211 = vadd.f32 %v1343, %v4068
      %v5212 = vadd.f32 %v1344, %v4071
      %v5213 = vadd.f32 %v1345, %v4073
      %v5214 = vadd.f32 %v1346, %v4076
      %v5215 = vadd.f32 %v1347, %v4078
      %v5216 = vadd.f32 %v1348, %v4081
      %v5217 = vadd.f32 %v1349, %v4083
      %v5218 = vadd.f32 %v1350, %v4086
      %v5219 = vadd.f32 %v1351, %v4088
      %v5220 = vadd.f32 %v1352, %v4091
      %v5221 = vadd.f32 %v1353, %v4093
      %v5222 = vadd.f32 %v1354, %v4096
      %v5223 = vadd.f32 %v1355, %v4098
      %v5224 = vadd.f32 %v1356, %v4101
      %v5225 = vadd.f32 %v1357, %v4103
      %v5226 = vadd.f32 %v1358, %v4106
      %v5227 = vadd.f32 %v1359, %v4108
      %v5228 = vadd.f32 %v1360, %v4111
      %v5229 = vadd.f32 %v1361, %v4113
      %v5230 = vadd.f32 %v1362, %v4116
      %v5231 = vadd.f32 %v1363, %v4118
      %v5232 = vadd.f32 %v1364, %v4121
      %v5233 = vadd.f32 %v1365, %v4123
      %v5234 = vadd.f32 %v1366, %v4126
      %v5235 = vadd.f32 %v1367, %v4128
      %v5236 = vadd.f32 %v1368, %v4131
      %v5237 = vadd.f32 %v1369, %v4133
      %v5238 = vadd.f32 %v1370, %v4136
      %v5239 = vadd.f32 %v1371, %v4138
      %v5240 = vadd.f32 %v1372, %v4141
      %v5241 = vadd.f32 %v1373, %v4143
      %v5242 = vadd.f32 %v1374, %v4146
      %v5243 = vadd.f32 %v1375, %v4148
      %v5244 = vadd.f32 %v1376, %v4151
      %v5245 = vadd.f32 %v1377, %v4153
      %v5246 = vadd.f32 %v1378, %v4156
      %v5247 = vadd.f32 %v1379, %v4158
      %v5248 = vadd.f32 %v1380, %v4161
      %v5249 = vadd.f32 %v1381, %v4163
      %v5250 = vadd.f32 %v1382, %v4166
      %v5251 = vadd.f32 %v1383, %v4168
      %v5252 = vadd.f32 %v1384, %v4171
      %v5253 = vadd.f32 %v1385, %v4173
      %v5254 = vadd.f32 %v1386, %v4176
      %v5255 = vadd.f32 %v1387, %v4178
      %v5256 = vadd.f32 %v1388, %v4181
      %v5257 = vadd.f32 %v1389, %v4183
      %v5258 = vadd.f32 %v1390, %v4186
      %v5259 = vadd.f32 %v1391, %v4188
      %v5260 = vadd.f32 %v1392, %v4191
      %v5261 = vadd.f32 %v1393, %v4193
      %v5262 = vadd.f32 %v1394, %v4196
      %v5263 = vadd.f32 %v1395, %v4198
      %v5264 = vadd.f32 %v1396, %v4201
      %v5265 = vadd.f32 %v1397, %v4203
      %v5266 = vadd.f32 %v1398, %v4206
      %v5267 = vadd.f32 %v1399, %v4208
      %v5268 = vadd.f32 %v1400, %v4211
      %v5269 = vadd.f32 %v1401, %v4213
      %v5270 = vadd.f32 %v1402, %v4216
      %v5271 = vadd.f32 %v1403, %v4218
      %v5272 = vadd.f32 %v1404, %v4221
      %v5273 = vadd.f32 %v1405, %v4223
      %v5274 = vadd.f32 %v1406, %v4226
      %v5275 = vadd.f32 %v1407, %v4228
      %v5276 = vadd.f32 %v1408, %v4231
      %v5277 = vadd.f32 %v1409, %v4233
      %v5278 = vadd.f32 %v1410, %v4236
      %v5279 = vadd.f32 %v1411, %v4238
      %v5280 = vadd.f32 %v1412, %v4241
      %v5281 = vadd.f32 %v1413, %v4243
      %v5282 = vadd.f32 %v1414, %v4246
      %v5283 = vadd.f32 %v1415, %v4248
      %v5284 = vadd.f32 %v1416, %v4251
      %v5285 = vadd.f32 %v1417, %v4253
      %v5286 = vadd.f32 %v1418, %v4256
      %v5287 = vadd.f32 %v1419, %v4258
      %v5288 = vadd.f32 %v1420, %v4261
      %v5289 = vadd.f32 %v1421, %v4263
      %v5290 = vadd.f32 %v1422, %v4266
      %v5291 = vadd.f32 %v1423, %v4268
      %v5292 = vadd.f32 %v1424, %v4271
      %v5293 = vadd.f32 %v1425, %v4273
      %v5294 = vadd.f32 %v1426, %v4276
      %v5295 = vadd.f32 %v1427, %v4278
      %v5296 = vadd.f32 %v1428, %v4281
      %v5297 = vadd.f32 %v1429, %v4283
      %v5298 = vadd.f32 %v1430, %v4286
      %v5299 = vadd.f32 %v1431, %v4288
      %v5300 = vadd.f32 %v1432, %v4291
      %v5301 = vadd.f32 %v1433, %v4293
      %v5302 = vadd.f32 %v1434, %v4296
      %v5303 = vadd.f32 %v1435, %v4298
      %v5304 = vadd.f32 %v1436, %v4301
      %v5305 = vadd.f32 %v1437, %v4303
      %v5306 = vadd.f32 %v1438, %v4306
      %v5307 = vadd.f32 %v1439, %v4308
      %v5308 = vadd.f32 %v1440, %v4311
      %v5309 = vadd.f32 %v1441, %v4313
      %v5310 = vadd.f32 %v1442, %v4316
      %v5311 = vadd.f32 %v1443, %v4318
      %v5312 = vadd.f32 %v1444, %v4321
      %v5313 = vadd.f32 %v1445, %v4323
      %v5314 = vadd.f32 %v1446, %v4326
      %v5315 = vadd.f32 %v1447, %v4328
      %v5316 = vadd.f32 %v1448, %v4331
      %v5317 = vadd.f32 %v1449, %v4333
      %v5318 = vadd.f32 %v1450, %v4336
      %v5319 = vadd.f32 %v1451, %v4338
      %v5320 = vadd.f32 %v1452, %v4341
      %v5321 = vadd.f32 %v1453, %v4343
      %v5322 = vadd.f32 %v1454, %v4346
      %v5323 = vadd.f32 %v1455, %v4348
      %v5324 = vadd.f32 %v1456, %v4351
      %v5325 = vadd.f32 %v1457, %v4353
      %v5326 = vadd.f32 %v1458, %v4356
      %v5327 = vadd.f32 %v1459, %v4358
      %v5328 = vadd.f32 %v1460, %v4361
      %v5329 = vadd.f32 %v1461, %v4363
      %v5330 = vadd.f32 %v1462, %v4366
      %v5331 = vadd.f32 %v1463, %v4368
      %v5332 = vadd.f32 %v1464, %v4371
      %v5333 = vadd.f32 %v1465, %v4373
      %v5334 = vadd.f32 %v1466, %v4376
      %v5335 = vadd.f32 %v1467, %v4378
      %v5336 = vadd.f32 %v1468, %v4381
      %v5337 = vadd.f32 %v1469, %v4383
      %v5338 = vadd.f32 %v1470, %v4386
      %v5339 = vadd.f32 %v1471, %v4388
      %v5340 = vadd.f32 %v1472, %v4391
      %v5341 = vadd.f32 %v1473, %v4393
      %v5342 = vadd.f32 %v1474, %v4396
      %v5343 = vadd.f32 %v1475, %v4398
      %v5344 = vadd.f32 %v1476, %v4401
      %v5345 = vadd.f32 %v1477, %v4403
      %v5346 = vadd.f32 %v1478, %v4406
      %v5347 = vadd.f32 %v1479, %v4408
      %v5348 = vadd.f32 %v1480, %v4411
      %v5349 = vadd.f32 %v1481, %v4413
      %v5350 = vadd.f32 %v1482, %v4416
      %v5351 = vadd.f32 %v1483, %v4418
      %v5352 = vadd.f32 %v1484, %v4421
      %v5353 = vadd.f32 %v1485, %v4423
      %v5354 = vadd.f32 %v1486, %v4426
      %v5355 = vadd.f32 %v1487, %v4428
      %v5356 = vadd.f32 %v1488, %v4431
      %v5357 = vadd.f32 %v1489, %v4433
      %v5358 = vadd.f32 %v1490, %v4436
      %v5359 = vadd.f32 %v1491, %v4438
      %v5360 = vadd.f32 %v1492, %v4441
      %v5361 = vadd.f32 %v1493, %v4443
      %v5362 = vadd.f32 %v1494, %v4446
      %v5363 = vadd.f32 %v1495, %v4448
      %v5364 = vadd.f32 %v1496, %v4451
      %v5365 = vadd.f32 %v1497, %v4453
      %v5366 = vadd.f32 %v1498, %v4456
      %v5367 = vadd.f32 %v1499, %v4458
      %v5368 = vadd.f32 %v1500, %v4461
      %v5369 = vadd.f32 %v1501, %v4463
      %v5370 = vadd.f32 %v1502, %v4466
      %v5371 = vadd.f32 %v1503, %v4468
      %v5372 = vadd.f32 %v1504, %v4471
      %v5373 = vadd.f32 %v1505, %v4473
      %v5374 = vadd.f32 %v1506, %v4476
      %v5375 = vadd.f32 %v1507, %v4478
      %v5376 = vadd.f32 %v1508, %v4481
      %v5377 = vadd.f32 %v1509, %v4483
      %v5378 = vadd.f32 %v1510, %v4486
      %v5379 = vadd.f32 %v1511, %v4488
      %v5380 = vadd.f32 %v1512, %v4491
      %v5381 = vadd.f32 %v1513, %v4493
      %v5382 = vadd.f32 %v1514, %v4496
      %v5383 = vadd.f32 %v1515, %v4498
      %v5384 = vadd.f32 %v1516, %v4501
      %v5385 = vadd.f32 %v1517, %v4503
      %v5386 = vadd.f32 %v1518, %v4506
      %v5387 = vadd.f32 %v1519, %v4508
      %v5388 = vadd.f32 %v1520, %v4511
      %v5389 = vadd.f32 %v1521, %v4513
      %v5390 = vadd.f32 %v1522, %v4516
      %v5391 = vadd.f32 %v1523, %v4518
      %v5392 = vadd.f32 %v1524, %v4521
      %v5393 = vadd.f32 %v1525, %v4523
      %v5394 = vadd.f32 %v1526, %v4526
      %v5395 = vadd.f32 %v1527, %v4528
      %v5396 = vadd.f32 %v1528, %v4531
      %v5397 = vadd.f32 %v1529, %v4533
      %v5398 = vadd.f32 %v1530, %v4536
      %v5399 = vadd.f32 %v1531, %v4538
      %v5400 = vadd.f32 %v1532, %v4541
      %v5401 = vadd.f32 %v1533, %v4543
      %v5402 = vadd.f32 %v1534, %v4546
      %v5403 = vadd.f32 %v1535, %v4548
      %v5404 = vadd.f32 %v1536, %v4551
      %v5405 = vadd.f32 %v1537, %v4553
      %v5406 = vadd.f32 %v1538, %v4556
      %v5407 = vadd.f32 %v1539, %v4558
      %v5408 = vadd.f32 %v1540, %v4561
      %v5409 = vadd.f32 %v1541, %v4563
      %v5410 = vadd.f32 %v1542, %v4566
      %v5411 = vadd.f32 %v1543, %v4568
      %v5412 = vadd.f32 %v1544, %v4571
      %v5413 = vadd.f32 %v1545, %v4573
      %v5414 = vadd.f32 %v1546, %v4576
      %v5415 = vadd.f32 %v1547, %v4578
      %v5416 = vadd.f32 %v1548, %v4581
      %v5417 = vadd.f32 %v1549, %v4583
      %v5418 = vadd.f32 %v1550, %v4586
      %v5419 = vadd.f32 %v1551, %v4588
      %v5420 = vadd.f32 %v1552, %v4591
      %v5421 = vadd.f32 %v1553, %v4593
      %v5422 = vadd.f32 %v1554, %v4596
      %v5423 = vadd.f32 %v1555, %v4598
      %v5424 = vadd.f32 %v1556, %v4601
      %v5425 = vadd.f32 %v1557, %v4603
      %v5426 = vadd.f32 %v1558, %v4606
      %v5427 = vadd.f32 %v1559, %v4608
      %v5428 = vadd.f32 %v1560, %v4611
      %v5429 = vadd.f32 %v1561, %v4613
      %v5430 = vadd.f32 %v1562, %v4616
      %v5431 = vadd.f32 %v1563, %v4618
      %v5432 = vadd.f32 %v1564, %v4621
      %v5433 = vadd.f32 %v1565, %v4623
      %v5434 = vadd.f32 %v1566, %v4626
      %v5435 = vadd.f32 %v1567, %v4628
      %v5436 = vadd.f32 %v1568, %v4631
      %v5437 = vadd.f32 %v1569, %v4633
      %v5438 = vadd.f32 %v1570, %v4636
      %v5439 = vadd.f32 %v1571, %v4638
      %v5440 = vadd.f32 %v1572, %v4641
      %v5441 = vadd.f32 %v1573, %v4643
      %v5442 = vadd.f32 %v1574, %v4646
      %v5443 = vadd.f32 %v1575, %v4648
      %v5444 = vadd.f32 %v1576, %v4651
      %v5445 = vadd.f32 %v1577, %v4653
      %v5446 = vadd.f32 %v1578, %v4656
      %v5447 = vadd.f32 %v1579, %v4658
      %v5448 = vadd.f32 %v1580, %v4661
      %v5449 = vadd.f32 %v1581, %v4663
      %v5450 = vadd.f32 %v1582, %v4666
      %v5451 = vadd.f32 %v1583, %v4668
      %v5452 = vadd.f32 %v1584, %v4671
      %v5453 = vadd.f32 %v1585, %v4673
      %v5454 = vadd.f32 %v1586, %v4676
      %v5455 = vadd.f32 %v1587, %v4678
      %v5456 = vadd.f32 %v1588, %v4681
      %v5457 = vadd.f32 %v1589, %v4683
      %v5458 = vadd.f32 %v1590, %v4686
      %v5459 = vadd.f32 %v1591, %v4688
      %v5460 = vadd.f32 %v1592, %v4691
      %v5461 = vadd.f32 %v1593, %v4693
      %v5462 = vadd.f32 %v1594, %v4696
      %v5463 = vadd.f32 %v1595, %v4698
      %v5464 = vadd.f32 %v1596, %v4701
      %v5465 = vadd.f32 %v1597, %v4703
      %v5466 = vadd.f32 %v1598, %v4706
      %v5467 = vadd.f32 %v1599, %v4708
      %v5468 = vadd.f32 %v1600, %v4711
      %v5469 = vadd.f32 %v1601, %v4713
      %v5470 = vadd.f32 %v1602, %v4716
      %v5471 = vadd.f32 %v1603, %v4718
      %v5472 = vadd.f32 %v1604, %v4721
      %v5473 = vadd.f32 %v1605, %v4723
      %v5474 = vadd.f32 %v1606, %v4726
      %v5475 = vadd.f32 %v1607, %v4728
      %v5476 = vadd.f32 %v1608, %v4731
      %v5477 = vadd.f32 %v1609, %v4733
      %v5478 = vadd.f32 %v1610, %v4736
      %v5479 = vadd.f32 %v1611, %v4738
      %v5480 = vadd.f32 %v1612, %v4741
      %v5481 = vadd.f32 %v1613, %v4743
      %v5482 = vadd.f32 %v1614, %v4746
      %v5483 = vadd.f32 %v1615, %v4748
      %v5484 = vadd.f32 %v1616, %v4751
      %v5485 = vadd.f32 %v1617, %v4753
      %v5486 = vadd.f32 %v1618, %v4756
      %v5487 = vadd.f32 %v1619, %v4758
      %v5488 = vadd.f32 %v1620, %v4761
      %v5489 = vadd.f32 %v1621, %v4763
      %v5490 = vadd.f32 %v1622, %v4766
      %v5491 = vadd.f32 %v1623, %v4768
      %v5492 = vadd.f32 %v1624, %v4771
      %v5493 = vadd.f32 %v1625, %v4773
      %v5494 = vadd.f32 %v1626, %v4776
      %v5495 = vadd.f32 %v1627, %v4778
      %v5496 = vadd.f32 %v1628, %v4781
      %v5497 = vadd.f32 %v1629, %v4783
      %v5498 = vadd.f32 %v1630, %v4786
      %v5499 = vadd.f32 %v1631, %v4788
      %v5500 = vadd.f32 %v1632, %v4791
      %v5501 = vadd.f32 %v1633, %v4793
      %v5502 = vadd.f32 %v1634, %v4796
      %v5503 = vadd.f32 %v1635, %v4798
      %v5504 = vadd.f32 %v1636, %v4801
      %v5505 = vadd.f32 %v1637, %v4803
      %v5506 = vadd.f32 %v1638, %v4806
      %v5507 = vadd.f32 %v1639, %v4808
      %v5508 = vadd.f32 %v1640, %v4811
      %v5509 = vadd.f32 %v1641, %v4813
      %v5510 = vadd.f32 %v1642, %v4816
      %v5511 = vadd.f32 %v1643, %v4818
      %v5512 = vadd.f32 %v1644, %v4821
      %v5513 = vadd.f32 %v1645, %v4823
      %v5514 = vadd.f32 %v1646, %v4826
      %v5515 = vadd.f32 %v1647, %v4828
      %v5516 = vadd.f32 %v1648, %v4831
      %v5517 = vadd.f32 %v1649, %v4833
      %v5518 = vadd.f32 %v1650, %v4836
      %v5519 = vadd.f32 %v1651, %v4838
      %v5520 = vadd.f32 %v1652, %v4841
      %v5521 = vadd.f32 %v1653, %v4843
      %v5522 = vadd.f32 %v1654, %v4846
      %v5523 = vadd.f32 %v1655, %v4848
      %v5524 = vadd.f32 %v1656, %v4851
      %v5525 = vadd.f32 %v1657, %v4853
      %v5526 = vadd.f32 %v1658, %v4856
      %v5527 = vadd.f32 %v1659, %v4858
      %v5528 = vadd.f32 %v1660, %v4861
      %v5529 = vadd.f32 %v1661, %v4863
      %v5530 = vadd.f32 %v1662, %v4866
      %v5531 = vadd.f32 %v1663, %v4868
      %v5532 = vadd.f32 %v1664, %v4871
      %v5533 = vadd.f32 %v1665, %v4873
      %v5534 = vadd.f32 %v1666, %v4876
      %v5535 = vadd.f32 %v1667, %v4878
      %v5536 = vadd.f32 %v1668, %v4881
      %v5537 = vadd.f32 %v1669, %v4883
      %v5538 = vadd.f32 %v1670, %v4886
      %v5539 = vadd.f32 %v1671, %v4888
      %v5540 = vadd.f32 %v1672, %v4891
      %v5541 = vadd.f32 %v1673, %v4893
      %v5542 = vadd.f32 %v1674, %v4896
      %v5543 = vadd.f32 %v1675, %v4898
      %v5544 = vadd.f32 %v1676, %v4901
      %v5545 = vadd.f32 %v1677, %v4903
      %v5546 = vadd.f32 %v1678, %v4906
      %v5547 = vadd.f32 %v1679, %v4908
      %v5548 = vadd.f32 %v1680, %v4911
      %v5549 = vadd.f32 %v1681, %v4913
      %v5550 = vadd.f32 %v1682, %v4916
      %v5551 = vadd.f32 %v1683, %v4918
      %v5552 = vadd.f32 %v1684, %v4921
      %v5553 = vadd.f32 %v1685, %v4923
      %v5554 = vadd.f32 %v1686, %v4926
      %v5555 = vadd.f32 %v1687, %v4928
      %v5556 = vadd.f32 %v1688, %v4931
      %v5557 = vadd.f32 %v1689, %v4933
      %v5558 = vadd.f32 %v1690, %v4936
      %v5559 = vadd.f32 %v1691, %v4938
      %v5560 = vadd.f32 %v1692, %v4941
      %v5561 = vadd.f32 %v1693, %v4943
      %v5562 = vadd.f32 %v1694, %v4946
      %v5563 = vadd.f32 %v1695, %v4948
      %v5564 = vadd.f32 %v1696, %v4951
      %v5565 = vadd.f32 %v1697, %v4953
      %v5566 = vadd.f32 %v1698, %v4956
      %v5567 = vadd.f32 %v1699, %v4958
      %v5568 = vadd.f32 %v1700, %v4961
      %v5569 = vadd.f32 %v1701, %v4963
      %v5570 = vadd.f32 %v1702, %v4966
      %v5571 = vadd.f32 %v1703, %v4968
      %v5572 = vadd.f32 %v1704, %v4971
      %v5573 = vadd.f32 %v1705, %v4973
      %v5574 = vadd.f32 %v1706, %v4976
      %v5575 = vadd.f32 %v1707, %v4978
      %v5576 = vadd.f32 %v1708, %v4981
      %v5577 = vadd.f32 %v1709, %v4983
      %v5578 = vadd.f32 %v1710, %v4986
      %v5579 = vadd.f32 %v1711, %v4988
      %v5580 = vadd.f32 %v1712, %v4991
      %v5581 = vadd.f32 %v1713, %v4993
      %v5582 = vadd.f32 %v1714, %v4996
      %v5583 = vadd.f32 %v1715, %v4998
      %v5584 = vadd.f32 %v1716, %v5001
      %v5585 = vadd.f32 %v1717, %v5003
      %v5586 = vadd.f32 %v1718, %v5006
      %v5587 = vadd.f32 %v1719, %v5008
      %v5588 = vadd.f32 %v1720, %v5011
      %v5589 = vadd.f32 %v1721, %v5013
      %v5590 = vadd.f32 %v1722, %v5016
      %v5591 = vadd.f32 %v1723, %v5018
      %v5592 = vadd.f32 %v1724, %v5021
      %v5593 = vadd.f32 %v1725, %v5023
      %v5594 = vadd.f32 %v1726, %v5026
      %v5595 = vadd.f32 %v1727, %v5028
      %v5596 = vadd.f32 %v1728, %v5031
      %v5597 = vadd.f32 %v1729, %v5033
      %v5598 = vadd.f32 %v1730, %v5036
      %v5599 = vadd.f32 %v1731, %v5038
      %v5600 = vadd.f32 %v1732, %v5041
      %v5601 = vadd.f32 %v1733, %v5043
      %v5602 = vadd.f32 %v1734, %v5046
      %v5603 = vadd.f32 %v1735, %v5048
      %v5604 = vadd.f32 %v1736, %v5051
      %v5605 = vadd.f32 %v1737, %v5053
      %v5606 = vadd.f32 %v1738, %v5056
      %v5607 = vadd.f32 %v1739, %v5058
      %v5608 = vadd.f32 %v1740, %v5061
      %v5609 = vadd.f32 %v1741, %v5063
      %v5610 = vadd.f32 %v1742, %v5066
      %v5611 = vadd.f32 %v1743, %v5068
      %v5612 = vadd.f32 %v1744, %v5071
      %v5613 = vadd.f32 %v1745, %v5073
      %v5614 = vadd.f32 %v1746, %v5076
      %v5615 = vadd.f32 %v1747, %v5078
      %v5616 = vadd.f32 %v1748, %v5081
      %v5617 = vadd.f32 %v1749, %v5083
      %v5618 = vadd.f32 %v1750, %v5086
      %v5619 = vadd.f32 %v1751, %v5088
      %v5620 = vadd.f32 %v1752, %v5091
      %v5621 = vadd.f32 %v1753, %v5093
      %v5622 = vadd.f32 %v1754, %v5096
      %v5623 = vadd.f32 %v1755, %v5098
      %v5624 = vadd.f32 %v1756, %v5101
      %v5625 = vadd.f32 %v1757, %v5103
      %v5626 = vadd.f32 %v1758, %v5106
      %v5627 = vadd.f32 %v1759, %v5108
      %v5628 = vadd.f32 %v1760, %v5111
      %v5629 = vadd.f32 %v1761, %v5113
      %v5630 = vadd.f32 %v1762, %v5116
      %v5631 = vadd.f32 %v1763, %v5118
      %vm5632 = vcmask 64512
      %5633 = vst.msk [vmem:[#allocation2] sm:$0xff] %vm5632, %v5120
      %5634 = vst.msk [vmem:[#allocation2 + $0x8] sm:$0xff] %vm5632, %v5121
      %5635 = vst.msk [vmem:[#allocation2 + $0x10] sm:$0xff] %vm5632, %v5122
      %5636 = vst.msk [vmem:[#allocation2 + $0x18] sm:$0xff] %vm5632, %v5123
      %5637 = vst.msk [vmem:[#allocation2 + $0x20] sm:$0xff] %vm5632, %v5124
      %5638 = vst.msk [vmem:[#allocation2 + $0x28] sm:$0xff] %vm5632, %v5125
      %5639 = vst.msk [vmem:[#allocation2 + $0x30] sm:$0xff] %vm5632, %v5126
      %5640 = vst.msk [vmem:[#allocation2 + $0x38] sm:$0xff] %vm5632, %v5127
      %5641 = vst.msk [vmem:[#allocation2 + $0x40] sm:$0xff] %vm5632, %v5128
      %5642 = vst.msk [vmem:[#allocation2 + $0x48] sm:$0xff] %vm5632, %v5129
      %5643 = vst.msk [vmem:[#allocation2 + $0x50] sm:$0xff] %vm5632, %v5130
      %5644 = vst.msk [vmem:[#allocation2 + $0x58] sm:$0xff] %vm5632, %v5131
      %5645 = vst.msk [vmem:[#allocation2 + $0x60] sm:$0xff] %vm5632, %v5132
      %5646 = vst.msk [vmem:[#allocation2 + $0x68] sm:$0xff] %vm5632, %v5133
      %5647 = vst.msk [vmem:[#allocation2 + $0x70] sm:$0xff] %vm5632, %v5134
      %5648 = vst.msk [vmem:[#allocation2 + $0x78] sm:$0xff] %vm5632, %v5135
      %5649 = vst.msk [vmem:[#allocation2 + $0x80] sm:$0xff] %vm5632, %v5136
      %5650 = vst.msk [vmem:[#allocation2 + $0x88] sm:$0xff] %vm5632, %v5137
      %5651 = vst.msk [vmem:[#allocation2 + $0x90] sm:$0xff] %vm5632, %v5138
      %5652 = vst.msk [vmem:[#allocation2 + $0x98] sm:$0xff] %vm5632, %v5139
      %5653 = vst.msk [vmem:[#allocation2 + $0xa0] sm:$0xff] %vm5632, %v5140
      %5654 = vst.msk [vmem:[#allocation2 + $0xa8] sm:$0xff] %vm5632, %v5141
      %5655 = vst.msk [vmem:[#allocation2 + $0xb0] sm:$0xff] %vm5632, %v5142
      %5656 = vst.msk [vmem:[#allocation2 + $0xb8] sm:$0xff] %vm5632, %v5143
      %5657 = vst.msk [vmem:[#allocation2 + $0xc0] sm:$0xff] %vm5632, %v5144
      %5658 = vst.msk [vmem:[#allocation2 + $0xc8] sm:$0xff] %vm5632, %v5145
      %5659 = vst.msk [vmem:[#allocation2 + $0xd0] sm:$0xff] %vm5632, %v5146
      %5660 = vst.msk [vmem:[#allocation2 + $0xd8] sm:$0xff] %vm5632, %v5147
      %5661 = vst.msk [vmem:[#allocation2 + $0xe0] sm:$0xff] %vm5632, %v5148
      %5662 = vst.msk [vmem:[#allocation2 + $0xe8] sm:$0xff] %vm5632, %v5149
      %5663 = vst.msk [vmem:[#allocation2 + $0xf0] sm:$0xff] %vm5632, %v5150
      %5664 = vst.msk [vmem:[#allocation2 + $0xf8] sm:$0xff] %vm5632, %v5151
      %5665 = vst.msk [vmem:[#allocation2 + $0x100] sm:$0xff] %vm5632, %v5152
      %5666 = vst.msk [vmem:[#allocation2 + $0x108] sm:$0xff] %vm5632, %v5153
      %5667 = vst.msk [vmem:[#allocation2 + $0x110] sm:$0xff] %vm5632, %v5154
      %5668 = vst.msk [vmem:[#allocation2 + $0x118] sm:$0xff] %vm5632, %v5155
      %5669 = vst.msk [vmem:[#allocation2 + $0x120] sm:$0xff] %vm5632, %v5156
      %5670 = vst.msk [vmem:[#allocation2 + $0x128] sm:$0xff] %vm5632, %v5157
      %5671 = vst.msk [vmem:[#allocation2 + $0x130] sm:$0xff] %vm5632, %v5158
      %5672 = vst.msk [vmem:[#allocation2 + $0x138] sm:$0xff] %vm5632, %v5159
      %5673 = vst.msk [vmem:[#allocation2 + $0x140] sm:$0xff] %vm5632, %v5160
      %5674 = vst.msk [vmem:[#allocation2 + $0x148] sm:$0xff] %vm5632, %v5161
      %5675 = vst.msk [vmem:[#allocation2 + $0x150] sm:$0xff] %vm5632, %v5162
      %5676 = vst.msk [vmem:[#allocation2 + $0x158] sm:$0xff] %vm5632, %v5163
      %5677 = vst.msk [vmem:[#allocation2 + $0x160] sm:$0xff] %vm5632, %v5164
      %5678 = vst.msk [vmem:[#allocation2 + $0x168] sm:$0xff] %vm5632, %v5165
      %5679 = vst.msk [vmem:[#allocation2 + $0x170] sm:$0xff] %vm5632, %v5166
      %5680 = vst.msk [vmem:[#allocation2 + $0x178] sm:$0xff] %vm5632, %v5167
      %5681 = vst.msk [vmem:[#allocation2 + $0x180] sm:$0xff] %vm5632, %v5168
      %5682 = vst.msk [vmem:[#allocation2 + $0x188] sm:$0xff] %vm5632, %v5169
      %5683 = vst.msk [vmem:[#allocation2 + $0x190] sm:$0xff] %vm5632, %v5170
      %5684 = vst.msk [vmem:[#allocation2 + $0x198] sm:$0xff] %vm5632, %v5171
      %5685 = vst.msk [vmem:[#allocation2 + $0x1a0] sm:$0xff] %vm5632, %v5172
      %5686 = vst.msk [vmem:[#allocation2 + $0x1a8] sm:$0xff] %vm5632, %v5173
      %5687 = vst.msk [vmem:[#allocation2 + $0x1b0] sm:$0xff] %vm5632, %v5174
      %5688 = vst.msk [vmem:[#allocation2 + $0x1b8] sm:$0xff] %vm5632, %v5175
      %5689 = vst.msk [vmem:[#allocation2 + $0x1c0] sm:$0xff] %vm5632, %v5176
      %5690 = vst.msk [vmem:[#allocation2 + $0x1c8] sm:$0xff] %vm5632, %v5177
      %5691 = vst.msk [vmem:[#allocation2 + $0x1d0] sm:$0xff] %vm5632, %v5178
      %5692 = vst.msk [vmem:[#allocation2 + $0x1d8] sm:$0xff] %vm5632, %v5179
      %5693 = vst.msk [vmem:[#allocation2 + $0x1e0] sm:$0xff] %vm5632, %v5180
      %5694 = vst.msk [vmem:[#allocation2 + $0x1e8] sm:$0xff] %vm5632, %v5181
      %5695 = vst.msk [vmem:[#allocation2 + $0x1f0] sm:$0xff] %vm5632, %v5182
      %5696 = vst.msk [vmem:[#allocation2 + $0x1f8] sm:$0xff] %vm5632, %v5183
      %5697 = vst.msk [vmem:[#allocation2 + $0x200] sm:$0xff] %vm5632, %v5184
      %5698 = vst.msk [vmem:[#allocation2 + $0x208] sm:$0xff] %vm5632, %v5185
      %5699 = vst.msk [vmem:[#allocation2 + $0x210] sm:$0xff] %vm5632, %v5186
      %5700 = vst.msk [vmem:[#allocation2 + $0x218] sm:$0xff] %vm5632, %v5187
      %5701 = vst.msk [vmem:[#allocation2 + $0x220] sm:$0xff] %vm5632, %v5188
      %5702 = vst.msk [vmem:[#allocation2 + $0x228] sm:$0xff] %vm5632, %v5189
      %5703 = vst.msk [vmem:[#allocation2 + $0x230] sm:$0xff] %vm5632, %v5190
      %5704 = vst.msk [vmem:[#allocation2 + $0x238] sm:$0xff] %vm5632, %v5191
      %5705 = vst.msk [vmem:[#allocation2 + $0x240] sm:$0xff] %vm5632, %v5192
      %5706 = vst.msk [vmem:[#allocation2 + $0x248] sm:$0xff] %vm5632, %v5193
      %5707 = vst.msk [vmem:[#allocation2 + $0x250] sm:$0xff] %vm5632, %v5194
      %5708 = vst.msk [vmem:[#allocation2 + $0x258] sm:$0xff] %vm5632, %v5195
      %5709 = vst.msk [vmem:[#allocation2 + $0x260] sm:$0xff] %vm5632, %v5196
      %5710 = vst.msk [vmem:[#allocation2 + $0x268] sm:$0xff] %vm5632, %v5197
      %5711 = vst.msk [vmem:[#allocation2 + $0x270] sm:$0xff] %vm5632, %v5198
      %5712 = vst.msk [vmem:[#allocation2 + $0x278] sm:$0xff] %vm5632, %v5199
      %5713 = vst.msk [vmem:[#allocation2 + $0x280] sm:$0xff] %vm5632, %v5200
      %5714 = vst.msk [vmem:[#allocation2 + $0x288] sm:$0xff] %vm5632, %v5201
      %5715 = vst.msk [vmem:[#allocation2 + $0x290] sm:$0xff] %vm5632, %v5202
      %5716 = vst.msk [vmem:[#allocation2 + $0x298] sm:$0xff] %vm5632, %v5203
      %5717 = vst.msk [vmem:[#allocation2 + $0x2a0] sm:$0xff] %vm5632, %v5204
      %5718 = vst.msk [vmem:[#allocation2 + $0x2a8] sm:$0xff] %vm5632, %v5205
      %5719 = vst.msk [vmem:[#allocation2 + $0x2b0] sm:$0xff] %vm5632, %v5206
      %5720 = vst.msk [vmem:[#allocation2 + $0x2b8] sm:$0xff] %vm5632, %v5207
      %5721 = vst.msk [vmem:[#allocation2 + $0x2c0] sm:$0xff] %vm5632, %v5208
      %5722 = vst.msk [vmem:[#allocation2 + $0x2c8] sm:$0xff] %vm5632, %v5209
      %5723 = vst.msk [vmem:[#allocation2 + $0x2d0] sm:$0xff] %vm5632, %v5210
      %5724 = vst.msk [vmem:[#allocation2 + $0x2d8] sm:$0xff] %vm5632, %v5211
      %5725 = vst.msk [vmem:[#allocation2 + $0x2e0] sm:$0xff] %vm5632, %v5212
      %5726 = vst.msk [vmem:[#allocation2 + $0x2e8] sm:$0xff] %vm5632, %v5213
      %5727 = vst.msk [vmem:[#allocation2 + $0x2f0] sm:$0xff] %vm5632, %v5214
      %5728 = vst.msk [vmem:[#allocation2 + $0x2f8] sm:$0xff] %vm5632, %v5215
      %5729 = vst.msk [vmem:[#allocation2 + $0x300] sm:$0xff] %vm5632, %v5216
      %5730 = vst.msk [vmem:[#allocation2 + $0x308] sm:$0xff] %vm5632, %v5217
      %5731 = vst.msk [vmem:[#allocation2 + $0x310] sm:$0xff] %vm5632, %v5218
      %5732 = vst.msk [vmem:[#allocation2 + $0x318] sm:$0xff] %vm5632, %v5219
      %5733 = vst.msk [vmem:[#allocation2 + $0x320] sm:$0xff] %vm5632, %v5220
      %5734 = vst.msk [vmem:[#allocation2 + $0x328] sm:$0xff] %vm5632, %v5221
      %5735 = vst.msk [vmem:[#allocation2 + $0x330] sm:$0xff] %vm5632, %v5222
      %5736 = vst.msk [vmem:[#allocation2 + $0x338] sm:$0xff] %vm5632, %v5223
      %5737 = vst.msk [vmem:[#allocation2 + $0x340] sm:$0xff] %vm5632, %v5224
      %5738 = vst.msk [vmem:[#allocation2 + $0x348] sm:$0xff] %vm5632, %v5225
      %5739 = vst.msk [vmem:[#allocation2 + $0x350] sm:$0xff] %vm5632, %v5226
      %5740 = vst.msk [vmem:[#allocation2 + $0x358] sm:$0xff] %vm5632, %v5227
      %5741 = vst.msk [vmem:[#allocation2 + $0x360] sm:$0xff] %vm5632, %v5228
      %5742 = vst.msk [vmem:[#allocation2 + $0x368] sm:$0xff] %vm5632, %v5229
      %5743 = vst.msk [vmem:[#allocation2 + $0x370] sm:$0xff] %vm5632, %v5230
      %5744 = vst.msk [vmem:[#allocation2 + $0x378] sm:$0xff] %vm5632, %v5231
      %5745 = vst.msk [vmem:[#allocation2 + $0x380] sm:$0xff] %vm5632, %v5232
      %5746 = vst.msk [vmem:[#allocation2 + $0x388] sm:$0xff] %vm5632, %v5233
      %5747 = vst.msk [vmem:[#allocation2 + $0x390] sm:$0xff] %vm5632, %v5234
      %5748 = vst.msk [vmem:[#allocation2 + $0x398] sm:$0xff] %vm5632, %v5235
      %5749 = vst.msk [vmem:[#allocation2 + $0x3a0] sm:$0xff] %vm5632, %v5236
      %5750 = vst.msk [vmem:[#allocation2 + $0x3a8] sm:$0xff] %vm5632, %v5237
      %5751 = vst.msk [vmem:[#allocation2 + $0x3b0] sm:$0xff] %vm5632, %v5238
      %5752 = vst.msk [vmem:[#allocation2 + $0x3b8] sm:$0xff] %vm5632, %v5239
      %5753 = vst.msk [vmem:[#allocation2 + $0x3c0] sm:$0xff] %vm5632, %v5240
      %5754 = vst.msk [vmem:[#allocation2 + $0x3c8] sm:$0xff] %vm5632, %v5241
      %5755 = vst.msk [vmem:[#allocation2 + $0x3d0] sm:$0xff] %vm5632, %v5242
      %5756 = vst.msk [vmem:[#allocation2 + $0x3d8] sm:$0xff] %vm5632, %v5243
      %5757 = vst.msk [vmem:[#allocation2 + $0x3e0] sm:$0xff] %vm5632, %v5244
      %5758 = vst.msk [vmem:[#allocation2 + $0x3e8] sm:$0xff] %vm5632, %v5245
      %5759 = vst.msk [vmem:[#allocation2 + $0x3f0] sm:$0xff] %vm5632, %v5246
      %5760 = vst.msk [vmem:[#allocation2 + $0x3f8] sm:$0xff] %vm5632, %v5247
      %5761 = vst.msk [vmem:[#allocation2 + $0x400] sm:$0xff] %vm5632, %v5248
      %5762 = vst.msk [vmem:[#allocation2 + $0x408] sm:$0xff] %vm5632, %v5249
      %5763 = vst.msk [vmem:[#allocation2 + $0x410] sm:$0xff] %vm5632, %v5250
      %5764 = vst.msk [vmem:[#allocation2 + $0x418] sm:$0xff] %vm5632, %v5251
      %5765 = vst.msk [vmem:[#allocation2 + $0x420] sm:$0xff] %vm5632, %v5252
      %5766 = vst.msk [vmem:[#allocation2 + $0x428] sm:$0xff] %vm5632, %v5253
      %5767 = vst.msk [vmem:[#allocation2 + $0x430] sm:$0xff] %vm5632, %v5254
      %5768 = vst.msk [vmem:[#allocation2 + $0x438] sm:$0xff] %vm5632, %v5255
      %5769 = vst.msk [vmem:[#allocation2 + $0x440] sm:$0xff] %vm5632, %v5256
      %5770 = vst.msk [vmem:[#allocation2 + $0x448] sm:$0xff] %vm5632, %v5257
      %5771 = vst.msk [vmem:[#allocation2 + $0x450] sm:$0xff] %vm5632, %v5258
      %5772 = vst.msk [vmem:[#allocation2 + $0x458] sm:$0xff] %vm5632, %v5259
      %5773 = vst.msk [vmem:[#allocation2 + $0x460] sm:$0xff] %vm5632, %v5260
      %5774 = vst.msk [vmem:[#allocation2 + $0x468] sm:$0xff] %vm5632, %v5261
      %5775 = vst.msk [vmem:[#allocation2 + $0x470] sm:$0xff] %vm5632, %v5262
      %5776 = vst.msk [vmem:[#allocation2 + $0x478] sm:$0xff] %vm5632, %v5263
      %5777 = vst.msk [vmem:[#allocation2 + $0x480] sm:$0xff] %vm5632, %v5264
      %5778 = vst.msk [vmem:[#allocation2 + $0x488] sm:$0xff] %vm5632, %v5265
      %5779 = vst.msk [vmem:[#allocation2 + $0x490] sm:$0xff] %vm5632, %v5266
      %5780 = vst.msk [vmem:[#allocation2 + $0x498] sm:$0xff] %vm5632, %v5267
      %5781 = vst.msk [vmem:[#allocation2 + $0x4a0] sm:$0xff] %vm5632, %v5268
      %5782 = vst.msk [vmem:[#allocation2 + $0x4a8] sm:$0xff] %vm5632, %v5269
      %5783 = vst.msk [vmem:[#allocation2 + $0x4b0] sm:$0xff] %vm5632, %v5270
      %5784 = vst.msk [vmem:[#allocation2 + $0x4b8] sm:$0xff] %vm5632, %v5271
      %5785 = vst.msk [vmem:[#allocation2 + $0x4c0] sm:$0xff] %vm5632, %v5272
      %5786 = vst.msk [vmem:[#allocation2 + $0x4c8] sm:$0xff] %vm5632, %v5273
      %5787 = vst.msk [vmem:[#allocation2 + $0x4d0] sm:$0xff] %vm5632, %v5274
      %5788 = vst.msk [vmem:[#allocation2 + $0x4d8] sm:$0xff] %vm5632, %v5275
      %5789 = vst.msk [vmem:[#allocation2 + $0x4e0] sm:$0xff] %vm5632, %v5276
      %5790 = vst.msk [vmem:[#allocation2 + $0x4e8] sm:$0xff] %vm5632, %v5277
      %5791 = vst.msk [vmem:[#allocation2 + $0x4f0] sm:$0xff] %vm5632, %v5278
      %5792 = vst.msk [vmem:[#allocation2 + $0x4f8] sm:$0xff] %vm5632, %v5279
      %5793 = vst.msk [vmem:[#allocation2 + $0x500] sm:$0xff] %vm5632, %v5280
      %5794 = vst.msk [vmem:[#allocation2 + $0x508] sm:$0xff] %vm5632, %v5281
      %5795 = vst.msk [vmem:[#allocation2 + $0x510] sm:$0xff] %vm5632, %v5282
      %5796 = vst.msk [vmem:[#allocation2 + $0x518] sm:$0xff] %vm5632, %v5283
      %5797 = vst.msk [vmem:[#allocation2 + $0x520] sm:$0xff] %vm5632, %v5284
      %5798 = vst.msk [vmem:[#allocation2 + $0x528] sm:$0xff] %vm5632, %v5285
      %5799 = vst.msk [vmem:[#allocation2 + $0x530] sm:$0xff] %vm5632, %v5286
      %5800 = vst.msk [vmem:[#allocation2 + $0x538] sm:$0xff] %vm5632, %v5287
      %5801 = vst.msk [vmem:[#allocation2 + $0x540] sm:$0xff] %vm5632, %v5288
      %5802 = vst.msk [vmem:[#allocation2 + $0x548] sm:$0xff] %vm5632, %v5289
      %5803 = vst.msk [vmem:[#allocation2 + $0x550] sm:$0xff] %vm5632, %v5290
      %5804 = vst.msk [vmem:[#allocation2 + $0x558] sm:$0xff] %vm5632, %v5291
      %5805 = vst.msk [vmem:[#allocation2 + $0x560] sm:$0xff] %vm5632, %v5292
      %5806 = vst.msk [vmem:[#allocation2 + $0x568] sm:$0xff] %vm5632, %v5293
      %5807 = vst.msk [vmem:[#allocation2 + $0x570] sm:$0xff] %vm5632, %v5294
      %5808 = vst.msk [vmem:[#allocation2 + $0x578] sm:$0xff] %vm5632, %v5295
      %5809 = vst.msk [vmem:[#allocation2 + $0x580] sm:$0xff] %vm5632, %v5296
      %5810 = vst.msk [vmem:[#allocation2 + $0x588] sm:$0xff] %vm5632, %v5297
      %5811 = vst.msk [vmem:[#allocation2 + $0x590] sm:$0xff] %vm5632, %v5298
      %5812 = vst.msk [vmem:[#allocation2 + $0x598] sm:$0xff] %vm5632, %v5299
      %5813 = vst.msk [vmem:[#allocation2 + $0x5a0] sm:$0xff] %vm5632, %v5300
      %5814 = vst.msk [vmem:[#allocation2 + $0x5a8] sm:$0xff] %vm5632, %v5301
      %5815 = vst.msk [vmem:[#allocation2 + $0x5b0] sm:$0xff] %vm5632, %v5302
      %5816 = vst.msk [vmem:[#allocation2 + $0x5b8] sm:$0xff] %vm5632, %v5303
      %5817 = vst.msk [vmem:[#allocation2 + $0x5c0] sm:$0xff] %vm5632, %v5304
      %5818 = vst.msk [vmem:[#allocation2 + $0x5c8] sm:$0xff] %vm5632, %v5305
      %5819 = vst.msk [vmem:[#allocation2 + $0x5d0] sm:$0xff] %vm5632, %v5306
      %5820 = vst.msk [vmem:[#allocation2 + $0x5d8] sm:$0xff] %vm5632, %v5307
      %5821 = vst.msk [vmem:[#allocation2 + $0x5e0] sm:$0xff] %vm5632, %v5308
      %5822 = vst.msk [vmem:[#allocation2 + $0x5e8] sm:$0xff] %vm5632, %v5309
      %5823 = vst.msk [vmem:[#allocation2 + $0x5f0] sm:$0xff] %vm5632, %v5310
      %5824 = vst.msk [vmem:[#allocation2 + $0x5f8] sm:$0xff] %vm5632, %v5311
      %5825 = vst.msk [vmem:[#allocation2 + $0x600] sm:$0xff] %vm5632, %v5312
      %5826 = vst.msk [vmem:[#allocation2 + $0x608] sm:$0xff] %vm5632, %v5313
      %5827 = vst.msk [vmem:[#allocation2 + $0x610] sm:$0xff] %vm5632, %v5314
      %5828 = vst.msk [vmem:[#allocation2 + $0x618] sm:$0xff] %vm5632, %v5315
      %5829 = vst.msk [vmem:[#allocation2 + $0x620] sm:$0xff] %vm5632, %v5316
      %5830 = vst.msk [vmem:[#allocation2 + $0x628] sm:$0xff] %vm5632, %v5317
      %5831 = vst.msk [vmem:[#allocation2 + $0x630] sm:$0xff] %vm5632, %v5318
      %5832 = vst.msk [vmem:[#allocation2 + $0x638] sm:$0xff] %vm5632, %v5319
      %5833 = vst.msk [vmem:[#allocation2 + $0x640] sm:$0xff] %vm5632, %v5320
      %5834 = vst.msk [vmem:[#allocation2 + $0x648] sm:$0xff] %vm5632, %v5321
      %5835 = vst.msk [vmem:[#allocation2 + $0x650] sm:$0xff] %vm5632, %v5322
      %5836 = vst.msk [vmem:[#allocation2 + $0x658] sm:$0xff] %vm5632, %v5323
      %5837 = vst.msk [vmem:[#allocation2 + $0x660] sm:$0xff] %vm5632, %v5324
      %5838 = vst.msk [vmem:[#allocation2 + $0x668] sm:$0xff] %vm5632, %v5325
      %5839 = vst.msk [vmem:[#allocation2 + $0x670] sm:$0xff] %vm5632, %v5326
      %5840 = vst.msk [vmem:[#allocation2 + $0x678] sm:$0xff] %vm5632, %v5327
      %5841 = vst.msk [vmem:[#allocation2 + $0x680] sm:$0xff] %vm5632, %v5328
      %5842 = vst.msk [vmem:[#allocation2 + $0x688] sm:$0xff] %vm5632, %v5329
      %5843 = vst.msk [vmem:[#allocation2 + $0x690] sm:$0xff] %vm5632, %v5330
      %5844 = vst.msk [vmem:[#allocation2 + $0x698] sm:$0xff] %vm5632, %v5331
      %5845 = vst.msk [vmem:[#allocation2 + $0x6a0] sm:$0xff] %vm5632, %v5332
      %5846 = vst.msk [vmem:[#allocation2 + $0x6a8] sm:$0xff] %vm5632, %v5333
      %5847 = vst.msk [vmem:[#allocation2 + $0x6b0] sm:$0xff] %vm5632, %v5334
      %5848 = vst.msk [vmem:[#allocation2 + $0x6b8] sm:$0xff] %vm5632, %v5335
      %5849 = vst.msk [vmem:[#allocation2 + $0x6c0] sm:$0xff] %vm5632, %v5336
      %5850 = vst.msk [vmem:[#allocation2 + $0x6c8] sm:$0xff] %vm5632, %v5337
      %5851 = vst.msk [vmem:[#allocation2 + $0x6d0] sm:$0xff] %vm5632, %v5338
      %5852 = vst.msk [vmem:[#allocation2 + $0x6d8] sm:$0xff] %vm5632, %v5339
      %5853 = vst.msk [vmem:[#allocation2 + $0x6e0] sm:$0xff] %vm5632, %v5340
      %5854 = vst.msk [vmem:[#allocation2 + $0x6e8] sm:$0xff] %vm5632, %v5341
      %5855 = vst.msk [vmem:[#allocation2 + $0x6f0] sm:$0xff] %vm5632, %v5342
      %5856 = vst.msk [vmem:[#allocation2 + $0x6f8] sm:$0xff] %vm5632, %v5343
      %5857 = vst.msk [vmem:[#allocation2 + $0x700] sm:$0xff] %vm5632, %v5344
      %5858 = vst.msk [vmem:[#allocation2 + $0x708] sm:$0xff] %vm5632, %v5345
      %5859 = vst.msk [vmem:[#allocation2 + $0x710] sm:$0xff] %vm5632, %v5346
      %5860 = vst.msk [vmem:[#allocation2 + $0x718] sm:$0xff] %vm5632, %v5347
      %5861 = vst.msk [vmem:[#allocation2 + $0x720] sm:$0xff] %vm5632, %v5348
      %5862 = vst.msk [vmem:[#allocation2 + $0x728] sm:$0xff] %vm5632, %v5349
      %5863 = vst.msk [vmem:[#allocation2 + $0x730] sm:$0xff] %vm5632, %v5350
      %5864 = vst.msk [vmem:[#allocation2 + $0x738] sm:$0xff] %vm5632, %v5351
      %5865 = vst.msk [vmem:[#allocation2 + $0x740] sm:$0xff] %vm5632, %v5352
      %5866 = vst.msk [vmem:[#allocation2 + $0x748] sm:$0xff] %vm5632, %v5353
      %5867 = vst.msk [vmem:[#allocation2 + $0x750] sm:$0xff] %vm5632, %v5354
      %5868 = vst.msk [vmem:[#allocation2 + $0x758] sm:$0xff] %vm5632, %v5355
      %5869 = vst.msk [vmem:[#allocation2 + $0x760] sm:$0xff] %vm5632, %v5356
      %5870 = vst.msk [vmem:[#allocation2 + $0x768] sm:$0xff] %vm5632, %v5357
      %5871 = vst.msk [vmem:[#allocation2 + $0x770] sm:$0xff] %vm5632, %v5358
      %5872 = vst.msk [vmem:[#allocation2 + $0x778] sm:$0xff] %vm5632, %v5359
      %5873 = vst.msk [vmem:[#allocation2 + $0x780] sm:$0xff] %vm5632, %v5360
      %5874 = vst.msk [vmem:[#allocation2 + $0x788] sm:$0xff] %vm5632, %v5361
      %5875 = vst.msk [vmem:[#allocation2 + $0x790] sm:$0xff] %vm5632, %v5362
      %5876 = vst.msk [vmem:[#allocation2 + $0x798] sm:$0xff] %vm5632, %v5363
      %5877 = vst.msk [vmem:[#allocation2 + $0x7a0] sm:$0xff] %vm5632, %v5364
      %5878 = vst.msk [vmem:[#allocation2 + $0x7a8] sm:$0xff] %vm5632, %v5365
      %5879 = vst.msk [vmem:[#allocation2 + $0x7b0] sm:$0xff] %vm5632, %v5366
      %5880 = vst.msk [vmem:[#allocation2 + $0x7b8] sm:$0xff] %vm5632, %v5367
      %5881 = vst.msk [vmem:[#allocation2 + $0x7c0] sm:$0xff] %vm5632, %v5368
      %5882 = vst.msk [vmem:[#allocation2 + $0x7c8] sm:$0xff] %vm5632, %v5369
      %5883 = vst.msk [vmem:[#allocation2 + $0x7d0] sm:$0xff] %vm5632, %v5370
      %5884 = vst.msk [vmem:[#allocation2 + $0x7d8] sm:$0xff] %vm5632, %v5371
      %5885 = vst.msk [vmem:[#allocation2 + $0x7e0] sm:$0xff] %vm5632, %v5372
      %5886 = vst.msk [vmem:[#allocation2 + $0x7e8] sm:$0xff] %vm5632, %v5373
      %5887 = vst.msk [vmem:[#allocation2 + $0x7f0] sm:$0xff] %vm5632, %v5374
      %5888 = vst.msk [vmem:[#allocation2 + $0x7f8] sm:$0xff] %vm5632, %v5375
      %5889 = vst.msk [vmem:[#allocation2 + $0x800] sm:$0xff] %vm5632, %v5376
      %5890 = vst.msk [vmem:[#allocation2 + $0x808] sm:$0xff] %vm5632, %v5377
      %5891 = vst.msk [vmem:[#allocation2 + $0x810] sm:$0xff] %vm5632, %v5378
      %5892 = vst.msk [vmem:[#allocation2 + $0x818] sm:$0xff] %vm5632, %v5379
      %5893 = vst.msk [vmem:[#allocation2 + $0x820] sm:$0xff] %vm5632, %v5380
      %5894 = vst.msk [vmem:[#allocation2 + $0x828] sm:$0xff] %vm5632, %v5381
      %5895 = vst.msk [vmem:[#allocation2 + $0x830] sm:$0xff] %vm5632, %v5382
      %5896 = vst.msk [vmem:[#allocation2 + $0x838] sm:$0xff] %vm5632, %v5383
      %5897 = vst.msk [vmem:[#allocation2 + $0x840] sm:$0xff] %vm5632, %v5384
      %5898 = vst.msk [vmem:[#allocation2 + $0x848] sm:$0xff] %vm5632, %v5385
      %5899 = vst.msk [vmem:[#allocation2 + $0x850] sm:$0xff] %vm5632, %v5386
      %5900 = vst.msk [vmem:[#allocation2 + $0x858] sm:$0xff] %vm5632, %v5387
      %5901 = vst.msk [vmem:[#allocation2 + $0x860] sm:$0xff] %vm5632, %v5388
      %5902 = vst.msk [vmem:[#allocation2 + $0x868] sm:$0xff] %vm5632, %v5389
      %5903 = vst.msk [vmem:[#allocation2 + $0x870] sm:$0xff] %vm5632, %v5390
      %5904 = vst.msk [vmem:[#allocation2 + $0x878] sm:$0xff] %vm5632, %v5391
      %5905 = vst.msk [vmem:[#allocation2 + $0x880] sm:$0xff] %vm5632, %v5392
      %5906 = vst.msk [vmem:[#allocation2 + $0x888] sm:$0xff] %vm5632, %v5393
      %5907 = vst.msk [vmem:[#allocation2 + $0x890] sm:$0xff] %vm5632, %v5394
      %5908 = vst.msk [vmem:[#allocation2 + $0x898] sm:$0xff] %vm5632, %v5395
      %5909 = vst.msk [vmem:[#allocation2 + $0x8a0] sm:$0xff] %vm5632, %v5396
      %5910 = vst.msk [vmem:[#allocation2 + $0x8a8] sm:$0xff] %vm5632, %v5397
      %5911 = vst.msk [vmem:[#allocation2 + $0x8b0] sm:$0xff] %vm5632, %v5398
      %5912 = vst.msk [vmem:[#allocation2 + $0x8b8] sm:$0xff] %vm5632, %v5399
      %5913 = vst.msk [vmem:[#allocation2 + $0x8c0] sm:$0xff] %vm5632, %v5400
      %5914 = vst.msk [vmem:[#allocation2 + $0x8c8] sm:$0xff] %vm5632, %v5401
      %5915 = vst.msk [vmem:[#allocation2 + $0x8d0] sm:$0xff] %vm5632, %v5402
      %5916 = vst.msk [vmem:[#allocation2 + $0x8d8] sm:$0xff] %vm5632, %v5403
      %5917 = vst.msk [vmem:[#allocation2 + $0x8e0] sm:$0xff] %vm5632, %v5404
      %5918 = vst.msk [vmem:[#allocation2 + $0x8e8] sm:$0xff] %vm5632, %v5405
      %5919 = vst.msk [vmem:[#allocation2 + $0x8f0] sm:$0xff] %vm5632, %v5406
      %5920 = vst.msk [vmem:[#allocation2 + $0x8f8] sm:$0xff] %vm5632, %v5407
      %5921 = vst.msk [vmem:[#allocation2 + $0x900] sm:$0xff] %vm5632, %v5408
      %5922 = vst.msk [vmem:[#allocation2 + $0x908] sm:$0xff] %vm5632, %v5409
      %5923 = vst.msk [vmem:[#allocation2 + $0x910] sm:$0xff] %vm5632, %v5410
      %5924 = vst.msk [vmem:[#allocation2 + $0x918] sm:$0xff] %vm5632, %v5411
      %5925 = vst.msk [vmem:[#allocation2 + $0x920] sm:$0xff] %vm5632, %v5412
      %5926 = vst.msk [vmem:[#allocation2 + $0x928] sm:$0xff] %vm5632, %v5413
      %5927 = vst.msk [vmem:[#allocation2 + $0x930] sm:$0xff] %vm5632, %v5414
      %5928 = vst.msk [vmem:[#allocation2 + $0x938] sm:$0xff] %vm5632, %v5415
      %5929 = vst.msk [vmem:[#allocation2 + $0x940] sm:$0xff] %vm5632, %v5416
      %5930 = vst.msk [vmem:[#allocation2 + $0x948] sm:$0xff] %vm5632, %v5417
      %5931 = vst.msk [vmem:[#allocation2 + $0x950] sm:$0xff] %vm5632, %v5418
      %5932 = vst.msk [vmem:[#allocation2 + $0x958] sm:$0xff] %vm5632, %v5419
      %5933 = vst.msk [vmem:[#allocation2 + $0x960] sm:$0xff] %vm5632, %v5420
      %5934 = vst.msk [vmem:[#allocation2 + $0x968] sm:$0xff] %vm5632, %v5421
      %5935 = vst.msk [vmem:[#allocation2 + $0x970] sm:$0xff] %vm5632, %v5422
      %5936 = vst.msk [vmem:[#allocation2 + $0x978] sm:$0xff] %vm5632, %v5423
      %5937 = vst.msk [vmem:[#allocation2 + $0x980] sm:$0xff] %vm5632, %v5424
      %5938 = vst.msk [vmem:[#allocation2 + $0x988] sm:$0xff] %vm5632, %v5425
      %5939 = vst.msk [vmem:[#allocation2 + $0x990] sm:$0xff] %vm5632, %v5426
      %5940 = vst.msk [vmem:[#allocation2 + $0x998] sm:$0xff] %vm5632, %v5427
      %5941 = vst.msk [vmem:[#allocation2 + $0x9a0] sm:$0xff] %vm5632, %v5428
      %5942 = vst.msk [vmem:[#allocation2 + $0x9a8] sm:$0xff] %vm5632, %v5429
      %5943 = vst.msk [vmem:[#allocation2 + $0x9b0] sm:$0xff] %vm5632, %v5430
      %5944 = vst.msk [vmem:[#allocation2 + $0x9b8] sm:$0xff] %vm5632, %v5431
      %5945 = vst.msk [vmem:[#allocation2 + $0x9c0] sm:$0xff] %vm5632, %v5432
      %5946 = vst.msk [vmem:[#allocation2 + $0x9c8] sm:$0xff] %vm5632, %v5433
      %5947 = vst.msk [vmem:[#allocation2 + $0x9d0] sm:$0xff] %vm5632, %v5434
      %5948 = vst.msk [vmem:[#allocation2 + $0x9d8] sm:$0xff] %vm5632, %v5435
      %5949 = vst.msk [vmem:[#allocation2 + $0x9e0] sm:$0xff] %vm5632, %v5436
      %5950 = vst.msk [vmem:[#allocation2 + $0x9e8] sm:$0xff] %vm5632, %v5437
      %5951 = vst.msk [vmem:[#allocation2 + $0x9f0] sm:$0xff] %vm5632, %v5438
      %5952 = vst.msk [vmem:[#allocation2 + $0x9f8] sm:$0xff] %vm5632, %v5439
      %5953 = vst.msk [vmem:[#allocation2 + $0xa00] sm:$0xff] %vm5632, %v5440
      %5954 = vst.msk [vmem:[#allocation2 + $0xa08] sm:$0xff] %vm5632, %v5441
      %5955 = vst.msk [vmem:[#allocation2 + $0xa10] sm:$0xff] %vm5632, %v5442
      %5956 = vst.msk [vmem:[#allocation2 + $0xa18] sm:$0xff] %vm5632, %v5443
      %5957 = vst.msk [vmem:[#allocation2 + $0xa20] sm:$0xff] %vm5632, %v5444
      %5958 = vst.msk [vmem:[#allocation2 + $0xa28] sm:$0xff] %vm5632, %v5445
      %5959 = vst.msk [vmem:[#allocation2 + $0xa30] sm:$0xff] %vm5632, %v5446
      %5960 = vst.msk [vmem:[#allocation2 + $0xa38] sm:$0xff] %vm5632, %v5447
      %5961 = vst.msk [vmem:[#allocation2 + $0xa40] sm:$0xff] %vm5632, %v5448
      %5962 = vst.msk [vmem:[#allocation2 + $0xa48] sm:$0xff] %vm5632, %v5449
      %5963 = vst.msk [vmem:[#allocation2 + $0xa50] sm:$0xff] %vm5632, %v5450
      %5964 = vst.msk [vmem:[#allocation2 + $0xa58] sm:$0xff] %vm5632, %v5451
      %5965 = vst.msk [vmem:[#allocation2 + $0xa60] sm:$0xff] %vm5632, %v5452
      %5966 = vst.msk [vmem:[#allocation2 + $0xa68] sm:$0xff] %vm5632, %v5453
      %5967 = vst.msk [vmem:[#allocation2 + $0xa70] sm:$0xff] %vm5632, %v5454
      %5968 = vst.msk [vmem:[#allocation2 + $0xa78] sm:$0xff] %vm5632, %v5455
      %5969 = vst.msk [vmem:[#allocation2 + $0xa80] sm:$0xff] %vm5632, %v5456
      %5970 = vst.msk [vmem:[#allocation2 + $0xa88] sm:$0xff] %vm5632, %v5457
      %5971 = vst.msk [vmem:[#allocation2 + $0xa90] sm:$0xff] %vm5632, %v5458
      %5972 = vst.msk [vmem:[#allocation2 + $0xa98] sm:$0xff] %vm5632, %v5459
      %5973 = vst.msk [vmem:[#allocation2 + $0xaa0] sm:$0xff] %vm5632, %v5460
      %5974 = vst.msk [vmem:[#allocation2 + $0xaa8] sm:$0xff] %vm5632, %v5461
      %5975 = vst.msk [vmem:[#allocation2 + $0xab0] sm:$0xff] %vm5632, %v5462
      %5976 = vst.msk [vmem:[#allocation2 + $0xab8] sm:$0xff] %vm5632, %v5463
      %5977 = vst.msk [vmem:[#allocation2 + $0xac0] sm:$0xff] %vm5632, %v5464
      %5978 = vst.msk [vmem:[#allocation2 + $0xac8] sm:$0xff] %vm5632, %v5465
      %5979 = vst.msk [vmem:[#allocation2 + $0xad0] sm:$0xff] %vm5632, %v5466
      %5980 = vst.msk [vmem:[#allocation2 + $0xad8] sm:$0xff] %vm5632, %v5467
      %5981 = vst.msk [vmem:[#allocation2 + $0xae0] sm:$0xff] %vm5632, %v5468
      %5982 = vst.msk [vmem:[#allocation2 + $0xae8] sm:$0xff] %vm5632, %v5469
      %5983 = vst.msk [vmem:[#allocation2 + $0xaf0] sm:$0xff] %vm5632, %v5470
      %5984 = vst.msk [vmem:[#allocation2 + $0xaf8] sm:$0xff] %vm5632, %v5471
      %5985 = vst.msk [vmem:[#allocation2 + $0xb00] sm:$0xff] %vm5632, %v5472
      %5986 = vst.msk [vmem:[#allocation2 + $0xb08] sm:$0xff] %vm5632, %v5473
      %5987 = vst.msk [vmem:[#allocation2 + $0xb10] sm:$0xff] %vm5632, %v5474
      %5988 = vst.msk [vmem:[#allocation2 + $0xb18] sm:$0xff] %vm5632, %v5475
      %5989 = vst.msk [vmem:[#allocation2 + $0xb20] sm:$0xff] %vm5632, %v5476
      %5990 = vst.msk [vmem:[#allocation2 + $0xb28] sm:$0xff] %vm5632, %v5477
      %5991 = vst.msk [vmem:[#allocation2 + $0xb30] sm:$0xff] %vm5632, %v5478
      %5992 = vst.msk [vmem:[#allocation2 + $0xb38] sm:$0xff] %vm5632, %v5479
      %5993 = vst.msk [vmem:[#allocation2 + $0xb40] sm:$0xff] %vm5632, %v5480
      %5994 = vst.msk [vmem:[#allocation2 + $0xb48] sm:$0xff] %vm5632, %v5481
      %5995 = vst.msk [vmem:[#allocation2 + $0xb50] sm:$0xff] %vm5632, %v5482
      %5996 = vst.msk [vmem:[#allocation2 + $0xb58] sm:$0xff] %vm5632, %v5483
      %5997 = vst.msk [vmem:[#allocation2 + $0xb60] sm:$0xff] %vm5632, %v5484
      %5998 = vst.msk [vmem:[#allocation2 + $0xb68] sm:$0xff] %vm5632, %v5485
      %5999 = vst.msk [vmem:[#allocation2 + $0xb70] sm:$0xff] %vm5632, %v5486
      %6000 = vst.msk [vmem:[#allocation2 + $0xb78] sm:$0xff] %vm5632, %v5487
      %6001 = vst.msk [vmem:[#allocation2 + $0xb80] sm:$0xff] %vm5632, %v5488
      %6002 = vst.msk [vmem:[#allocation2 + $0xb88] sm:$0xff] %vm5632, %v5489
      %6003 = vst.msk [vmem:[#allocation2 + $0xb90] sm:$0xff] %vm5632, %v5490
      %6004 = vst.msk [vmem:[#allocation2 + $0xb98] sm:$0xff] %vm5632, %v5491
      %6005 = vst.msk [vmem:[#allocation2 + $0xba0] sm:$0xff] %vm5632, %v5492
      %6006 = vst.msk [vmem:[#allocation2 + $0xba8] sm:$0xff] %vm5632, %v5493
      %6007 = vst.msk [vmem:[#allocation2 + $0xbb0] sm:$0xff] %vm5632, %v5494
      %6008 = vst.msk [vmem:[#allocation2 + $0xbb8] sm:$0xff] %vm5632, %v5495
      %6009 = vst.msk [vmem:[#allocation2 + $0xbc0] sm:$0xff] %vm5632, %v5496
      %6010 = vst.msk [vmem:[#allocation2 + $0xbc8] sm:$0xff] %vm5632, %v5497
      %6011 = vst.msk [vmem:[#allocation2 + $0xbd0] sm:$0xff] %vm5632, %v5498
      %6012 = vst.msk [vmem:[#allocation2 + $0xbd8] sm:$0xff] %vm5632, %v5499
      %6013 = vst.msk [vmem:[#allocation2 + $0xbe0] sm:$0xff] %vm5632, %v5500
      %6014 = vst.msk [vmem:[#allocation2 + $0xbe8] sm:$0xff] %vm5632, %v5501
      %6015 = vst.msk [vmem:[#allocation2 + $0xbf0] sm:$0xff] %vm5632, %v5502
      %6016 = vst.msk [vmem:[#allocation2 + $0xbf8] sm:$0xff] %vm5632, %v5503
      %6017 = vst.msk [vmem:[#allocation2 + $0xc00] sm:$0xff] %vm5632, %v5504
      %6018 = vst.msk [vmem:[#allocation2 + $0xc08] sm:$0xff] %vm5632, %v5505
      %6019 = vst.msk [vmem:[#allocation2 + $0xc10] sm:$0xff] %vm5632, %v5506
      %6020 = vst.msk [vmem:[#allocation2 + $0xc18] sm:$0xff] %vm5632, %v5507
      %6021 = vst.msk [vmem:[#allocation2 + $0xc20] sm:$0xff] %vm5632, %v5508
      %6022 = vst.msk [vmem:[#allocation2 + $0xc28] sm:$0xff] %vm5632, %v5509
      %6023 = vst.msk [vmem:[#allocation2 + $0xc30] sm:$0xff] %vm5632, %v5510
      %6024 = vst.msk [vmem:[#allocation2 + $0xc38] sm:$0xff] %vm5632, %v5511
      %6025 = vst.msk [vmem:[#allocation2 + $0xc40] sm:$0xff] %vm5632, %v5512
      %6026 = vst.msk [vmem:[#allocation2 + $0xc48] sm:$0xff] %vm5632, %v5513
      %6027 = vst.msk [vmem:[#allocation2 + $0xc50] sm:$0xff] %vm5632, %v5514
      %6028 = vst.msk [vmem:[#allocation2 + $0xc58] sm:$0xff] %vm5632, %v5515
      %6029 = vst.msk [vmem:[#allocation2 + $0xc60] sm:$0xff] %vm5632, %v5516
      %6030 = vst.msk [vmem:[#allocation2 + $0xc68] sm:$0xff] %vm5632, %v5517
      %6031 = vst.msk [vmem:[#allocation2 + $0xc70] sm:$0xff] %vm5632, %v5518
      %6032 = vst.msk [vmem:[#allocation2 + $0xc78] sm:$0xff] %vm5632, %v5519
      %6033 = vst.msk [vmem:[#allocation2 + $0xc80] sm:$0xff] %vm5632, %v5520
      %6034 = vst.msk [vmem:[#allocation2 + $0xc88] sm:$0xff] %vm5632, %v5521
      %6035 = vst.msk [vmem:[#allocation2 + $0xc90] sm:$0xff] %vm5632, %v5522
      %6036 = vst.msk [vmem:[#allocation2 + $0xc98] sm:$0xff] %vm5632, %v5523
      %6037 = vst.msk [vmem:[#allocation2 + $0xca0] sm:$0xff] %vm5632, %v5524
      %6038 = vst.msk [vmem:[#allocation2 + $0xca8] sm:$0xff] %vm5632, %v5525
      %6039 = vst.msk [vmem:[#allocation2 + $0xcb0] sm:$0xff] %vm5632, %v5526
      %6040 = vst.msk [vmem:[#allocation2 + $0xcb8] sm:$0xff] %vm5632, %v5527
      %6041 = vst.msk [vmem:[#allocation2 + $0xcc0] sm:$0xff] %vm5632, %v5528
      %6042 = vst.msk [vmem:[#allocation2 + $0xcc8] sm:$0xff] %vm5632, %v5529
      %6043 = vst.msk [vmem:[#allocation2 + $0xcd0] sm:$0xff] %vm5632, %v5530
      %6044 = vst.msk [vmem:[#allocation2 + $0xcd8] sm:$0xff] %vm5632, %v5531
      %6045 = vst.msk [vmem:[#allocation2 + $0xce0] sm:$0xff] %vm5632, %v5532
      %6046 = vst.msk [vmem:[#allocation2 + $0xce8] sm:$0xff] %vm5632, %v5533
      %6047 = vst.msk [vmem:[#allocation2 + $0xcf0] sm:$0xff] %vm5632, %v5534
      %6048 = vst.msk [vmem:[#allocation2 + $0xcf8] sm:$0xff] %vm5632, %v5535
      %6049 = vst.msk [vmem:[#allocation2 + $0xd00] sm:$0xff] %vm5632, %v5536
      %6050 = vst.msk [vmem:[#allocation2 + $0xd08] sm:$0xff] %vm5632, %v5537
      %6051 = vst.msk [vmem:[#allocation2 + $0xd10] sm:$0xff] %vm5632, %v5538
      %6052 = vst.msk [vmem:[#allocation2 + $0xd18] sm:$0xff] %vm5632, %v5539
      %6053 = vst.msk [vmem:[#allocation2 + $0xd20] sm:$0xff] %vm5632, %v5540
      %6054 = vst.msk [vmem:[#allocation2 + $0xd28] sm:$0xff] %vm5632, %v5541
      %6055 = vst.msk [vmem:[#allocation2 + $0xd30] sm:$0xff] %vm5632, %v5542
      %6056 = vst.msk [vmem:[#allocation2 + $0xd38] sm:$0xff] %vm5632, %v5543
      %6057 = vst.msk [vmem:[#allocation2 + $0xd40] sm:$0xff] %vm5632, %v5544
      %6058 = vst.msk [vmem:[#allocation2 + $0xd48] sm:$0xff] %vm5632, %v5545
      %6059 = vst.msk [vmem:[#allocation2 + $0xd50] sm:$0xff] %vm5632, %v5546
      %6060 = vst.msk [vmem:[#allocation2 + $0xd58] sm:$0xff] %vm5632, %v5547
      %6061 = vst.msk [vmem:[#allocation2 + $0xd60] sm:$0xff] %vm5632, %v5548
      %6062 = vst.msk [vmem:[#allocation2 + $0xd68] sm:$0xff] %vm5632, %v5549
      %6063 = vst.msk [vmem:[#allocation2 + $0xd70] sm:$0xff] %vm5632, %v5550
      %6064 = vst.msk [vmem:[#allocation2 + $0xd78] sm:$0xff] %vm5632, %v5551
      %6065 = vst.msk [vmem:[#allocation2 + $0xd80] sm:$0xff] %vm5632, %v5552
      %6066 = vst.msk [vmem:[#allocation2 + $0xd88] sm:$0xff] %vm5632, %v5553
      %6067 = vst.msk [vmem:[#allocation2 + $0xd90] sm:$0xff] %vm5632, %v5554
      %6068 = vst.msk [vmem:[#allocation2 + $0xd98] sm:$0xff] %vm5632, %v5555
      %6069 = vst.msk [vmem:[#allocation2 + $0xda0] sm:$0xff] %vm5632, %v5556
      %6070 = vst.msk [vmem:[#allocation2 + $0xda8] sm:$0xff] %vm5632, %v5557
      %6071 = vst.msk [vmem:[#allocation2 + $0xdb0] sm:$0xff] %vm5632, %v5558
      %6072 = vst.msk [vmem:[#allocation2 + $0xdb8] sm:$0xff] %vm5632, %v5559
      %6073 = vst.msk [vmem:[#allocation2 + $0xdc0] sm:$0xff] %vm5632, %v5560
      %6074 = vst.msk [vmem:[#allocation2 + $0xdc8] sm:$0xff] %vm5632, %v5561
      %6075 = vst.msk [vmem:[#allocation2 + $0xdd0] sm:$0xff] %vm5632, %v5562
      %6076 = vst.msk [vmem:[#allocation2 + $0xdd8] sm:$0xff] %vm5632, %v5563
      %6077 = vst.msk [vmem:[#allocation2 + $0xde0] sm:$0xff] %vm5632, %v5564
      %6078 = vst.msk [vmem:[#allocation2 + $0xde8] sm:$0xff] %vm5632, %v5565
      %6079 = vst.msk [vmem:[#allocation2 + $0xdf0] sm:$0xff] %vm5632, %v5566
      %6080 = vst.msk [vmem:[#allocation2 + $0xdf8] sm:$0xff] %vm5632, %v5567
      %6081 = vst.msk [vmem:[#allocation2 + $0xe00] sm:$0xff] %vm5632, %v5568
      %6082 = vst.msk [vmem:[#allocation2 + $0xe08] sm:$0xff] %vm5632, %v5569
      %6083 = vst.msk [vmem:[#allocation2 + $0xe10] sm:$0xff] %vm5632, %v5570
      %6084 = vst.msk [vmem:[#allocation2 + $0xe18] sm:$0xff] %vm5632, %v5571
      %6085 = vst.msk [vmem:[#allocation2 + $0xe20] sm:$0xff] %vm5632, %v5572
      %6086 = vst.msk [vmem:[#allocation2 + $0xe28] sm:$0xff] %vm5632, %v5573
      %6087 = vst.msk [vmem:[#allocation2 + $0xe30] sm:$0xff] %vm5632, %v5574
      %6088 = vst.msk [vmem:[#allocation2 + $0xe38] sm:$0xff] %vm5632, %v5575
      %6089 = vst.msk [vmem:[#allocation2 + $0xe40] sm:$0xff] %vm5632, %v5576
      %6090 = vst.msk [vmem:[#allocation2 + $0xe48] sm:$0xff] %vm5632, %v5577
      %6091 = vst.msk [vmem:[#allocation2 + $0xe50] sm:$0xff] %vm5632, %v5578
      %6092 = vst.msk [vmem:[#allocation2 + $0xe58] sm:$0xff] %vm5632, %v5579
      %6093 = vst.msk [vmem:[#allocation2 + $0xe60] sm:$0xff] %vm5632, %v5580
      %6094 = vst.msk [vmem:[#allocation2 + $0xe68] sm:$0xff] %vm5632, %v5581
      %6095 = vst.msk [vmem:[#allocation2 + $0xe70] sm:$0xff] %vm5632, %v5582
      %6096 = vst.msk [vmem:[#allocation2 + $0xe78] sm:$0xff] %vm5632, %v5583
      %6097 = vst.msk [vmem:[#allocation2 + $0xe80] sm:$0xff] %vm5632, %v5584
      %6098 = vst.msk [vmem:[#allocation2 + $0xe88] sm:$0xff] %vm5632, %v5585
      %6099 = vst.msk [vmem:[#allocation2 + $0xe90] sm:$0xff] %vm5632, %v5586
      %6100 = vst.msk [vmem:[#allocation2 + $0xe98] sm:$0xff] %vm5632, %v5587
      %6101 = vst.msk [vmem:[#allocation2 + $0xea0] sm:$0xff] %vm5632, %v5588
      %6102 = vst.msk [vmem:[#allocation2 + $0xea8] sm:$0xff] %vm5632, %v5589
      %6103 = vst.msk [vmem:[#allocation2 + $0xeb0] sm:$0xff] %vm5632, %v5590
      %6104 = vst.msk [vmem:[#allocation2 + $0xeb8] sm:$0xff] %vm5632, %v5591
      %6105 = vst.msk [vmem:[#allocation2 + $0xec0] sm:$0xff] %vm5632, %v5592
      %6106 = vst.msk [vmem:[#allocation2 + $0xec8] sm:$0xff] %vm5632, %v5593
      %6107 = vst.msk [vmem:[#allocation2 + $0xed0] sm:$0xff] %vm5632, %v5594
      %6108 = vst.msk [vmem:[#allocation2 + $0xed8] sm:$0xff] %vm5632, %v5595
      %6109 = vst.msk [vmem:[#allocation2 + $0xee0] sm:$0xff] %vm5632, %v5596
      %6110 = vst.msk [vmem:[#allocation2 + $0xee8] sm:$0xff] %vm5632, %v5597
      %6111 = vst.msk [vmem:[#allocation2 + $0xef0] sm:$0xff] %vm5632, %v5598
      %6112 = vst.msk [vmem:[#allocation2 + $0xef8] sm:$0xff] %vm5632, %v5599
      %6113 = vst.msk [vmem:[#allocation2 + $0xf00] sm:$0xff] %vm5632, %v5600
      %6114 = vst.msk [vmem:[#allocation2 + $0xf08] sm:$0xff] %vm5632, %v5601
      %6115 = vst.msk [vmem:[#allocation2 + $0xf10] sm:$0xff] %vm5632, %v5602
      %6116 = vst.msk [vmem:[#allocation2 + $0xf18] sm:$0xff] %vm5632, %v5603
      %6117 = vst.msk [vmem:[#allocation2 + $0xf20] sm:$0xff] %vm5632, %v5604
      %6118 = vst.msk [vmem:[#allocation2 + $0xf28] sm:$0xff] %vm5632, %v5605
      %6119 = vst.msk [vmem:[#allocation2 + $0xf30] sm:$0xff] %vm5632, %v5606
      %6120 = vst.msk [vmem:[#allocation2 + $0xf38] sm:$0xff] %vm5632, %v5607
      %6121 = vst.msk [vmem:[#allocation2 + $0xf40] sm:$0xff] %vm5632, %v5608
      %6122 = vst.msk [vmem:[#allocation2 + $0xf48] sm:$0xff] %vm5632, %v5609
      %6123 = vst.msk [vmem:[#allocation2 + $0xf50] sm:$0xff] %vm5632, %v5610
      %6124 = vst.msk [vmem:[#allocation2 + $0xf58] sm:$0xff] %vm5632, %v5611
      %6125 = vst.msk [vmem:[#allocation2 + $0xf60] sm:$0xff] %vm5632, %v5612
      %6126 = vst.msk [vmem:[#allocation2 + $0xf68] sm:$0xff] %vm5632, %v5613
      %6127 = vst.msk [vmem:[#allocation2 + $0xf70] sm:$0xff] %vm5632, %v5614
      %6128 = vst.msk [vmem:[#allocation2 + $0xf78] sm:$0xff] %vm5632, %v5615
      %6129 = vst.msk [vmem:[#allocation2 + $0xf80] sm:$0xff] %vm5632, %v5616
      %6130 = vst.msk [vmem:[#allocation2 + $0xf88] sm:$0xff] %vm5632, %v5617
      %6131 = vst.msk [vmem:[#allocation2 + $0xf90] sm:$0xff] %vm5632, %v5618
      %6132 = vst.msk [vmem:[#allocation2 + $0xf98] sm:$0xff] %vm5632, %v5619
      %6133 = vst.msk [vmem:[#allocation2 + $0xfa0] sm:$0xff] %vm5632, %v5620
      %6134 = vst.msk [vmem:[#allocation2 + $0xfa8] sm:$0xff] %vm5632, %v5621
      %6135 = vst.msk [vmem:[#allocation2 + $0xfb0] sm:$0xff] %vm5632, %v5622
      %6136 = vst.msk [vmem:[#allocation2 + $0xfb8] sm:$0xff] %vm5632, %v5623
      %6137 = vst.msk [vmem:[#allocation2 + $0xfc0] sm:$0xff] %vm5632, %v5624
      %6138 = vst.msk [vmem:[#allocation2 + $0xfc8] sm:$0xff] %vm5632, %v5625
      %6139 = vst.msk [vmem:[#allocation2 + $0xfd0] sm:$0xff] %vm5632, %v5626
      %6140 = vst.msk [vmem:[#allocation2 + $0xfd8] sm:$0xff] %vm5632, %v5627
      %6141 = vst.msk [vmem:[#allocation2 + $0xfe0] sm:$0xff] %vm5632, %v5628
      %6142 = vst.msk [vmem:[#allocation2 + $0xfe8] sm:$0xff] %vm5632, %v5629
      %6143 = vst.msk [vmem:[#allocation2 + $0xff0] sm:$0xff] %vm5632, %v5630
      %6144 = vst.msk [vmem:[#allocation2 + $0xff8] sm:$0xff] %vm5632, %v5631
      // Predicated region
      $region33: #{_matmul_impl.1} parent=27 // pred_check
        %p6145 = pneg %p219
      $region34: #{_matmul_impl.1} parent=27 // pred_check_branch
        %6147 = sbr.rel (%p6145) target = $region36
      $region35: #{_matmul_impl.1} parent=27 // pred_region
        %v6148 = vld [vmem:[#allocation2] sm:$0xff]
        %v6149 = vld [vmem:[#allocation2 + $0x8] sm:$0xff]
        %v6150 = vld [vmem:[#allocation2 + $0x10] sm:$0xff]
        %v6151 = vld [vmem:[#allocation2 + $0x18] sm:$0xff]
        %v6152 = vld [vmem:[#allocation2 + $0x20] sm:$0xff]
        %v6153 = vld [vmem:[#allocation2 + $0x28] sm:$0xff]
        %v6154 = vld [vmem:[#allocation2 + $0x30] sm:$0xff]
        %v6155 = vld [vmem:[#allocation2 + $0x38] sm:$0xff]
        %v6156 = vld [vmem:[#allocation2 + $0x40] sm:$0xff]
        %v6157 = vld [vmem:[#allocation2 + $0x48] sm:$0xff]
        %v6158 = vld [vmem:[#allocation2 + $0x50] sm:$0xff]
        %v6159 = vld [vmem:[#allocation2 + $0x58] sm:$0xff]
        %v6160 = vld [vmem:[#allocation2 + $0x60] sm:$0xff]
        %v6161 = vld [vmem:[#allocation2 + $0x68] sm:$0xff]
        %v6162 = vld [vmem:[#allocation2 + $0x70] sm:$0xff]
        %v6163 = vld [vmem:[#allocation2 + $0x78] sm:$0xff]
        %v6164 = vld [vmem:[#allocation2 + $0x80] sm:$0xff]
        %v6165 = vld [vmem:[#allocation2 + $0x88] sm:$0xff]
        %v6166 = vld [vmem:[#allocation2 + $0x90] sm:$0xff]
        %v6167 = vld [vmem:[#allocation2 + $0x98] sm:$0xff]
        %v6168 = vld [vmem:[#allocation2 + $0xa0] sm:$0xff]
        %v6169 = vld [vmem:[#allocation2 + $0xa8] sm:$0xff]
        %v6170 = vld [vmem:[#allocation2 + $0xb0] sm:$0xff]
        %v6171 = vld [vmem:[#allocation2 + $0xb8] sm:$0xff]
        %v6172 = vld [vmem:[#allocation2 + $0xc0] sm:$0xff]
        %v6173 = vld [vmem:[#allocation2 + $0xc8] sm:$0xff]
        %v6174 = vld [vmem:[#allocation2 + $0xd0] sm:$0xff]
        %v6175 = vld [vmem:[#allocation2 + $0xd8] sm:$0xff]
        %v6176 = vld [vmem:[#allocation2 + $0xe0] sm:$0xff]
        %v6177 = vld [vmem:[#allocation2 + $0xe8] sm:$0xff]
        %v6178 = vld [vmem:[#allocation2 + $0xf0] sm:$0xff]
        %v6179 = vld [vmem:[#allocation2 + $0xf8] sm:$0xff]
        %v6180 = vld [vmem:[#allocation2 + $0x100] sm:$0xff]
        %v6181 = vld [vmem:[#allocation2 + $0x108] sm:$0xff]
        %v6182 = vld [vmem:[#allocation2 + $0x110] sm:$0xff]
        %v6183 = vld [vmem:[#allocation2 + $0x118] sm:$0xff]
        %v6184 = vld [vmem:[#allocation2 + $0x120] sm:$0xff]
        %v6185 = vld [vmem:[#allocation2 + $0x128] sm:$0xff]
        %v6186 = vld [vmem:[#allocation2 + $0x130] sm:$0xff]
        %v6187 = vld [vmem:[#allocation2 + $0x138] sm:$0xff]
        %v6188 = vld [vmem:[#allocation2 + $0x140] sm:$0xff]
        %v6189 = vld [vmem:[#allocation2 + $0x148] sm:$0xff]
        %v6190 = vld [vmem:[#allocation2 + $0x150] sm:$0xff]
        %v6191 = vld [vmem:[#allocation2 + $0x158] sm:$0xff]
        %v6192 = vld [vmem:[#allocation2 + $0x160] sm:$0xff]
        %v6193 = vld [vmem:[#allocation2 + $0x168] sm:$0xff]
        %v6194 = vld [vmem:[#allocation2 + $0x170] sm:$0xff]
        %v6195 = vld [vmem:[#allocation2 + $0x178] sm:$0xff]
        %v6196 = vld [vmem:[#allocation2 + $0x180] sm:$0xff]
        %v6197 = vld [vmem:[#allocation2 + $0x188] sm:$0xff]
        %v6198 = vld [vmem:[#allocation2 + $0x190] sm:$0xff]
        %v6199 = vld [vmem:[#allocation2 + $0x198] sm:$0xff]
        %v6200 = vld [vmem:[#allocation2 + $0x1a0] sm:$0xff]
        %v6201 = vld [vmem:[#allocation2 + $0x1a8] sm:$0xff]
        %v6202 = vld [vmem:[#allocation2 + $0x1b0] sm:$0xff]
        %v6203 = vld [vmem:[#allocation2 + $0x1b8] sm:$0xff]
        %v6204 = vld [vmem:[#allocation2 + $0x1c0] sm:$0xff]
        %v6205 = vld [vmem:[#allocation2 + $0x1c8] sm:$0xff]
        %v6206 = vld [vmem:[#allocation2 + $0x1d0] sm:$0xff]
        %v6207 = vld [vmem:[#allocation2 + $0x1d8] sm:$0xff]
        %v6208 = vld [vmem:[#allocation2 + $0x1e0] sm:$0xff]
        %v6209 = vld [vmem:[#allocation2 + $0x1e8] sm:$0xff]
        %v6210 = vld [vmem:[#allocation2 + $0x1f0] sm:$0xff]
        %v6211 = vld [vmem:[#allocation2 + $0x1f8] sm:$0xff]
        %v6212 = vld [vmem:[#allocation2 + $0x200] sm:$0xff]
        %v6213 = vld [vmem:[#allocation2 + $0x208] sm:$0xff]
        %v6214 = vld [vmem:[#allocation2 + $0x210] sm:$0xff]
        %v6215 = vld [vmem:[#allocation2 + $0x218] sm:$0xff]
        %v6216 = vld [vmem:[#allocation2 + $0x220] sm:$0xff]
        %v6217 = vld [vmem:[#allocation2 + $0x228] sm:$0xff]
        %v6218 = vld [vmem:[#allocation2 + $0x230] sm:$0xff]
        %v6219 = vld [vmem:[#allocation2 + $0x238] sm:$0xff]
        %v6220 = vld [vmem:[#allocation2 + $0x240] sm:$0xff]
        %v6221 = vld [vmem:[#allocation2 + $0x248] sm:$0xff]
        %v6222 = vld [vmem:[#allocation2 + $0x250] sm:$0xff]
        %v6223 = vld [vmem:[#allocation2 + $0x258] sm:$0xff]
        %v6224 = vld [vmem:[#allocation2 + $0x260] sm:$0xff]
        %v6225 = vld [vmem:[#allocation2 + $0x268] sm:$0xff]
        %v6226 = vld [vmem:[#allocation2 + $0x270] sm:$0xff]
        %v6227 = vld [vmem:[#allocation2 + $0x278] sm:$0xff]
        %v6228 = vld [vmem:[#allocation2 + $0x280] sm:$0xff]
        %v6229 = vld [vmem:[#allocation2 + $0x288] sm:$0xff]
        %v6230 = vld [vmem:[#allocation2 + $0x290] sm:$0xff]
        %v6231 = vld [vmem:[#allocation2 + $0x298] sm:$0xff]
        %v6232 = vld [vmem:[#allocation2 + $0x2a0] sm:$0xff]
        %v6233 = vld [vmem:[#allocation2 + $0x2a8] sm:$0xff]
        %v6234 = vld [vmem:[#allocation2 + $0x2b0] sm:$0xff]
        %v6235 = vld [vmem:[#allocation2 + $0x2b8] sm:$0xff]
        %v6236 = vld [vmem:[#allocation2 + $0x2c0] sm:$0xff]
        %v6237 = vld [vmem:[#allocation2 + $0x2c8] sm:$0xff]
        %v6238 = vld [vmem:[#allocation2 + $0x2d0] sm:$0xff]
        %v6239 = vld [vmem:[#allocation2 + $0x2d8] sm:$0xff]
        %v6240 = vld [vmem:[#allocation2 + $0x2e0] sm:$0xff]
        %v6241 = vld [vmem:[#allocation2 + $0x2e8] sm:$0xff]
        %v6242 = vld [vmem:[#allocation2 + $0x2f0] sm:$0xff]
        %v6243 = vld [vmem:[#allocation2 + $0x2f8] sm:$0xff]
        %v6244 = vld [vmem:[#allocation2 + $0x300] sm:$0xff]
        %v6245 = vld [vmem:[#allocation2 + $0x308] sm:$0xff]
        %v6246 = vld [vmem:[#allocation2 + $0x310] sm:$0xff]
        %v6247 = vld [vmem:[#allocation2 + $0x318] sm:$0xff]
        %v6248 = vld [vmem:[#allocation2 + $0x320] sm:$0xff]
        %v6249 = vld [vmem:[#allocation2 + $0x328] sm:$0xff]
        %v6250 = vld [vmem:[#allocation2 + $0x330] sm:$0xff]
        %v6251 = vld [vmem:[#allocation2 + $0x338] sm:$0xff]
        %v6252 = vld [vmem:[#allocation2 + $0x340] sm:$0xff]
        %v6253 = vld [vmem:[#allocation2 + $0x348] sm:$0xff]
        %v6254 = vld [vmem:[#allocation2 + $0x350] sm:$0xff]
        %v6255 = vld [vmem:[#allocation2 + $0x358] sm:$0xff]
        %v6256 = vld [vmem:[#allocation2 + $0x360] sm:$0xff]
        %v6257 = vld [vmem:[#allocation2 + $0x368] sm:$0xff]
        %v6258 = vld [vmem:[#allocation2 + $0x370] sm:$0xff]
        %v6259 = vld [vmem:[#allocation2 + $0x378] sm:$0xff]
        %v6260 = vld [vmem:[#allocation2 + $0x380] sm:$0xff]
        %v6261 = vld [vmem:[#allocation2 + $0x388] sm:$0xff]
        %v6262 = vld [vmem:[#allocation2 + $0x390] sm:$0xff]
        %v6263 = vld [vmem:[#allocation2 + $0x398] sm:$0xff]
        %v6264 = vld [vmem:[#allocation2 + $0x3a0] sm:$0xff]
        %v6265 = vld [vmem:[#allocation2 + $0x3a8] sm:$0xff]
        %v6266 = vld [vmem:[#allocation2 + $0x3b0] sm:$0xff]
        %v6267 = vld [vmem:[#allocation2 + $0x3b8] sm:$0xff]
        %v6268 = vld [vmem:[#allocation2 + $0x3c0] sm:$0xff]
        %v6269 = vld [vmem:[#allocation2 + $0x3c8] sm:$0xff]
        %v6270 = vld [vmem:[#allocation2 + $0x3d0] sm:$0xff]
        %v6271 = vld [vmem:[#allocation2 + $0x3d8] sm:$0xff]
        %v6272 = vld [vmem:[#allocation2 + $0x3e0] sm:$0xff]
        %v6273 = vld [vmem:[#allocation2 + $0x3e8] sm:$0xff]
        %v6274 = vld [vmem:[#allocation2 + $0x3f0] sm:$0xff]
        %v6275 = vld [vmem:[#allocation2 + $0x3f8] sm:$0xff]
        %v6276 = vld [vmem:[#allocation2 + $0x400] sm:$0xff]
        %v6277 = vld [vmem:[#allocation2 + $0x408] sm:$0xff]
        %v6278 = vld [vmem:[#allocation2 + $0x410] sm:$0xff]
        %v6279 = vld [vmem:[#allocation2 + $0x418] sm:$0xff]
        %v6280 = vld [vmem:[#allocation2 + $0x420] sm:$0xff]
        %v6281 = vld [vmem:[#allocation2 + $0x428] sm:$0xff]
        %v6282 = vld [vmem:[#allocation2 + $0x430] sm:$0xff]
        %v6283 = vld [vmem:[#allocation2 + $0x438] sm:$0xff]
        %v6284 = vld [vmem:[#allocation2 + $0x440] sm:$0xff]
        %v6285 = vld [vmem:[#allocation2 + $0x448] sm:$0xff]
        %v6286 = vld [vmem:[#allocation2 + $0x450] sm:$0xff]
        %v6287 = vld [vmem:[#allocation2 + $0x458] sm:$0xff]
        %v6288 = vld [vmem:[#allocation2 + $0x460] sm:$0xff]
        %v6289 = vld [vmem:[#allocation2 + $0x468] sm:$0xff]
        %v6290 = vld [vmem:[#allocation2 + $0x470] sm:$0xff]
        %v6291 = vld [vmem:[#allocation2 + $0x478] sm:$0xff]
        %v6292 = vld [vmem:[#allocation2 + $0x480] sm:$0xff]
        %v6293 = vld [vmem:[#allocation2 + $0x488] sm:$0xff]
        %v6294 = vld [vmem:[#allocation2 + $0x490] sm:$0xff]
        %v6295 = vld [vmem:[#allocation2 + $0x498] sm:$0xff]
        %v6296 = vld [vmem:[#allocation2 + $0x4a0] sm:$0xff]
        %v6297 = vld [vmem:[#allocation2 + $0x4a8] sm:$0xff]
        %v6298 = vld [vmem:[#allocation2 + $0x4b0] sm:$0xff]
        %v6299 = vld [vmem:[#allocation2 + $0x4b8] sm:$0xff]
        %v6300 = vld [vmem:[#allocation2 + $0x4c0] sm:$0xff]
        %v6301 = vld [vmem:[#allocation2 + $0x4c8] sm:$0xff]
        %v6302 = vld [vmem:[#allocation2 + $0x4d0] sm:$0xff]
        %v6303 = vld [vmem:[#allocation2 + $0x4d8] sm:$0xff]
        %v6304 = vld [vmem:[#allocation2 + $0x4e0] sm:$0xff]
        %v6305 = vld [vmem:[#allocation2 + $0x4e8] sm:$0xff]
        %v6306 = vld [vmem:[#allocation2 + $0x4f0] sm:$0xff]
        %v6307 = vld [vmem:[#allocation2 + $0x4f8] sm:$0xff]
        %v6308 = vld [vmem:[#allocation2 + $0x500] sm:$0xff]
        %v6309 = vld [vmem:[#allocation2 + $0x508] sm:$0xff]
        %v6310 = vld [vmem:[#allocation2 + $0x510] sm:$0xff]
        %v6311 = vld [vmem:[#allocation2 + $0x518] sm:$0xff]
        %v6312 = vld [vmem:[#allocation2 + $0x520] sm:$0xff]
        %v6313 = vld [vmem:[#allocation2 + $0x528] sm:$0xff]
        %v6314 = vld [vmem:[#allocation2 + $0x530] sm:$0xff]
        %v6315 = vld [vmem:[#allocation2 + $0x538] sm:$0xff]
        %v6316 = vld [vmem:[#allocation2 + $0x540] sm:$0xff]
        %v6317 = vld [vmem:[#allocation2 + $0x548] sm:$0xff]
        %v6318 = vld [vmem:[#allocation2 + $0x550] sm:$0xff]
        %v6319 = vld [vmem:[#allocation2 + $0x558] sm:$0xff]
        %v6320 = vld [vmem:[#allocation2 + $0x560] sm:$0xff]
        %v6321 = vld [vmem:[#allocation2 + $0x568] sm:$0xff]
        %v6322 = vld [vmem:[#allocation2 + $0x570] sm:$0xff]
        %v6323 = vld [vmem:[#allocation2 + $0x578] sm:$0xff]
        %v6324 = vld [vmem:[#allocation2 + $0x580] sm:$0xff]
        %v6325 = vld [vmem:[#allocation2 + $0x588] sm:$0xff]
        %v6326 = vld [vmem:[#allocation2 + $0x590] sm:$0xff]
        %v6327 = vld [vmem:[#allocation2 + $0x598] sm:$0xff]
        %v6328 = vld [vmem:[#allocation2 + $0x5a0] sm:$0xff]
        %v6329 = vld [vmem:[#allocation2 + $0x5a8] sm:$0xff]
        %v6330 = vld [vmem:[#allocation2 + $0x5b0] sm:$0xff]
        %v6331 = vld [vmem:[#allocation2 + $0x5b8] sm:$0xff]
        %v6332 = vld [vmem:[#allocation2 + $0x5c0] sm:$0xff]
        %v6333 = vld [vmem:[#allocation2 + $0x5c8] sm:$0xff]
        %v6334 = vld [vmem:[#allocation2 + $0x5d0] sm:$0xff]
        %v6335 = vld [vmem:[#allocation2 + $0x5d8] sm:$0xff]
        %v6336 = vld [vmem:[#allocation2 + $0x5e0] sm:$0xff]
        %v6337 = vld [vmem:[#allocation2 + $0x5e8] sm:$0xff]
        %v6338 = vld [vmem:[#allocation2 + $0x5f0] sm:$0xff]
        %v6339 = vld [vmem:[#allocation2 + $0x5f8] sm:$0xff]
        %v6340 = vld [vmem:[#allocation2 + $0x600] sm:$0xff]
        %v6341 = vld [vmem:[#allocation2 + $0x608] sm:$0xff]
        %v6342 = vld [vmem:[#allocation2 + $0x610] sm:$0xff]
        %v6343 = vld [vmem:[#allocation2 + $0x618] sm:$0xff]
        %v6344 = vld [vmem:[#allocation2 + $0x620] sm:$0xff]
        %v6345 = vld [vmem:[#allocation2 + $0x628] sm:$0xff]
        %v6346 = vld [vmem:[#allocation2 + $0x630] sm:$0xff]
        %v6347 = vld [vmem:[#allocation2 + $0x638] sm:$0xff]
        %v6348 = vld [vmem:[#allocation2 + $0x640] sm:$0xff]
        %v6349 = vld [vmem:[#allocation2 + $0x648] sm:$0xff]
        %v6350 = vld [vmem:[#allocation2 + $0x650] sm:$0xff]
        %v6351 = vld [vmem:[#allocation2 + $0x658] sm:$0xff]
        %v6352 = vld [vmem:[#allocation2 + $0x660] sm:$0xff]
        %v6353 = vld [vmem:[#allocation2 + $0x668] sm:$0xff]
        %v6354 = vld [vmem:[#allocation2 + $0x670] sm:$0xff]
        %v6355 = vld [vmem:[#allocation2 + $0x678] sm:$0xff]
        %v6356 = vld [vmem:[#allocation2 + $0x680] sm:$0xff]
        %v6357 = vld [vmem:[#allocation2 + $0x688] sm:$0xff]
        %v6358 = vld [vmem:[#allocation2 + $0x690] sm:$0xff]
        %v6359 = vld [vmem:[#allocation2 + $0x698] sm:$0xff]
        %v6360 = vld [vmem:[#allocation2 + $0x6a0] sm:$0xff]
        %v6361 = vld [vmem:[#allocation2 + $0x6a8] sm:$0xff]
        %v6362 = vld [vmem:[#allocation2 + $0x6b0] sm:$0xff]
        %v6363 = vld [vmem:[#allocation2 + $0x6b8] sm:$0xff]
        %v6364 = vld [vmem:[#allocation2 + $0x6c0] sm:$0xff]
        %v6365 = vld [vmem:[#allocation2 + $0x6c8] sm:$0xff]
        %v6366 = vld [vmem:[#allocation2 + $0x6d0] sm:$0xff]
        %v6367 = vld [vmem:[#allocation2 + $0x6d8] sm:$0xff]
        %v6368 = vld [vmem:[#allocation2 + $0x6e0] sm:$0xff]
        %v6369 = vld [vmem:[#allocation2 + $0x6e8] sm:$0xff]
        %v6370 = vld [vmem:[#allocation2 + $0x6f0] sm:$0xff]
        %v6371 = vld [vmem:[#allocation2 + $0x6f8] sm:$0xff]
        %v6372 = vld [vmem:[#allocation2 + $0x700] sm:$0xff]
        %v6373 = vld [vmem:[#allocation2 + $0x708] sm:$0xff]
        %v6374 = vld [vmem:[#allocation2 + $0x710] sm:$0xff]
        %v6375 = vld [vmem:[#allocation2 + $0x718] sm:$0xff]
        %v6376 = vld [vmem:[#allocation2 + $0x720] sm:$0xff]
        %v6377 = vld [vmem:[#allocation2 + $0x728] sm:$0xff]
        %v6378 = vld [vmem:[#allocation2 + $0x730] sm:$0xff]
        %v6379 = vld [vmem:[#allocation2 + $0x738] sm:$0xff]
        %v6380 = vld [vmem:[#allocation2 + $0x740] sm:$0xff]
        %v6381 = vld [vmem:[#allocation2 + $0x748] sm:$0xff]
        %v6382 = vld [vmem:[#allocation2 + $0x750] sm:$0xff]
        %v6383 = vld [vmem:[#allocation2 + $0x758] sm:$0xff]
        %v6384 = vld [vmem:[#allocation2 + $0x760] sm:$0xff]
        %v6385 = vld [vmem:[#allocation2 + $0x768] sm:$0xff]
        %v6386 = vld [vmem:[#allocation2 + $0x770] sm:$0xff]
        %v6387 = vld [vmem:[#allocation2 + $0x778] sm:$0xff]
        %v6388 = vld [vmem:[#allocation2 + $0x780] sm:$0xff]
        %v6389 = vld [vmem:[#allocation2 + $0x788] sm:$0xff]
        %v6390 = vld [vmem:[#allocation2 + $0x790] sm:$0xff]
        %v6391 = vld [vmem:[#allocation2 + $0x798] sm:$0xff]
        %v6392 = vld [vmem:[#allocation2 + $0x7a0] sm:$0xff]
        %v6393 = vld [vmem:[#allocation2 + $0x7a8] sm:$0xff]
        %v6394 = vld [vmem:[#allocation2 + $0x7b0] sm:$0xff]
        %v6395 = vld [vmem:[#allocation2 + $0x7b8] sm:$0xff]
        %v6396 = vld [vmem:[#allocation2 + $0x7c0] sm:$0xff]
        %v6397 = vld [vmem:[#allocation2 + $0x7c8] sm:$0xff]
        %v6398 = vld [vmem:[#allocation2 + $0x7d0] sm:$0xff]
        %v6399 = vld [vmem:[#allocation2 + $0x7d8] sm:$0xff]
        %v6400 = vld [vmem:[#allocation2 + $0x7e0] sm:$0xff]
        %v6401 = vld [vmem:[#allocation2 + $0x7e8] sm:$0xff]
        %v6402 = vld [vmem:[#allocation2 + $0x7f0] sm:$0xff]
        %v6403 = vld [vmem:[#allocation2 + $0x7f8] sm:$0xff]
        %v6404 = vld [vmem:[#allocation2 + $0x800] sm:$0xff]
        %v6405 = vld [vmem:[#allocation2 + $0x808] sm:$0xff]
        %v6406 = vld [vmem:[#allocation2 + $0x810] sm:$0xff]
        %v6407 = vld [vmem:[#allocation2 + $0x818] sm:$0xff]
        %v6408 = vld [vmem:[#allocation2 + $0x820] sm:$0xff]
        %v6409 = vld [vmem:[#allocation2 + $0x828] sm:$0xff]
        %v6410 = vld [vmem:[#allocation2 + $0x830] sm:$0xff]
        %v6411 = vld [vmem:[#allocation2 + $0x838] sm:$0xff]
        %v6412 = vld [vmem:[#allocation2 + $0x840] sm:$0xff]
        %v6413 = vld [vmem:[#allocation2 + $0x848] sm:$0xff]
        %v6414 = vld [vmem:[#allocation2 + $0x850] sm:$0xff]
        %v6415 = vld [vmem:[#allocation2 + $0x858] sm:$0xff]
        %v6416 = vld [vmem:[#allocation2 + $0x860] sm:$0xff]
        %v6417 = vld [vmem:[#allocation2 + $0x868] sm:$0xff]
        %v6418 = vld [vmem:[#allocation2 + $0x870] sm:$0xff]
        %v6419 = vld [vmem:[#allocation2 + $0x878] sm:$0xff]
        %v6420 = vld [vmem:[#allocation2 + $0x880] sm:$0xff]
        %v6421 = vld [vmem:[#allocation2 + $0x888] sm:$0xff]
        %v6422 = vld [vmem:[#allocation2 + $0x890] sm:$0xff]
        %v6423 = vld [vmem:[#allocation2 + $0x898] sm:$0xff]
        %v6424 = vld [vmem:[#allocation2 + $0x8a0] sm:$0xff]
        %v6425 = vld [vmem:[#allocation2 + $0x8a8] sm:$0xff]
        %v6426 = vld [vmem:[#allocation2 + $0x8b0] sm:$0xff]
        %v6427 = vld [vmem:[#allocation2 + $0x8b8] sm:$0xff]
        %v6428 = vld [vmem:[#allocation2 + $0x8c0] sm:$0xff]
        %v6429 = vld [vmem:[#allocation2 + $0x8c8] sm:$0xff]
        %v6430 = vld [vmem:[#allocation2 + $0x8d0] sm:$0xff]
        %v6431 = vld [vmem:[#allocation2 + $0x8d8] sm:$0xff]
        %v6432 = vld [vmem:[#allocation2 + $0x8e0] sm:$0xff]
        %v6433 = vld [vmem:[#allocation2 + $0x8e8] sm:$0xff]
        %v6434 = vld [vmem:[#allocation2 + $0x8f0] sm:$0xff]
        %v6435 = vld [vmem:[#allocation2 + $0x8f8] sm:$0xff]
        %v6436 = vld [vmem:[#allocation2 + $0x900] sm:$0xff]
        %v6437 = vld [vmem:[#allocation2 + $0x908] sm:$0xff]
        %v6438 = vld [vmem:[#allocation2 + $0x910] sm:$0xff]
        %v6439 = vld [vmem:[#allocation2 + $0x918] sm:$0xff]
        %v6440 = vld [vmem:[#allocation2 + $0x920] sm:$0xff]
        %v6441 = vld [vmem:[#allocation2 + $0x928] sm:$0xff]
        %v6442 = vld [vmem:[#allocation2 + $0x930] sm:$0xff]
        %v6443 = vld [vmem:[#allocation2 + $0x938] sm:$0xff]
        %v6444 = vld [vmem:[#allocation2 + $0x940] sm:$0xff]
        %v6445 = vld [vmem:[#allocation2 + $0x948] sm:$0xff]
        %v6446 = vld [vmem:[#allocation2 + $0x950] sm:$0xff]
        %v6447 = vld [vmem:[#allocation2 + $0x958] sm:$0xff]
        %v6448 = vld [vmem:[#allocation2 + $0x960] sm:$0xff]
        %v6449 = vld [vmem:[#allocation2 + $0x968] sm:$0xff]
        %v6450 = vld [vmem:[#allocation2 + $0x970] sm:$0xff]
        %v6451 = vld [vmem:[#allocation2 + $0x978] sm:$0xff]
        %v6452 = vld [vmem:[#allocation2 + $0x980] sm:$0xff]
        %v6453 = vld [vmem:[#allocation2 + $0x988] sm:$0xff]
        %v6454 = vld [vmem:[#allocation2 + $0x990] sm:$0xff]
        %v6455 = vld [vmem:[#allocation2 + $0x998] sm:$0xff]
        %v6456 = vld [vmem:[#allocation2 + $0x9a0] sm:$0xff]
        %v6457 = vld [vmem:[#allocation2 + $0x9a8] sm:$0xff]
        %v6458 = vld [vmem:[#allocation2 + $0x9b0] sm:$0xff]
        %v6459 = vld [vmem:[#allocation2 + $0x9b8] sm:$0xff]
        %v6460 = vld [vmem:[#allocation2 + $0x9c0] sm:$0xff]
        %v6461 = vld [vmem:[#allocation2 + $0x9c8] sm:$0xff]
        %v6462 = vld [vmem:[#allocation2 + $0x9d0] sm:$0xff]
        %v6463 = vld [vmem:[#allocation2 + $0x9d8] sm:$0xff]
        %v6464 = vld [vmem:[#allocation2 + $0x9e0] sm:$0xff]
        %v6465 = vld [vmem:[#allocation2 + $0x9e8] sm:$0xff]
        %v6466 = vld [vmem:[#allocation2 + $0x9f0] sm:$0xff]
        %v6467 = vld [vmem:[#allocation2 + $0x9f8] sm:$0xff]
        %v6468 = vld [vmem:[#allocation2 + $0xa00] sm:$0xff]
        %v6469 = vld [vmem:[#allocation2 + $0xa08] sm:$0xff]
        %v6470 = vld [vmem:[#allocation2 + $0xa10] sm:$0xff]
        %v6471 = vld [vmem:[#allocation2 + $0xa18] sm:$0xff]
        %v6472 = vld [vmem:[#allocation2 + $0xa20] sm:$0xff]
        %v6473 = vld [vmem:[#allocation2 + $0xa28] sm:$0xff]
        %v6474 = vld [vmem:[#allocation2 + $0xa30] sm:$0xff]
        %v6475 = vld [vmem:[#allocation2 + $0xa38] sm:$0xff]
        %v6476 = vld [vmem:[#allocation2 + $0xa40] sm:$0xff]
        %v6477 = vld [vmem:[#allocation2 + $0xa48] sm:$0xff]
        %v6478 = vld [vmem:[#allocation2 + $0xa50] sm:$0xff]
        %v6479 = vld [vmem:[#allocation2 + $0xa58] sm:$0xff]
        %v6480 = vld [vmem:[#allocation2 + $0xa60] sm:$0xff]
        %v6481 = vld [vmem:[#allocation2 + $0xa68] sm:$0xff]
        %v6482 = vld [vmem:[#allocation2 + $0xa70] sm:$0xff]
        %v6483 = vld [vmem:[#allocation2 + $0xa78] sm:$0xff]
        %v6484 = vld [vmem:[#allocation2 + $0xa80] sm:$0xff]
        %v6485 = vld [vmem:[#allocation2 + $0xa88] sm:$0xff]
        %v6486 = vld [vmem:[#allocation2 + $0xa90] sm:$0xff]
        %v6487 = vld [vmem:[#allocation2 + $0xa98] sm:$0xff]
        %v6488 = vld [vmem:[#allocation2 + $0xaa0] sm:$0xff]
        %v6489 = vld [vmem:[#allocation2 + $0xaa8] sm:$0xff]
        %v6490 = vld [vmem:[#allocation2 + $0xab0] sm:$0xff]
        %v6491 = vld [vmem:[#allocation2 + $0xab8] sm:$0xff]
        %v6492 = vld [vmem:[#allocation2 + $0xac0] sm:$0xff]
        %v6493 = vld [vmem:[#allocation2 + $0xac8] sm:$0xff]
        %v6494 = vld [vmem:[#allocation2 + $0xad0] sm:$0xff]
        %v6495 = vld [vmem:[#allocation2 + $0xad8] sm:$0xff]
        %v6496 = vld [vmem:[#allocation2 + $0xae0] sm:$0xff]
        %v6497 = vld [vmem:[#allocation2 + $0xae8] sm:$0xff]
        %v6498 = vld [vmem:[#allocation2 + $0xaf0] sm:$0xff]
        %v6499 = vld [vmem:[#allocation2 + $0xaf8] sm:$0xff]
        %v6500 = vld [vmem:[#allocation2 + $0xb00] sm:$0xff]
        %v6501 = vld [vmem:[#allocation2 + $0xb08] sm:$0xff]
        %v6502 = vld [vmem:[#allocation2 + $0xb10] sm:$0xff]
        %v6503 = vld [vmem:[#allocation2 + $0xb18] sm:$0xff]
        %v6504 = vld [vmem:[#allocation2 + $0xb20] sm:$0xff]
        %v6505 = vld [vmem:[#allocation2 + $0xb28] sm:$0xff]
        %v6506 = vld [vmem:[#allocation2 + $0xb30] sm:$0xff]
        %v6507 = vld [vmem:[#allocation2 + $0xb38] sm:$0xff]
        %v6508 = vld [vmem:[#allocation2 + $0xb40] sm:$0xff]
        %v6509 = vld [vmem:[#allocation2 + $0xb48] sm:$0xff]
        %v6510 = vld [vmem:[#allocation2 + $0xb50] sm:$0xff]
        %v6511 = vld [vmem:[#allocation2 + $0xb58] sm:$0xff]
        %v6512 = vld [vmem:[#allocation2 + $0xb60] sm:$0xff]
        %v6513 = vld [vmem:[#allocation2 + $0xb68] sm:$0xff]
        %v6514 = vld [vmem:[#allocation2 + $0xb70] sm:$0xff]
        %v6515 = vld [vmem:[#allocation2 + $0xb78] sm:$0xff]
        %v6516 = vld [vmem:[#allocation2 + $0xb80] sm:$0xff]
        %v6517 = vld [vmem:[#allocation2 + $0xb88] sm:$0xff]
        %v6518 = vld [vmem:[#allocation2 + $0xb90] sm:$0xff]
        %v6519 = vld [vmem:[#allocation2 + $0xb98] sm:$0xff]
        %v6520 = vld [vmem:[#allocation2 + $0xba0] sm:$0xff]
        %v6521 = vld [vmem:[#allocation2 + $0xba8] sm:$0xff]
        %v6522 = vld [vmem:[#allocation2 + $0xbb0] sm:$0xff]
        %v6523 = vld [vmem:[#allocation2 + $0xbb8] sm:$0xff]
        %v6524 = vld [vmem:[#allocation2 + $0xbc0] sm:$0xff]
        %v6525 = vld [vmem:[#allocation2 + $0xbc8] sm:$0xff]
        %v6526 = vld [vmem:[#allocation2 + $0xbd0] sm:$0xff]
        %v6527 = vld [vmem:[#allocation2 + $0xbd8] sm:$0xff]
        %v6528 = vld [vmem:[#allocation2 + $0xbe0] sm:$0xff]
        %v6529 = vld [vmem:[#allocation2 + $0xbe8] sm:$0xff]
        %v6530 = vld [vmem:[#allocation2 + $0xbf0] sm:$0xff]
        %v6531 = vld [vmem:[#allocation2 + $0xbf8] sm:$0xff]
        %v6532 = vld [vmem:[#allocation2 + $0xc00] sm:$0xff]
        %v6533 = vld [vmem:[#allocation2 + $0xc08] sm:$0xff]
        %v6534 = vld [vmem:[#allocation2 + $0xc10] sm:$0xff]
        %v6535 = vld [vmem:[#allocation2 + $0xc18] sm:$0xff]
        %v6536 = vld [vmem:[#allocation2 + $0xc20] sm:$0xff]
        %v6537 = vld [vmem:[#allocation2 + $0xc28] sm:$0xff]
        %v6538 = vld [vmem:[#allocation2 + $0xc30] sm:$0xff]
        %v6539 = vld [vmem:[#allocation2 + $0xc38] sm:$0xff]
        %v6540 = vld [vmem:[#allocation2 + $0xc40] sm:$0xff]
        %v6541 = vld [vmem:[#allocation2 + $0xc48] sm:$0xff]
        %v6542 = vld [vmem:[#allocation2 + $0xc50] sm:$0xff]
        %v6543 = vld [vmem:[#allocation2 + $0xc58] sm:$0xff]
        %v6544 = vld [vmem:[#allocation2 + $0xc60] sm:$0xff]
        %v6545 = vld [vmem:[#allocation2 + $0xc68] sm:$0xff]
        %v6546 = vld [vmem:[#allocation2 + $0xc70] sm:$0xff]
        %v6547 = vld [vmem:[#allocation2 + $0xc78] sm:$0xff]
        %v6548 = vld [vmem:[#allocation2 + $0xc80] sm:$0xff]
        %v6549 = vld [vmem:[#allocation2 + $0xc88] sm:$0xff]
        %v6550 = vld [vmem:[#allocation2 + $0xc90] sm:$0xff]
        %v6551 = vld [vmem:[#allocation2 + $0xc98] sm:$0xff]
        %v6552 = vld [vmem:[#allocation2 + $0xca0] sm:$0xff]
        %v6553 = vld [vmem:[#allocation2 + $0xca8] sm:$0xff]
        %v6554 = vld [vmem:[#allocation2 + $0xcb0] sm:$0xff]
        %v6555 = vld [vmem:[#allocation2 + $0xcb8] sm:$0xff]
        %v6556 = vld [vmem:[#allocation2 + $0xcc0] sm:$0xff]
        %v6557 = vld [vmem:[#allocation2 + $0xcc8] sm:$0xff]
        %v6558 = vld [vmem:[#allocation2 + $0xcd0] sm:$0xff]
        %v6559 = vld [vmem:[#allocation2 + $0xcd8] sm:$0xff]
        %v6560 = vld [vmem:[#allocation2 + $0xce0] sm:$0xff]
        %v6561 = vld [vmem:[#allocation2 + $0xce8] sm:$0xff]
        %v6562 = vld [vmem:[#allocation2 + $0xcf0] sm:$0xff]
        %v6563 = vld [vmem:[#allocation2 + $0xcf8] sm:$0xff]
        %v6564 = vld [vmem:[#allocation2 + $0xd00] sm:$0xff]
        %v6565 = vld [vmem:[#allocation2 + $0xd08] sm:$0xff]
        %v6566 = vld [vmem:[#allocation2 + $0xd10] sm:$0xff]
        %v6567 = vld [vmem:[#allocation2 + $0xd18] sm:$0xff]
        %v6568 = vld [vmem:[#allocation2 + $0xd20] sm:$0xff]
        %v6569 = vld [vmem:[#allocation2 + $0xd28] sm:$0xff]
        %v6570 = vld [vmem:[#allocation2 + $0xd30] sm:$0xff]
        %v6571 = vld [vmem:[#allocation2 + $0xd38] sm:$0xff]
        %v6572 = vld [vmem:[#allocation2 + $0xd40] sm:$0xff]
        %v6573 = vld [vmem:[#allocation2 + $0xd48] sm:$0xff]
        %v6574 = vld [vmem:[#allocation2 + $0xd50] sm:$0xff]
        %v6575 = vld [vmem:[#allocation2 + $0xd58] sm:$0xff]
        %v6576 = vld [vmem:[#allocation2 + $0xd60] sm:$0xff]
        %v6577 = vld [vmem:[#allocation2 + $0xd68] sm:$0xff]
        %v6578 = vld [vmem:[#allocation2 + $0xd70] sm:$0xff]
        %v6579 = vld [vmem:[#allocation2 + $0xd78] sm:$0xff]
        %v6580 = vld [vmem:[#allocation2 + $0xd80] sm:$0xff]
        %v6581 = vld [vmem:[#allocation2 + $0xd88] sm:$0xff]
        %v6582 = vld [vmem:[#allocation2 + $0xd90] sm:$0xff]
        %v6583 = vld [vmem:[#allocation2 + $0xd98] sm:$0xff]
        %v6584 = vld [vmem:[#allocation2 + $0xda0] sm:$0xff]
        %v6585 = vld [vmem:[#allocation2 + $0xda8] sm:$0xff]
        %v6586 = vld [vmem:[#allocation2 + $0xdb0] sm:$0xff]
        %v6587 = vld [vmem:[#allocation2 + $0xdb8] sm:$0xff]
        %v6588 = vld [vmem:[#allocation2 + $0xdc0] sm:$0xff]
        %v6589 = vld [vmem:[#allocation2 + $0xdc8] sm:$0xff]
        %v6590 = vld [vmem:[#allocation2 + $0xdd0] sm:$0xff]
        %v6591 = vld [vmem:[#allocation2 + $0xdd8] sm:$0xff]
        %v6592 = vld [vmem:[#allocation2 + $0xde0] sm:$0xff]
        %v6593 = vld [vmem:[#allocation2 + $0xde8] sm:$0xff]
        %v6594 = vld [vmem:[#allocation2 + $0xdf0] sm:$0xff]
        %v6595 = vld [vmem:[#allocation2 + $0xdf8] sm:$0xff]
        %v6596 = vld [vmem:[#allocation2 + $0xe00] sm:$0xff]
        %v6597 = vld [vmem:[#allocation2 + $0xe08] sm:$0xff]
        %v6598 = vld [vmem:[#allocation2 + $0xe10] sm:$0xff]
        %v6599 = vld [vmem:[#allocation2 + $0xe18] sm:$0xff]
        %v6600 = vld [vmem:[#allocation2 + $0xe20] sm:$0xff]
        %v6601 = vld [vmem:[#allocation2 + $0xe28] sm:$0xff]
        %v6602 = vld [vmem:[#allocation2 + $0xe30] sm:$0xff]
        %v6603 = vld [vmem:[#allocation2 + $0xe38] sm:$0xff]
        %v6604 = vld [vmem:[#allocation2 + $0xe40] sm:$0xff]
        %v6605 = vld [vmem:[#allocation2 + $0xe48] sm:$0xff]
        %v6606 = vld [vmem:[#allocation2 + $0xe50] sm:$0xff]
        %v6607 = vld [vmem:[#allocation2 + $0xe58] sm:$0xff]
        %v6608 = vld [vmem:[#allocation2 + $0xe60] sm:$0xff]
        %v6609 = vld [vmem:[#allocation2 + $0xe68] sm:$0xff]
        %v6610 = vld [vmem:[#allocation2 + $0xe70] sm:$0xff]
        %v6611 = vld [vmem:[#allocation2 + $0xe78] sm:$0xff]
        %v6612 = vld [vmem:[#allocation2 + $0xe80] sm:$0xff]
        %v6613 = vld [vmem:[#allocation2 + $0xe88] sm:$0xff]
        %v6614 = vld [vmem:[#allocation2 + $0xe90] sm:$0xff]
        %v6615 = vld [vmem:[#allocation2 + $0xe98] sm:$0xff]
        %v6616 = vld [vmem:[#allocation2 + $0xea0] sm:$0xff]
        %v6617 = vld [vmem:[#allocation2 + $0xea8] sm:$0xff]
        %v6618 = vld [vmem:[#allocation2 + $0xeb0] sm:$0xff]
        %v6619 = vld [vmem:[#allocation2 + $0xeb8] sm:$0xff]
        %v6620 = vld [vmem:[#allocation2 + $0xec0] sm:$0xff]
        %v6621 = vld [vmem:[#allocation2 + $0xec8] sm:$0xff]
        %v6622 = vld [vmem:[#allocation2 + $0xed0] sm:$0xff]
        %v6623 = vld [vmem:[#allocation2 + $0xed8] sm:$0xff]
        %v6624 = vld [vmem:[#allocation2 + $0xee0] sm:$0xff]
        %v6625 = vld [vmem:[#allocation2 + $0xee8] sm:$0xff]
        %v6626 = vld [vmem:[#allocation2 + $0xef0] sm:$0xff]
        %v6627 = vld [vmem:[#allocation2 + $0xef8] sm:$0xff]
        %v6628 = vld [vmem:[#allocation2 + $0xf00] sm:$0xff]
        %v6629 = vld [vmem:[#allocation2 + $0xf08] sm:$0xff]
        %v6630 = vld [vmem:[#allocation2 + $0xf10] sm:$0xff]
        %v6631 = vld [vmem:[#allocation2 + $0xf18] sm:$0xff]
        %v6632 = vld [vmem:[#allocation2 + $0xf20] sm:$0xff]
        %v6633 = vld [vmem:[#allocation2 + $0xf28] sm:$0xff]
        %v6634 = vld [vmem:[#allocation2 + $0xf30] sm:$0xff]
        %v6635 = vld [vmem:[#allocation2 + $0xf38] sm:$0xff]
        %v6636 = vld [vmem:[#allocation2 + $0xf40] sm:$0xff]
        %v6637 = vld [vmem:[#allocation2 + $0xf48] sm:$0xff]
        %v6638 = vld [vmem:[#allocation2 + $0xf50] sm:$0xff]
        %v6639 = vld [vmem:[#allocation2 + $0xf58] sm:$0xff]
        %v6640 = vld [vmem:[#allocation2 + $0xf60] sm:$0xff]
        %v6641 = vld [vmem:[#allocation2 + $0xf68] sm:$0xff]
        %v6642 = vld [vmem:[#allocation2 + $0xf70] sm:$0xff]
        %v6643 = vld [vmem:[#allocation2 + $0xf78] sm:$0xff]
        %v6644 = vld [vmem:[#allocation2 + $0xf80] sm:$0xff]
        %v6645 = vld [vmem:[#allocation2 + $0xf88] sm:$0xff]
        %v6646 = vld [vmem:[#allocation2 + $0xf90] sm:$0xff]
        %v6647 = vld [vmem:[#allocation2 + $0xf98] sm:$0xff]
        %v6648 = vld [vmem:[#allocation2 + $0xfa0] sm:$0xff]
        %v6649 = vld [vmem:[#allocation2 + $0xfa8] sm:$0xff]
        %v6650 = vld [vmem:[#allocation2 + $0xfb0] sm:$0xff]
        %v6651 = vld [vmem:[#allocation2 + $0xfb8] sm:$0xff]
        %v6652 = vld [vmem:[#allocation2 + $0xfc0] sm:$0xff]
        %v6653 = vld [vmem:[#allocation2 + $0xfc8] sm:$0xff]
        %v6654 = vld [vmem:[#allocation2 + $0xfd0] sm:$0xff]
        %v6655 = vld [vmem:[#allocation2 + $0xfd8] sm:$0xff]
        %v6656 = vld [vmem:[#allocation2 + $0xfe0] sm:$0xff]
        %v6657 = vld [vmem:[#allocation2 + $0xfe8] sm:$0xff]
        %v6658 = vld [vmem:[#allocation2 + $0xff0] sm:$0xff]
        %v6659 = vld [vmem:[#allocation2 + $0xff8] sm:$0xff]
        %6660 = vst.msk [vmem:[%s216] sm:$0xff] %vm5632, %v6148
        %6661 = vst.msk [vmem:[%s216 + $0x8] sm:$0xff] %vm5632, %v6149
        %6662 = vst.msk [vmem:[%s216 + $0x10] sm:$0xff] %vm5632, %v6150
        %6663 = vst.msk [vmem:[%s216 + $0x18] sm:$0xff] %vm5632, %v6151
        %6664 = vst.msk [vmem:[%s216 + $0x20] sm:$0xff] %vm5632, %v6152
        %6665 = vst.msk [vmem:[%s216 + $0x28] sm:$0xff] %vm5632, %v6153
        %6666 = vst.msk [vmem:[%s216 + $0x30] sm:$0xff] %vm5632, %v6154
        %6667 = vst.msk [vmem:[%s216 + $0x38] sm:$0xff] %vm5632, %v6155
        %6668 = vst.msk [vmem:[%s216 + $0x40] sm:$0xff] %vm5632, %v6156
        %6669 = vst.msk [vmem:[%s216 + $0x48] sm:$0xff] %vm5632, %v6157
        %6670 = vst.msk [vmem:[%s216 + $0x50] sm:$0xff] %vm5632, %v6158
        %6671 = vst.msk [vmem:[%s216 + $0x58] sm:$0xff] %vm5632, %v6159
        %6672 = vst.msk [vmem:[%s216 + $0x60] sm:$0xff] %vm5632, %v6160
        %6673 = vst.msk [vmem:[%s216 + $0x68] sm:$0xff] %vm5632, %v6161
        %6674 = vst.msk [vmem:[%s216 + $0x70] sm:$0xff] %vm5632, %v6162
        %6675 = vst.msk [vmem:[%s216 + $0x78] sm:$0xff] %vm5632, %v6163
        %6676 = vst.msk [vmem:[%s216 + $0x80] sm:$0xff] %vm5632, %v6164
        %6677 = vst.msk [vmem:[%s216 + $0x88] sm:$0xff] %vm5632, %v6165
        %6678 = vst.msk [vmem:[%s216 + $0x90] sm:$0xff] %vm5632, %v6166
        %6679 = vst.msk [vmem:[%s216 + $0x98] sm:$0xff] %vm5632, %v6167
        %6680 = vst.msk [vmem:[%s216 + $0xa0] sm:$0xff] %vm5632, %v6168
        %6681 = vst.msk [vmem:[%s216 + $0xa8] sm:$0xff] %vm5632, %v6169
        %6682 = vst.msk [vmem:[%s216 + $0xb0] sm:$0xff] %vm5632, %v6170
        %6683 = vst.msk [vmem:[%s216 + $0xb8] sm:$0xff] %vm5632, %v6171
        %6684 = vst.msk [vmem:[%s216 + $0xc0] sm:$0xff] %vm5632, %v6172
        %6685 = vst.msk [vmem:[%s216 + $0xc8] sm:$0xff] %vm5632, %v6173
        %6686 = vst.msk [vmem:[%s216 + $0xd0] sm:$0xff] %vm5632, %v6174
        %6687 = vst.msk [vmem:[%s216 + $0xd8] sm:$0xff] %vm5632, %v6175
        %6688 = vst.msk [vmem:[%s216 + $0xe0] sm:$0xff] %vm5632, %v6176
        %6689 = vst.msk [vmem:[%s216 + $0xe8] sm:$0xff] %vm5632, %v6177
        %6690 = vst.msk [vmem:[%s216 + $0xf0] sm:$0xff] %vm5632, %v6178
        %6691 = vst.msk [vmem:[%s216 + $0xf8] sm:$0xff] %vm5632, %v6179
        %6692 = vst.msk [vmem:[%s216 + $0x100] sm:$0xff] %vm5632, %v6180
        %6693 = vst.msk [vmem:[%s216 + $0x108] sm:$0xff] %vm5632, %v6181
        %6694 = vst.msk [vmem:[%s216 + $0x110] sm:$0xff] %vm5632, %v6182
        %6695 = vst.msk [vmem:[%s216 + $0x118] sm:$0xff] %vm5632, %v6183
        %6696 = vst.msk [vmem:[%s216 + $0x120] sm:$0xff] %vm5632, %v6184
        %6697 = vst.msk [vmem:[%s216 + $0x128] sm:$0xff] %vm5632, %v6185
        %6698 = vst.msk [vmem:[%s216 + $0x130] sm:$0xff] %vm5632, %v6186
        %6699 = vst.msk [vmem:[%s216 + $0x138] sm:$0xff] %vm5632, %v6187
        %6700 = vst.msk [vmem:[%s216 + $0x140] sm:$0xff] %vm5632, %v6188
        %6701 = vst.msk [vmem:[%s216 + $0x148] sm:$0xff] %vm5632, %v6189
        %6702 = vst.msk [vmem:[%s216 + $0x150] sm:$0xff] %vm5632, %v6190
        %6703 = vst.msk [vmem:[%s216 + $0x158] sm:$0xff] %vm5632, %v6191
        %6704 = vst.msk [vmem:[%s216 + $0x160] sm:$0xff] %vm5632, %v6192
        %6705 = vst.msk [vmem:[%s216 + $0x168] sm:$0xff] %vm5632, %v6193
        %6706 = vst.msk [vmem:[%s216 + $0x170] sm:$0xff] %vm5632, %v6194
        %6707 = vst.msk [vmem:[%s216 + $0x178] sm:$0xff] %vm5632, %v6195
        %6708 = vst.msk [vmem:[%s216 + $0x180] sm:$0xff] %vm5632, %v6196
        %6709 = vst.msk [vmem:[%s216 + $0x188] sm:$0xff] %vm5632, %v6197
        %6710 = vst.msk [vmem:[%s216 + $0x190] sm:$0xff] %vm5632, %v6198
        %6711 = vst.msk [vmem:[%s216 + $0x198] sm:$0xff] %vm5632, %v6199
        %6712 = vst.msk [vmem:[%s216 + $0x1a0] sm:$0xff] %vm5632, %v6200
        %6713 = vst.msk [vmem:[%s216 + $0x1a8] sm:$0xff] %vm5632, %v6201
        %6714 = vst.msk [vmem:[%s216 + $0x1b0] sm:$0xff] %vm5632, %v6202
        %6715 = vst.msk [vmem:[%s216 + $0x1b8] sm:$0xff] %vm5632, %v6203
        %6716 = vst.msk [vmem:[%s216 + $0x1c0] sm:$0xff] %vm5632, %v6204
        %6717 = vst.msk [vmem:[%s216 + $0x1c8] sm:$0xff] %vm5632, %v6205
        %6718 = vst.msk [vmem:[%s216 + $0x1d0] sm:$0xff] %vm5632, %v6206
        %6719 = vst.msk [vmem:[%s216 + $0x1d8] sm:$0xff] %vm5632, %v6207
        %6720 = vst.msk [vmem:[%s216 + $0x1e0] sm:$0xff] %vm5632, %v6208
        %6721 = vst.msk [vmem:[%s216 + $0x1e8] sm:$0xff] %vm5632, %v6209
        %6722 = vst.msk [vmem:[%s216 + $0x1f0] sm:$0xff] %vm5632, %v6210
        %6723 = vst.msk [vmem:[%s216 + $0x1f8] sm:$0xff] %vm5632, %v6211
        %6724 = vst.msk [vmem:[%s216 + $0x200] sm:$0xff] %vm5632, %v6212
        %6725 = vst.msk [vmem:[%s216 + $0x208] sm:$0xff] %vm5632, %v6213
        %6726 = vst.msk [vmem:[%s216 + $0x210] sm:$0xff] %vm5632, %v6214
        %6727 = vst.msk [vmem:[%s216 + $0x218] sm:$0xff] %vm5632, %v6215
        %6728 = vst.msk [vmem:[%s216 + $0x220] sm:$0xff] %vm5632, %v6216
        %6729 = vst.msk [vmem:[%s216 + $0x228] sm:$0xff] %vm5632, %v6217
        %6730 = vst.msk [vmem:[%s216 + $0x230] sm:$0xff] %vm5632, %v6218
        %6731 = vst.msk [vmem:[%s216 + $0x238] sm:$0xff] %vm5632, %v6219
        %6732 = vst.msk [vmem:[%s216 + $0x240] sm:$0xff] %vm5632, %v6220
        %6733 = vst.msk [vmem:[%s216 + $0x248] sm:$0xff] %vm5632, %v6221
        %6734 = vst.msk [vmem:[%s216 + $0x250] sm:$0xff] %vm5632, %v6222
        %6735 = vst.msk [vmem:[%s216 + $0x258] sm:$0xff] %vm5632, %v6223
        %6736 = vst.msk [vmem:[%s216 + $0x260] sm:$0xff] %vm5632, %v6224
        %6737 = vst.msk [vmem:[%s216 + $0x268] sm:$0xff] %vm5632, %v6225
        %6738 = vst.msk [vmem:[%s216 + $0x270] sm:$0xff] %vm5632, %v6226
        %6739 = vst.msk [vmem:[%s216 + $0x278] sm:$0xff] %vm5632, %v6227
        %6740 = vst.msk [vmem:[%s216 + $0x280] sm:$0xff] %vm5632, %v6228
        %6741 = vst.msk [vmem:[%s216 + $0x288] sm:$0xff] %vm5632, %v6229
        %6742 = vst.msk [vmem:[%s216 + $0x290] sm:$0xff] %vm5632, %v6230
        %6743 = vst.msk [vmem:[%s216 + $0x298] sm:$0xff] %vm5632, %v6231
        %6744 = vst.msk [vmem:[%s216 + $0x2a0] sm:$0xff] %vm5632, %v6232
        %6745 = vst.msk [vmem:[%s216 + $0x2a8] sm:$0xff] %vm5632, %v6233
        %6746 = vst.msk [vmem:[%s216 + $0x2b0] sm:$0xff] %vm5632, %v6234
        %6747 = vst.msk [vmem:[%s216 + $0x2b8] sm:$0xff] %vm5632, %v6235
        %6748 = vst.msk [vmem:[%s216 + $0x2c0] sm:$0xff] %vm5632, %v6236
        %6749 = vst.msk [vmem:[%s216 + $0x2c8] sm:$0xff] %vm5632, %v6237
        %6750 = vst.msk [vmem:[%s216 + $0x2d0] sm:$0xff] %vm5632, %v6238
        %6751 = vst.msk [vmem:[%s216 + $0x2d8] sm:$0xff] %vm5632, %v6239
        %6752 = vst.msk [vmem:[%s216 + $0x2e0] sm:$0xff] %vm5632, %v6240
        %6753 = vst.msk [vmem:[%s216 + $0x2e8] sm:$0xff] %vm5632, %v6241
        %6754 = vst.msk [vmem:[%s216 + $0x2f0] sm:$0xff] %vm5632, %v6242
        %6755 = vst.msk [vmem:[%s216 + $0x2f8] sm:$0xff] %vm5632, %v6243
        %6756 = vst.msk [vmem:[%s216 + $0x300] sm:$0xff] %vm5632, %v6244
        %6757 = vst.msk [vmem:[%s216 + $0x308] sm:$0xff] %vm5632, %v6245
        %6758 = vst.msk [vmem:[%s216 + $0x310] sm:$0xff] %vm5632, %v6246
        %6759 = vst.msk [vmem:[%s216 + $0x318] sm:$0xff] %vm5632, %v6247
        %6760 = vst.msk [vmem:[%s216 + $0x320] sm:$0xff] %vm5632, %v6248
        %6761 = vst.msk [vmem:[%s216 + $0x328] sm:$0xff] %vm5632, %v6249
        %6762 = vst.msk [vmem:[%s216 + $0x330] sm:$0xff] %vm5632, %v6250
        %6763 = vst.msk [vmem:[%s216 + $0x338] sm:$0xff] %vm5632, %v6251
        %6764 = vst.msk [vmem:[%s216 + $0x340] sm:$0xff] %vm5632, %v6252
        %6765 = vst.msk [vmem:[%s216 + $0x348] sm:$0xff] %vm5632, %v6253
        %6766 = vst.msk [vmem:[%s216 + $0x350] sm:$0xff] %vm5632, %v6254
        %6767 = vst.msk [vmem:[%s216 + $0x358] sm:$0xff] %vm5632, %v6255
        %6768 = vst.msk [vmem:[%s216 + $0x360] sm:$0xff] %vm5632, %v6256
        %6769 = vst.msk [vmem:[%s216 + $0x368] sm:$0xff] %vm5632, %v6257
        %6770 = vst.msk [vmem:[%s216 + $0x370] sm:$0xff] %vm5632, %v6258
        %6771 = vst.msk [vmem:[%s216 + $0x378] sm:$0xff] %vm5632, %v6259
        %6772 = vst.msk [vmem:[%s216 + $0x380] sm:$0xff] %vm5632, %v6260
        %6773 = vst.msk [vmem:[%s216 + $0x388] sm:$0xff] %vm5632, %v6261
        %6774 = vst.msk [vmem:[%s216 + $0x390] sm:$0xff] %vm5632, %v6262
        %6775 = vst.msk [vmem:[%s216 + $0x398] sm:$0xff] %vm5632, %v6263
        %6776 = vst.msk [vmem:[%s216 + $0x3a0] sm:$0xff] %vm5632, %v6264
        %6777 = vst.msk [vmem:[%s216 + $0x3a8] sm:$0xff] %vm5632, %v6265
        %6778 = vst.msk [vmem:[%s216 + $0x3b0] sm:$0xff] %vm5632, %v6266
        %6779 = vst.msk [vmem:[%s216 + $0x3b8] sm:$0xff] %vm5632, %v6267
        %6780 = vst.msk [vmem:[%s216 + $0x3c0] sm:$0xff] %vm5632, %v6268
        %6781 = vst.msk [vmem:[%s216 + $0x3c8] sm:$0xff] %vm5632, %v6269
        %6782 = vst.msk [vmem:[%s216 + $0x3d0] sm:$0xff] %vm5632, %v6270
        %6783 = vst.msk [vmem:[%s216 + $0x3d8] sm:$0xff] %vm5632, %v6271
        %6784 = vst.msk [vmem:[%s216 + $0x3e0] sm:$0xff] %vm5632, %v6272
        %6785 = vst.msk [vmem:[%s216 + $0x3e8] sm:$0xff] %vm5632, %v6273
        %6786 = vst.msk [vmem:[%s216 + $0x3f0] sm:$0xff] %vm5632, %v6274
        %6787 = vst.msk [vmem:[%s216 + $0x3f8] sm:$0xff] %vm5632, %v6275
        %6788 = vst.msk [vmem:[%s216 + $0x400] sm:$0xff] %vm5632, %v6276
        %6789 = vst.msk [vmem:[%s216 + $0x408] sm:$0xff] %vm5632, %v6277
        %6790 = vst.msk [vmem:[%s216 + $0x410] sm:$0xff] %vm5632, %v6278
        %6791 = vst.msk [vmem:[%s216 + $0x418] sm:$0xff] %vm5632, %v6279
        %6792 = vst.msk [vmem:[%s216 + $0x420] sm:$0xff] %vm5632, %v6280
        %6793 = vst.msk [vmem:[%s216 + $0x428] sm:$0xff] %vm5632, %v6281
        %6794 = vst.msk [vmem:[%s216 + $0x430] sm:$0xff] %vm5632, %v6282
        %6795 = vst.msk [vmem:[%s216 + $0x438] sm:$0xff] %vm5632, %v6283
        %6796 = vst.msk [vmem:[%s216 + $0x440] sm:$0xff] %vm5632, %v6284
        %6797 = vst.msk [vmem:[%s216 + $0x448] sm:$0xff] %vm5632, %v6285
        %6798 = vst.msk [vmem:[%s216 + $0x450] sm:$0xff] %vm5632, %v6286
        %6799 = vst.msk [vmem:[%s216 + $0x458] sm:$0xff] %vm5632, %v6287
        %6800 = vst.msk [vmem:[%s216 + $0x460] sm:$0xff] %vm5632, %v6288
        %6801 = vst.msk [vmem:[%s216 + $0x468] sm:$0xff] %vm5632, %v6289
        %6802 = vst.msk [vmem:[%s216 + $0x470] sm:$0xff] %vm5632, %v6290
        %6803 = vst.msk [vmem:[%s216 + $0x478] sm:$0xff] %vm5632, %v6291
        %6804 = vst.msk [vmem:[%s216 + $0x480] sm:$0xff] %vm5632, %v6292
        %6805 = vst.msk [vmem:[%s216 + $0x488] sm:$0xff] %vm5632, %v6293
        %6806 = vst.msk [vmem:[%s216 + $0x490] sm:$0xff] %vm5632, %v6294
        %6807 = vst.msk [vmem:[%s216 + $0x498] sm:$0xff] %vm5632, %v6295
        %6808 = vst.msk [vmem:[%s216 + $0x4a0] sm:$0xff] %vm5632, %v6296
        %6809 = vst.msk [vmem:[%s216 + $0x4a8] sm:$0xff] %vm5632, %v6297
        %6810 = vst.msk [vmem:[%s216 + $0x4b0] sm:$0xff] %vm5632, %v6298
        %6811 = vst.msk [vmem:[%s216 + $0x4b8] sm:$0xff] %vm5632, %v6299
        %6812 = vst.msk [vmem:[%s216 + $0x4c0] sm:$0xff] %vm5632, %v6300
        %6813 = vst.msk [vmem:[%s216 + $0x4c8] sm:$0xff] %vm5632, %v6301
        %6814 = vst.msk [vmem:[%s216 + $0x4d0] sm:$0xff] %vm5632, %v6302
        %6815 = vst.msk [vmem:[%s216 + $0x4d8] sm:$0xff] %vm5632, %v6303
        %6816 = vst.msk [vmem:[%s216 + $0x4e0] sm:$0xff] %vm5632, %v6304
        %6817 = vst.msk [vmem:[%s216 + $0x4e8] sm:$0xff] %vm5632, %v6305
        %6818 = vst.msk [vmem:[%s216 + $0x4f0] sm:$0xff] %vm5632, %v6306
        %6819 = vst.msk [vmem:[%s216 + $0x4f8] sm:$0xff] %vm5632, %v6307
        %6820 = vst.msk [vmem:[%s216 + $0x500] sm:$0xff] %vm5632, %v6308
        %6821 = vst.msk [vmem:[%s216 + $0x508] sm:$0xff] %vm5632, %v6309
        %6822 = vst.msk [vmem:[%s216 + $0x510] sm:$0xff] %vm5632, %v6310
        %6823 = vst.msk [vmem:[%s216 + $0x518] sm:$0xff] %vm5632, %v6311
        %6824 = vst.msk [vmem:[%s216 + $0x520] sm:$0xff] %vm5632, %v6312
        %6825 = vst.msk [vmem:[%s216 + $0x528] sm:$0xff] %vm5632, %v6313
        %6826 = vst.msk [vmem:[%s216 + $0x530] sm:$0xff] %vm5632, %v6314
        %6827 = vst.msk [vmem:[%s216 + $0x538] sm:$0xff] %vm5632, %v6315
        %6828 = vst.msk [vmem:[%s216 + $0x540] sm:$0xff] %vm5632, %v6316
        %6829 = vst.msk [vmem:[%s216 + $0x548] sm:$0xff] %vm5632, %v6317
        %6830 = vst.msk [vmem:[%s216 + $0x550] sm:$0xff] %vm5632, %v6318
        %6831 = vst.msk [vmem:[%s216 + $0x558] sm:$0xff] %vm5632, %v6319
        %6832 = vst.msk [vmem:[%s216 + $0x560] sm:$0xff] %vm5632, %v6320
        %6833 = vst.msk [vmem:[%s216 + $0x568] sm:$0xff] %vm5632, %v6321
        %6834 = vst.msk [vmem:[%s216 + $0x570] sm:$0xff] %vm5632, %v6322
        %6835 = vst.msk [vmem:[%s216 + $0x578] sm:$0xff] %vm5632, %v6323
        %6836 = vst.msk [vmem:[%s216 + $0x580] sm:$0xff] %vm5632, %v6324
        %6837 = vst.msk [vmem:[%s216 + $0x588] sm:$0xff] %vm5632, %v6325
        %6838 = vst.msk [vmem:[%s216 + $0x590] sm:$0xff] %vm5632, %v6326
        %6839 = vst.msk [vmem:[%s216 + $0x598] sm:$0xff] %vm5632, %v6327
        %6840 = vst.msk [vmem:[%s216 + $0x5a0] sm:$0xff] %vm5632, %v6328
        %6841 = vst.msk [vmem:[%s216 + $0x5a8] sm:$0xff] %vm5632, %v6329
        %6842 = vst.msk [vmem:[%s216 + $0x5b0] sm:$0xff] %vm5632, %v6330
        %6843 = vst.msk [vmem:[%s216 + $0x5b8] sm:$0xff] %vm5632, %v6331
        %6844 = vst.msk [vmem:[%s216 + $0x5c0] sm:$0xff] %vm5632, %v6332
        %6845 = vst.msk [vmem:[%s216 + $0x5c8] sm:$0xff] %vm5632, %v6333
        %6846 = vst.msk [vmem:[%s216 + $0x5d0] sm:$0xff] %vm5632, %v6334
        %6847 = vst.msk [vmem:[%s216 + $0x5d8] sm:$0xff] %vm5632, %v6335
        %6848 = vst.msk [vmem:[%s216 + $0x5e0] sm:$0xff] %vm5632, %v6336
        %6849 = vst.msk [vmem:[%s216 + $0x5e8] sm:$0xff] %vm5632, %v6337
        %6850 = vst.msk [vmem:[%s216 + $0x5f0] sm:$0xff] %vm5632, %v6338
        %6851 = vst.msk [vmem:[%s216 + $0x5f8] sm:$0xff] %vm5632, %v6339
        %6852 = vst.msk [vmem:[%s216 + $0x600] sm:$0xff] %vm5632, %v6340
        %6853 = vst.msk [vmem:[%s216 + $0x608] sm:$0xff] %vm5632, %v6341
        %6854 = vst.msk [vmem:[%s216 + $0x610] sm:$0xff] %vm5632, %v6342
        %6855 = vst.msk [vmem:[%s216 + $0x618] sm:$0xff] %vm5632, %v6343
        %6856 = vst.msk [vmem:[%s216 + $0x620] sm:$0xff] %vm5632, %v6344
        %6857 = vst.msk [vmem:[%s216 + $0x628] sm:$0xff] %vm5632, %v6345
        %6858 = vst.msk [vmem:[%s216 + $0x630] sm:$0xff] %vm5632, %v6346
        %6859 = vst.msk [vmem:[%s216 + $0x638] sm:$0xff] %vm5632, %v6347
        %6860 = vst.msk [vmem:[%s216 + $0x640] sm:$0xff] %vm5632, %v6348
        %6861 = vst.msk [vmem:[%s216 + $0x648] sm:$0xff] %vm5632, %v6349
        %6862 = vst.msk [vmem:[%s216 + $0x650] sm:$0xff] %vm5632, %v6350
        %6863 = vst.msk [vmem:[%s216 + $0x658] sm:$0xff] %vm5632, %v6351
        %6864 = vst.msk [vmem:[%s216 + $0x660] sm:$0xff] %vm5632, %v6352
        %6865 = vst.msk [vmem:[%s216 + $0x668] sm:$0xff] %vm5632, %v6353
        %6866 = vst.msk [vmem:[%s216 + $0x670] sm:$0xff] %vm5632, %v6354
        %6867 = vst.msk [vmem:[%s216 + $0x678] sm:$0xff] %vm5632, %v6355
        %6868 = vst.msk [vmem:[%s216 + $0x680] sm:$0xff] %vm5632, %v6356
        %6869 = vst.msk [vmem:[%s216 + $0x688] sm:$0xff] %vm5632, %v6357
        %6870 = vst.msk [vmem:[%s216 + $0x690] sm:$0xff] %vm5632, %v6358
        %6871 = vst.msk [vmem:[%s216 + $0x698] sm:$0xff] %vm5632, %v6359
        %6872 = vst.msk [vmem:[%s216 + $0x6a0] sm:$0xff] %vm5632, %v6360
        %6873 = vst.msk [vmem:[%s216 + $0x6a8] sm:$0xff] %vm5632, %v6361
        %6874 = vst.msk [vmem:[%s216 + $0x6b0] sm:$0xff] %vm5632, %v6362
        %6875 = vst.msk [vmem:[%s216 + $0x6b8] sm:$0xff] %vm5632, %v6363
        %6876 = vst.msk [vmem:[%s216 + $0x6c0] sm:$0xff] %vm5632, %v6364
        %6877 = vst.msk [vmem:[%s216 + $0x6c8] sm:$0xff] %vm5632, %v6365
        %6878 = vst.msk [vmem:[%s216 + $0x6d0] sm:$0xff] %vm5632, %v6366
        %6879 = vst.msk [vmem:[%s216 + $0x6d8] sm:$0xff] %vm5632, %v6367
        %6880 = vst.msk [vmem:[%s216 + $0x6e0] sm:$0xff] %vm5632, %v6368
        %6881 = vst.msk [vmem:[%s216 + $0x6e8] sm:$0xff] %vm5632, %v6369
        %6882 = vst.msk [vmem:[%s216 + $0x6f0] sm:$0xff] %vm5632, %v6370
        %6883 = vst.msk [vmem:[%s216 + $0x6f8] sm:$0xff] %vm5632, %v6371
        %6884 = vst.msk [vmem:[%s216 + $0x700] sm:$0xff] %vm5632, %v6372
        %6885 = vst.msk [vmem:[%s216 + $0x708] sm:$0xff] %vm5632, %v6373
        %6886 = vst.msk [vmem:[%s216 + $0x710] sm:$0xff] %vm5632, %v6374
        %6887 = vst.msk [vmem:[%s216 + $0x718] sm:$0xff] %vm5632, %v6375
        %6888 = vst.msk [vmem:[%s216 + $0x720] sm:$0xff] %vm5632, %v6376
        %6889 = vst.msk [vmem:[%s216 + $0x728] sm:$0xff] %vm5632, %v6377
        %6890 = vst.msk [vmem:[%s216 + $0x730] sm:$0xff] %vm5632, %v6378
        %6891 = vst.msk [vmem:[%s216 + $0x738] sm:$0xff] %vm5632, %v6379
        %6892 = vst.msk [vmem:[%s216 + $0x740] sm:$0xff] %vm5632, %v6380
        %6893 = vst.msk [vmem:[%s216 + $0x748] sm:$0xff] %vm5632, %v6381
        %6894 = vst.msk [vmem:[%s216 + $0x750] sm:$0xff] %vm5632, %v6382
        %6895 = vst.msk [vmem:[%s216 + $0x758] sm:$0xff] %vm5632, %v6383
        %6896 = vst.msk [vmem:[%s216 + $0x760] sm:$0xff] %vm5632, %v6384
        %6897 = vst.msk [vmem:[%s216 + $0x768] sm:$0xff] %vm5632, %v6385
        %6898 = vst.msk [vmem:[%s216 + $0x770] sm:$0xff] %vm5632, %v6386
        %6899 = vst.msk [vmem:[%s216 + $0x778] sm:$0xff] %vm5632, %v6387
        %6900 = vst.msk [vmem:[%s216 + $0x780] sm:$0xff] %vm5632, %v6388
        %6901 = vst.msk [vmem:[%s216 + $0x788] sm:$0xff] %vm5632, %v6389
        %6902 = vst.msk [vmem:[%s216 + $0x790] sm:$0xff] %vm5632, %v6390
        %6903 = vst.msk [vmem:[%s216 + $0x798] sm:$0xff] %vm5632, %v6391
        %6904 = vst.msk [vmem:[%s216 + $0x7a0] sm:$0xff] %vm5632, %v6392
        %6905 = vst.msk [vmem:[%s216 + $0x7a8] sm:$0xff] %vm5632, %v6393
        %6906 = vst.msk [vmem:[%s216 + $0x7b0] sm:$0xff] %vm5632, %v6394
        %6907 = vst.msk [vmem:[%s216 + $0x7b8] sm:$0xff] %vm5632, %v6395
        %6908 = vst.msk [vmem:[%s216 + $0x7c0] sm:$0xff] %vm5632, %v6396
        %6909 = vst.msk [vmem:[%s216 + $0x7c8] sm:$0xff] %vm5632, %v6397
        %6910 = vst.msk [vmem:[%s216 + $0x7d0] sm:$0xff] %vm5632, %v6398
        %6911 = vst.msk [vmem:[%s216 + $0x7d8] sm:$0xff] %vm5632, %v6399
        %6912 = vst.msk [vmem:[%s216 + $0x7e0] sm:$0xff] %vm5632, %v6400
        %6913 = vst.msk [vmem:[%s216 + $0x7e8] sm:$0xff] %vm5632, %v6401
        %6914 = vst.msk [vmem:[%s216 + $0x7f0] sm:$0xff] %vm5632, %v6402
        %6915 = vst.msk [vmem:[%s216 + $0x7f8] sm:$0xff] %vm5632, %v6403
        %6916 = vst.msk [vmem:[%s216 + $0x800] sm:$0xff] %vm5632, %v6404
        %6917 = vst.msk [vmem:[%s216 + $0x808] sm:$0xff] %vm5632, %v6405
        %6918 = vst.msk [vmem:[%s216 + $0x810] sm:$0xff] %vm5632, %v6406
        %6919 = vst.msk [vmem:[%s216 + $0x818] sm:$0xff] %vm5632, %v6407
        %6920 = vst.msk [vmem:[%s216 + $0x820] sm:$0xff] %vm5632, %v6408
        %6921 = vst.msk [vmem:[%s216 + $0x828] sm:$0xff] %vm5632, %v6409
        %6922 = vst.msk [vmem:[%s216 + $0x830] sm:$0xff] %vm5632, %v6410
        %6923 = vst.msk [vmem:[%s216 + $0x838] sm:$0xff] %vm5632, %v6411
        %6924 = vst.msk [vmem:[%s216 + $0x840] sm:$0xff] %vm5632, %v6412
        %6925 = vst.msk [vmem:[%s216 + $0x848] sm:$0xff] %vm5632, %v6413
        %6926 = vst.msk [vmem:[%s216 + $0x850] sm:$0xff] %vm5632, %v6414
        %6927 = vst.msk [vmem:[%s216 + $0x858] sm:$0xff] %vm5632, %v6415
        %6928 = vst.msk [vmem:[%s216 + $0x860] sm:$0xff] %vm5632, %v6416
        %6929 = vst.msk [vmem:[%s216 + $0x868] sm:$0xff] %vm5632, %v6417
        %6930 = vst.msk [vmem:[%s216 + $0x870] sm:$0xff] %vm5632, %v6418
        %6931 = vst.msk [vmem:[%s216 + $0x878] sm:$0xff] %vm5632, %v6419
        %6932 = vst.msk [vmem:[%s216 + $0x880] sm:$0xff] %vm5632, %v6420
        %6933 = vst.msk [vmem:[%s216 + $0x888] sm:$0xff] %vm5632, %v6421
        %6934 = vst.msk [vmem:[%s216 + $0x890] sm:$0xff] %vm5632, %v6422
        %6935 = vst.msk [vmem:[%s216 + $0x898] sm:$0xff] %vm5632, %v6423
        %6936 = vst.msk [vmem:[%s216 + $0x8a0] sm:$0xff] %vm5632, %v6424
        %6937 = vst.msk [vmem:[%s216 + $0x8a8] sm:$0xff] %vm5632, %v6425
        %6938 = vst.msk [vmem:[%s216 + $0x8b0] sm:$0xff] %vm5632, %v6426
        %6939 = vst.msk [vmem:[%s216 + $0x8b8] sm:$0xff] %vm5632, %v6427
        %6940 = vst.msk [vmem:[%s216 + $0x8c0] sm:$0xff] %vm5632, %v6428
        %6941 = vst.msk [vmem:[%s216 + $0x8c8] sm:$0xff] %vm5632, %v6429
        %6942 = vst.msk [vmem:[%s216 + $0x8d0] sm:$0xff] %vm5632, %v6430
        %6943 = vst.msk [vmem:[%s216 + $0x8d8] sm:$0xff] %vm5632, %v6431
        %6944 = vst.msk [vmem:[%s216 + $0x8e0] sm:$0xff] %vm5632, %v6432
        %6945 = vst.msk [vmem:[%s216 + $0x8e8] sm:$0xff] %vm5632, %v6433
        %6946 = vst.msk [vmem:[%s216 + $0x8f0] sm:$0xff] %vm5632, %v6434
        %6947 = vst.msk [vmem:[%s216 + $0x8f8] sm:$0xff] %vm5632, %v6435
        %6948 = vst.msk [vmem:[%s216 + $0x900] sm:$0xff] %vm5632, %v6436
        %6949 = vst.msk [vmem:[%s216 + $0x908] sm:$0xff] %vm5632, %v6437
        %6950 = vst.msk [vmem:[%s216 + $0x910] sm:$0xff] %vm5632, %v6438
        %6951 = vst.msk [vmem:[%s216 + $0x918] sm:$0xff] %vm5632, %v6439
        %6952 = vst.msk [vmem:[%s216 + $0x920] sm:$0xff] %vm5632, %v6440
        %6953 = vst.msk [vmem:[%s216 + $0x928] sm:$0xff] %vm5632, %v6441
        %6954 = vst.msk [vmem:[%s216 + $0x930] sm:$0xff] %vm5632, %v6442
        %6955 = vst.msk [vmem:[%s216 + $0x938] sm:$0xff] %vm5632, %v6443
        %6956 = vst.msk [vmem:[%s216 + $0x940] sm:$0xff] %vm5632, %v6444
        %6957 = vst.msk [vmem:[%s216 + $0x948] sm:$0xff] %vm5632, %v6445
        %6958 = vst.msk [vmem:[%s216 + $0x950] sm:$0xff] %vm5632, %v6446
        %6959 = vst.msk [vmem:[%s216 + $0x958] sm:$0xff] %vm5632, %v6447
        %6960 = vst.msk [vmem:[%s216 + $0x960] sm:$0xff] %vm5632, %v6448
        %6961 = vst.msk [vmem:[%s216 + $0x968] sm:$0xff] %vm5632, %v6449
        %6962 = vst.msk [vmem:[%s216 + $0x970] sm:$0xff] %vm5632, %v6450
        %6963 = vst.msk [vmem:[%s216 + $0x978] sm:$0xff] %vm5632, %v6451
        %6964 = vst.msk [vmem:[%s216 + $0x980] sm:$0xff] %vm5632, %v6452
        %6965 = vst.msk [vmem:[%s216 + $0x988] sm:$0xff] %vm5632, %v6453
        %6966 = vst.msk [vmem:[%s216 + $0x990] sm:$0xff] %vm5632, %v6454
        %6967 = vst.msk [vmem:[%s216 + $0x998] sm:$0xff] %vm5632, %v6455
        %6968 = vst.msk [vmem:[%s216 + $0x9a0] sm:$0xff] %vm5632, %v6456
        %6969 = vst.msk [vmem:[%s216 + $0x9a8] sm:$0xff] %vm5632, %v6457
        %6970 = vst.msk [vmem:[%s216 + $0x9b0] sm:$0xff] %vm5632, %v6458
        %6971 = vst.msk [vmem:[%s216 + $0x9b8] sm:$0xff] %vm5632, %v6459
        %6972 = vst.msk [vmem:[%s216 + $0x9c0] sm:$0xff] %vm5632, %v6460
        %6973 = vst.msk [vmem:[%s216 + $0x9c8] sm:$0xff] %vm5632, %v6461
        %6974 = vst.msk [vmem:[%s216 + $0x9d0] sm:$0xff] %vm5632, %v6462
        %6975 = vst.msk [vmem:[%s216 + $0x9d8] sm:$0xff] %vm5632, %v6463
        %6976 = vst.msk [vmem:[%s216 + $0x9e0] sm:$0xff] %vm5632, %v6464
        %6977 = vst.msk [vmem:[%s216 + $0x9e8] sm:$0xff] %vm5632, %v6465
        %6978 = vst.msk [vmem:[%s216 + $0x9f0] sm:$0xff] %vm5632, %v6466
        %6979 = vst.msk [vmem:[%s216 + $0x9f8] sm:$0xff] %vm5632, %v6467
        %6980 = vst.msk [vmem:[%s216 + $0xa00] sm:$0xff] %vm5632, %v6468
        %6981 = vst.msk [vmem:[%s216 + $0xa08] sm:$0xff] %vm5632, %v6469
        %6982 = vst.msk [vmem:[%s216 + $0xa10] sm:$0xff] %vm5632, %v6470
        %6983 = vst.msk [vmem:[%s216 + $0xa18] sm:$0xff] %vm5632, %v6471
        %6984 = vst.msk [vmem:[%s216 + $0xa20] sm:$0xff] %vm5632, %v6472
        %6985 = vst.msk [vmem:[%s216 + $0xa28] sm:$0xff] %vm5632, %v6473
        %6986 = vst.msk [vmem:[%s216 + $0xa30] sm:$0xff] %vm5632, %v6474
        %6987 = vst.msk [vmem:[%s216 + $0xa38] sm:$0xff] %vm5632, %v6475
        %6988 = vst.msk [vmem:[%s216 + $0xa40] sm:$0xff] %vm5632, %v6476
        %6989 = vst.msk [vmem:[%s216 + $0xa48] sm:$0xff] %vm5632, %v6477
        %6990 = vst.msk [vmem:[%s216 + $0xa50] sm:$0xff] %vm5632, %v6478
        %6991 = vst.msk [vmem:[%s216 + $0xa58] sm:$0xff] %vm5632, %v6479
        %6992 = vst.msk [vmem:[%s216 + $0xa60] sm:$0xff] %vm5632, %v6480
        %6993 = vst.msk [vmem:[%s216 + $0xa68] sm:$0xff] %vm5632, %v6481
        %6994 = vst.msk [vmem:[%s216 + $0xa70] sm:$0xff] %vm5632, %v6482
        %6995 = vst.msk [vmem:[%s216 + $0xa78] sm:$0xff] %vm5632, %v6483
        %6996 = vst.msk [vmem:[%s216 + $0xa80] sm:$0xff] %vm5632, %v6484
        %6997 = vst.msk [vmem:[%s216 + $0xa88] sm:$0xff] %vm5632, %v6485
        %6998 = vst.msk [vmem:[%s216 + $0xa90] sm:$0xff] %vm5632, %v6486
        %6999 = vst.msk [vmem:[%s216 + $0xa98] sm:$0xff] %vm5632, %v6487
        %7000 = vst.msk [vmem:[%s216 + $0xaa0] sm:$0xff] %vm5632, %v6488
        %7001 = vst.msk [vmem:[%s216 + $0xaa8] sm:$0xff] %vm5632, %v6489
        %7002 = vst.msk [vmem:[%s216 + $0xab0] sm:$0xff] %vm5632, %v6490
        %7003 = vst.msk [vmem:[%s216 + $0xab8] sm:$0xff] %vm5632, %v6491
        %7004 = vst.msk [vmem:[%s216 + $0xac0] sm:$0xff] %vm5632, %v6492
        %7005 = vst.msk [vmem:[%s216 + $0xac8] sm:$0xff] %vm5632, %v6493
        %7006 = vst.msk [vmem:[%s216 + $0xad0] sm:$0xff] %vm5632, %v6494
        %7007 = vst.msk [vmem:[%s216 + $0xad8] sm:$0xff] %vm5632, %v6495
        %7008 = vst.msk [vmem:[%s216 + $0xae0] sm:$0xff] %vm5632, %v6496
        %7009 = vst.msk [vmem:[%s216 + $0xae8] sm:$0xff] %vm5632, %v6497
        %7010 = vst.msk [vmem:[%s216 + $0xaf0] sm:$0xff] %vm5632, %v6498
        %7011 = vst.msk [vmem:[%s216 + $0xaf8] sm:$0xff] %vm5632, %v6499
        %7012 = vst.msk [vmem:[%s216 + $0xb00] sm:$0xff] %vm5632, %v6500
        %7013 = vst.msk [vmem:[%s216 + $0xb08] sm:$0xff] %vm5632, %v6501
        %7014 = vst.msk [vmem:[%s216 + $0xb10] sm:$0xff] %vm5632, %v6502
        %7015 = vst.msk [vmem:[%s216 + $0xb18] sm:$0xff] %vm5632, %v6503
        %7016 = vst.msk [vmem:[%s216 + $0xb20] sm:$0xff] %vm5632, %v6504
        %7017 = vst.msk [vmem:[%s216 + $0xb28] sm:$0xff] %vm5632, %v6505
        %7018 = vst.msk [vmem:[%s216 + $0xb30] sm:$0xff] %vm5632, %v6506
        %7019 = vst.msk [vmem:[%s216 + $0xb38] sm:$0xff] %vm5632, %v6507
        %7020 = vst.msk [vmem:[%s216 + $0xb40] sm:$0xff] %vm5632, %v6508
        %7021 = vst.msk [vmem:[%s216 + $0xb48] sm:$0xff] %vm5632, %v6509
        %7022 = vst.msk [vmem:[%s216 + $0xb50] sm:$0xff] %vm5632, %v6510
        %7023 = vst.msk [vmem:[%s216 + $0xb58] sm:$0xff] %vm5632, %v6511
        %7024 = vst.msk [vmem:[%s216 + $0xb60] sm:$0xff] %vm5632, %v6512
        %7025 = vst.msk [vmem:[%s216 + $0xb68] sm:$0xff] %vm5632, %v6513
        %7026 = vst.msk [vmem:[%s216 + $0xb70] sm:$0xff] %vm5632, %v6514
        %7027 = vst.msk [vmem:[%s216 + $0xb78] sm:$0xff] %vm5632, %v6515
        %7028 = vst.msk [vmem:[%s216 + $0xb80] sm:$0xff] %vm5632, %v6516
        %7029 = vst.msk [vmem:[%s216 + $0xb88] sm:$0xff] %vm5632, %v6517
        %7030 = vst.msk [vmem:[%s216 + $0xb90] sm:$0xff] %vm5632, %v6518
        %7031 = vst.msk [vmem:[%s216 + $0xb98] sm:$0xff] %vm5632, %v6519
        %7032 = vst.msk [vmem:[%s216 + $0xba0] sm:$0xff] %vm5632, %v6520
        %7033 = vst.msk [vmem:[%s216 + $0xba8] sm:$0xff] %vm5632, %v6521
        %7034 = vst.msk [vmem:[%s216 + $0xbb0] sm:$0xff] %vm5632, %v6522
        %7035 = vst.msk [vmem:[%s216 + $0xbb8] sm:$0xff] %vm5632, %v6523
        %7036 = vst.msk [vmem:[%s216 + $0xbc0] sm:$0xff] %vm5632, %v6524
        %7037 = vst.msk [vmem:[%s216 + $0xbc8] sm:$0xff] %vm5632, %v6525
        %7038 = vst.msk [vmem:[%s216 + $0xbd0] sm:$0xff] %vm5632, %v6526
        %7039 = vst.msk [vmem:[%s216 + $0xbd8] sm:$0xff] %vm5632, %v6527
        %7040 = vst.msk [vmem:[%s216 + $0xbe0] sm:$0xff] %vm5632, %v6528
        %7041 = vst.msk [vmem:[%s216 + $0xbe8] sm:$0xff] %vm5632, %v6529
        %7042 = vst.msk [vmem:[%s216 + $0xbf0] sm:$0xff] %vm5632, %v6530
        %7043 = vst.msk [vmem:[%s216 + $0xbf8] sm:$0xff] %vm5632, %v6531
        %7044 = vst.msk [vmem:[%s216 + $0xc00] sm:$0xff] %vm5632, %v6532
        %7045 = vst.msk [vmem:[%s216 + $0xc08] sm:$0xff] %vm5632, %v6533
        %7046 = vst.msk [vmem:[%s216 + $0xc10] sm:$0xff] %vm5632, %v6534
        %7047 = vst.msk [vmem:[%s216 + $0xc18] sm:$0xff] %vm5632, %v6535
        %7048 = vst.msk [vmem:[%s216 + $0xc20] sm:$0xff] %vm5632, %v6536
        %7049 = vst.msk [vmem:[%s216 + $0xc28] sm:$0xff] %vm5632, %v6537
        %7050 = vst.msk [vmem:[%s216 + $0xc30] sm:$0xff] %vm5632, %v6538
        %7051 = vst.msk [vmem:[%s216 + $0xc38] sm:$0xff] %vm5632, %v6539
        %7052 = vst.msk [vmem:[%s216 + $0xc40] sm:$0xff] %vm5632, %v6540
        %7053 = vst.msk [vmem:[%s216 + $0xc48] sm:$0xff] %vm5632, %v6541
        %7054 = vst.msk [vmem:[%s216 + $0xc50] sm:$0xff] %vm5632, %v6542
        %7055 = vst.msk [vmem:[%s216 + $0xc58] sm:$0xff] %vm5632, %v6543
        %7056 = vst.msk [vmem:[%s216 + $0xc60] sm:$0xff] %vm5632, %v6544
        %7057 = vst.msk [vmem:[%s216 + $0xc68] sm:$0xff] %vm5632, %v6545
        %7058 = vst.msk [vmem:[%s216 + $0xc70] sm:$0xff] %vm5632, %v6546
        %7059 = vst.msk [vmem:[%s216 + $0xc78] sm:$0xff] %vm5632, %v6547
        %7060 = vst.msk [vmem:[%s216 + $0xc80] sm:$0xff] %vm5632, %v6548
        %7061 = vst.msk [vmem:[%s216 + $0xc88] sm:$0xff] %vm5632, %v6549
        %7062 = vst.msk [vmem:[%s216 + $0xc90] sm:$0xff] %vm5632, %v6550
        %7063 = vst.msk [vmem:[%s216 + $0xc98] sm:$0xff] %vm5632, %v6551
        %7064 = vst.msk [vmem:[%s216 + $0xca0] sm:$0xff] %vm5632, %v6552
        %7065 = vst.msk [vmem:[%s216 + $0xca8] sm:$0xff] %vm5632, %v6553
        %7066 = vst.msk [vmem:[%s216 + $0xcb0] sm:$0xff] %vm5632, %v6554
        %7067 = vst.msk [vmem:[%s216 + $0xcb8] sm:$0xff] %vm5632, %v6555
        %7068 = vst.msk [vmem:[%s216 + $0xcc0] sm:$0xff] %vm5632, %v6556
        %7069 = vst.msk [vmem:[%s216 + $0xcc8] sm:$0xff] %vm5632, %v6557
        %7070 = vst.msk [vmem:[%s216 + $0xcd0] sm:$0xff] %vm5632, %v6558
        %7071 = vst.msk [vmem:[%s216 + $0xcd8] sm:$0xff] %vm5632, %v6559
        %7072 = vst.msk [vmem:[%s216 + $0xce0] sm:$0xff] %vm5632, %v6560
        %7073 = vst.msk [vmem:[%s216 + $0xce8] sm:$0xff] %vm5632, %v6561
        %7074 = vst.msk [vmem:[%s216 + $0xcf0] sm:$0xff] %vm5632, %v6562
        %7075 = vst.msk [vmem:[%s216 + $0xcf8] sm:$0xff] %vm5632, %v6563
        %7076 = vst.msk [vmem:[%s216 + $0xd00] sm:$0xff] %vm5632, %v6564
        %7077 = vst.msk [vmem:[%s216 + $0xd08] sm:$0xff] %vm5632, %v6565
        %7078 = vst.msk [vmem:[%s216 + $0xd10] sm:$0xff] %vm5632, %v6566
        %7079 = vst.msk [vmem:[%s216 + $0xd18] sm:$0xff] %vm5632, %v6567
        %7080 = vst.msk [vmem:[%s216 + $0xd20] sm:$0xff] %vm5632, %v6568
        %7081 = vst.msk [vmem:[%s216 + $0xd28] sm:$0xff] %vm5632, %v6569
        %7082 = vst.msk [vmem:[%s216 + $0xd30] sm:$0xff] %vm5632, %v6570
        %7083 = vst.msk [vmem:[%s216 + $0xd38] sm:$0xff] %vm5632, %v6571
        %7084 = vst.msk [vmem:[%s216 + $0xd40] sm:$0xff] %vm5632, %v6572
        %7085 = vst.msk [vmem:[%s216 + $0xd48] sm:$0xff] %vm5632, %v6573
        %7086 = vst.msk [vmem:[%s216 + $0xd50] sm:$0xff] %vm5632, %v6574
        %7087 = vst.msk [vmem:[%s216 + $0xd58] sm:$0xff] %vm5632, %v6575
        %7088 = vst.msk [vmem:[%s216 + $0xd60] sm:$0xff] %vm5632, %v6576
        %7089 = vst.msk [vmem:[%s216 + $0xd68] sm:$0xff] %vm5632, %v6577
        %7090 = vst.msk [vmem:[%s216 + $0xd70] sm:$0xff] %vm5632, %v6578
        %7091 = vst.msk [vmem:[%s216 + $0xd78] sm:$0xff] %vm5632, %v6579
        %7092 = vst.msk [vmem:[%s216 + $0xd80] sm:$0xff] %vm5632, %v6580
        %7093 = vst.msk [vmem:[%s216 + $0xd88] sm:$0xff] %vm5632, %v6581
        %7094 = vst.msk [vmem:[%s216 + $0xd90] sm:$0xff] %vm5632, %v6582
        %7095 = vst.msk [vmem:[%s216 + $0xd98] sm:$0xff] %vm5632, %v6583
        %7096 = vst.msk [vmem:[%s216 + $0xda0] sm:$0xff] %vm5632, %v6584
        %7097 = vst.msk [vmem:[%s216 + $0xda8] sm:$0xff] %vm5632, %v6585
        %7098 = vst.msk [vmem:[%s216 + $0xdb0] sm:$0xff] %vm5632, %v6586
        %7099 = vst.msk [vmem:[%s216 + $0xdb8] sm:$0xff] %vm5632, %v6587
        %7100 = vst.msk [vmem:[%s216 + $0xdc0] sm:$0xff] %vm5632, %v6588
        %7101 = vst.msk [vmem:[%s216 + $0xdc8] sm:$0xff] %vm5632, %v6589
        %7102 = vst.msk [vmem:[%s216 + $0xdd0] sm:$0xff] %vm5632, %v6590
        %7103 = vst.msk [vmem:[%s216 + $0xdd8] sm:$0xff] %vm5632, %v6591
        %7104 = vst.msk [vmem:[%s216 + $0xde0] sm:$0xff] %vm5632, %v6592
        %7105 = vst.msk [vmem:[%s216 + $0xde8] sm:$0xff] %vm5632, %v6593
        %7106 = vst.msk [vmem:[%s216 + $0xdf0] sm:$0xff] %vm5632, %v6594
        %7107 = vst.msk [vmem:[%s216 + $0xdf8] sm:$0xff] %vm5632, %v6595
        %7108 = vst.msk [vmem:[%s216 + $0xe00] sm:$0xff] %vm5632, %v6596
        %7109 = vst.msk [vmem:[%s216 + $0xe08] sm:$0xff] %vm5632, %v6597
        %7110 = vst.msk [vmem:[%s216 + $0xe10] sm:$0xff] %vm5632, %v6598
        %7111 = vst.msk [vmem:[%s216 + $0xe18] sm:$0xff] %vm5632, %v6599
        %7112 = vst.msk [vmem:[%s216 + $0xe20] sm:$0xff] %vm5632, %v6600
        %7113 = vst.msk [vmem:[%s216 + $0xe28] sm:$0xff] %vm5632, %v6601
        %7114 = vst.msk [vmem:[%s216 + $0xe30] sm:$0xff] %vm5632, %v6602
        %7115 = vst.msk [vmem:[%s216 + $0xe38] sm:$0xff] %vm5632, %v6603
        %7116 = vst.msk [vmem:[%s216 + $0xe40] sm:$0xff] %vm5632, %v6604
        %7117 = vst.msk [vmem:[%s216 + $0xe48] sm:$0xff] %vm5632, %v6605
        %7118 = vst.msk [vmem:[%s216 + $0xe50] sm:$0xff] %vm5632, %v6606
        %7119 = vst.msk [vmem:[%s216 + $0xe58] sm:$0xff] %vm5632, %v6607
        %7120 = vst.msk [vmem:[%s216 + $0xe60] sm:$0xff] %vm5632, %v6608
        %7121 = vst.msk [vmem:[%s216 + $0xe68] sm:$0xff] %vm5632, %v6609
        %7122 = vst.msk [vmem:[%s216 + $0xe70] sm:$0xff] %vm5632, %v6610
        %7123 = vst.msk [vmem:[%s216 + $0xe78] sm:$0xff] %vm5632, %v6611
        %7124 = vst.msk [vmem:[%s216 + $0xe80] sm:$0xff] %vm5632, %v6612
        %7125 = vst.msk [vmem:[%s216 + $0xe88] sm:$0xff] %vm5632, %v6613
        %7126 = vst.msk [vmem:[%s216 + $0xe90] sm:$0xff] %vm5632, %v6614
        %7127 = vst.msk [vmem:[%s216 + $0xe98] sm:$0xff] %vm5632, %v6615
        %7128 = vst.msk [vmem:[%s216 + $0xea0] sm:$0xff] %vm5632, %v6616
        %7129 = vst.msk [vmem:[%s216 + $0xea8] sm:$0xff] %vm5632, %v6617
        %7130 = vst.msk [vmem:[%s216 + $0xeb0] sm:$0xff] %vm5632, %v6618
        %7131 = vst.msk [vmem:[%s216 + $0xeb8] sm:$0xff] %vm5632, %v6619
        %7132 = vst.msk [vmem:[%s216 + $0xec0] sm:$0xff] %vm5632, %v6620
        %7133 = vst.msk [vmem:[%s216 + $0xec8] sm:$0xff] %vm5632, %v6621
        %7134 = vst.msk [vmem:[%s216 + $0xed0] sm:$0xff] %vm5632, %v6622
        %7135 = vst.msk [vmem:[%s216 + $0xed8] sm:$0xff] %vm5632, %v6623
        %7136 = vst.msk [vmem:[%s216 + $0xee0] sm:$0xff] %vm5632, %v6624
        %7137 = vst.msk [vmem:[%s216 + $0xee8] sm:$0xff] %vm5632, %v6625
        %7138 = vst.msk [vmem:[%s216 + $0xef0] sm:$0xff] %vm5632, %v6626
        %7139 = vst.msk [vmem:[%s216 + $0xef8] sm:$0xff] %vm5632, %v6627
        %7140 = vst.msk [vmem:[%s216 + $0xf00] sm:$0xff] %vm5632, %v6628
        %7141 = vst.msk [vmem:[%s216 + $0xf08] sm:$0xff] %vm5632, %v6629
        %7142 = vst.msk [vmem:[%s216 + $0xf10] sm:$0xff] %vm5632, %v6630
        %7143 = vst.msk [vmem:[%s216 + $0xf18] sm:$0xff] %vm5632, %v6631
        %7144 = vst.msk [vmem:[%s216 + $0xf20] sm:$0xff] %vm5632, %v6632
        %7145 = vst.msk [vmem:[%s216 + $0xf28] sm:$0xff] %vm5632, %v6633
        %7146 = vst.msk [vmem:[%s216 + $0xf30] sm:$0xff] %vm5632, %v6634
        %7147 = vst.msk [vmem:[%s216 + $0xf38] sm:$0xff] %vm5632, %v6635
        %7148 = vst.msk [vmem:[%s216 + $0xf40] sm:$0xff] %vm5632, %v6636
        %7149 = vst.msk [vmem:[%s216 + $0xf48] sm:$0xff] %vm5632, %v6637
        %7150 = vst.msk [vmem:[%s216 + $0xf50] sm:$0xff] %vm5632, %v6638
        %7151 = vst.msk [vmem:[%s216 + $0xf58] sm:$0xff] %vm5632, %v6639
        %7152 = vst.msk [vmem:[%s216 + $0xf60] sm:$0xff] %vm5632, %v6640
        %7153 = vst.msk [vmem:[%s216 + $0xf68] sm:$0xff] %vm5632, %v6641
        %7154 = vst.msk [vmem:[%s216 + $0xf70] sm:$0xff] %vm5632, %v6642
        %7155 = vst.msk [vmem:[%s216 + $0xf78] sm:$0xff] %vm5632, %v6643
        %7156 = vst.msk [vmem:[%s216 + $0xf80] sm:$0xff] %vm5632, %v6644
        %7157 = vst.msk [vmem:[%s216 + $0xf88] sm:$0xff] %vm5632, %v6645
        %7158 = vst.msk [vmem:[%s216 + $0xf90] sm:$0xff] %vm5632, %v6646
        %7159 = vst.msk [vmem:[%s216 + $0xf98] sm:$0xff] %vm5632, %v6647
        %7160 = vst.msk [vmem:[%s216 + $0xfa0] sm:$0xff] %vm5632, %v6648
        %7161 = vst.msk [vmem:[%s216 + $0xfa8] sm:$0xff] %vm5632, %v6649
        %7162 = vst.msk [vmem:[%s216 + $0xfb0] sm:$0xff] %vm5632, %v6650
        %7163 = vst.msk [vmem:[%s216 + $0xfb8] sm:$0xff] %vm5632, %v6651
        %7164 = vst.msk [vmem:[%s216 + $0xfc0] sm:$0xff] %vm5632, %v6652
        %7165 = vst.msk [vmem:[%s216 + $0xfc8] sm:$0xff] %vm5632, %v6653
        %7166 = vst.msk [vmem:[%s216 + $0xfd0] sm:$0xff] %vm5632, %v6654
        %7167 = vst.msk [vmem:[%s216 + $0xfd8] sm:$0xff] %vm5632, %v6655
        %7168 = vst.msk [vmem:[%s216 + $0xfe0] sm:$0xff] %vm5632, %v6656
        %7169 = vst.msk [vmem:[%s216 + $0xfe8] sm:$0xff] %vm5632, %v6657
        %7170 = vst.msk [vmem:[%s216 + $0xff0] sm:$0xff] %vm5632, %v6658
        %7171 = vst.msk [vmem:[%s216 + $0xff8] sm:$0xff] %vm5632, %v6659
      $region36: #{_matmul_impl.1} parent=27 // pred_fallthru
        _
      %s7172 = smul.u32 512, %s18
      %p7173 = scmp.lt.s32.totalorder %s7172, 4095
      %s7174 = scalar_select %p7173, %s7172, 4095
      %p7175 = scmp.lt.s32.totalorder %s19, 0
      %s7176 = scalar_select %p7175, %s19, 0
      %s7177 = sadd.s32 %s7176, %s7174
      %s7178 = smul.addr %s7177, 8
      %s7179 = scalar_lea.vmem %s2, %s7178
      // Predicated region
      $region37: #{_matmul_impl.1} parent=27 // pred_check
        %p7180 = pneg %p108
      $region38: #{_matmul_impl.1} parent=27 // pred_check_branch
        %7182 = sbr.rel (%p7180) target = $region40
      $region39: #{_matmul_impl.1} parent=27 // pred_region
        %s7183 = smul.u32 512, %s18
      $region40: #{_matmul_impl.1} parent=27 // pred_fallthru
        _
    $region28: #{_matmul_impl.1} parent=5 // pred_fallthru
      _
    %p7184 = scmp.le.s32.totalorder 2, %s8
    // Predicated region
    $region41: #{_matmul_impl.1} parent=5 // pred_check
      %p7185 = pneg %p7184
    $region42: #{_matmul_impl.1} parent=5 // pred_check_branch
      %7187 = sbr.rel (%p7185) target = $region44
    $region43: #{_matmul_impl.1} parent=5 // pred_region
      %s7188 = ssub.s32 %s8, 2
      // Predicated region
      $region45: #{_matmul_impl.1} parent=43 // pred_check
        %p7189 = pneg %p114
      $region46: #{_matmul_impl.1} parent=43 // pred_check_branch
        %7191 = sbr.rel (%p7189) target = $region48
      $region47: #{_matmul_impl.1} parent=43 // pred_region
        %s7192 = smul.u32 512, %s21
        %p7193 = scmp.lt.s32.totalorder %s7192, 4095
        %s7194 = scalar_select %p7193, %s7192, 4095
        %p7195 = scmp.lt.s32.totalorder %s22, 0
        %s7196 = scalar_select %p7195, %s22, 0
        %s7197 = sadd.s32 %s7196, %s7194
        %s7198 = smul.addr %s7197, 8
        %s7199 = scalar_lea.vmem %s2, %s7198
      $region48: #{_matmul_impl.1} parent=43 // pred_fallthru
        _
    $region44: #{_matmul_impl.1} parent=5 // pred_fallthru
      _
  $region6: #{_matmul_impl.1} parent=0 // loop_footer
    %s12 = sadd.s32 1, %s8
  $region7: #{_matmul_impl.1} parent=0 // loop_footer_branch
    %7 = sbr.rel target = $region3
  $region8: #{_matmul_impl.1} parent=0 // loop_exit
    _

</llo_original>
